<compile_context>
chip_gen: v7x
topology: tpu7x:2x2x1
jax: 0.10.0
libtpu: 0.0.40
codegen_flags: <defaults>
</compile_context>

<pallas_src>
import math
import functools

import jax
import jax.numpy as jnp
from jax import lax
from jax.experimental import pallas as pl
from jax.experimental.pallas import tpu as pltpu

NEG_INF = -1e30
MXU_DTYPE = jnp.bfloat16   # MXU operand dtype; accumulation / softmax / residuals / BN are f32.


# ----------------------------------------------------------------------------
# In-kernel building blocks (single batch element)
# ----------------------------------------------------------------------------

def _mha(q_in, k_in, v_in, bias,
         wq_ref, wk_ref, wv_ref, bq_ref, bk_ref, bv_ref, wo_ref, bo_ref,
         nhead, head_dim):
    """Multi-head attention. q_in:[Lq,E], k_in/v_in:[Lk,E] f32, bias:[1,Lk] f32 or None.

    Full-width projections + single fused out-projection; per-head score/AV only.
    1/sqrt(head_dim) is pre-folded into wq/bq.  Returns [Lq,E] f32.
    """
    q = jnp.dot(q_in.astype(MXU_DTYPE), wq_ref[...],
                preferred_element_type=jnp.float32) + bq_ref[...]
    k = jnp.dot(k_in.astype(MXU_DTYPE), wk_ref[...],
                preferred_element_type=jnp.float32) + bk_ref[...]
    v = jnp.dot(v_in.astype(MXU_DTYPE), wv_ref[...],
                preferred_element_type=jnp.float32) + bv_ref[...]
    q = q.astype(MXU_DTYPE)
    k = k.astype(MXU_DTYPE)
    v = v.astype(MXU_DTYPE)

    lq, lk = q_in.shape[0], k_in.shape[0]
    bias_full = None if bias is None else jnp.broadcast_to(bias, (lq, lk))  # hoisted once

    # TODO(synk): tile over the KV axis (flash-style online softmax) for large S.
    heads = []
    for h in range(nhead):
        lo = h * head_dim
        qh = q[:, lo:lo + head_dim]
        kh = k[:, lo:lo + head_dim]
        vh = v[:, lo:lo + head_dim]
        s = lax.dot_general(qh, kh, (((1,), (1,)), ((), ())),
                            preferred_element_type=jnp.float32)          # [Lq, Lk] f32
        if bias_full is not None:
            s = s + bias_full
        s = s - jnp.max(s, axis=-1, keepdims=True)
        p = jnp.exp(s)
        p = p * pl.reciprocal(jnp.sum(p, axis=-1, keepdims=True), approx=True)
        heads.append(jnp.dot(p.astype(MXU_DTYPE), vh,
                             preferred_element_type=jnp.float32))         # [Lq, Dh] f32

    o = jnp.concatenate(heads, axis=-1)                                   # [Lq, E] f32
    return (jnp.dot(o.astype(MXU_DTYPE), wo_ref[...],
                    preferred_element_type=jnp.float32) + bo_ref[...])


def _ffn(y, w1_ref, b1_ref, w2_ref, b2_ref):
    # TODO(synk): tile over S (and K=FF) at production shapes.
    h = jnp.maximum(jnp.dot(y.astype(MXU_DTYPE), w1_ref[...],
                            preferred_element_type=jnp.float32) + b1_ref[...], 0.0)
    return jnp.dot(h.astype(MXU_DTYPE), w2_ref[...],
                   preferred_element_type=jnp.float32) + b2_ref[...]


# ----------------------------------------------------------------------------
# Fused layer kernels (one batch element per grid step)
# ----------------------------------------------------------------------------

def _enc_layer_kernel(x_ref, pos_ref, bias_ref,
                      wq, wk, wv, bq, bk, bv, wo, bo,
                      n1s, n1b, w1, b1, w2, b2, n2s, n2b,
                      o_ref, *, nhead, head_dim):
    x = x_ref[0]                       # [S, E] f32
    qk_in = x + pos_ref[0]
    bias = bias_ref[0]                 # [1, S] f32

    attn = _mha(qk_in, qk_in, x, bias,
                wq, wk, wv, bq, bk, bv, wo, bo, nhead, head_dim)
    y = (x + attn) * n1s[...] + n1b[...]                 # residual + BN1 (eval affine)
    z = _ffn(y, w1, b1, w2, b2)
    o_ref[0] = ((y + z) * n2s[...] + n2b[...]).astype(o_ref.dtype)


def _dec_layer_kernel(tgt_ref, mem_ref, qpos_ref, pos_ref, bias_ref,
                      sa_wq, sa_wk, sa_wv, sa_bq, sa_bk, sa_bv, sa_wo, sa_bo,
                      n1s, n1b,
                      ca_wq, ca_wk, ca_wv, ca_bq, ca_bk, ca_bv, ca_wo, ca_bo,
                      n2s, n2b, w1, b1, w2, b2, n3s, n3b,
                      o_ref, *, nhead, head_dim):
    t = tgt_ref[0]                     # [T, E]
    m = mem_ref[0]                     # [S, E]
    qp = qpos_ref[0]
    pp = pos_ref[0]
    bias = bias_ref[0]                 # [1, S]

    # self-attention (no key-padding mask on the target side in this module)
    q_in = t + qp
    sa = _mha(q_in, q_in, t, None,
              sa_wq, sa_wk, sa_wv, sa_bq, sa_bk, sa_bv, sa_wo, sa_bo,
              nhead, head_dim)
    y1 = (t + sa) * n1s[...] + n1b[...]

    # cross-attention against encoder memory (masked on source padding)
    ca = _mha(y1 + qp, m + pp, m, bias,
              ca_wq, ca_wk, ca_wv, ca_bq, ca_bk, ca_bv, ca_wo, ca_bo,
              nhead, head_dim)
    y2 = (y1 + ca) * n2s[...] + n2b[...]

    z = _ffn(y2, w1, b1, w2, b2)
    o_ref[0] = ((y2 + z) * n3s[...] + n3b[...]).astype(o_ref.dtype)   # final norm folded in


def _pool_tgtfc_kernel(mem_ref, maskv_ref, w1m_ref, w1s_ref, bns_ref, bnb_ref,
                       w2_ref, b2_ref, o_ref, *, unbiased):
    mem = mem_ref[0]                                    # [S, E] f32
    m = maskv_ref[0]                                    # [S, 1] f32 (1.0 = valid)
    x = mem * m
    cnt = jnp.maximum(jnp.sum(m, axis=0, keepdims=True), 1.0)      # [1, 1]
    mean = jnp.sum(x, axis=0, keepdims=True) / cnt                 # [1, E]
    centered = x - mean   # matches torch reference quirk: padded (zeroed) rows add (-mean)^2
    var = jnp.sum(centered * centered, axis=0, keepdims=True)      # [1, E]
    if unbiased:          # mask=None path == torch.std (unbiased); guard the S==1 case
        std = jnp.sqrt(var / jnp.maximum(cnt - 1.0, 1.0))
    else:                 # masked path divides by (count + 1) as in the reference
        std = jnp.sqrt(var / (cnt + 1.0))
    # tgt_fc: Linear(2E->FF no bias) -> BN(FF) -> ReLU -> Linear(FF->E)
    h = (jnp.dot(mean.astype(MXU_DTYPE), w1m_ref[...], preferred_element_type=jnp.float32)
         + jnp.dot(std.astype(MXU_DTYPE), w1s_ref[...], preferred_element_type=jnp.float32))
    h = jnp.maximum(h * bns_ref[...] + bnb_ref[...], 0.0)
    tgt0 = jnp.dot(h.astype(MXU_DTYPE), w2_ref[...],
                   preferred_element_type=jnp.float32) + b2_ref[...]
    o_ref[0] = tgt0.astype(o_ref.dtype)


# ----------------------------------------------------------------------------
# pallas_call wrappers
# ----------------------------------------------------------------------------

def _batch_spec(block_shape):
    zeros = (0,) * (len(block_shape) - 1)
    return pl.BlockSpec(block_shape, lambda b: (b,) + zeros)


def _rep_spec(arr):
    zeros = (0,) * arr.ndim
    return pl.BlockSpec(arr.shape, lambda b: zeros)


def _nbytes(x):
    return int(x.size) * jnp.dtype(x.dtype).itemsize


def _vmem_limit(act_arrays, batch, weights):
    """Shape-aware scoped-VMEM limit: double-buffered per-step blocks + headroom."""
    blk = sum(_nbytes(a) // batch for a in act_arrays)
    blk += sum(_nbytes(w) for w in weights)
    return int(min(max(4 * blk + (16 << 20), 32 << 20), 96 << 20))


def encoder_layer_fwd(x, pos, bias, lp, nhead):
    B, S, E = x.shape
    head_dim = E // nhead
    sa = lp["self_attn"]
    weights = [sa["wq"], sa["wk"], sa["wv"], sa["bq"], sa["bk"], sa["bv"],
               sa["wo"], sa["bo"],
               lp["norm1_s"], lp["norm1_b"],
               lp["w1"], lp["b1"], lp["w2"], lp["b2"],
               lp["norm2_s"], lp["norm2_b"]]
    return pl.pallas_call(
        functools.partial(_enc_layer_kernel, nhead=nhead, head_dim=head_dim),
        out_shape=jax.ShapeDtypeStruct((B, S, E), x.dtype),
        grid=(B,),
        in_specs=[_batch_spec((1, S, E)), _batch_spec((1, S, E)),
                  _batch_spec((1, 1, S))] + [_rep_spec(w) for w in weights],
        out_specs=_batch_spec((1, S, E)),
        compiler_params=pltpu.CompilerParams(
            dimension_semantics=("parallel",),
            vmem_limit_bytes=_vmem_limit([x, pos, bias, x], B, weights)),
    )(x, pos, bias, *weights)


def decoder_layer_fwd(tgt, memory, qpos, pos, bias, lp, nhead):
    B, T, E = tgt.shape
    S = memory.shape[1]
    head_dim = E // nhead
    sa, ca = lp["self_attn"], lp["cross_attn"]
    weights = [sa["wq"], sa["wk"], sa["wv"], sa["bq"], sa["bk"], sa["bv"],
               sa["wo"], sa["bo"],
               lp["norm1_s"], lp["norm1_b"],
               ca["wq"], ca["wk"], ca["wv"], ca["bq"], ca["bk"], ca["bv"],
               ca["wo"], ca["bo"],
               lp["norm2_s"], lp["norm2_b"],
               lp["w1"], lp["b1"], lp["w2"], lp["b2"],
               lp["norm3_s"], lp["norm3_b"]]
    return pl.pallas_call(
        functools.partial(_dec_layer_kernel, nhead=nhead, head_dim=head_dim),
        out_shape=jax.ShapeDtypeStruct((B, T, E), tgt.dtype),
        grid=(B,),
        in_specs=[_batch_spec((1, T, E)), _batch_spec((1, S, E)),
                  _batch_spec((1, T, E)), _batch_spec((1, S, E)),
                  _batch_spec((1, 1, S))] + [_rep_spec(w) for w in weights],
        out_specs=_batch_spec((1, T, E)),
        compiler_params=pltpu.CompilerParams(
            dimension_semantics=("parallel",),
            vmem_limit_bytes=_vmem_limit([tgt, memory, qpos, pos, bias, tgt], B, weights)),
    )(tgt, memory, qpos, pos, bias, *weights)


def pool_and_tgt_fc(memory, mask_valid, tp, unbiased):
    B, S, E = memory.shape
    weights = [tp["w1m"], tp["w1s"], tp["bn_s"], tp["bn_b"], tp["w2"], tp["b2"]]
    return pl.pallas_call(
        functools.partial(_pool_tgtfc_kernel, unbiased=unbiased),
        out_shape=jax.ShapeDtypeStruct((B, 1, E), memory.dtype),
        grid=(B,),
        in_specs=[_batch_spec((1, S, E)), _batch_spec((1, S, 1))]
                 + [_rep_spec(w) for w in weights],
        out_specs=_batch_spec((1, 1, E)),
        compiler_params=pltpu.CompilerParams(
            dimension_semantics=("parallel",),
            vmem_limit_bytes=_vmem_limit([memory, mask_valid], B, weights)),
    )(memory, mask_valid, *weights)


# ----------------------------------------------------------------------------
# Forward pass orchestration
# ----------------------------------------------------------------------------

def transformer_forward(prepared, src, mask, query_embed, pos_embed, *, nhead):
    bs, c, sl = src.shape
    x = jnp.transpose(src, (0, 2, 1))                              # [B, S, E]
    pos = (jnp.transpose(pos_embed, (0, 2, 1)) if pos_embed is not None
           else jnp.zeros_like(x))

    if query_embed.ndim == 2:
        tl = query_embed.shape[0]
        qpos = jnp.broadcast_to(query_embed[None, :, :], (bs, tl, c)).astype(x.dtype)
    else:
        tl = query_embed.shape[2]
        qpos = jnp.transpose(query_embed, (0, 2, 1)).astype(x.dtype)

    if mask is not None:
        bias = jnp.where(mask, NEG_INF, 0.0).astype(jnp.float32).reshape(bs, 1, sl)
        mask_valid = jnp.logical_not(mask).astype(x.dtype).reshape(bs, sl, 1)
        unbiased = False
    else:
        bias = jnp.zeros((bs, 1, sl), jnp.float32)
        mask_valid = jnp.ones((bs, sl, 1), x.dtype)
        unbiased = True

    # ---- encoder (one fused kernel per layer) ----
    memory = x
    for lp in prepared["encoder_layers"]:
        memory = encoder_layer_fwd(memory, pos, bias, lp, nhead)

    # ---- masked mean/std pooling + tgt_fc (single fused kernel, parallel over B) ----
    tgt0 = pool_and_tgt_fc(memory, mask_valid, prepared["tgt_fc"], unbiased)  # [B, 1, E]
    tgt = jnp.broadcast_to(tgt0, (bs, tl, c)).astype(x.dtype)

    # ---- decoder (one fused kernel per layer; final decoder norm folded into last layer) ----
    out = tgt
    for lp in prepared["decoder_layers"]:
        out = decoder_layer_fwd(out, memory, qpos, pos, bias, lp, nhead)

    decoder_output = jnp.transpose(out, (0, 2, 1))                 # [B, C, T]
    encoder_memory = jnp.transpose(memory, (0, 2, 1))              # [B, C, S]
    return decoder_output, encoder_memory


# ----------------------------------------------------------------------------
# Parameter preparation (done ONCE): pre-transpose weights to [in,out], cast to
# bf16 for MXU, fold attention scale into wq/bq, fold eval BatchNorm into
# per-channel scale/shift, fold the decoder's final norm into last-layer norm3.
# ----------------------------------------------------------------------------

def _prep_bn(bn, eps=1e-5):
    scale = bn["gamma"] / jnp.sqrt(bn["rv"] + eps)
    shift = bn["beta"] - bn["rm"] * scale
    C = scale.shape[0]
    return (scale.reshape(1, C).astype(jnp.float32),
            shift.reshape(1, C).astype(jnp.float32))


def _prep_mha(p, E, nhead):
    head_dim = E // nhead
    scale = 1.0 / math.sqrt(head_dim)
    wq, wk, wv = jnp.split(p["in_w"], 3, axis=0)       # torch layout [E_out, E_in]
    bq, bk, bv = jnp.split(p["in_b"], 3, axis=0)
    return {"wq": (jnp.transpose(wq) * scale).astype(MXU_DTYPE),   # scale pre-folded
            "wk": jnp.transpose(wk).astype(MXU_DTYPE),
            "wv": jnp.transpose(wv).astype(MXU_DTYPE),
            "bq": (bq * scale).reshape(1, E).astype(jnp.float32),
            "bk": bk.reshape(1, E).astype(jnp.float32),
            "bv": bv.reshape(1, E).astype(jnp.float32),
            "wo": jnp.transpose(p["out_w"]).astype(MXU_DTYPE),
            "bo": p["out_b"].reshape(1, E).astype(jnp.float32)}


def _prep_linear(w, b):
    return jnp.transpose(w).astype(MXU_DTYPE), b.reshape(1, -1).astype(jnp.float32)


def prepare_params(params, E, nhead):
    prepared = {"encoder_layers": [], "decoder_layers": []}
    for lp in params["encoder_layers"]:
        n1s, n1b = _prep_bn(lp["norm1"])
        n2s, n2b = _prep_bn(lp["norm2"])
        w1, b1 = _prep_linear(lp["lin1_w"], lp["lin1_b"])
        w2, b2 = _prep_linear(lp["lin2_w"], lp["lin2_b"])
        prepared["encoder_layers"].append({
            "self_attn": _prep_mha(lp["self_attn"], E, nhead),
            "norm1_s": n1s, "norm1_b": n1b, "norm2_s": n2s, "norm2_b": n2b,
            "w1": w1, "b1": b1, "w2": w2, "b2": b2})

    fin_s, fin_b = _prep_bn(params["decoder_norm"])
    n_dec = len(params["decoder_layers"])
    for i, lp in enumerate(params["decoder_layers"]):
        n1s, n1b = _prep_bn(lp["norm1"])
        n2s, n2b = _prep_bn(lp["norm2"])
        n3s, n3b = _prep_bn(lp["norm3"])
        if i == n_dec - 1:
            # fold the decoder's final _BatchNorm1d into the last layer's norm3 affine
            n3s, n3b = n3s * fin_s, n3b * fin_s + fin_b
        w1, b1 = _prep_linear(lp["lin1_w"], lp["lin1_b"])
        w2, b2 = _prep_linear(lp["lin2_w"], lp["lin2_b"])
        prepared["decoder_layers"].append({
            "self_attn": _prep_mha(lp["self_attn"], E, nhead),
            "cross_attn": _prep_mha(lp["cross_attn"], E, nhead),
            "norm1_s": n1s, "norm1_b": n1b, "norm2_s": n2s, "norm2_b": n2b,
            "norm3_s": n3s, "norm3_b": n3b,
            "w1": w1, "b1": b1, "w2": w2, "b2": b2})

    tfc = params["tgt_fc"]
    bn_s, bn_b = _prep_bn(tfc["bn"])
    w1_t = jnp.transpose(tfc["w1"])                  # [2E, FF]
    w2, b2 = _prep_linear(tfc["w2"], tfc["b2"])
    prepared["tgt_fc"] = {"w1m": w1_t[:E, :].astype(MXU_DTYPE),
                          "w1s": w1_t[E:, :].astype(MXU_DTYPE),
                          "bn_s": bn_s, "bn_b": bn_b, "w2": w2, "b2": b2}
    return prepared


# ----------------------------------------------------------------------------
# Deterministic raw parameter init (mirrors torch xavier_uniform_ on dim>1 params)
# ----------------------------------------------------------------------------

def _xavier(key, shape):
    fan_out, fan_in = shape
    bound = math.sqrt(6.0 / (fan_in + fan_out))
    return jax.random.uniform(key, shape, jnp.float32, -bound, bound)


def _init_bn(C):
    return {"gamma": jnp.ones((C,), jnp.float32), "beta": jnp.zeros((C,), jnp.float32),
            "rm": jnp.zeros((C,), jnp.float32), "rv": jnp.ones((C,), jnp.float32)}


def _init_mha(key, E):
    k1, k2 = jax.random.split(key)
    return {"in_w": _xavier(k1, (3 * E, E)), "in_b": jnp.zeros((3 * E,), jnp.float32),
            "out_w": _xavier(k2, (E, E)), "out_b": jnp.zeros((E,), jnp.float32)}


def _init_enc_layer(key, E, FF):
    ks = jax.random.split(key, 3)
    return {"self_attn": _init_mha(ks[0], E),
            "lin1_w": _xavier(ks[1], (FF, E)), "lin1_b": jnp.zeros((FF,), jnp.float32),
            "lin2_w": _xavier(ks[2], (E, FF)), "lin2_b": jnp.zeros((E,), jnp.float32),
            "norm1": _init_bn(E), "norm2": _init_bn(E)}


def _init_dec_layer(key, E, FF):
    ks = jax.random.split(key, 4)
    return {"self_attn": _init_mha(ks[0], E), "cross_attn": _init_mha(ks[1], E),
            "lin1_w": _xavier(ks[2], (FF, E)), "lin1_b": jnp.zeros((FF,), jnp.float32),
            "lin2_w": _xavier(ks[3], (E, FF)), "lin2_b": jnp.zeros((E,), jnp.float32),
            "norm1": _init_bn(E), "norm2": _init_bn(E), "norm3": _init_bn(E)}


def init_transformer_params(key, E, FF, num_enc, num_dec):
    keys = jax.random.split(key, num_enc + num_dec + 2)
    enc = [_init_enc_layer(keys[i], E, FF) for i in range(num_enc)]
    dec = [_init_dec_layer(keys[num_enc + i], E, FF) for i in range(num_dec)]
    k1, k2 = jax.random.split(keys[-1])
    tgt_fc = {"w1": _xavier(k1, (FF, 2 * E)), "bn": _init_bn(FF),
              "w2": _xavier(k2, (E, FF)), "b2": jnp.zeros((E,), jnp.float32)}
    return {"encoder_layers": enc, "decoder_layers": dec,
            "decoder_norm": _init_bn(E), "tgt_fc": tgt_fc}


# ----------------------------------------------------------------------------
# Demo
# ----------------------------------------------------------------------------

if __name__ == "__main__":
    d_model, nhead, dim_ff = 32, 4, 64
    num_enc, num_dec = 2, 2
    bs, sl, tl = 2, 16, 8

    root = jax.random.PRNGKey(0)
    kp, k1, k2, k3 = jax.random.split(root, 4)

    raw_params = init_transformer_params(kp, d_model, dim_ff, num_enc, num_dec)
    params = prepare_params(raw_params, d_model, nhead)   # one-time weight prep

    src = jax.random.normal(k1, (bs, d_model, sl), jnp.float32)
    pos_embed = jax.random.normal(k2, (bs, d_model, sl), jnp.float32)
    query_embed = jax.random.normal(k3, (tl, d_model), jnp.float32)
    lengths = jnp.array([sl, sl - 5])
    mask = jnp.arange(sl)[None, :] >= lengths[:, None]     # [bs, sl], True = padded

    fwd = jax.jit(functools.partial(transformer_forward, nhead=nhead))
    dec_out, enc_mem = fwd(params, src, mask, query_embed, pos_embed)
    jax.block_until_ready((dec_out, enc_mem))

    assert dec_out.shape == (bs, d_model, tl)
    assert enc_mem.shape == (bs, d_model, sl)
    assert bool(jnp.all(jnp.isfinite(dec_out))) and bool(jnp.all(jnp.isfinite(enc_mem)))
    print("KERNEL_OK")
</pallas_src>

<mosaic_0001>
module attributes {stable_mosaic.version = 11 : i64} {
  func.func @_enc_layer_kernel(%arg0: i32, %arg1: memref<1x16x32xf32, #tpu.memory_space<vmem>>, %arg2: memref<1x16x32xf32, #tpu.memory_space<vmem>>, %arg3: memref<1x1x16xf32, #tpu.memory_space<vmem>>, %arg4: memref<32x32xbf16, #tpu.memory_space<vmem>>, %arg5: memref<32x32xbf16, #tpu.memory_space<vmem>>, %arg6: memref<32x32xbf16, #tpu.memory_space<vmem>>, %arg7: memref<1x32xf32, #tpu.memory_space<vmem>>, %arg8: memref<1x32xf32, #tpu.memory_space<vmem>>, %arg9: memref<1x32xf32, #tpu.memory_space<vmem>>, %arg10: memref<32x32xbf16, #tpu.memory_space<vmem>>, %arg11: memref<1x32xf32, #tpu.memory_space<vmem>>, %arg12: memref<1x32xf32, #tpu.memory_space<vmem>>, %arg13: memref<1x32xf32, #tpu.memory_space<vmem>>, %arg14: memref<32x64xbf16, #tpu.memory_space<vmem>>, %arg15: memref<1x64xf32, #tpu.memory_space<vmem>>, %arg16: memref<64x32xbf16, #tpu.memory_space<vmem>>, %arg17: memref<1x32xf32, #tpu.memory_space<vmem>>, %arg18: memref<1x32xf32, #tpu.memory_space<vmem>>, %arg19: memref<1x32xf32, #tpu.memory_space<vmem>>, %arg20: memref<1x16x32xf32, #tpu.memory_space<vmem>>) attributes {dimension_semantics = [#tpu.dimension_semantics<parallel>], iteration_bounds = array<i64: 2>, scalar_prefetch = 0 : i64, scratch_operands = 0 : i64, tpu.core_type = #tpu.core_type<tc>, window_params = [{transform_indices = @transform_0, window_bounds = array<i64: 1, 16, 32>}, {transform_indices = @transform_1, window_bounds = array<i64: 1, 16, 32>}, {transform_indices = @transform_2, window_bounds = array<i64: 1, 1, 16>}, {pipeline_mode = #tpu.pipeline_mode<synchronous>, transform_indices = @transform_3, window_bounds = array<i64: 32, 32>}, {pipeline_mode = #tpu.pipeline_mode<synchronous>, transform_indices = @transform_4, window_bounds = array<i64: 32, 32>}, {pipeline_mode = #tpu.pipeline_mode<synchronous>, transform_indices = @transform_5, window_bounds = array<i64: 32, 32>}, {pipeline_mode = #tpu.pipeline_mode<synchronous>, transform_indices = @transform_6, window_bounds = array<i64: 1, 32>}, {pipeline_mode = #tpu.pipeline_mode<synchronous>, transform_indices = @transform_7, window_bounds = array<i64: 1, 32>}, {pipeline_mode = #tpu.pipeline_mode<synchronous>, transform_indices = @transform_8, window_bounds = array<i64: 1, 32>}, {pipeline_mode = #tpu.pipeline_mode<synchronous>, transform_indices = @transform_9, window_bounds = array<i64: 32, 32>}, {pipeline_mode = #tpu.pipeline_mode<synchronous>, transform_indices = @transform_10, window_bounds = array<i64: 1, 32>}, {pipeline_mode = #tpu.pipeline_mode<synchronous>, transform_indices = @transform_11, window_bounds = array<i64: 1, 32>}, {pipeline_mode = #tpu.pipeline_mode<synchronous>, transform_indices = @transform_12, window_bounds = array<i64: 1, 32>}, {pipeline_mode = #tpu.pipeline_mode<synchronous>, transform_indices = @transform_13, window_bounds = array<i64: 32, 64>}, {pipeline_mode = #tpu.pipeline_mode<synchronous>, transform_indices = @transform_14, window_bounds = array<i64: 1, 64>}, {pipeline_mode = #tpu.pipeline_mode<synchronous>, transform_indices = @transform_15, window_bounds = array<i64: 64, 32>}, {pipeline_mode = #tpu.pipeline_mode<synchronous>, transform_indices = @transform_16, window_bounds = array<i64: 1, 32>}, {pipeline_mode = #tpu.pipeline_mode<synchronous>, transform_indices = @transform_17, window_bounds = array<i64: 1, 32>}, {pipeline_mode = #tpu.pipeline_mode<synchronous>, transform_indices = @transform_18, window_bounds = array<i64: 1, 32>}, {transform_indices = @transform_19, window_bounds = array<i64: 1, 16, 32>}]} {
    %c0 = arith.constant 0 : index
    %c0_0 = arith.constant 0 : index
    %c0_1 = arith.constant 0 : index
    %0 = vector.load %arg1[%c0, %c0_0, %c0_1] : memref<1x16x32xf32, #tpu.memory_space<vmem>>, vector<1x16x32xf32>
    %1 = vector.shape_cast %0 : vector<1x16x32xf32> to vector<16x32xf32>
    %c0_2 = arith.constant 0 : index
    %c0_3 = arith.constant 0 : index
    %c0_4 = arith.constant 0 : index
    %2 = vector.load %arg2[%c0_2, %c0_3, %c0_4] : memref<1x16x32xf32, #tpu.memory_space<vmem>>, vector<1x16x32xf32>
    %3 = vector.shape_cast %2 : vector<1x16x32xf32> to vector<16x32xf32>
    %4 = arith.addf %1, %3 : vector<16x32xf32>
    %c0_5 = arith.constant 0 : index
    %c0_6 = arith.constant 0 : index
    %c0_7 = arith.constant 0 : index
    %5 = vector.load %arg3[%c0_5, %c0_6, %c0_7] : memref<1x1x16xf32, #tpu.memory_space<vmem>>, vector<1x1x16xf32>
    %6 = vector.shape_cast %5 : vector<1x1x16xf32> to vector<1x16xf32>
    %7 = arith.truncf %4 : vector<16x32xf32> to vector<16x32xbf16>
    %c0_8 = arith.constant 0 : index
    %c0_9 = arith.constant 0 : index
    %8 = vector.load %arg4[%c0_8, %c0_9] : memref<32x32xbf16, #tpu.memory_space<vmem>>, vector<32x32xbf16>
    %cst = arith.constant dense<0.000000e+00> : vector<16x32xf32>
    %9 = tpu.matmul %7, %8, %cst {dimension_numbers = #tpu.dot_dimension_numbers<[1], [0], [0], [1], [0, 0, 1, 1], [], []>} : vector<16x32xbf16>, vector<32x32xbf16>, vector<16x32xf32> -> vector<16x32xf32>
    %c0_10 = arith.constant 0 : index
    %c0_11 = arith.constant 0 : index
    %10 = vector.load %arg7[%c0_10, %c0_11] : memref<1x32xf32, #tpu.memory_space<vmem>>, vector<1x32xf32>
    %11 = vector.broadcast %10 : vector<1x32xf32> to vector<16x32xf32>
    %12 = arith.addf %9, %11 : vector<16x32xf32>
    %13 = arith.truncf %4 : vector<16x32xf32> to vector<16x32xbf16>
    %c0_12 = arith.constant 0 : index
    %c0_13 = arith.constant 0 : index
    %14 = vector.load %arg5[%c0_12, %c0_13] : memref<32x32xbf16, #tpu.memory_space<vmem>>, vector<32x32xbf16>
    %cst_14 = arith.constant dense<0.000000e+00> : vector<16x32xf32>
    %15 = tpu.matmul %13, %14, %cst_14 {dimension_numbers = #tpu.dot_dimension_numbers<[1], [0], [0], [1], [0, 0, 1, 1], [], []>} : vector<16x32xbf16>, vector<32x32xbf16>, vector<16x32xf32> -> vector<16x32xf32>
    %c0_15 = arith.constant 0 : index
    %c0_16 = arith.constant 0 : index
    %16 = vector.load %arg8[%c0_15, %c0_16] : memref<1x32xf32, #tpu.memory_space<vmem>>, vector<1x32xf32>
    %17 = vector.broadcast %16 : vector<1x32xf32> to vector<16x32xf32>
    %18 = arith.addf %15, %17 : vector<16x32xf32>
    %19 = arith.truncf %1 : vector<16x32xf32> to vector<16x32xbf16>
    %c0_17 = arith.constant 0 : index
    %c0_18 = arith.constant 0 : index
    %20 = vector.load %arg6[%c0_17, %c0_18] : memref<32x32xbf16, #tpu.memory_space<vmem>>, vector<32x32xbf16>
    %cst_19 = arith.constant dense<0.000000e+00> : vector<16x32xf32>
    %21 = tpu.matmul %19, %20, %cst_19 {dimension_numbers = #tpu.dot_dimension_numbers<[1], [0], [0], [1], [0, 0, 1, 1], [], []>} : vector<16x32xbf16>, vector<32x32xbf16>, vector<16x32xf32> -> vector<16x32xf32>
    %c0_20 = arith.constant 0 : index
    %c0_21 = arith.constant 0 : index
    %22 = vector.load %arg9[%c0_20, %c0_21] : memref<1x32xf32, #tpu.memory_space<vmem>>, vector<1x32xf32>
    %23 = vector.broadcast %22 : vector<1x32xf32> to vector<16x32xf32>
    %24 = arith.addf %21, %23 : vector<16x32xf32>
    %25 = arith.truncf %12 : vector<16x32xf32> to vector<16x32xbf16>
    %26 = arith.truncf %18 : vector<16x32xf32> to vector<16x32xbf16>
    %27 = arith.truncf %24 : vector<16x32xf32> to vector<16x32xbf16>
    %28 = vector.shape_cast %6 : vector<1x16xf32> to vector<1x16xf32>
    %29 = vector.broadcast %28 : vector<1x16xf32> to vector<16x16xf32>
    %30 = vector.extract_strided_slice %25 {offsets = [0, 0], sizes = [16, 8], strides = [1, 1]} : vector<16x32xbf16> to vector<16x8xbf16>
    %31 = vector.extract_strided_slice %26 {offsets = [0, 0], sizes = [16, 8], strides = [1, 1]} : vector<16x32xbf16> to vector<16x8xbf16>
    %32 = vector.extract_strided_slice %27 {offsets = [0, 0], sizes = [16, 8], strides = [1, 1]} : vector<16x32xbf16> to vector<16x8xbf16>
    %cst_22 = arith.constant dense<0.000000e+00> : vector<16x16xf32>
    %33 = tpu.matmul %30, %31, %cst_22 {dimension_numbers = #tpu.dot_dimension_numbers<[1], [1], [0], [0], [0, 0, 1, 0], [], []>} : vector<16x8xbf16>, vector<16x8xbf16>, vector<16x16xf32> -> vector<16x16xf32>
    %34 = arith.addf %33, %29 : vector<16x16xf32>
    %cst_23 = arith.constant dense<0xFF800000> : vector<16xf32>
    %35 = vector.multi_reduction <maximumf>, %34, %cst_23 [1] : vector<16x16xf32> to vector<16xf32>
    %36 = vector.shape_cast %35 : vector<16xf32> to vector<16x1xf32>
    %37 = vector.broadcast %36 : vector<16x1xf32> to vector<16x16xf32>
    %38 = arith.subf %34, %37 : vector<16x16xf32>
    %39 = math.exp %38 : vector<16x16xf32>
    %cst_24 = arith.constant dense<0.000000e+00> : vector<16xf32>
    %40 = vector.multi_reduction <add>, %39, %cst_24 [1] : vector<16x16xf32> to vector<16xf32>
    %41 = vector.shape_cast %40 : vector<16xf32> to vector<16x1xf32>
    %42 = tpu.reciprocal %41 {approx = true} : vector<16x1xf32> -> vector<16x1xf32>
    %43 = vector.broadcast %42 : vector<16x1xf32> to vector<16x16xf32>
    %44 = arith.mulf %39, %43 : vector<16x16xf32>
    %45 = arith.truncf %44 : vector<16x16xf32> to vector<16x16xbf16>
    %cst_25 = arith.constant dense<0.000000e+00> : vector<16x8xf32>
    %46 = tpu.matmul %45, %32, %cst_25 {dimension_numbers = #tpu.dot_dimension_numbers<[1], [0], [0], [1], [0, 0, 1, 1], [], []>} : vector<16x16xbf16>, vector<16x8xbf16>, vector<16x8xf32> -> vector<16x8xf32>
    %47 = vector.extract_strided_slice %25 {offsets = [0, 8], sizes = [16, 8], strides = [1, 1]} : vector<16x32xbf16> to vector<16x8xbf16>
    %48 = vector.extract_strided_slice %26 {offsets = [0, 8], sizes = [16, 8], strides = [1, 1]} : vector<16x32xbf16> to vector<16x8xbf16>
    %49 = vector.extract_strided_slice %27 {offsets = [0, 8], sizes = [16, 8], strides = [1, 1]} : vector<16x32xbf16> to vector<16x8xbf16>
    %cst_26 = arith.constant dense<0.000000e+00> : vector<16x16xf32>
    %50 = tpu.matmul %47, %48, %cst_26 {dimension_numbers = #tpu.dot_dimension_numbers<[1], [1], [0], [0], [0, 0, 1, 0], [], []>} : vector<16x8xbf16>, vector<16x8xbf16>, vector<16x16xf32> -> vector<16x16xf32>
    %51 = arith.addf %50, %29 : vector<16x16xf32>
    %cst_27 = arith.constant dense<0xFF800000> : vector<16xf32>
    %52 = vector.multi_reduction <maximumf>, %51, %cst_27 [1] : vector<16x16xf32> to vector<16xf32>
    %53 = vector.shape_cast %52 : vector<16xf32> to vector<16x1xf32>
    %54 = vector.broadcast %53 : vector<16x1xf32> to vector<16x16xf32>
    %55 = arith.subf %51, %54 : vector<16x16xf32>
    %56 = math.exp %55 : vector<16x16xf32>
    %cst_28 = arith.constant dense<0.000000e+00> : vector<16xf32>
    %57 = vector.multi_reduction <add>, %56, %cst_28 [1] : vector<16x16xf32> to vector<16xf32>
    %58 = vector.shape_cast %57 : vector<16xf32> to vector<16x1xf32>
    %59 = tpu.reciprocal %58 {approx = true} : vector<16x1xf32> -> vector<16x1xf32>
    %60 = vector.broadcast %59 : vector<16x1xf32> to vector<16x16xf32>
    %61 = arith.mulf %56, %60 : vector<16x16xf32>
    %62 = arith.truncf %61 : vector<16x16xf32> to vector<16x16xbf16>
    %cst_29 = arith.constant dense<0.000000e+00> : vector<16x8xf32>
    %63 = tpu.matmul %62, %49, %cst_29 {dimension_numbers = #tpu.dot_dimension_numbers<[1], [0], [0], [1], [0, 0, 1, 1], [], []>} : vector<16x16xbf16>, vector<16x8xbf16>, vector<16x8xf32> -> vector<16x8xf32>
    %64 = vector.extract_strided_slice %25 {offsets = [0, 16], sizes = [16, 8], strides = [1, 1]} : vector<16x32xbf16> to vector<16x8xbf16>
    %65 = vector.extract_strided_slice %26 {offsets = [0, 16], sizes = [16, 8], strides = [1, 1]} : vector<16x32xbf16> to vector<16x8xbf16>
    %66 = vector.extract_strided_slice %27 {offsets = [0, 16], sizes = [16, 8], strides = [1, 1]} : vector<16x32xbf16> to vector<16x8xbf16>
    %cst_30 = arith.constant dense<0.000000e+00> : vector<16x16xf32>
    %67 = tpu.matmul %64, %65, %cst_30 {dimension_numbers = #tpu.dot_dimension_numbers<[1], [1], [0], [0], [0, 0, 1, 0], [], []>} : vector<16x8xbf16>, vector<16x8xbf16>, vector<16x16xf32> -> vector<16x16xf32>
    %68 = arith.addf %67, %29 : vector<16x16xf32>
    %cst_31 = arith.constant dense<0xFF800000> : vector<16xf32>
    %69 = vector.multi_reduction <maximumf>, %68, %cst_31 [1] : vector<16x16xf32> to vector<16xf32>
    %70 = vector.shape_cast %69 : vector<16xf32> to vector<16x1xf32>
    %71 = vector.broadcast %70 : vector<16x1xf32> to vector<16x16xf32>
    %72 = arith.subf %68, %71 : vector<16x16xf32>
    %73 = math.exp %72 : vector<16x16xf32>
    %cst_32 = arith.constant dense<0.000000e+00> : vector<16xf32>
    %74 = vector.multi_reduction <add>, %73, %cst_32 [1] : vector<16x16xf32> to vector<16xf32>
    %75 = vector.shape_cast %74 : vector<16xf32> to vector<16x1xf32>
    %76 = tpu.reciprocal %75 {approx = true} : vector<16x1xf32> -> vector<16x1xf32>
    %77 = vector.broadcast %76 : vector<16x1xf32> to vector<16x16xf32>
    %78 = arith.mulf %73, %77 : vector<16x16xf32>
    %79 = arith.truncf %78 : vector<16x16xf32> to vector<16x16xbf16>
    %cst_33 = arith.constant dense<0.000000e+00> : vector<16x8xf32>
    %80 = tpu.matmul %79, %66, %cst_33 {dimension_numbers = #tpu.dot_dimension_numbers<[1], [0], [0], [1], [0, 0, 1, 1], [], []>} : vector<16x16xbf16>, vector<16x8xbf16>, vector<16x8xf32> -> vector<16x8xf32>
    %81 = vector.extract_strided_slice %25 {offsets = [0, 24], sizes = [16, 8], strides = [1, 1]} : vector<16x32xbf16> to vector<16x8xbf16>
    %82 = vector.extract_strided_slice %26 {offsets = [0, 24], sizes = [16, 8], strides = [1, 1]} : vector<16x32xbf16> to vector<16x8xbf16>
    %83 = vector.extract_strided_slice %27 {offsets = [0, 24], sizes = [16, 8], strides = [1, 1]} : vector<16x32xbf16> to vector<16x8xbf16>
    %cst_34 = arith.constant dense<0.000000e+00> : vector<16x16xf32>
    %84 = tpu.matmul %81, %82, %cst_34 {dimension_numbers = #tpu.dot_dimension_numbers<[1], [1], [0], [0], [0, 0, 1, 0], [], []>} : vector<16x8xbf16>, vector<16x8xbf16>, vector<16x16xf32> -> vector<16x16xf32>
    %85 = arith.addf %84, %29 : vector<16x16xf32>
    %cst_35 = arith.constant dense<0xFF800000> : vector<16xf32>
    %86 = vector.multi_reduction <maximumf>, %85, %cst_35 [1] : vector<16x16xf32> to vector<16xf32>
    %87 = vector.shape_cast %86 : vector<16xf32> to vector<16x1xf32>
    %88 = vector.broadcast %87 : vector<16x1xf32> to vector<16x16xf32>
    %89 = arith.subf %85, %88 : vector<16x16xf32>
    %90 = math.exp %89 : vector<16x16xf32>
    %cst_36 = arith.constant dense<0.000000e+00> : vector<16xf32>
    %91 = vector.multi_reduction <add>, %90, %cst_36 [1] : vector<16x16xf32> to vector<16xf32>
    %92 = vector.shape_cast %91 : vector<16xf32> to vector<16x1xf32>
    %93 = tpu.reciprocal %92 {approx = true} : vector<16x1xf32> -> vector<16x1xf32>
    %94 = vector.broadcast %93 : vector<16x1xf32> to vector<16x16xf32>
    %95 = arith.mulf %90, %94 : vector<16x16xf32>
    %96 = arith.truncf %95 : vector<16x16xf32> to vector<16x16xbf16>
    %cst_37 = arith.constant dense<0.000000e+00> : vector<16x8xf32>
    %97 = tpu.matmul %96, %83, %cst_37 {dimension_numbers = #tpu.dot_dimension_numbers<[1], [0], [0], [1], [0, 0, 1, 1], [], []>} : vector<16x16xbf16>, vector<16x8xbf16>, vector<16x8xf32> -> vector<16x8xf32>
    %98 = tpu.concatenate %46, %63, %80, %97 in 1 : vector<16x8xf32>, vector<16x8xf32>, vector<16x8xf32>, vector<16x8xf32> -> vector<16x32xf32>
    %99 = arith.truncf %98 : vector<16x32xf32> to vector<16x32xbf16>
    %c0_38 = arith.constant 0 : index
    %c0_39 = arith.constant 0 : index
    %100 = vector.load %arg10[%c0_38, %c0_39] : memref<32x32xbf16, #tpu.memory_space<vmem>>, vector<32x32xbf16>
    %cst_40 = arith.constant dense<0.000000e+00> : vector<16x32xf32>
    %101 = tpu.matmul %99, %100, %cst_40 {dimension_numbers = #tpu.dot_dimension_numbers<[1], [0], [0], [1], [0, 0, 1, 1], [], []>} : vector<16x32xbf16>, vector<32x32xbf16>, vector<16x32xf32> -> vector<16x32xf32>
    %c0_41 = arith.constant 0 : index
    %c0_42 = arith.constant 0 : index
    %102 = vector.load %arg11[%c0_41, %c0_42] : memref<1x32xf32, #tpu.memory_space<vmem>>, vector<1x32xf32>
    %103 = vector.broadcast %102 : vector<1x32xf32> to vector<16x32xf32>
    %104 = arith.addf %101, %103 : vector<16x32xf32>
    %105 = arith.addf %1, %104 : vector<16x32xf32>
    %c0_43 = arith.constant 0 : index
    %c0_44 = arith.constant 0 : index
    %106 = vector.load %arg12[%c0_43, %c0_44] : memref<1x32xf32, #tpu.memory_space<vmem>>, vector<1x32xf32>
    %107 = vector.broadcast %106 : vector<1x32xf32> to vector<16x32xf32>
    %108 = arith.mulf %105, %107 : vector<16x32xf32>
    %c0_45 = arith.constant 0 : index
    %c0_46 = arith.constant 0 : index
    %109 = vector.load %arg13[%c0_45, %c0_46] : memref<1x32xf32, #tpu.memory_space<vmem>>, vector<1x32xf32>
    %110 = vector.broadcast %109 : vector<1x32xf32> to vector<16x32xf32>
    %111 = arith.addf %108, %110 : vector<16x32xf32>
    %112 = arith.truncf %111 : vector<16x32xf32> to vector<16x32xbf16>
    %c0_47 = arith.constant 0 : index
    %c0_48 = arith.constant 0 : index
    %113 = vector.load %arg14[%c0_47, %c0_48] : memref<32x64xbf16, #tpu.memory_space<vmem>>, vector<32x64xbf16>
    %cst_49 = arith.constant dense<0.000000e+00> : vector<16x64xf32>
    %114 = tpu.matmul %112, %113, %cst_49 {dimension_numbers = #tpu.dot_dimension_numbers<[1], [0], [0], [1], [0, 0, 1, 1], [], []>} : vector<16x32xbf16>, vector<32x64xbf16>, vector<16x64xf32> -> vector<16x64xf32>
    %c0_50 = arith.constant 0 : index
    %c0_51 = arith.constant 0 : index
    %115 = vector.load %arg15[%c0_50, %c0_51] : memref<1x64xf32, #tpu.memory_space<vmem>>, vector<1x64xf32>
    %116 = vector.broadcast %115 : vector<1x64xf32> to vector<16x64xf32>
    %117 = arith.addf %114, %116 : vector<16x64xf32>
    %cst_52 = arith.constant 0.000000e+00 : f32
    %118 = vector.broadcast %cst_52 : f32 to vector<16x64xf32>
    %119 = arith.maximumf %117, %118 : vector<16x64xf32>
    %120 = arith.truncf %119 : vector<16x64xf32> to vector<16x64xbf16>
    %c0_53 = arith.constant 0 : index
    %c0_54 = arith.constant 0 : index
    %121 = vector.load %arg16[%c0_53, %c0_54] : memref<64x32xbf16, #tpu.memory_space<vmem>>, vector<64x32xbf16>
    %cst_55 = arith.constant dense<0.000000e+00> : vector<16x32xf32>
    %122 = tpu.matmul %120, %121, %cst_55 {dimension_numbers = #tpu.dot_dimension_numbers<[1], [0], [0], [1], [0, 0, 1, 1], [], []>} : vector<16x64xbf16>, vector<64x32xbf16>, vector<16x32xf32> -> vector<16x32xf32>
    %c0_56 = arith.constant 0 : index
    %c0_57 = arith.constant 0 : index
    %123 = vector.load %arg17[%c0_56, %c0_57] : memref<1x32xf32, #tpu.memory_space<vmem>>, vector<1x32xf32>
    %124 = vector.broadcast %123 : vector<1x32xf32> to vector<16x32xf32>
    %125 = arith.addf %122, %124 : vector<16x32xf32>
    %126 = arith.addf %111, %125 : vector<16x32xf32>
    %c0_58 = arith.constant 0 : index
    %c0_59 = arith.constant 0 : index
    %127 = vector.load %arg18[%c0_58, %c0_59] : memref<1x32xf32, #tpu.memory_space<vmem>>, vector<1x32xf32>
    %128 = vector.broadcast %127 : vector<1x32xf32> to vector<16x32xf32>
    %129 = arith.mulf %126, %128 : vector<16x32xf32>
    %c0_60 = arith.constant 0 : index
    %c0_61 = arith.constant 0 : index
    %130 = vector.load %arg19[%c0_60, %c0_61] : memref<1x32xf32, #tpu.memory_space<vmem>>, vector<1x32xf32>
    %131 = vector.broadcast %130 : vector<1x32xf32> to vector<16x32xf32>
    %132 = arith.addf %129, %131 : vector<16x32xf32>
    %c0_62 = arith.constant 0 : index
    %c0_63 = arith.constant 0 : index
    %c0_64 = arith.constant 0 : index
    %133 = vector.load %arg20[%c0_62, %c0_63, %c0_64] : memref<1x16x32xf32, #tpu.memory_space<vmem>>, vector<1x16x32xf32>
    %134 = vector.shape_cast %133 : vector<1x16x32xf32> to vector<16x32xf32>
    %135 = vector.shape_cast %132 : vector<16x32xf32> to vector<1x16x32xf32>
    tpu.vector_store %arg20[%c0_62, %c0_63, %c0_64], %135 {strides = array<i32>} : memref<1x16x32xf32, #tpu.memory_space<vmem>>, vector<1x16x32xf32>,
    return
  }
  func.func @transform_0(%arg0: i32) -> (i32, i32, i32) {
    %c0_i32 = arith.constant 0 : i32
    %c0_i32_0 = arith.constant 0 : i32
    %c0_i32_1 = arith.constant 0 : i32
    return %arg0, %c0_i32, %c0_i32_0 : i32, i32, i32
  }
  func.func @transform_1(%arg0: i32) -> (i32, i32, i32) {
    %c0_i32 = arith.constant 0 : i32
    %c0_i32_0 = arith.constant 0 : i32
    %c0_i32_1 = arith.constant 0 : i32
    return %arg0, %c0_i32, %c0_i32_0 : i32, i32, i32
  }
  func.func @transform_2(%arg0: i32) -> (i32, i32, i32) {
    %c0_i32 = arith.constant 0 : i32
    %c0_i32_0 = arith.constant 0 : i32
    %c0_i32_1 = arith.constant 0 : i32
    return %arg0, %c0_i32, %c0_i32_0 : i32, i32, i32
  }
  func.func @transform_3(%arg0: i32) -> (i32, i32) {
    %c0_i32 = arith.constant 0 : i32
    %c0_i32_0 = arith.constant 0 : i32
    %c0_i32_1 = arith.constant 0 : i32
    return %c0_i32, %c0_i32_0 : i32, i32
  }
  func.func @transform_4(%arg0: i32) -> (i32, i32) {
    %c0_i32 = arith.constant 0 : i32
    %c0_i32_0 = arith.constant 0 : i32
    %c0_i32_1 = arith.constant 0 : i32
    return %c0_i32, %c0_i32_0 : i32, i32
  }
  func.func @transform_5(%arg0: i32) -> (i32, i32) {
    %c0_i32 = arith.constant 0 : i32
    %c0_i32_0 = arith.constant 0 : i32
    %c0_i32_1 = arith.constant 0 : i32
    return %c0_i32, %c0_i32_0 : i32, i32
  }
  func.func @transform_6(%arg0: i32) -> (i32, i32) {
    %c0_i32 = arith.constant 0 : i32
    %c0_i32_0 = arith.constant 0 : i32
    %c0_i32_1 = arith.constant 0 : i32
    return %c0_i32, %c0_i32_0 : i32, i32
  }
  func.func @transform_7(%arg0: i32) -> (i32, i32) {
    %c0_i32 = arith.constant 0 : i32
    %c0_i32_0 = arith.constant 0 : i32
    %c0_i32_1 = arith.constant 0 : i32
    return %c0_i32, %c0_i32_0 : i32, i32
  }
  func.func @transform_8(%arg0: i32) -> (i32, i32) {
    %c0_i32 = arith.constant 0 : i32
    %c0_i32_0 = arith.constant 0 : i32
    %c0_i32_1 = arith.constant 0 : i32
    return %c0_i32, %c0_i32_0 : i32, i32
  }
  func.func @transform_9(%arg0: i32) -> (i32, i32) {
    %c0_i32 = arith.constant 0 : i32
    %c0_i32_0 = arith.constant 0 : i32
    %c0_i32_1 = arith.constant 0 : i32
    return %c0_i32, %c0_i32_0 : i32, i32
  }
  func.func @transform_10(%arg0: i32) -> (i32, i32) {
    %c0_i32 = arith.constant 0 : i32
    %c0_i32_0 = arith.constant 0 : i32
    %c0_i32_1 = arith.constant 0 : i32
    return %c0_i32, %c0_i32_0 : i32, i32
  }
  func.func @transform_11(%arg0: i32) -> (i32, i32) {
    %c0_i32 = arith.constant 0 : i32
    %c0_i32_0 = arith.constant 0 : i32
    %c0_i32_1 = arith.constant 0 : i32
    return %c0_i32, %c0_i32_0 : i32, i32
  }
  func.func @transform_12(%arg0: i32) -> (i32, i32) {
    %c0_i32 = arith.constant 0 : i32
    %c0_i32_0 = arith.constant 0 : i32
    %c0_i32_1 = arith.constant 0 : i32
    return %c0_i32, %c0_i32_0 : i32, i32
  }
  func.func @transform_13(%arg0: i32) -> (i32, i32) {
    %c0_i32 = arith.constant 0 : i32
    %c0_i32_0 = arith.constant 0 : i32
    %c0_i32_1 = arith.constant 0 : i32
    return %c0_i32, %c0_i32_0 : i32, i32
  }
  func.func @transform_14(%arg0: i32) -> (i32, i32) {
    %c0_i32 = arith.constant 0 : i32
    %c0_i32_0 = arith.constant 0 : i32
    %c0_i32_1 = arith.constant 0 : i32
    return %c0_i32, %c0_i32_0 : i32, i32
  }
  func.func @transform_15(%arg0: i32) -> (i32, i32) {
    %c0_i32 = arith.constant 0 : i32
    %c0_i32_0 = arith.constant 0 : i32
    %c0_i32_1 = arith.constant 0 : i32
    return %c0_i32, %c0_i32_0 : i32, i32
  }
  func.func @transform_16(%arg0: i32) -> (i32, i32) {
    %c0_i32 = arith.constant 0 : i32
    %c0_i32_0 = arith.constant 0 : i32
    %c0_i32_1 = arith.constant 0 : i32
    return %c0_i32, %c0_i32_0 : i32, i32
  }
  func.func @transform_17(%arg0: i32) -> (i32, i32) {
    %c0_i32 = arith.constant 0 : i32
    %c0_i32_0 = arith.constant 0 : i32
    %c0_i32_1 = arith.constant 0 : i32
    return %c0_i32, %c0_i32_0 : i32, i32
  }
  func.func @transform_18(%arg0: i32) -> (i32, i32) {
    %c0_i32 = arith.constant 0 : i32
    %c0_i32_0 = arith.constant 0 : i32
    %c0_i32_1 = arith.constant 0 : i32
    return %c0_i32, %c0_i32_0 : i32, i32
  }
  func.func @transform_19(%arg0: i32) -> (i32, i32, i32) {
    %c0_i32 = arith.constant 0 : i32
    %c0_i32_0 = arith.constant 0 : i32
    %c0_i32_1 = arith.constant 0 : i32
    return %arg0, %c0_i32, %c0_i32_0 : i32, i32, i32
  }
}

module attributes {stable_mosaic.version = 11 : i64} {
  func.func @_pool_tgtfc_kernel(%arg0: i32, %arg1: memref<1x16x32xf32, #tpu.memory_space<vmem>>, %arg2: memref<1x16x1xf32, #tpu.memory_space<vmem>>, %arg3: memref<32x64xbf16, #tpu.memory_space<vmem>>, %arg4: memref<32x64xbf16, #tpu.memory_space<vmem>>, %arg5: memref<1x64xf32, #tpu.memory_space<vmem>>, %arg6: memref<1x64xf32, #tpu.memory_space<vmem>>, %arg7: memref<64x32xbf16, #tpu.memory_space<vmem>>, %arg8: memref<1x32xf32, #tpu.memory_space<vmem>>, %arg9: memref<1x1x32xf32, #tpu.memory_space<vmem>>) attributes {dimension_semantics = [#tpu.dimension_semantics<parallel>], iteration_bounds = array<i64: 2>, scalar_prefetch = 0 : i64, scratch_operands = 0 : i64, tpu.core_type = #tpu.core_type<tc>, window_params = [{transform_indices = @transform_0, window_bounds = array<i64: 1, 16, 32>}, {transform_indices = @transform_1, window_bounds = array<i64: 1, 16, 1>}, {pipeline_mode = #tpu.pipeline_mode<synchronous>, transform_indices = @transform_2, window_bounds = array<i64: 32, 64>}, {pipeline_mode = #tpu.pipeline_mode<synchronous>, transform_indices = @transform_3, window_bounds = array<i64: 32, 64>}, {pipeline_mode = #tpu.pipeline_mode<synchronous>, transform_indices = @transform_4, window_bounds = array<i64: 1, 64>}, {pipeline_mode = #tpu.pipeline_mode<synchronous>, transform_indices = @transform_5, window_bounds = array<i64: 1, 64>}, {pipeline_mode = #tpu.pipeline_mode<synchronous>, transform_indices = @transform_6, window_bounds = array<i64: 64, 32>}, {pipeline_mode = #tpu.pipeline_mode<synchronous>, transform_indices = @transform_7, window_bounds = array<i64: 1, 32>}, {transform_indices = @transform_8, window_bounds = array<i64: 1, 1, 32>}]} {
    %c0 = arith.constant 0 : index
    %c0_0 = arith.constant 0 : index
    %c0_1 = arith.constant 0 : index
    %0 = vector.load %arg1[%c0, %c0_0, %c0_1] : memref<1x16x32xf32, #tpu.memory_space<vmem>>, vector<1x16x32xf32>
    %1 = vector.shape_cast %0 : vector<1x16x32xf32> to vector<16x32xf32>
    %c0_2 = arith.constant 0 : index
    %c0_3 = arith.constant 0 : index
    %c0_4 = arith.constant 0 : index
    %2 = vector.load %arg2[%c0_2, %c0_3, %c0_4] : memref<1x16x1xf32, #tpu.memory_space<vmem>>, vector<1x16x1xf32>
    %3 = vector.shape_cast %2 : vector<1x16x1xf32> to vector<16x1xf32>
    %4 = vector.broadcast %3 : vector<16x1xf32> to vector<16x32xf32>
    %5 = arith.mulf %1, %4 : vector<16x32xf32>
    %cst = arith.constant dense<0.000000e+00> : vector<1xf32>
    %6 = vector.multi_reduction <add>, %3, %cst [0] : vector<16x1xf32> to vector<1xf32>
    %7 = vector.shape_cast %6 : vector<1xf32> to vector<1x1xf32>
    %cst_5 = arith.constant 1.000000e+00 : f32
    %8 = vector.broadcast %cst_5 : f32 to vector<1x1xf32>
    %9 = arith.maximumf %7, %8 : vector<1x1xf32>
    %cst_6 = arith.constant dense<0.000000e+00> : vector<32xf32>
    %10 = vector.multi_reduction <add>, %5, %cst_6 [0] : vector<16x32xf32> to vector<32xf32>
    %11 = vector.shape_cast %10 : vector<32xf32> to vector<1x32xf32>
    %12 = vector.broadcast %9 : vector<1x1xf32> to vector<1x32xf32>
    %13 = arith.divf %11, %12 : vector<1x32xf32>
    %14 = vector.broadcast %13 : vector<1x32xf32> to vector<16x32xf32>
    %15 = arith.subf %5, %14 : vector<16x32xf32>
    %16 = arith.mulf %15, %15 : vector<16x32xf32>
    %cst_7 = arith.constant dense<0.000000e+00> : vector<32xf32>
    %17 = vector.multi_reduction <add>, %16, %cst_7 [0] : vector<16x32xf32> to vector<32xf32>
    %18 = vector.shape_cast %17 : vector<32xf32> to vector<1x32xf32>
    %cst_8 = arith.constant 1.000000e+00 : f32
    %19 = vector.broadcast %cst_8 : f32 to vector<1x1xf32>
    %20 = arith.addf %9, %19 : vector<1x1xf32>
    %21 = vector.broadcast %20 : vector<1x1xf32> to vector<1x32xf32>
    %22 = arith.divf %18, %21 : vector<1x32xf32>
    %23 = math.sqrt %22 : vector<1x32xf32>
    %24 = arith.truncf %13 : vector<1x32xf32> to vector<1x32xbf16>
    %c0_9 = arith.constant 0 : index
    %c0_10 = arith.constant 0 : index
    %25 = vector.load %arg3[%c0_9, %c0_10] : memref<32x64xbf16, #tpu.memory_space<vmem>>, vector<32x64xbf16>
    %cst_11 = arith.constant dense<0.000000e+00> : vector<1x64xf32>
    %26 = tpu.matmul %24, %25, %cst_11 {dimension_numbers = #tpu.dot_dimension_numbers<[1], [0], [0], [1], [0, 0, 1, 1], [], []>} : vector<1x32xbf16>, vector<32x64xbf16>, vector<1x64xf32> -> vector<1x64xf32>
    %27 = arith.truncf %23 : vector<1x32xf32> to vector<1x32xbf16>
    %c0_12 = arith.constant 0 : index
    %c0_13 = arith.constant 0 : index
    %28 = vector.load %arg4[%c0_12, %c0_13] : memref<32x64xbf16, #tpu.memory_space<vmem>>, vector<32x64xbf16>
    %cst_14 = arith.constant dense<0.000000e+00> : vector<1x64xf32>
    %29 = tpu.matmul %27, %28, %cst_14 {dimension_numbers = #tpu.dot_dimension_numbers<[1], [0], [0], [1], [0, 0, 1, 1], [], []>} : vector<1x32xbf16>, vector<32x64xbf16>, vector<1x64xf32> -> vector<1x64xf32>
    %30 = arith.addf %26, %29 : vector<1x64xf32>
    %c0_15 = arith.constant 0 : index
    %c0_16 = arith.constant 0 : index
    %31 = vector.load %arg5[%c0_15, %c0_16] : memref<1x64xf32, #tpu.memory_space<vmem>>, vector<1x64xf32>
    %32 = arith.mulf %30, %31 : vector<1x64xf32>
    %c0_17 = arith.constant 0 : index
    %c0_18 = arith.constant 0 : index
    %33 = vector.load %arg6[%c0_17, %c0_18] : memref<1x64xf32, #tpu.memory_space<vmem>>, vector<1x64xf32>
    %34 = arith.addf %32, %33 : vector<1x64xf32>
    %cst_19 = arith.constant 0.000000e+00 : f32
    %35 = vector.broadcast %cst_19 : f32 to vector<1x64xf32>
    %36 = arith.maximumf %34, %35 : vector<1x64xf32>
    %37 = arith.truncf %36 : vector<1x64xf32> to vector<1x64xbf16>
    %c0_20 = arith.constant 0 : index
    %c0_21 = arith.constant 0 : index
    %38 = vector.load %arg7[%c0_20, %c0_21] : memref<64x32xbf16, #tpu.memory_space<vmem>>, vector<64x32xbf16>
    %cst_22 = arith.constant dense<0.000000e+00> : vector<1x32xf32>
    %39 = tpu.matmul %37, %38, %cst_22 {dimension_numbers = #tpu.dot_dimension_numbers<[1], [0], [0], [1], [0, 0, 1, 1], [], []>} : vector<1x64xbf16>, vector<64x32xbf16>, vector<1x32xf32> -> vector<1x32xf32>
    %c0_23 = arith.constant 0 : index
    %c0_24 = arith.constant 0 : index
    %40 = vector.load %arg8[%c0_23, %c0_24] : memref<1x32xf32, #tpu.memory_space<vmem>>, vector<1x32xf32>
    %41 = arith.addf %39, %40 : vector<1x32xf32>
    %c0_25 = arith.constant 0 : index
    %c0_26 = arith.constant 0 : index
    %c0_27 = arith.constant 0 : index
    %42 = vector.load %arg9[%c0_25, %c0_26, %c0_27] : memref<1x1x32xf32, #tpu.memory_space<vmem>>, vector<1x1x32xf32>
    %43 = vector.shape_cast %42 : vector<1x1x32xf32> to vector<1x32xf32>
    %44 = vector.shape_cast %41 : vector<1x32xf32> to vector<1x1x32xf32>
    tpu.vector_store %arg9[%c0_25, %c0_26, %c0_27], %44 {strides = array<i32>} : memref<1x1x32xf32, #tpu.memory_space<vmem>>, vector<1x1x32xf32>,
    return
  }
  func.func @transform_0(%arg0: i32) -> (i32, i32, i32) {
    %c0_i32 = arith.constant 0 : i32
    %c0_i32_0 = arith.constant 0 : i32
    %c0_i32_1 = arith.constant 0 : i32
    return %arg0, %c0_i32, %c0_i32_0 : i32, i32, i32
  }
  func.func @transform_1(%arg0: i32) -> (i32, i32, i32) {
    %c0_i32 = arith.constant 0 : i32
    %c0_i32_0 = arith.constant 0 : i32
    %c0_i32_1 = arith.constant 0 : i32
    return %arg0, %c0_i32, %c0_i32_0 : i32, i32, i32
  }
  func.func @transform_2(%arg0: i32) -> (i32, i32) {
    %c0_i32 = arith.constant 0 : i32
    %c0_i32_0 = arith.constant 0 : i32
    %c0_i32_1 = arith.constant 0 : i32
    return %c0_i32, %c0_i32_0 : i32, i32
  }
  func.func @transform_3(%arg0: i32) -> (i32, i32) {
    %c0_i32 = arith.constant 0 : i32
    %c0_i32_0 = arith.constant 0 : i32
    %c0_i32_1 = arith.constant 0 : i32
    return %c0_i32, %c0_i32_0 : i32, i32
  }
  func.func @transform_4(%arg0: i32) -> (i32, i32) {
    %c0_i32 = arith.constant 0 : i32
    %c0_i32_0 = arith.constant 0 : i32
    %c0_i32_1 = arith.constant 0 : i32
    return %c0_i32, %c0_i32_0 : i32, i32
  }
  func.func @transform_5(%arg0: i32) -> (i32, i32) {
    %c0_i32 = arith.constant 0 : i32
    %c0_i32_0 = arith.constant 0 : i32
    %c0_i32_1 = arith.constant 0 : i32
    return %c0_i32, %c0_i32_0 : i32, i32
  }
  func.func @transform_6(%arg0: i32) -> (i32, i32) {
    %c0_i32 = arith.constant 0 : i32
    %c0_i32_0 = arith.constant 0 : i32
    %c0_i32_1 = arith.constant 0 : i32
    return %c0_i32, %c0_i32_0 : i32, i32
  }
  func.func @transform_7(%arg0: i32) -> (i32, i32) {
    %c0_i32 = arith.constant 0 : i32
    %c0_i32_0 = arith.constant 0 : i32
    %c0_i32_1 = arith.constant 0 : i32
    return %c0_i32, %c0_i32_0 : i32, i32
  }
  func.func @transform_8(%arg0: i32) -> (i32, i32, i32) {
    %c0_i32 = arith.constant 0 : i32
    %c0_i32_0 = arith.constant 0 : i32
    %c0_i32_1 = arith.constant 0 : i32
    return %arg0, %c0_i32, %c0_i32_0 : i32, i32, i32
  }
}

module attributes {stable_mosaic.version = 11 : i64} {
  func.func @_dec_layer_kernel(%arg0: i32, %arg1: memref<1x8x32xf32, #tpu.memory_space<vmem>>, %arg2: memref<1x16x32xf32, #tpu.memory_space<vmem>>, %arg3: memref<1x8x32xf32, #tpu.memory_space<vmem>>, %arg4: memref<1x16x32xf32, #tpu.memory_space<vmem>>, %arg5: memref<1x1x16xf32, #tpu.memory_space<vmem>>, %arg6: memref<32x32xbf16, #tpu.memory_space<vmem>>, %arg7: memref<32x32xbf16, #tpu.memory_space<vmem>>, %arg8: memref<32x32xbf16, #tpu.memory_space<vmem>>, %arg9: memref<1x32xf32, #tpu.memory_space<vmem>>, %arg10: memref<1x32xf32, #tpu.memory_space<vmem>>, %arg11: memref<1x32xf32, #tpu.memory_space<vmem>>, %arg12: memref<32x32xbf16, #tpu.memory_space<vmem>>, %arg13: memref<1x32xf32, #tpu.memory_space<vmem>>, %arg14: memref<1x32xf32, #tpu.memory_space<vmem>>, %arg15: memref<1x32xf32, #tpu.memory_space<vmem>>, %arg16: memref<32x32xbf16, #tpu.memory_space<vmem>>, %arg17: memref<32x32xbf16, #tpu.memory_space<vmem>>, %arg18: memref<32x32xbf16, #tpu.memory_space<vmem>>, %arg19: memref<1x32xf32, #tpu.memory_space<vmem>>, %arg20: memref<1x32xf32, #tpu.memory_space<vmem>>, %arg21: memref<1x32xf32, #tpu.memory_space<vmem>>, %arg22: memref<32x32xbf16, #tpu.memory_space<vmem>>, %arg23: memref<1x32xf32, #tpu.memory_space<vmem>>, %arg24: memref<1x32xf32, #tpu.memory_space<vmem>>, %arg25: memref<1x32xf32, #tpu.memory_space<vmem>>, %arg26: memref<32x64xbf16, #tpu.memory_space<vmem>>, %arg27: memref<1x64xf32, #tpu.memory_space<vmem>>, %arg28: memref<64x32xbf16, #tpu.memory_space<vmem>>, %arg29: memref<1x32xf32, #tpu.memory_space<vmem>>, %arg30: memref<1x32xf32, #tpu.memory_space<vmem>>, %arg31: memref<1x32xf32, #tpu.memory_space<vmem>>, %arg32: memref<1x8x32xf32, #tpu.memory_space<vmem>>) attributes {dimension_semantics = [#tpu.dimension_semantics<parallel>], iteration_bounds = array<i64: 2>, scalar_prefetch = 0 : i64, scratch_operands = 0 : i64, tpu.core_type = #tpu.core_type<tc>, window_params = [{transform_indices = @transform_0, window_bounds = array<i64: 1, 8, 32>}, {transform_indices = @transform_1, window_bounds = array<i64: 1, 16, 32>}, {transform_indices = @transform_2, window_bounds = array<i64: 1, 8, 32>}, {transform_indices = @transform_3, window_bounds = array<i64: 1, 16, 32>}, {transform_indices = @transform_4, window_bounds = array<i64: 1, 1, 16>}, {pipeline_mode = #tpu.pipeline_mode<synchronous>, transform_indices = @transform_5, window_bounds = array<i64: 32, 32>}, {pipeline_mode = #tpu.pipeline_mode<synchronous>, transform_indices = @transform_6, window_bounds = array<i64: 32, 32>}, {pipeline_mode = #tpu.pipeline_mode<synchronous>, transform_indices = @transform_7, window_bounds = array<i64: 32, 32>}, {pipeline_mode = #tpu.pipeline_mode<synchronous>, transform_indices = @transform_8, window_bounds = array<i64: 1, 32>}, {pipeline_mode = #tpu.pipeline_mode<synchronous>, transform_indices = @transform_9, window_bounds = array<i64: 1, 32>}, {pipeline_mode = #tpu.pipeline_mode<synchronous>, transform_indices = @transform_10, window_bounds = array<i64: 1, 32>}, {pipeline_mode = #tpu.pipeline_mode<synchronous>, transform_indices = @transform_11, window_bounds = array<i64: 32, 32>}, {pipeline_mode = #tpu.pipeline_mode<synchronous>, transform_indices = @transform_12, window_bounds = array<i64: 1, 32>}, {pipeline_mode = #tpu.pipeline_mode<synchronous>, transform_indices = @transform_13, window_bounds = array<i64: 1, 32>}, {pipeline_mode = #tpu.pipeline_mode<synchronous>, transform_indices = @transform_14, window_bounds = array<i64: 1, 32>}, {pipeline_mode = #tpu.pipeline_mode<synchronous>, transform_indices = @transform_15, window_bounds = array<i64: 32, 32>}, {pipeline_mode = #tpu.pipeline_mode<synchronous>, transform_indices = @transform_16, window_bounds = array<i64: 32, 32>}, {pipeline_mode = #tpu.pipeline_mode<synchronous>, transform_indices = @transform_17, window_bounds = array<i64: 32, 32>}, {pipeline_mode = #tpu.pipeline_mode<synchronous>, transform_indices = @transform_18, window_bounds = array<i64: 1, 32>}, {pipeline_mode = #tpu.pipeline_mode<synchronous>, transform_indices = @transform_19, window_bounds = array<i64: 1, 32>}, {pipeline_mode = #tpu.pipeline_mode<synchronous>, transform_indices = @transform_20, window_bounds = array<i64: 1, 32>}, {pipeline_mode = #tpu.pipeline_mode<synchronous>, transform_indices = @transform_21, window_bounds = array<i64: 32, 32>}, {pipeline_mode = #tpu.pipeline_mode<synchronous>, transform_indices = @transform_22, window_bounds = array<i64: 1, 32>}, {pipeline_mode = #tpu.pipeline_mode<synchronous>, transform_indices = @transform_23, window_bounds = array<i64: 1, 32>}, {pipeline_mode = #tpu.pipeline_mode<synchronous>, transform_indices = @transform_24, window_bounds = array<i64: 1, 32>}, {pipeline_mode = #tpu.pipeline_mode<synchronous>, transform_indices = @transform_25, window_bounds = array<i64: 32, 64>}, {pipeline_mode = #tpu.pipeline_mode<synchronous>, transform_indices = @transform_26, window_bounds = array<i64: 1, 64>}, {pipeline_mode = #tpu.pipeline_mode<synchronous>, transform_indices = @transform_27, window_bounds = array<i64: 64, 32>}, {pipeline_mode = #tpu.pipeline_mode<synchronous>, transform_indices = @transform_28, window_bounds = array<i64: 1, 32>}, {pipeline_mode = #tpu.pipeline_mode<synchronous>, transform_indices = @transform_29, window_bounds = array<i64: 1, 32>}, {pipeline_mode = #tpu.pipeline_mode<synchronous>, transform_indices = @transform_30, window_bounds = array<i64: 1, 32>}, {transform_indices = @transform_31, window_bounds = array<i64: 1, 8, 32>}]} {
    %c0 = arith.constant 0 : index
    %c0_0 = arith.constant 0 : index
    %c0_1 = arith.constant 0 : index
    %0 = vector.load %arg1[%c0, %c0_0, %c0_1] : memref<1x8x32xf32, #tpu.memory_space<vmem>>, vector<1x8x32xf32>
    %1 = vector.shape_cast %0 : vector<1x8x32xf32> to vector<8x32xf32>
    %c0_2 = arith.constant 0 : index
    %c0_3 = arith.constant 0 : index
    %c0_4 = arith.constant 0 : index
    %2 = vector.load %arg2[%c0_2, %c0_3, %c0_4] : memref<1x16x32xf32, #tpu.memory_space<vmem>>, vector<1x16x32xf32>
    %3 = vector.shape_cast %2 : vector<1x16x32xf32> to vector<16x32xf32>
    %c0_5 = arith.constant 0 : index
    %c0_6 = arith.constant 0 : index
    %c0_7 = arith.constant 0 : index
    %4 = vector.load %arg3[%c0_5, %c0_6, %c0_7] : memref<1x8x32xf32, #tpu.memory_space<vmem>>, vector<1x8x32xf32>
    %5 = vector.shape_cast %4 : vector<1x8x32xf32> to vector<8x32xf32>
    %c0_8 = arith.constant 0 : index
    %c0_9 = arith.constant 0 : index
    %c0_10 = arith.constant 0 : index
    %6 = vector.load %arg4[%c0_8, %c0_9, %c0_10] : memref<1x16x32xf32, #tpu.memory_space<vmem>>, vector<1x16x32xf32>
    %7 = vector.shape_cast %6 : vector<1x16x32xf32> to vector<16x32xf32>
    %c0_11 = arith.constant 0 : index
    %c0_12 = arith.constant 0 : index
    %c0_13 = arith.constant 0 : index
    %8 = vector.load %arg5[%c0_11, %c0_12, %c0_13] : memref<1x1x16xf32, #tpu.memory_space<vmem>>, vector<1x1x16xf32>
    %9 = vector.shape_cast %8 : vector<1x1x16xf32> to vector<1x16xf32>
    %10 = arith.addf %1, %5 : vector<8x32xf32>
    %11 = arith.truncf %10 : vector<8x32xf32> to vector<8x32xbf16>
    %c0_14 = arith.constant 0 : index
    %c0_15 = arith.constant 0 : index
    %12 = vector.load %arg6[%c0_14, %c0_15] : memref<32x32xbf16, #tpu.memory_space<vmem>>, vector<32x32xbf16>
    %cst = arith.constant dense<0.000000e+00> : vector<8x32xf32>
    %13 = tpu.matmul %11, %12, %cst {dimension_numbers = #tpu.dot_dimension_numbers<[1], [0], [0], [1], [0, 0, 1, 1], [], []>} : vector<8x32xbf16>, vector<32x32xbf16>, vector<8x32xf32> -> vector<8x32xf32>
    %c0_16 = arith.constant 0 : index
    %c0_17 = arith.constant 0 : index
    %14 = vector.load %arg9[%c0_16, %c0_17] : memref<1x32xf32, #tpu.memory_space<vmem>>, vector<1x32xf32>
    %15 = vector.broadcast %14 : vector<1x32xf32> to vector<8x32xf32>
    %16 = arith.addf %13, %15 : vector<8x32xf32>
    %17 = arith.truncf %10 : vector<8x32xf32> to vector<8x32xbf16>
    %c0_18 = arith.constant 0 : index
    %c0_19 = arith.constant 0 : index
    %18 = vector.load %arg7[%c0_18, %c0_19] : memref<32x32xbf16, #tpu.memory_space<vmem>>, vector<32x32xbf16>
    %cst_20 = arith.constant dense<0.000000e+00> : vector<8x32xf32>
    %19 = tpu.matmul %17, %18, %cst_20 {dimension_numbers = #tpu.dot_dimension_numbers<[1], [0], [0], [1], [0, 0, 1, 1], [], []>} : vector<8x32xbf16>, vector<32x32xbf16>, vector<8x32xf32> -> vector<8x32xf32>
    %c0_21 = arith.constant 0 : index
    %c0_22 = arith.constant 0 : index
    %20 = vector.load %arg10[%c0_21, %c0_22] : memref<1x32xf32, #tpu.memory_space<vmem>>, vector<1x32xf32>
    %21 = vector.broadcast %20 : vector<1x32xf32> to vector<8x32xf32>
    %22 = arith.addf %19, %21 : vector<8x32xf32>
    %23 = arith.truncf %1 : vector<8x32xf32> to vector<8x32xbf16>
    %c0_23 = arith.constant 0 : index
    %c0_24 = arith.constant 0 : index
    %24 = vector.load %arg8[%c0_23, %c0_24] : memref<32x32xbf16, #tpu.memory_space<vmem>>, vector<32x32xbf16>
    %cst_25 = arith.constant dense<0.000000e+00> : vector<8x32xf32>
    %25 = tpu.matmul %23, %24, %cst_25 {dimension_numbers = #tpu.dot_dimension_numbers<[1], [0], [0], [1], [0, 0, 1, 1], [], []>} : vector<8x32xbf16>, vector<32x32xbf16>, vector<8x32xf32> -> vector<8x32xf32>
    %c0_26 = arith.constant 0 : index
    %c0_27 = arith.constant 0 : index
    %26 = vector.load %arg11[%c0_26, %c0_27] : memref<1x32xf32, #tpu.memory_space<vmem>>, vector<1x32xf32>
    %27 = vector.broadcast %26 : vector<1x32xf32> to vector<8x32xf32>
    %28 = arith.addf %25, %27 : vector<8x32xf32>
    %29 = arith.truncf %16 : vector<8x32xf32> to vector<8x32xbf16>
    %30 = arith.truncf %22 : vector<8x32xf32> to vector<8x32xbf16>
    %31 = arith.truncf %28 : vector<8x32xf32> to vector<8x32xbf16>
    %32 = vector.extract_strided_slice %29 {offsets = [0, 0], sizes = [8, 8], strides = [1, 1]} : vector<8x32xbf16> to vector<8x8xbf16>
    %33 = vector.extract_strided_slice %30 {offsets = [0, 0], sizes = [8, 8], strides = [1, 1]} : vector<8x32xbf16> to vector<8x8xbf16>
    %34 = vector.extract_strided_slice %31 {offsets = [0, 0], sizes = [8, 8], strides = [1, 1]} : vector<8x32xbf16> to vector<8x8xbf16>
    %cst_28 = arith.constant dense<0.000000e+00> : vector<8x8xf32>
    %35 = tpu.matmul %32, %33, %cst_28 {dimension_numbers = #tpu.dot_dimension_numbers<[1], [1], [0], [0], [0, 0, 1, 0], [], []>} : vector<8x8xbf16>, vector<8x8xbf16>, vector<8x8xf32> -> vector<8x8xf32>
    %cst_29 = arith.constant dense<0xFF800000> : vector<8xf32>
    %36 = vector.multi_reduction <maximumf>, %35, %cst_29 [1] : vector<8x8xf32> to vector<8xf32>
    %37 = vector.shape_cast %36 : vector<8xf32> to vector<8x1xf32>
    %38 = vector.broadcast %37 : vector<8x1xf32> to vector<8x8xf32>
    %39 = arith.subf %35, %38 : vector<8x8xf32>
    %40 = math.exp %39 : vector<8x8xf32>
    %cst_30 = arith.constant dense<0.000000e+00> : vector<8xf32>
    %41 = vector.multi_reduction <add>, %40, %cst_30 [1] : vector<8x8xf32> to vector<8xf32>
    %42 = vector.shape_cast %41 : vector<8xf32> to vector<8x1xf32>
    %43 = tpu.reciprocal %42 {approx = true} : vector<8x1xf32> -> vector<8x1xf32>
    %44 = vector.broadcast %43 : vector<8x1xf32> to vector<8x8xf32>
    %45 = arith.mulf %40, %44 : vector<8x8xf32>
    %46 = arith.truncf %45 : vector<8x8xf32> to vector<8x8xbf16>
    %cst_31 = arith.constant dense<0.000000e+00> : vector<8x8xf32>
    %47 = tpu.matmul %46, %34, %cst_31 {dimension_numbers = #tpu.dot_dimension_numbers<[1], [0], [0], [1], [0, 0, 1, 1], [], []>} : vector<8x8xbf16>, vector<8x8xbf16>, vector<8x8xf32> -> vector<8x8xf32>
    %48 = vector.extract_strided_slice %29 {offsets = [0, 8], sizes = [8, 8], strides = [1, 1]} : vector<8x32xbf16> to vector<8x8xbf16>
    %49 = vector.extract_strided_slice %30 {offsets = [0, 8], sizes = [8, 8], strides = [1, 1]} : vector<8x32xbf16> to vector<8x8xbf16>
    %50 = vector.extract_strided_slice %31 {offsets = [0, 8], sizes = [8, 8], strides = [1, 1]} : vector<8x32xbf16> to vector<8x8xbf16>
    %cst_32 = arith.constant dense<0.000000e+00> : vector<8x8xf32>
    %51 = tpu.matmul %48, %49, %cst_32 {dimension_numbers = #tpu.dot_dimension_numbers<[1], [1], [0], [0], [0, 0, 1, 0], [], []>} : vector<8x8xbf16>, vector<8x8xbf16>, vector<8x8xf32> -> vector<8x8xf32>
    %cst_33 = arith.constant dense<0xFF800000> : vector<8xf32>
    %52 = vector.multi_reduction <maximumf>, %51, %cst_33 [1] : vector<8x8xf32> to vector<8xf32>
    %53 = vector.shape_cast %52 : vector<8xf32> to vector<8x1xf32>
    %54 = vector.broadcast %53 : vector<8x1xf32> to vector<8x8xf32>
    %55 = arith.subf %51, %54 : vector<8x8xf32>
    %56 = math.exp %55 : vector<8x8xf32>
    %cst_34 = arith.constant dense<0.000000e+00> : vector<8xf32>
    %57 = vector.multi_reduction <add>, %56, %cst_34 [1] : vector<8x8xf32> to vector<8xf32>
    %58 = vector.shape_cast %57 : vector<8xf32> to vector<8x1xf32>
    %59 = tpu.reciprocal %58 {approx = true} : vector<8x1xf32> -> vector<8x1xf32>
    %60 = vector.broadcast %59 : vector<8x1xf32> to vector<8x8xf32>
    %61 = arith.mulf %56, %60 : vector<8x8xf32>
    %62 = arith.truncf %61 : vector<8x8xf32> to vector<8x8xbf16>
    %cst_35 = arith.constant dense<0.000000e+00> : vector<8x8xf32>
    %63 = tpu.matmul %62, %50, %cst_35 {dimension_numbers = #tpu.dot_dimension_numbers<[1], [0], [0], [1], [0, 0, 1, 1], [], []>} : vector<8x8xbf16>, vector<8x8xbf16>, vector<8x8xf32> -> vector<8x8xf32>
    %64 = vector.extract_strided_slice %29 {offsets = [0, 16], sizes = [8, 8], strides = [1, 1]} : vector<8x32xbf16> to vector<8x8xbf16>
    %65 = vector.extract_strided_slice %30 {offsets = [0, 16], sizes = [8, 8], strides = [1, 1]} : vector<8x32xbf16> to vector<8x8xbf16>
    %66 = vector.extract_strided_slice %31 {offsets = [0, 16], sizes = [8, 8], strides = [1, 1]} : vector<8x32xbf16> to vector<8x8xbf16>
    %cst_36 = arith.constant dense<0.000000e+00> : vector<8x8xf32>
    %67 = tpu.matmul %64, %65, %cst_36 {dimension_numbers = #tpu.dot_dimension_numbers<[1], [1], [0], [0], [0, 0, 1, 0], [], []>} : vector<8x8xbf16>, vector<8x8xbf16>, vector<8x8xf32> -> vector<8x8xf32>
    %cst_37 = arith.constant dense<0xFF800000> : vector<8xf32>
    %68 = vector.multi_reduction <maximumf>, %67, %cst_37 [1] : vector<8x8xf32> to vector<8xf32>
    %69 = vector.shape_cast %68 : vector<8xf32> to vector<8x1xf32>
    %70 = vector.broadcast %69 : vector<8x1xf32> to vector<8x8xf32>
    %71 = arith.subf %67, %70 : vector<8x8xf32>
    %72 = math.exp %71 : vector<8x8xf32>
    %cst_38 = arith.constant dense<0.000000e+00> : vector<8xf32>
    %73 = vector.multi_reduction <add>, %72, %cst_38 [1] : vector<8x8xf32> to vector<8xf32>
    %74 = vector.shape_cast %73 : vector<8xf32> to vector<8x1xf32>
    %75 = tpu.reciprocal %74 {approx = true} : vector<8x1xf32> -> vector<8x1xf32>
    %76 = vector.broadcast %75 : vector<8x1xf32> to vector<8x8xf32>
    %77 = arith.mulf %72, %76 : vector<8x8xf32>
    %78 = arith.truncf %77 : vector<8x8xf32> to vector<8x8xbf16>
    %cst_39 = arith.constant dense<0.000000e+00> : vector<8x8xf32>
    %79 = tpu.matmul %78, %66, %cst_39 {dimension_numbers = #tpu.dot_dimension_numbers<[1], [0], [0], [1], [0, 0, 1, 1], [], []>} : vector<8x8xbf16>, vector<8x8xbf16>, vector<8x8xf32> -> vector<8x8xf32>
    %80 = vector.extract_strided_slice %29 {offsets = [0, 24], sizes = [8, 8], strides = [1, 1]} : vector<8x32xbf16> to vector<8x8xbf16>
    %81 = vector.extract_strided_slice %30 {offsets = [0, 24], sizes = [8, 8], strides = [1, 1]} : vector<8x32xbf16> to vector<8x8xbf16>
    %82 = vector.extract_strided_slice %31 {offsets = [0, 24], sizes = [8, 8], strides = [1, 1]} : vector<8x32xbf16> to vector<8x8xbf16>
    %cst_40 = arith.constant dense<0.000000e+00> : vector<8x8xf32>
    %83 = tpu.matmul %80, %81, %cst_40 {dimension_numbers = #tpu.dot_dimension_numbers<[1], [1], [0], [0], [0, 0, 1, 0], [], []>} : vector<8x8xbf16>, vector<8x8xbf16>, vector<8x8xf32> -> vector<8x8xf32>
    %cst_41 = arith.constant dense<0xFF800000> : vector<8xf32>
    %84 = vector.multi_reduction <maximumf>, %83, %cst_41 [1] : vector<8x8xf32> to vector<8xf32>
    %85 = vector.shape_cast %84 : vector<8xf32> to vector<8x1xf32>
    %86 = vector.broadcast %85 : vector<8x1xf32> to vector<8x8xf32>
    %87 = arith.subf %83, %86 : vector<8x8xf32>
    %88 = math.exp %87 : vector<8x8xf32>
    %cst_42 = arith.constant dense<0.000000e+00> : vector<8xf32>
    %89 = vector.multi_reduction <add>, %88, %cst_42 [1] : vector<8x8xf32> to vector<8xf32>
    %90 = vector.shape_cast %89 : vector<8xf32> to vector<8x1xf32>
    %91 = tpu.reciprocal %90 {approx = true} : vector<8x1xf32> -> vector<8x1xf32>
    %92 = vector.broadcast %91 : vector<8x1xf32> to vector<8x8xf32>
    %93 = arith.mulf %88, %92 : vector<8x8xf32>
    %94 = arith.truncf %93 : vector<8x8xf32> to vector<8x8xbf16>
    %cst_43 = arith.constant dense<0.000000e+00> : vector<8x8xf32>
    %95 = tpu.matmul %94, %82, %cst_43 {dimension_numbers = #tpu.dot_dimension_numbers<[1], [0], [0], [1], [0, 0, 1, 1], [], []>} : vector<8x8xbf16>, vector<8x8xbf16>, vector<8x8xf32> -> vector<8x8xf32>
    %96 = tpu.concatenate %47, %63, %79, %95 in 1 : vector<8x8xf32>, vector<8x8xf32>, vector<8x8xf32>, vector<8x8xf32> -> vector<8x32xf32>
    %97 = arith.truncf %96 : vector<8x32xf32> to vector<8x32xbf16>
    %c0_44 = arith.constant 0 : index
    %c0_45 = arith.constant 0 : index
    %98 = vector.load %arg12[%c0_44, %c0_45] : memref<32x32xbf16, #tpu.memory_space<vmem>>, vector<32x32xbf16>
    %cst_46 = arith.constant dense<0.000000e+00> : vector<8x32xf32>
    %99 = tpu.matmul %97, %98, %cst_46 {dimension_numbers = #tpu.dot_dimension_numbers<[1], [0], [0], [1], [0, 0, 1, 1], [], []>} : vector<8x32xbf16>, vector<32x32xbf16>, vector<8x32xf32> -> vector<8x32xf32>
    %c0_47 = arith.constant 0 : index
    %c0_48 = arith.constant 0 : index
    %100 = vector.load %arg13[%c0_47, %c0_48] : memref<1x32xf32, #tpu.memory_space<vmem>>, vector<1x32xf32>
    %101 = vector.broadcast %100 : vector<1x32xf32> to vector<8x32xf32>
    %102 = arith.addf %99, %101 : vector<8x32xf32>
    %103 = arith.addf %1, %102 : vector<8x32xf32>
    %c0_49 = arith.constant 0 : index
    %c0_50 = arith.constant 0 : index
    %104 = vector.load %arg14[%c0_49, %c0_50] : memref<1x32xf32, #tpu.memory_space<vmem>>, vector<1x32xf32>
    %105 = vector.broadcast %104 : vector<1x32xf32> to vector<8x32xf32>
    %106 = arith.mulf %103, %105 : vector<8x32xf32>
    %c0_51 = arith.constant 0 : index
    %c0_52 = arith.constant 0 : index
    %107 = vector.load %arg15[%c0_51, %c0_52] : memref<1x32xf32, #tpu.memory_space<vmem>>, vector<1x32xf32>
    %108 = vector.broadcast %107 : vector<1x32xf32> to vector<8x32xf32>
    %109 = arith.addf %106, %108 : vector<8x32xf32>
    %110 = arith.addf %109, %5 : vector<8x32xf32>
    %111 = arith.addf %3, %7 : vector<16x32xf32>
    %112 = arith.truncf %110 : vector<8x32xf32> to vector<8x32xbf16>
    %c0_53 = arith.constant 0 : index
    %c0_54 = arith.constant 0 : index
    %113 = vector.load %arg16[%c0_53, %c0_54] : memref<32x32xbf16, #tpu.memory_space<vmem>>, vector<32x32xbf16>
    %cst_55 = arith.constant dense<0.000000e+00> : vector<8x32xf32>
    %114 = tpu.matmul %112, %113, %cst_55 {dimension_numbers = #tpu.dot_dimension_numbers<[1], [0], [0], [1], [0, 0, 1, 1], [], []>} : vector<8x32xbf16>, vector<32x32xbf16>, vector<8x32xf32> -> vector<8x32xf32>
    %c0_56 = arith.constant 0 : index
    %c0_57 = arith.constant 0 : index
    %115 = vector.load %arg19[%c0_56, %c0_57] : memref<1x32xf32, #tpu.memory_space<vmem>>, vector<1x32xf32>
    %116 = vector.broadcast %115 : vector<1x32xf32> to vector<8x32xf32>
    %117 = arith.addf %114, %116 : vector<8x32xf32>
    %118 = arith.truncf %111 : vector<16x32xf32> to vector<16x32xbf16>
    %c0_58 = arith.constant 0 : index
    %c0_59 = arith.constant 0 : index
    %119 = vector.load %arg17[%c0_58, %c0_59] : memref<32x32xbf16, #tpu.memory_space<vmem>>, vector<32x32xbf16>
    %cst_60 = arith.constant dense<0.000000e+00> : vector<16x32xf32>
    %120 = tpu.matmul %118, %119, %cst_60 {dimension_numbers = #tpu.dot_dimension_numbers<[1], [0], [0], [1], [0, 0, 1, 1], [], []>} : vector<16x32xbf16>, vector<32x32xbf16>, vector<16x32xf32> -> vector<16x32xf32>
    %c0_61 = arith.constant 0 : index
    %c0_62 = arith.constant 0 : index
    %121 = vector.load %arg20[%c0_61, %c0_62] : memref<1x32xf32, #tpu.memory_space<vmem>>, vector<1x32xf32>
    %122 = vector.broadcast %121 : vector<1x32xf32> to vector<16x32xf32>
    %123 = arith.addf %120, %122 : vector<16x32xf32>
    %124 = arith.truncf %3 : vector<16x32xf32> to vector<16x32xbf16>
    %c0_63 = arith.constant 0 : index
    %c0_64 = arith.constant 0 : index
    %125 = vector.load %arg18[%c0_63, %c0_64] : memref<32x32xbf16, #tpu.memory_space<vmem>>, vector<32x32xbf16>
    %cst_65 = arith.constant dense<0.000000e+00> : vector<16x32xf32>
    %126 = tpu.matmul %124, %125, %cst_65 {dimension_numbers = #tpu.dot_dimension_numbers<[1], [0], [0], [1], [0, 0, 1, 1], [], []>} : vector<16x32xbf16>, vector<32x32xbf16>, vector<16x32xf32> -> vector<16x32xf32>
    %c0_66 = arith.constant 0 : index
    %c0_67 = arith.constant 0 : index
    %127 = vector.load %arg21[%c0_66, %c0_67] : memref<1x32xf32, #tpu.memory_space<vmem>>, vector<1x32xf32>
    %128 = vector.broadcast %127 : vector<1x32xf32> to vector<16x32xf32>
    %129 = arith.addf %126, %128 : vector<16x32xf32>
    %130 = arith.truncf %117 : vector<8x32xf32> to vector<8x32xbf16>
    %131 = arith.truncf %123 : vector<16x32xf32> to vector<16x32xbf16>
    %132 = arith.truncf %129 : vector<16x32xf32> to vector<16x32xbf16>
    %133 = vector.shape_cast %9 : vector<1x16xf32> to vector<1x16xf32>
    %134 = vector.broadcast %133 : vector<1x16xf32> to vector<8x16xf32>
    %135 = vector.extract_strided_slice %130 {offsets = [0, 0], sizes = [8, 8], strides = [1, 1]} : vector<8x32xbf16> to vector<8x8xbf16>
    %136 = vector.extract_strided_slice %131 {offsets = [0, 0], sizes = [16, 8], strides = [1, 1]} : vector<16x32xbf16> to vector<16x8xbf16>
    %137 = vector.extract_strided_slice %132 {offsets = [0, 0], sizes = [16, 8], strides = [1, 1]} : vector<16x32xbf16> to vector<16x8xbf16>
    %cst_68 = arith.constant dense<0.000000e+00> : vector<8x16xf32>
    %138 = tpu.matmul %135, %136, %cst_68 {dimension_numbers = #tpu.dot_dimension_numbers<[1], [1], [0], [0], [0, 0, 1, 0], [], []>} : vector<8x8xbf16>, vector<16x8xbf16>, vector<8x16xf32> -> vector<8x16xf32>
    %139 = arith.addf %138, %134 : vector<8x16xf32>
    %cst_69 = arith.constant dense<0xFF800000> : vector<8xf32>
    %140 = vector.multi_reduction <maximumf>, %139, %cst_69 [1] : vector<8x16xf32> to vector<8xf32>
    %141 = vector.shape_cast %140 : vector<8xf32> to vector<8x1xf32>
    %142 = vector.broadcast %141 : vector<8x1xf32> to vector<8x16xf32>
    %143 = arith.subf %139, %142 : vector<8x16xf32>
    %144 = math.exp %143 : vector<8x16xf32>
    %cst_70 = arith.constant dense<0.000000e+00> : vector<8xf32>
    %145 = vector.multi_reduction <add>, %144, %cst_70 [1] : vector<8x16xf32> to vector<8xf32>
    %146 = vector.shape_cast %145 : vector<8xf32> to vector<8x1xf32>
    %147 = tpu.reciprocal %146 {approx = true} : vector<8x1xf32> -> vector<8x1xf32>
    %148 = vector.broadcast %147 : vector<8x1xf32> to vector<8x16xf32>
    %149 = arith.mulf %144, %148 : vector<8x16xf32>
    %150 = arith.truncf %149 : vector<8x16xf32> to vector<8x16xbf16>
    %cst_71 = arith.constant dense<0.000000e+00> : vector<8x8xf32>
    %151 = tpu.matmul %150, %137, %cst_71 {dimension_numbers = #tpu.dot_dimension_numbers<[1], [0], [0], [1], [0, 0, 1, 1], [], []>} : vector<8x16xbf16>, vector<16x8xbf16>, vector<8x8xf32> -> vector<8x8xf32>
    %152 = vector.extract_strided_slice %130 {offsets = [0, 8], sizes = [8, 8], strides = [1, 1]} : vector<8x32xbf16> to vector<8x8xbf16>
    %153 = vector.extract_strided_slice %131 {offsets = [0, 8], sizes = [16, 8], strides = [1, 1]} : vector<16x32xbf16> to vector<16x8xbf16>
    %154 = vector.extract_strided_slice %132 {offsets = [0, 8], sizes = [16, 8], strides = [1, 1]} : vector<16x32xbf16> to vector<16x8xbf16>
    %cst_72 = arith.constant dense<0.000000e+00> : vector<8x16xf32>
    %155 = tpu.matmul %152, %153, %cst_72 {dimension_numbers = #tpu.dot_dimension_numbers<[1], [1], [0], [0], [0, 0, 1, 0], [], []>} : vector<8x8xbf16>, vector<16x8xbf16>, vector<8x16xf32> -> vector<8x16xf32>
    %156 = arith.addf %155, %134 : vector<8x16xf32>
    %cst_73 = arith.constant dense<0xFF800000> : vector<8xf32>
    %157 = vector.multi_reduction <maximumf>, %156, %cst_73 [1] : vector<8x16xf32> to vector<8xf32>
    %158 = vector.shape_cast %157 : vector<8xf32> to vector<8x1xf32>
    %159 = vector.broadcast %158 : vector<8x1xf32> to vector<8x16xf32>
    %160 = arith.subf %156, %159 : vector<8x16xf32>
    %161 = math.exp %160 : vector<8x16xf32>
    %cst_74 = arith.constant dense<0.000000e+00> : vector<8xf32>
    %162 = vector.multi_reduction <add>, %161, %cst_74 [1] : vector<8x16xf32> to vector<8xf32>
    %163 = vector.shape_cast %162 : vector<8xf32> to vector<8x1xf32>
    %164 = tpu.reciprocal %163 {approx = true} : vector<8x1xf32> -> vector<8x1xf32>
    %165 = vector.broadcast %164 : vector<8x1xf32> to vector<8x16xf32>
    %166 = arith.mulf %161, %165 : vector<8x16xf32>
    %167 = arith.truncf %166 : vector<8x16xf32> to vector<8x16xbf16>
    %cst_75 = arith.constant dense<0.000000e+00> : vector<8x8xf32>
    %168 = tpu.matmul %167, %154, %cst_75 {dimension_numbers = #tpu.dot_dimension_numbers<[1], [0], [0], [1], [0, 0, 1, 1], [], []>} : vector<8x16xbf16>, vector<16x8xbf16>, vector<8x8xf32> -> vector<8x8xf32>
    %169 = vector.extract_strided_slice %130 {offsets = [0, 16], sizes = [8, 8], strides = [1, 1]} : vector<8x32xbf16> to vector<8x8xbf16>
    %170 = vector.extract_strided_slice %131 {offsets = [0, 16], sizes = [16, 8], strides = [1, 1]} : vector<16x32xbf16> to vector<16x8xbf16>
    %171 = vector.extract_strided_slice %132 {offsets = [0, 16], sizes = [16, 8], strides = [1, 1]} : vector<16x32xbf16> to vector<16x8xbf16>
    %cst_76 = arith.constant dense<0.000000e+00> : vector<8x16xf32>
    %172 = tpu.matmul %169, %170, %cst_76 {dimension_numbers = #tpu.dot_dimension_numbers<[1], [1], [0], [0], [0, 0, 1, 0], [], []>} : vector<8x8xbf16>, vector<16x8xbf16>, vector<8x16xf32> -> vector<8x16xf32>
    %173 = arith.addf %172, %134 : vector<8x16xf32>
    %cst_77 = arith.constant dense<0xFF800000> : vector<8xf32>
    %174 = vector.multi_reduction <maximumf>, %173, %cst_77 [1] : vector<8x16xf32> to vector<8xf32>
    %175 = vector.shape_cast %174 : vector<8xf32> to vector<8x1xf32>
    %176 = vector.broadcast %175 : vector<8x1xf32> to vector<8x16xf32>
    %177 = arith.subf %173, %176 : vector<8x16xf32>
    %178 = math.exp %177 : vector<8x16xf32>
    %cst_78 = arith.constant dense<0.000000e+00> : vector<8xf32>
    %179 = vector.multi_reduction <add>, %178, %cst_78 [1] : vector<8x16xf32> to vector<8xf32>
    %180 = vector.shape_cast %179 : vector<8xf32> to vector<8x1xf32>
    %181 = tpu.reciprocal %180 {approx = true} : vector<8x1xf32> -> vector<8x1xf32>
    %182 = vector.broadcast %181 : vector<8x1xf32> to vector<8x16xf32>
    %183 = arith.mulf %178, %182 : vector<8x16xf32>
    %184 = arith.truncf %183 : vector<8x16xf32> to vector<8x16xbf16>
    %cst_79 = arith.constant dense<0.000000e+00> : vector<8x8xf32>
    %185 = tpu.matmul %184, %171, %cst_79 {dimension_numbers = #tpu.dot_dimension_numbers<[1], [0], [0], [1], [0, 0, 1, 1], [], []>} : vector<8x16xbf16>, vector<16x8xbf16>, vector<8x8xf32> -> vector<8x8xf32>
    %186 = vector.extract_strided_slice %130 {offsets = [0, 24], sizes = [8, 8], strides = [1, 1]} : vector<8x32xbf16> to vector<8x8xbf16>
    %187 = vector.extract_strided_slice %131 {offsets = [0, 24], sizes = [16, 8], strides = [1, 1]} : vector<16x32xbf16> to vector<16x8xbf16>
    %188 = vector.extract_strided_slice %132 {offsets = [0, 24], sizes = [16, 8], strides = [1, 1]} : vector<16x32xbf16> to vector<16x8xbf16>
    %cst_80 = arith.constant dense<0.000000e+00> : vector<8x16xf32>
    %189 = tpu.matmul %186, %187, %cst_80 {dimension_numbers = #tpu.dot_dimension_numbers<[1], [1], [0], [0], [0, 0, 1, 0], [], []>} : vector<8x8xbf16>, vector<16x8xbf16>, vector<8x16xf32> -> vector<8x16xf32>
    %190 = arith.addf %189, %134 : vector<8x16xf32>
    %cst_81 = arith.constant dense<0xFF800000> : vector<8xf32>
    %191 = vector.multi_reduction <maximumf>, %190, %cst_81 [1] : vector<8x16xf32> to vector<8xf32>
    %192 = vector.shape_cast %191 : vector<8xf32> to vector<8x1xf32>
    %193 = vector.broadcast %192 : vector<8x1xf32> to vector<8x16xf32>
    %194 = arith.subf %190, %193 : vector<8x16xf32>
    %195 = math.exp %194 : vector<8x16xf32>
    %cst_82 = arith.constant dense<0.000000e+00> : vector<8xf32>
    %196 = vector.multi_reduction <add>, %195, %cst_82 [1] : vector<8x16xf32> to vector<8xf32>
    %197 = vector.shape_cast %196 : vector<8xf32> to vector<8x1xf32>
    %198 = tpu.reciprocal %197 {approx = true} : vector<8x1xf32> -> vector<8x1xf32>
    %199 = vector.broadcast %198 : vector<8x1xf32> to vector<8x16xf32>
    %200 = arith.mulf %195, %199 : vector<8x16xf32>
    %201 = arith.truncf %200 : vector<8x16xf32> to vector<8x16xbf16>
    %cst_83 = arith.constant dense<0.000000e+00> : vector<8x8xf32>
    %202 = tpu.matmul %201, %188, %cst_83 {dimension_numbers = #tpu.dot_dimension_numbers<[1], [0], [0], [1], [0, 0, 1, 1], [], []>} : vector<8x16xbf16>, vector<16x8xbf16>, vector<8x8xf32> -> vector<8x8xf32>
    %203 = tpu.concatenate %151, %168, %185, %202 in 1 : vector<8x8xf32>, vector<8x8xf32>, vector<8x8xf32>, vector<8x8xf32> -> vector<8x32xf32>
    %204 = arith.truncf %203 : vector<8x32xf32> to vector<8x32xbf16>
    %c0_84 = arith.constant 0 : index
    %c0_85 = arith.constant 0 : index
    %205 = vector.load %arg22[%c0_84, %c0_85] : memref<32x32xbf16, #tpu.memory_space<vmem>>, vector<32x32xbf16>
    %cst_86 = arith.constant dense<0.000000e+00> : vector<8x32xf32>
    %206 = tpu.matmul %204, %205, %cst_86 {dimension_numbers = #tpu.dot_dimension_numbers<[1], [0], [0], [1], [0, 0, 1, 1], [], []>} : vector<8x32xbf16>, vector<32x32xbf16>, vector<8x32xf32> -> vector<8x32xf32>
    %c0_87 = arith.constant 0 : index
    %c0_88 = arith.constant 0 : index
    %207 = vector.load %arg23[%c0_87, %c0_88] : memref<1x32xf32, #tpu.memory_space<vmem>>, vector<1x32xf32>
    %208 = vector.broadcast %207 : vector<1x32xf32> to vector<8x32xf32>
    %209 = arith.addf %206, %208 : vector<8x32xf32>
    %210 = arith.addf %109, %209 : vector<8x32xf32>
    %c0_89 = arith.constant 0 : index
    %c0_90 = arith.constant 0 : index
    %211 = vector.load %arg24[%c0_89, %c0_90] : memref<1x32xf32, #tpu.memory_space<vmem>>, vector<1x32xf32>
    %212 = vector.broadcast %211 : vector<1x32xf32> to vector<8x32xf32>
    %213 = arith.mulf %210, %212 : vector<8x32xf32>
    %c0_91 = arith.constant 0 : index
    %c0_92 = arith.constant 0 : index
    %214 = vector.load %arg25[%c0_91, %c0_92] : memref<1x32xf32, #tpu.memory_space<vmem>>, vector<1x32xf32>
    %215 = vector.broadcast %214 : vector<1x32xf32> to vector<8x32xf32>
    %216 = arith.addf %213, %215 : vector<8x32xf32>
    %217 = arith.truncf %216 : vector<8x32xf32> to vector<8x32xbf16>
    %c0_93 = arith.constant 0 : index
    %c0_94 = arith.constant 0 : index
    %218 = vector.load %arg26[%c0_93, %c0_94] : memref<32x64xbf16, #tpu.memory_space<vmem>>, vector<32x64xbf16>
    %cst_95 = arith.constant dense<0.000000e+00> : vector<8x64xf32>
    %219 = tpu.matmul %217, %218, %cst_95 {dimension_numbers = #tpu.dot_dimension_numbers<[1], [0], [0], [1], [0, 0, 1, 1], [], []>} : vector<8x32xbf16>, vector<32x64xbf16>, vector<8x64xf32> -> vector<8x64xf32>
    %c0_96 = arith.constant 0 : index
    %c0_97 = arith.constant 0 : index
    %220 = vector.load %arg27[%c0_96, %c0_97] : memref<1x64xf32, #tpu.memory_space<vmem>>, vector<1x64xf32>
    %221 = vector.broadcast %220 : vector<1x64xf32> to vector<8x64xf32>
    %222 = arith.addf %219, %221 : vector<8x64xf32>
    %cst_98 = arith.constant 0.000000e+00 : f32
    %223 = vector.broadcast %cst_98 : f32 to vector<8x64xf32>
    %224 = arith.maximumf %222, %223 : vector<8x64xf32>
    %225 = arith.truncf %224 : vector<8x64xf32> to vector<8x64xbf16>
    %c0_99 = arith.constant 0 : index
    %c0_100 = arith.constant 0 : index
    %226 = vector.load %arg28[%c0_99, %c0_100] : memref<64x32xbf16, #tpu.memory_space<vmem>>, vector<64x32xbf16>
    %cst_101 = arith.constant dense<0.000000e+00> : vector<8x32xf32>
    %227 = tpu.matmul %225, %226, %cst_101 {dimension_numbers = #tpu.dot_dimension_numbers<[1], [0], [0], [1], [0, 0, 1, 1], [], []>} : vector<8x64xbf16>, vector<64x32xbf16>, vector<8x32xf32> -> vector<8x32xf32>
    %c0_102 = arith.constant 0 : index
    %c0_103 = arith.constant 0 : index
    %228 = vector.load %arg29[%c0_102, %c0_103] : memref<1x32xf32, #tpu.memory_space<vmem>>, vector<1x32xf32>
    %229 = vector.broadcast %228 : vector<1x32xf32> to vector<8x32xf32>
    %230 = arith.addf %227, %229 : vector<8x32xf32>
    %231 = arith.addf %216, %230 : vector<8x32xf32>
    %c0_104 = arith.constant 0 : index
    %c0_105 = arith.constant 0 : index
    %232 = vector.load %arg30[%c0_104, %c0_105] : memref<1x32xf32, #tpu.memory_space<vmem>>, vector<1x32xf32>
    %233 = vector.broadcast %232 : vector<1x32xf32> to vector<8x32xf32>
    %234 = arith.mulf %231, %233 : vector<8x32xf32>
    %c0_106 = arith.constant 0 : index
    %c0_107 = arith.constant 0 : index
    %235 = vector.load %arg31[%c0_106, %c0_107] : memref<1x32xf32, #tpu.memory_space<vmem>>, vector<1x32xf32>
    %236 = vector.broadcast %235 : vector<1x32xf32> to vector<8x32xf32>
    %237 = arith.addf %234, %236 : vector<8x32xf32>
    %c0_108 = arith.constant 0 : index
    %c0_109 = arith.constant 0 : index
    %c0_110 = arith.constant 0 : index
    %238 = vector.load %arg32[%c0_108, %c0_109, %c0_110] : memref<1x8x32xf32, #tpu.memory_space<vmem>>, vector<1x8x32xf32>
    %239 = vector.shape_cast %238 : vector<1x8x32xf32> to vector<8x32xf32>
    %240 = vector.shape_cast %237 : vector<8x32xf32> to vector<1x8x32xf32>
    tpu.vector_store %arg32[%c0_108, %c0_109, %c0_110], %240 {strides = array<i32>} : memref<1x8x32xf32, #tpu.memory_space<vmem>>, vector<1x8x32xf32>,
    return
  }
  func.func @transform_0(%arg0: i32) -> (i32, i32, i32) {
    %c0_i32 = arith.constant 0 : i32
    %c0_i32_0 = arith.constant 0 : i32
    %c0_i32_1 = arith.constant 0 : i32
    return %arg0, %c0_i32, %c0_i32_0 : i32, i32, i32
  }
  func.func @transform_1(%arg0: i32) -> (i32, i32, i32) {
    %c0_i32 = arith.constant 0 : i32
    %c0_i32_0 = arith.constant 0 : i32
    %c0_i32_1 = arith.constant 0 : i32
    return %arg0, %c0_i32, %c0_i32_0 : i32, i32, i32
  }
  func.func @transform_2(%arg0: i32) -> (i32, i32, i32) {
    %c0_i32 = arith.constant 0 : i32
    %c0_i32_0 = arith.constant 0 : i32
    %c0_i32_1 = arith.constant 0 : i32
    return %arg0, %c0_i32, %c0_i32_0 : i32, i32, i32
  }
  func.func @transform_3(%arg0: i32) -> (i32, i32, i32) {
    %c0_i32 = arith.constant 0 : i32
    %c0_i32_0 = arith.constant 0 : i32
    %c0_i32_1 = arith.constant 0 : i32
    return %arg0, %c0_i32, %c0_i32_0 : i32, i32, i32
  }
  func.func @transform_4(%arg0: i32) -> (i32, i32, i32) {
    %c0_i32 = arith.constant 0 : i32
    %c0_i32_0 = arith.constant 0 : i32
    %c0_i32_1 = arith.constant 0 : i32
    return %arg0, %c0_i32, %c0_i32_0 : i32, i32, i32
  }
  func.func @transform_5(%arg0: i32) -> (i32, i32) {
    %c0_i32 = arith.constant 0 : i32
    %c0_i32_0 = arith.constant 0 : i32
    %c0_i32_1 = arith.constant 0 : i32
    return %c0_i32, %c0_i32_0 : i32, i32
  }
  func.func @transform_6(%arg0: i32) -> (i32, i32) {
    %c0_i32 = arith.constant 0 : i32
    %c0_i32_0 = arith.constant 0 : i32
    %c0_i32_1 = arith.constant 0 : i32
    return %c0_i32, %c0_i32_0 : i32, i32
  }
  func.func @transform_7(%arg0: i32) -> (i32, i32) {
    %c0_i32 = arith.constant 0 : i32
    %c0_i32_0 = arith.constant 0 : i32
    %c0_i32_1 = arith.constant 0 : i32
    return %c0_i32, %c0_i32_0 : i32, i32
  }
  func.func @transform_8(%arg0: i32) -> (i32, i32) {
    %c0_i32 = arith.constant 0 : i32
    %c0_i32_0 = arith.constant 0 : i32
    %c0_i32_1 = arith.constant 0 : i32
    return %c0_i32, %c0_i32_0 : i32, i32
  }
  func.func @transform_9(%arg0: i32) -> (i32, i32) {
    %c0_i32 = arith.constant 0 : i32
    %c0_i32_0 = arith.constant 0 : i32
    %c0_i32_1 = arith.constant 0 : i32
    return %c0_i32, %c0_i32_0 : i32, i32
  }
  func.func @transform_10(%arg0: i32) -> (i32, i32) {
    %c0_i32 = arith.constant 0 : i32
    %c0_i32_0 = arith.constant 0 : i32
    %c0_i32_1 = arith.constant 0 : i32
    return %c0_i32, %c0_i32_0 : i32, i32
  }
  func.func @transform_11(%arg0: i32) -> (i32, i32) {
    %c0_i32 = arith.constant 0 : i32
    %c0_i32_0 = arith.constant 0 : i32
    %c0_i32_1 = arith.constant 0 : i32
    return %c0_i32, %c0_i32_0 : i32, i32
  }
  func.func @transform_12(%arg0: i32) -> (i32, i32) {
    %c0_i32 = arith.constant 0 : i32
    %c0_i32_0 = arith.constant 0 : i32
    %c0_i32_1 = arith.constant 0 : i32
    return %c0_i32, %c0_i32_0 : i32, i32
  }
  func.func @transform_13(%arg0: i32) -> (i32, i32) {
    %c0_i32 = arith.constant 0 : i32
    %c0_i32_0 = arith.constant 0 : i32
    %c0_i32_1 = arith.constant 0 : i32
    return %c0_i32, %c0_i32_0 : i32, i32
  }
  func.func @transform_14(%arg0: i32) -> (i32, i32) {
    %c0_i32 = arith.constant 0 : i32
    %c0_i32_0 = arith.constant 0 : i32
    %c0_i32_1 = arith.constant 0 : i32
    return %c0_i32, %c0_i32_0 : i32, i32
  }
  func.func @transform_15(%arg0: i32) -> (i32, i32) {
    %c0_i32 = arith.constant 0 : i32
    %c0_i32_0 = arith.constant 0 : i32
    %c0_i32_1 = arith.constant 0 : i32
    return %c0_i32, %c0_i32_0 : i32, i32
  }
  func.func @transform_16(%arg0: i32) -> (i32, i32) {
    %c0_i32 = arith.constant 0 : i32
    %c0_i32_0 = arith.constant 0 : i32
    %c0_i32_1 = arith.constant 0 : i32
    return %c0_i32, %c0_i32_0 : i32, i32
  }
  func.func @transform_17(%arg0: i32) -> (i32, i32) {
    %c0_i32 = arith.constant 0 : i32
    %c0_i32_0 = arith.constant 0 : i32
    %c0_i32_1 = arith.constant 0 : i32
    return %c0_i32, %c0_i32_0 : i32, i32
  }
  func.func @transform_18(%arg0: i32) -> (i32, i32) {
    %c0_i32 = arith.constant 0 : i32
    %c0_i32_0 = arith.constant 0 : i32
    %c0_i32_1 = arith.constant 0 : i32
    return %c0_i32, %c0_i32_0 : i32, i32
  }
  func.func @transform_19(%arg0: i32) -> (i32, i32) {
    %c0_i32 = arith.constant 0 : i32
    %c0_i32_0 = arith.constant 0 : i32
    %c0_i32_1 = arith.constant 0 : i32
    return %c0_i32, %c0_i32_0 : i32, i32
  }
  func.func @transform_20(%arg0: i32) -> (i32, i32) {
    %c0_i32 = arith.constant 0 : i32
    %c0_i32_0 = arith.constant 0 : i32
    %c0_i32_1 = arith.constant 0 : i32
    return %c0_i32, %c0_i32_0 : i32, i32
  }
  func.func @transform_21(%arg0: i32) -> (i32, i32) {
    %c0_i32 = arith.constant 0 : i32
    %c0_i32_0 = arith.constant 0 : i32
    %c0_i32_1 = arith.constant 0 : i32
    return %c0_i32, %c0_i32_0 : i32, i32
  }
  func.func @transform_22(%arg0: i32) -> (i32, i32) {
    %c0_i32 = arith.constant 0 : i32
    %c0_i32_0 = arith.constant 0 : i32
    %c0_i32_1 = arith.constant 0 : i32
    return %c0_i32, %c0_i32_0 : i32, i32
  }
  func.func @transform_23(%arg0: i32) -> (i32, i32) {
    %c0_i32 = arith.constant 0 : i32
    %c0_i32_0 = arith.constant 0 : i32
    %c0_i32_1 = arith.constant 0 : i32
    return %c0_i32, %c0_i32_0 : i32, i32
  }
  func.func @transform_24(%arg0: i32) -> (i32, i32) {
    %c0_i32 = arith.constant 0 : i32
    %c0_i32_0 = arith.constant 0 : i32
    %c0_i32_1 = arith.constant 0 : i32
    return %c0_i32, %c0_i32_0 : i32, i32
  }
  func.func @transform_25(%arg0: i32) -> (i32, i32) {
    %c0_i32 = arith.constant 0 : i32
    %c0_i32_0 = arith.constant 0 : i32
    %c0_i32_1 = arith.constant 0 : i32
    return %c0_i32, %c0_i32_0 : i32, i32
  }
  func.func @transform_26(%arg0: i32) -> (i32, i32) {
    %c0_i32 = arith.constant 0 : i32
    %c0_i32_0 = arith.constant 0 : i32
    %c0_i32_1 = arith.constant 0 : i32
    return %c0_i32, %c0_i32_0 : i32, i32
  }
  func.func @transform_27(%arg0: i32) -> (i32, i32) {
    %c0_i32 = arith.constant 0 : i32
    %c0_i32_0 = arith.constant 0 : i32
    %c0_i32_1 = arith.constant 0 : i32
    return %c0_i32, %c0_i32_0 : i32, i32
  }
  func.func @transform_28(%arg0: i32) -> (i32, i32) {
    %c0_i32 = arith.constant 0 : i32
    %c0_i32_0 = arith.constant 0 : i32
    %c0_i32_1 = arith.constant 0 : i32
    return %c0_i32, %c0_i32_0 : i32, i32
  }
  func.func @transform_29(%arg0: i32) -> (i32, i32) {
    %c0_i32 = arith.constant 0 : i32
    %c0_i32_0 = arith.constant 0 : i32
    %c0_i32_1 = arith.constant 0 : i32
    return %c0_i32, %c0_i32_0 : i32, i32
  }
  func.func @transform_30(%arg0: i32) -> (i32, i32) {
    %c0_i32 = arith.constant 0 : i32
    %c0_i32_0 = arith.constant 0 : i32
    %c0_i32_1 = arith.constant 0 : i32
    return %c0_i32, %c0_i32_0 : i32, i32
  }
  func.func @transform_31(%arg0: i32) -> (i32, i32, i32) {
    %c0_i32 = arith.constant 0 : i32
    %c0_i32_0 = arith.constant 0 : i32
    %c0_i32_1 = arith.constant 0 : i32
    return %arg0, %c0_i32, %c0_i32_0 : i32, i32, i32
  }
}

module attributes {stable_mosaic.version = 11 : i64} {
  func.func @_dec_layer_kernel(%arg0: i32, %arg1: memref<1x8x32xf32, #tpu.memory_space<vmem>>, %arg2: memref<1x16x32xf32, #tpu.memory_space<vmem>>, %arg3: memref<1x8x32xf32, #tpu.memory_space<vmem>>, %arg4: memref<1x16x32xf32, #tpu.memory_space<vmem>>, %arg5: memref<1x1x16xf32, #tpu.memory_space<vmem>>, %arg6: memref<32x32xbf16, #tpu.memory_space<vmem>>, %arg7: memref<32x32xbf16, #tpu.memory_space<vmem>>, %arg8: memref<32x32xbf16, #tpu.memory_space<vmem>>, %arg9: memref<1x32xf32, #tpu.memory_space<vmem>>, %arg10: memref<1x32xf32, #tpu.memory_space<vmem>>, %arg11: memref<1x32xf32, #tpu.memory_space<vmem>>, %arg12: memref<32x32xbf16, #tpu.memory_space<vmem>>, %arg13: memref<1x32xf32, #tpu.memory_space<vmem>>, %arg14: memref<1x32xf32, #tpu.memory_space<vmem>>, %arg15: memref<1x32xf32, #tpu.memory_space<vmem>>, %arg16: memref<32x32xbf16, #tpu.memory_space<vmem>>, %arg17: memref<32x32xbf16, #tpu.memory_space<vmem>>, %arg18: memref<32x32xbf16, #tpu.memory_space<vmem>>, %arg19: memref<1x32xf32, #tpu.memory_space<vmem>>, %arg20: memref<1x32xf32, #tpu.memory_space<vmem>>, %arg21: memref<1x32xf32, #tpu.memory_space<vmem>>, %arg22: memref<32x32xbf16, #tpu.memory_space<vmem>>, %arg23: memref<1x32xf32, #tpu.memory_space<vmem>>, %arg24: memref<1x32xf32, #tpu.memory_space<vmem>>, %arg25: memref<1x32xf32, #tpu.memory_space<vmem>>, %arg26: memref<32x64xbf16, #tpu.memory_space<vmem>>, %arg27: memref<1x64xf32, #tpu.memory_space<vmem>>, %arg28: memref<64x32xbf16, #tpu.memory_space<vmem>>, %arg29: memref<1x32xf32, #tpu.memory_space<vmem>>, %arg30: memref<1x32xf32, #tpu.memory_space<vmem>>, %arg31: memref<1x32xf32, #tpu.memory_space<vmem>>, %arg32: memref<1x8x32xf32, #tpu.memory_space<vmem>>) attributes {dimension_semantics = [#tpu.dimension_semantics<parallel>], iteration_bounds = array<i64: 2>, scalar_prefetch = 0 : i64, scratch_operands = 0 : i64, tpu.core_type = #tpu.core_type<tc>, window_params = [{transform_indices = @transform_0, window_bounds = array<i64: 1, 8, 32>}, {transform_indices = @transform_1, window_bounds = array<i64: 1, 16, 32>}, {transform_indices = @transform_2, window_bounds = array<i64: 1, 8, 32>}, {transform_indices = @transform_3, window_bounds = array<i64: 1, 16, 32>}, {transform_indices = @transform_4, window_bounds = array<i64: 1, 1, 16>}, {pipeline_mode = #tpu.pipeline_mode<synchronous>, transform_indices = @transform_5, window_bounds = array<i64: 32, 32>}, {pipeline_mode = #tpu.pipeline_mode<synchronous>, transform_indices = @transform_6, window_bounds = array<i64: 32, 32>}, {pipeline_mode = #tpu.pipeline_mode<synchronous>, transform_indices = @transform_7, window_bounds = array<i64: 32, 32>}, {pipeline_mode = #tpu.pipeline_mode<synchronous>, transform_indices = @transform_8, window_bounds = array<i64: 1, 32>}, {pipeline_mode = #tpu.pipeline_mode<synchronous>, transform_indices = @transform_9, window_bounds = array<i64: 1, 32>}, {pipeline_mode = #tpu.pipeline_mode<synchronous>, transform_indices = @transform_10, window_bounds = array<i64: 1, 32>}, {pipeline_mode = #tpu.pipeline_mode<synchronous>, transform_indices = @transform_11, window_bounds = array<i64: 32, 32>}, {pipeline_mode = #tpu.pipeline_mode<synchronous>, transform_indices = @transform_12, window_bounds = array<i64: 1, 32>}, {pipeline_mode = #tpu.pipeline_mode<synchronous>, transform_indices = @transform_13, window_bounds = array<i64: 1, 32>}, {pipeline_mode = #tpu.pipeline_mode<synchronous>, transform_indices = @transform_14, window_bounds = array<i64: 1, 32>}, {pipeline_mode = #tpu.pipeline_mode<synchronous>, transform_indices = @transform_15, window_bounds = array<i64: 32, 32>}, {pipeline_mode = #tpu.pipeline_mode<synchronous>, transform_indices = @transform_16, window_bounds = array<i64: 32, 32>}, {pipeline_mode = #tpu.pipeline_mode<synchronous>, transform_indices = @transform_17, window_bounds = array<i64: 32, 32>}, {pipeline_mode = #tpu.pipeline_mode<synchronous>, transform_indices = @transform_18, window_bounds = array<i64: 1, 32>}, {pipeline_mode = #tpu.pipeline_mode<synchronous>, transform_indices = @transform_19, window_bounds = array<i64: 1, 32>}, {pipeline_mode = #tpu.pipeline_mode<synchronous>, transform_indices = @transform_20, window_bounds = array<i64: 1, 32>}, {pipeline_mode = #tpu.pipeline_mode<synchronous>, transform_indices = @transform_21, window_bounds = array<i64: 32, 32>}, {pipeline_mode = #tpu.pipeline_mode<synchronous>, transform_indices = @transform_22, window_bounds = array<i64: 1, 32>}, {pipeline_mode = #tpu.pipeline_mode<synchronous>, transform_indices = @transform_23, window_bounds = array<i64: 1, 32>}, {pipeline_mode = #tpu.pipeline_mode<synchronous>, transform_indices = @transform_24, window_bounds = array<i64: 1, 32>}, {pipeline_mode = #tpu.pipeline_mode<synchronous>, transform_indices = @transform_25, window_bounds = array<i64: 32, 64>}, {pipeline_mode = #tpu.pipeline_mode<synchronous>, transform_indices = @transform_26, window_bounds = array<i64: 1, 64>}, {pipeline_mode = #tpu.pipeline_mode<synchronous>, transform_indices = @transform_27, window_bounds = array<i64: 64, 32>}, {pipeline_mode = #tpu.pipeline_mode<synchronous>, transform_indices = @transform_28, window_bounds = array<i64: 1, 32>}, {pipeline_mode = #tpu.pipeline_mode<synchronous>, transform_indices = @transform_29, window_bounds = array<i64: 1, 32>}, {pipeline_mode = #tpu.pipeline_mode<synchronous>, transform_indices = @transform_30, window_bounds = array<i64: 1, 32>}, {transform_indices = @transform_31, window_bounds = array<i64: 1, 8, 32>}]} {
    %c0 = arith.constant 0 : index
    %c0_0 = arith.constant 0 : index
    %c0_1 = arith.constant 0 : index
    %0 = vector.load %arg1[%c0, %c0_0, %c0_1] : memref<1x8x32xf32, #tpu.memory_space<vmem>>, vector<1x8x32xf32>
    %1 = vector.shape_cast %0 : vector<1x8x32xf32> to vector<8x32xf32>
    %c0_2 = arith.constant 0 : index
    %c0_3 = arith.constant 0 : index
    %c0_4 = arith.constant 0 : index
    %2 = vector.load %arg2[%c0_2, %c0_3, %c0_4] : memref<1x16x32xf32, #tpu.memory_space<vmem>>, vector<1x16x32xf32>
    %3 = vector.shape_cast %2 : vector<1x16x32xf32> to vector<16x32xf32>
    %c0_5 = arith.constant 0 : index
    %c0_6 = arith.constant 0 : index
    %c0_7 = arith.constant 0 : index
    %4 = vector.load %arg3[%c0_5, %c0_6, %c0_7] : memref<1x8x32xf32, #tpu.memory_space<vmem>>, vector<1x8x32xf32>
    %5 = vector.shape_cast %4 : vector<1x8x32xf32> to vector<8x32xf32>
    %c0_8 = arith.constant 0 : index
    %c0_9 = arith.constant 0 : index
    %c0_10 = arith.constant 0 : index
    %6 = vector.load %arg4[%c0_8, %c0_9, %c0_10] : memref<1x16x32xf32, #tpu.memory_space<vmem>>, vector<1x16x32xf32>
    %7 = vector.shape_cast %6 : vector<1x16x32xf32> to vector<16x32xf32>
    %c0_11 = arith.constant 0 : index
    %c0_12 = arith.constant 0 : index
    %c0_13 = arith.constant 0 : index
    %8 = vector.load %arg5[%c0_11, %c0_12, %c0_13] : memref<1x1x16xf32, #tpu.memory_space<vmem>>, vector<1x1x16xf32>
    %9 = vector.shape_cast %8 : vector<1x1x16xf32> to vector<1x16xf32>
    %10 = arith.addf %1, %5 : vector<8x32xf32>
    %11 = arith.truncf %10 : vector<8x32xf32> to vector<8x32xbf16>
    %c0_14 = arith.constant 0 : index
    %c0_15 = arith.constant 0 : index
    %12 = vector.load %arg6[%c0_14, %c0_15] : memref<32x32xbf16, #tpu.memory_space<vmem>>, vector<32x32xbf16>
    %cst = arith.constant dense<0.000000e+00> : vector<8x32xf32>
    %13 = tpu.matmul %11, %12, %cst {dimension_numbers = #tpu.dot_dimension_numbers<[1], [0], [0], [1], [0, 0, 1, 1], [], []>} : vector<8x32xbf16>, vector<32x32xbf16>, vector<8x32xf32> -> vector<8x32xf32>
    %c0_16 = arith.constant 0 : index
    %c0_17 = arith.constant 0 : index
    %14 = vector.load %arg9[%c0_16, %c0_17] : memref<1x32xf32, #tpu.memory_space<vmem>>, vector<1x32xf32>
    %15 = vector.broadcast %14 : vector<1x32xf32> to vector<8x32xf32>
    %16 = arith.addf %13, %15 : vector<8x32xf32>
    %17 = arith.truncf %10 : vector<8x32xf32> to vector<8x32xbf16>
    %c0_18 = arith.constant 0 : index
    %c0_19 = arith.constant 0 : index
    %18 = vector.load %arg7[%c0_18, %c0_19] : memref<32x32xbf16, #tpu.memory_space<vmem>>, vector<32x32xbf16>
    %cst_20 = arith.constant dense<0.000000e+00> : vector<8x32xf32>
    %19 = tpu.matmul %17, %18, %cst_20 {dimension_numbers = #tpu.dot_dimension_numbers<[1], [0], [0], [1], [0, 0, 1, 1], [], []>} : vector<8x32xbf16>, vector<32x32xbf16>, vector<8x32xf32> -> vector<8x32xf32>
    %c0_21 = arith.constant 0 : index
    %c0_22 = arith.constant 0 : index
    %20 = vector.load %arg10[%c0_21, %c0_22] : memref<1x32xf32, #tpu.memory_space<vmem>>, vector<1x32xf32>
    %21 = vector.broadcast %20 : vector<1x32xf32> to vector<8x32xf32>
    %22 = arith.addf %19, %21 : vector<8x32xf32>
    %23 = arith.truncf %1 : vector<8x32xf32> to vector<8x32xbf16>
    %c0_23 = arith.constant 0 : index
    %c0_24 = arith.constant 0 : index
    %24 = vector.load %arg8[%c0_23, %c0_24] : memref<32x32xbf16, #tpu.memory_space<vmem>>, vector<32x32xbf16>
    %cst_25 = arith.constant dense<0.000000e+00> : vector<8x32xf32>
    %25 = tpu.matmul %23, %24, %cst_25 {dimension_numbers = #tpu.dot_dimension_numbers<[1], [0], [0], [1], [0, 0, 1, 1], [], []>} : vector<8x32xbf16>, vector<32x32xbf16>, vector<8x32xf32> -> vector<8x32xf32>
    %c0_26 = arith.constant 0 : index
    %c0_27 = arith.constant 0 : index
    %26 = vector.load %arg11[%c0_26, %c0_27] : memref<1x32xf32, #tpu.memory_space<vmem>>, vector<1x32xf32>
    %27 = vector.broadcast %26 : vector<1x32xf32> to vector<8x32xf32>
    %28 = arith.addf %25, %27 : vector<8x32xf32>
    %29 = arith.truncf %16 : vector<8x32xf32> to vector<8x32xbf16>
    %30 = arith.truncf %22 : vector<8x32xf32> to vector<8x32xbf16>
    %31 = arith.truncf %28 : vector<8x32xf32> to vector<8x32xbf16>
    %32 = vector.extract_strided_slice %29 {offsets = [0, 0], sizes = [8, 8], strides = [1, 1]} : vector<8x32xbf16> to vector<8x8xbf16>
    %33 = vector.extract_strided_slice %30 {offsets = [0, 0], sizes = [8, 8], strides = [1, 1]} : vector<8x32xbf16> to vector<8x8xbf16>
    %34 = vector.extract_strided_slice %31 {offsets = [0, 0], sizes = [8, 8], strides = [1, 1]} : vector<8x32xbf16> to vector<8x8xbf16>
    %cst_28 = arith.constant dense<0.000000e+00> : vector<8x8xf32>
    %35 = tpu.matmul %32, %33, %cst_28 {dimension_numbers = #tpu.dot_dimension_numbers<[1], [1], [0], [0], [0, 0, 1, 0], [], []>} : vector<8x8xbf16>, vector<8x8xbf16>, vector<8x8xf32> -> vector<8x8xf32>
    %cst_29 = arith.constant dense<0xFF800000> : vector<8xf32>
    %36 = vector.multi_reduction <maximumf>, %35, %cst_29 [1] : vector<8x8xf32> to vector<8xf32>
    %37 = vector.shape_cast %36 : vector<8xf32> to vector<8x1xf32>
    %38 = vector.broadcast %37 : vector<8x1xf32> to vector<8x8xf32>
    %39 = arith.subf %35, %38 : vector<8x8xf32>
    %40 = math.exp %39 : vector<8x8xf32>
    %cst_30 = arith.constant dense<0.000000e+00> : vector<8xf32>
    %41 = vector.multi_reduction <add>, %40, %cst_30 [1] : vector<8x8xf32> to vector<8xf32>
    %42 = vector.shape_cast %41 : vector<8xf32> to vector<8x1xf32>
    %43 = tpu.reciprocal %42 {approx = true} : vector<8x1xf32> -> vector<8x1xf32>
    %44 = vector.broadcast %43 : vector<8x1xf32> to vector<8x8xf32>
    %45 = arith.mulf %40, %44 : vector<8x8xf32>
    %46 = arith.truncf %45 : vector<8x8xf32> to vector<8x8xbf16>
    %cst_31 = arith.constant dense<0.000000e+00> : vector<8x8xf32>
    %47 = tpu.matmul %46, %34, %cst_31 {dimension_numbers = #tpu.dot_dimension_numbers<[1], [0], [0], [1], [0, 0, 1, 1], [], []>} : vector<8x8xbf16>, vector<8x8xbf16>, vector<8x8xf32> -> vector<8x8xf32>
    %48 = vector.extract_strided_slice %29 {offsets = [0, 8], sizes = [8, 8], strides = [1, 1]} : vector<8x32xbf16> to vector<8x8xbf16>
    %49 = vector.extract_strided_slice %30 {offsets = [0, 8], sizes = [8, 8], strides = [1, 1]} : vector<8x32xbf16> to vector<8x8xbf16>
    %50 = vector.extract_strided_slice %31 {offsets = [0, 8], sizes = [8, 8], strides = [1, 1]} : vector<8x32xbf16> to vector<8x8xbf16>
    %cst_32 = arith.constant dense<0.000000e+00> : vector<8x8xf32>
    %51 = tpu.matmul %48, %49, %cst_32 {dimension_numbers = #tpu.dot_dimension_numbers<[1], [1], [0], [0], [0, 0, 1, 0], [], []>} : vector<8x8xbf16>, vector<8x8xbf16>, vector<8x8xf32> -> vector<8x8xf32>
    %cst_33 = arith.constant dense<0xFF800000> : vector<8xf32>
    %52 = vector.multi_reduction <maximumf>, %51, %cst_33 [1] : vector<8x8xf32> to vector<8xf32>
    %53 = vector.shape_cast %52 : vector<8xf32> to vector<8x1xf32>
    %54 = vector.broadcast %53 : vector<8x1xf32> to vector<8x8xf32>
    %55 = arith.subf %51, %54 : vector<8x8xf32>
    %56 = math.exp %55 : vector<8x8xf32>
    %cst_34 = arith.constant dense<0.000000e+00> : vector<8xf32>
    %57 = vector.multi_reduction <add>, %56, %cst_34 [1] : vector<8x8xf32> to vector<8xf32>
    %58 = vector.shape_cast %57 : vector<8xf32> to vector<8x1xf32>
    %59 = tpu.reciprocal %58 {approx = true} : vector<8x1xf32> -> vector<8x1xf32>
    %60 = vector.broadcast %59 : vector<8x1xf32> to vector<8x8xf32>
    %61 = arith.mulf %56, %60 : vector<8x8xf32>
    %62 = arith.truncf %61 : vector<8x8xf32> to vector<8x8xbf16>
    %cst_35 = arith.constant dense<0.000000e+00> : vector<8x8xf32>
    %63 = tpu.matmul %62, %50, %cst_35 {dimension_numbers = #tpu.dot_dimension_numbers<[1], [0], [0], [1], [0, 0, 1, 1], [], []>} : vector<8x8xbf16>, vector<8x8xbf16>, vector<8x8xf32> -> vector<8x8xf32>
    %64 = vector.extract_strided_slice %29 {offsets = [0, 16], sizes = [8, 8], strides = [1, 1]} : vector<8x32xbf16> to vector<8x8xbf16>
    %65 = vector.extract_strided_slice %30 {offsets = [0, 16], sizes = [8, 8], strides = [1, 1]} : vector<8x32xbf16> to vector<8x8xbf16>
    %66 = vector.extract_strided_slice %31 {offsets = [0, 16], sizes = [8, 8], strides = [1, 1]} : vector<8x32xbf16> to vector<8x8xbf16>
    %cst_36 = arith.constant dense<0.000000e+00> : vector<8x8xf32>
    %67 = tpu.matmul %64, %65, %cst_36 {dimension_numbers = #tpu.dot_dimension_numbers<[1], [1], [0], [0], [0, 0, 1, 0], [], []>} : vector<8x8xbf16>, vector<8x8xbf16>, vector<8x8xf32> -> vector<8x8xf32>
    %cst_37 = arith.constant dense<0xFF800000> : vector<8xf32>
    %68 = vector.multi_reduction <maximumf>, %67, %cst_37 [1] : vector<8x8xf32> to vector<8xf32>
    %69 = vector.shape_cast %68 : vector<8xf32> to vector<8x1xf32>
    %70 = vector.broadcast %69 : vector<8x1xf32> to vector<8x8xf32>
    %71 = arith.subf %67, %70 : vector<8x8xf32>
    %72 = math.exp %71 : vector<8x8xf32>
    %cst_38 = arith.constant dense<0.000000e+00> : vector<8xf32>
    %73 = vector.multi_reduction <add>, %72, %cst_38 [1] : vector<8x8xf32> to vector<8xf32>
    %74 = vector.shape_cast %73 : vector<8xf32> to vector<8x1xf32>
    %75 = tpu.reciprocal %74 {approx = true} : vector<8x1xf32> -> vector<8x1xf32>
    %76 = vector.broadcast %75 : vector<8x1xf32> to vector<8x8xf32>
    %77 = arith.mulf %72, %76 : vector<8x8xf32>
    %78 = arith.truncf %77 : vector<8x8xf32> to vector<8x8xbf16>
    %cst_39 = arith.constant dense<0.000000e+00> : vector<8x8xf32>
    %79 = tpu.matmul %78, %66, %cst_39 {dimension_numbers = #tpu.dot_dimension_numbers<[1], [0], [0], [1], [0, 0, 1, 1], [], []>} : vector<8x8xbf16>, vector<8x8xbf16>, vector<8x8xf32> -> vector<8x8xf32>
    %80 = vector.extract_strided_slice %29 {offsets = [0, 24], sizes = [8, 8], strides = [1, 1]} : vector<8x32xbf16> to vector<8x8xbf16>
    %81 = vector.extract_strided_slice %30 {offsets = [0, 24], sizes = [8, 8], strides = [1, 1]} : vector<8x32xbf16> to vector<8x8xbf16>
    %82 = vector.extract_strided_slice %31 {offsets = [0, 24], sizes = [8, 8], strides = [1, 1]} : vector<8x32xbf16> to vector<8x8xbf16>
    %cst_40 = arith.constant dense<0.000000e+00> : vector<8x8xf32>
    %83 = tpu.matmul %80, %81, %cst_40 {dimension_numbers = #tpu.dot_dimension_numbers<[1], [1], [0], [0], [0, 0, 1, 0], [], []>} : vector<8x8xbf16>, vector<8x8xbf16>, vector<8x8xf32> -> vector<8x8xf32>
    %cst_41 = arith.constant dense<0xFF800000> : vector<8xf32>
    %84 = vector.multi_reduction <maximumf>, %83, %cst_41 [1] : vector<8x8xf32> to vector<8xf32>
    %85 = vector.shape_cast %84 : vector<8xf32> to vector<8x1xf32>
    %86 = vector.broadcast %85 : vector<8x1xf32> to vector<8x8xf32>
    %87 = arith.subf %83, %86 : vector<8x8xf32>
    %88 = math.exp %87 : vector<8x8xf32>
    %cst_42 = arith.constant dense<0.000000e+00> : vector<8xf32>
    %89 = vector.multi_reduction <add>, %88, %cst_42 [1] : vector<8x8xf32> to vector<8xf32>
    %90 = vector.shape_cast %89 : vector<8xf32> to vector<8x1xf32>
    %91 = tpu.reciprocal %90 {approx = true} : vector<8x1xf32> -> vector<8x1xf32>
    %92 = vector.broadcast %91 : vector<8x1xf32> to vector<8x8xf32>
    %93 = arith.mulf %88, %92 : vector<8x8xf32>
    %94 = arith.truncf %93 : vector<8x8xf32> to vector<8x8xbf16>
    %cst_43 = arith.constant dense<0.000000e+00> : vector<8x8xf32>
    %95 = tpu.matmul %94, %82, %cst_43 {dimension_numbers = #tpu.dot_dimension_numbers<[1], [0], [0], [1], [0, 0, 1, 1], [], []>} : vector<8x8xbf16>, vector<8x8xbf16>, vector<8x8xf32> -> vector<8x8xf32>
    %96 = tpu.concatenate %47, %63, %79, %95 in 1 : vector<8x8xf32>, vector<8x8xf32>, vector<8x8xf32>, vector<8x8xf32> -> vector<8x32xf32>
    %97 = arith.truncf %96 : vector<8x32xf32> to vector<8x32xbf16>
    %c0_44 = arith.constant 0 : index
    %c0_45 = arith.constant 0 : index
    %98 = vector.load %arg12[%c0_44, %c0_45] : memref<32x32xbf16, #tpu.memory_space<vmem>>, vector<32x32xbf16>
    %cst_46 = arith.constant dense<0.000000e+00> : vector<8x32xf32>
    %99 = tpu.matmul %97, %98, %cst_46 {dimension_numbers = #tpu.dot_dimension_numbers<[1], [0], [0], [1], [0, 0, 1, 1], [], []>} : vector<8x32xbf16>, vector<32x32xbf16>, vector<8x32xf32> -> vector<8x32xf32>
    %c0_47 = arith.constant 0 : index
    %c0_48 = arith.constant 0 : index
    %100 = vector.load %arg13[%c0_47, %c0_48] : memref<1x32xf32, #tpu.memory_space<vmem>>, vector<1x32xf32>
    %101 = vector.broadcast %100 : vector<1x32xf32> to vector<8x32xf32>
    %102 = arith.addf %99, %101 : vector<8x32xf32>
    %103 = arith.addf %1, %102 : vector<8x32xf32>
    %c0_49 = arith.constant 0 : index
    %c0_50 = arith.constant 0 : index
    %104 = vector.load %arg14[%c0_49, %c0_50] : memref<1x32xf32, #tpu.memory_space<vmem>>, vector<1x32xf32>
    %105 = vector.broadcast %104 : vector<1x32xf32> to vector<8x32xf32>
    %106 = arith.mulf %103, %105 : vector<8x32xf32>
    %c0_51 = arith.constant 0 : index
    %c0_52 = arith.constant 0 : index
    %107 = vector.load %arg15[%c0_51, %c0_52] : memref<1x32xf32, #tpu.memory_space<vmem>>, vector<1x32xf32>
    %108 = vector.broadcast %107 : vector<1x32xf32> to vector<8x32xf32>
    %109 = arith.addf %106, %108 : vector<8x32xf32>
    %110 = arith.addf %109, %5 : vector<8x32xf32>
    %111 = arith.addf %3, %7 : vector<16x32xf32>
    %112 = arith.truncf %110 : vector<8x32xf32> to vector<8x32xbf16>
    %c0_53 = arith.constant 0 : index
    %c0_54 = arith.constant 0 : index
    %113 = vector.load %arg16[%c0_53, %c0_54] : memref<32x32xbf16, #tpu.memory_space<vmem>>, vector<32x32xbf16>
    %cst_55 = arith.constant dense<0.000000e+00> : vector<8x32xf32>
    %114 = tpu.matmul %112, %113, %cst_55 {dimension_numbers = #tpu.dot_dimension_numbers<[1], [0], [0], [1], [0, 0, 1, 1], [], []>} : vector<8x32xbf16>, vector<32x32xbf16>, vector<8x32xf32> -> vector<8x32xf32>
    %c0_56 = arith.constant 0 : index
    %c0_57 = arith.constant 0 : index
    %115 = vector.load %arg19[%c0_56, %c0_57] : memref<1x32xf32, #tpu.memory_space<vmem>>, vector<1x32xf32>
    %116 = vector.broadcast %115 : vector<1x32xf32> to vector<8x32xf32>
    %117 = arith.addf %114, %116 : vector<8x32xf32>
    %118 = arith.truncf %111 : vector<16x32xf32> to vector<16x32xbf16>
    %c0_58 = arith.constant 0 : index
    %c0_59 = arith.constant 0 : index
    %119 = vector.load %arg17[%c0_58, %c0_59] : memref<32x32xbf16, #tpu.memory_space<vmem>>, vector<32x32xbf16>
    %cst_60 = arith.constant dense<0.000000e+00> : vector<16x32xf32>
    %120 = tpu.matmul %118, %119, %cst_60 {dimension_numbers = #tpu.dot_dimension_numbers<[1], [0], [0], [1], [0, 0, 1, 1], [], []>} : vector<16x32xbf16>, vector<32x32xbf16>, vector<16x32xf32> -> vector<16x32xf32>
    %c0_61 = arith.constant 0 : index
    %c0_62 = arith.constant 0 : index
    %121 = vector.load %arg20[%c0_61, %c0_62] : memref<1x32xf32, #tpu.memory_space<vmem>>, vector<1x32xf32>
    %122 = vector.broadcast %121 : vector<1x32xf32> to vector<16x32xf32>
    %123 = arith.addf %120, %122 : vector<16x32xf32>
    %124 = arith.truncf %3 : vector<16x32xf32> to vector<16x32xbf16>
    %c0_63 = arith.constant 0 : index
    %c0_64 = arith.constant 0 : index
    %125 = vector.load %arg18[%c0_63, %c0_64] : memref<32x32xbf16, #tpu.memory_space<vmem>>, vector<32x32xbf16>
    %cst_65 = arith.constant dense<0.000000e+00> : vector<16x32xf32>
    %126 = tpu.matmul %124, %125, %cst_65 {dimension_numbers = #tpu.dot_dimension_numbers<[1], [0], [0], [1], [0, 0, 1, 1], [], []>} : vector<16x32xbf16>, vector<32x32xbf16>, vector<16x32xf32> -> vector<16x32xf32>
    %c0_66 = arith.constant 0 : index
    %c0_67 = arith.constant 0 : index
    %127 = vector.load %arg21[%c0_66, %c0_67] : memref<1x32xf32, #tpu.memory_space<vmem>>, vector<1x32xf32>
    %128 = vector.broadcast %127 : vector<1x32xf32> to vector<16x32xf32>
    %129 = arith.addf %126, %128 : vector<16x32xf32>
    %130 = arith.truncf %117 : vector<8x32xf32> to vector<8x32xbf16>
    %131 = arith.truncf %123 : vector<16x32xf32> to vector<16x32xbf16>
    %132 = arith.truncf %129 : vector<16x32xf32> to vector<16x32xbf16>
    %133 = vector.shape_cast %9 : vector<1x16xf32> to vector<1x16xf32>
    %134 = vector.broadcast %133 : vector<1x16xf32> to vector<8x16xf32>
    %135 = vector.extract_strided_slice %130 {offsets = [0, 0], sizes = [8, 8], strides = [1, 1]} : vector<8x32xbf16> to vector<8x8xbf16>
    %136 = vector.extract_strided_slice %131 {offsets = [0, 0], sizes = [16, 8], strides = [1, 1]} : vector<16x32xbf16> to vector<16x8xbf16>
    %137 = vector.extract_strided_slice %132 {offsets = [0, 0], sizes = [16, 8], strides = [1, 1]} : vector<16x32xbf16> to vector<16x8xbf16>
    %cst_68 = arith.constant dense<0.000000e+00> : vector<8x16xf32>
    %138 = tpu.matmul %135, %136, %cst_68 {dimension_numbers = #tpu.dot_dimension_numbers<[1], [1], [0], [0], [0, 0, 1, 0], [], []>} : vector<8x8xbf16>, vector<16x8xbf16>, vector<8x16xf32> -> vector<8x16xf32>
    %139 = arith.addf %138, %134 : vector<8x16xf32>
    %cst_69 = arith.constant dense<0xFF800000> : vector<8xf32>
    %140 = vector.multi_reduction <maximumf>, %139, %cst_69 [1] : vector<8x16xf32> to vector<8xf32>
    %141 = vector.shape_cast %140 : vector<8xf32> to vector<8x1xf32>
    %142 = vector.broadcast %141 : vector<8x1xf32> to vector<8x16xf32>
    %143 = arith.subf %139, %142 : vector<8x16xf32>
    %144 = math.exp %143 : vector<8x16xf32>
    %cst_70 = arith.constant dense<0.000000e+00> : vector<8xf32>
    %145 = vector.multi_reduction <add>, %144, %cst_70 [1] : vector<8x16xf32> to vector<8xf32>
    %146 = vector.shape_cast %145 : vector<8xf32> to vector<8x1xf32>
    %147 = tpu.reciprocal %146 {approx = true} : vector<8x1xf32> -> vector<8x1xf32>
    %148 = vector.broadcast %147 : vector<8x1xf32> to vector<8x16xf32>
    %149 = arith.mulf %144, %148 : vector<8x16xf32>
    %150 = arith.truncf %149 : vector<8x16xf32> to vector<8x16xbf16>
    %cst_71 = arith.constant dense<0.000000e+00> : vector<8x8xf32>
    %151 = tpu.matmul %150, %137, %cst_71 {dimension_numbers = #tpu.dot_dimension_numbers<[1], [0], [0], [1], [0, 0, 1, 1], [], []>} : vector<8x16xbf16>, vector<16x8xbf16>, vector<8x8xf32> -> vector<8x8xf32>
    %152 = vector.extract_strided_slice %130 {offsets = [0, 8], sizes = [8, 8], strides = [1, 1]} : vector<8x32xbf16> to vector<8x8xbf16>
    %153 = vector.extract_strided_slice %131 {offsets = [0, 8], sizes = [16, 8], strides = [1, 1]} : vector<16x32xbf16> to vector<16x8xbf16>
    %154 = vector.extract_strided_slice %132 {offsets = [0, 8], sizes = [16, 8], strides = [1, 1]} : vector<16x32xbf16> to vector<16x8xbf16>
    %cst_72 = arith.constant dense<0.000000e+00> : vector<8x16xf32>
    %155 = tpu.matmul %152, %153, %cst_72 {dimension_numbers = #tpu.dot_dimension_numbers<[1], [1], [0], [0], [0, 0, 1, 0], [], []>} : vector<8x8xbf16>, vector<16x8xbf16>, vector<8x16xf32> -> vector<8x16xf32>
    %156 = arith.addf %155, %134 : vector<8x16xf32>
    %cst_73 = arith.constant dense<0xFF800000> : vector<8xf32>
    %157 = vector.multi_reduction <maximumf>, %156, %cst_73 [1] : vector<8x16xf32> to vector<8xf32>
    %158 = vector.shape_cast %157 : vector<8xf32> to vector<8x1xf32>
    %159 = vector.broadcast %158 : vector<8x1xf32> to vector<8x16xf32>
    %160 = arith.subf %156, %159 : vector<8x16xf32>
    %161 = math.exp %160 : vector<8x16xf32>
    %cst_74 = arith.constant dense<0.000000e+00> : vector<8xf32>
    %162 = vector.multi_reduction <add>, %161, %cst_74 [1] : vector<8x16xf32> to vector<8xf32>
    %163 = vector.shape_cast %162 : vector<8xf32> to vector<8x1xf32>
    %164 = tpu.reciprocal %163 {approx = true} : vector<8x1xf32> -> vector<8x1xf32>
    %165 = vector.broadcast %164 : vector<8x1xf32> to vector<8x16xf32>
    %166 = arith.mulf %161, %165 : vector<8x16xf32>
    %167 = arith.truncf %166 : vector<8x16xf32> to vector<8x16xbf16>
    %cst_75 = arith.constant dense<0.000000e+00> : vector<8x8xf32>
    %168 = tpu.matmul %167, %154, %cst_75 {dimension_numbers = #tpu.dot_dimension_numbers<[1], [0], [0], [1], [0, 0, 1, 1], [], []>} : vector<8x16xbf16>, vector<16x8xbf16>, vector<8x8xf32> -> vector<8x8xf32>
    %169 = vector.extract_strided_slice %130 {offsets = [0, 16], sizes = [8, 8], strides = [1, 1]} : vector<8x32xbf16> to vector<8x8xbf16>
    %170 = vector.extract_strided_slice %131 {offsets = [0, 16], sizes = [16, 8], strides = [1, 1]} : vector<16x32xbf16> to vector<16x8xbf16>
    %171 = vector.extract_strided_slice %132 {offsets = [0, 16], sizes = [16, 8], strides = [1, 1]} : vector<16x32xbf16> to vector<16x8xbf16>
    %cst_76 = arith.constant dense<0.000000e+00> : vector<8x16xf32>
    %172 = tpu.matmul %169, %170, %cst_76 {dimension_numbers = #tpu.dot_dimension_numbers<[1], [1], [0], [0], [0, 0, 1, 0], [], []>} : vector<8x8xbf16>, vector<16x8xbf16>, vector<8x16xf32> -> vector<8x16xf32>
    %173 = arith.addf %172, %134 : vector<8x16xf32>
    %cst_77 = arith.constant dense<0xFF800000> : vector<8xf32>
    %174 = vector.multi_reduction <maximumf>, %173, %cst_77 [1] : vector<8x16xf32> to vector<8xf32>
    %175 = vector.shape_cast %174 : vector<8xf32> to vector<8x1xf32>
    %176 = vector.broadcast %175 : vector<8x1xf32> to vector<8x16xf32>
    %177 = arith.subf %173, %176 : vector<8x16xf32>
    %178 = math.exp %177 : vector<8x16xf32>
    %cst_78 = arith.constant dense<0.000000e+00> : vector<8xf32>
    %179 = vector.multi_reduction <add>, %178, %cst_78 [1] : vector<8x16xf32> to vector<8xf32>
    %180 = vector.shape_cast %179 : vector<8xf32> to vector<8x1xf32>
    %181 = tpu.reciprocal %180 {approx = true} : vector<8x1xf32> -> vector<8x1xf32>
    %182 = vector.broadcast %181 : vector<8x1xf32> to vector<8x16xf32>
    %183 = arith.mulf %178, %182 : vector<8x16xf32>
    %184 = arith.truncf %183 : vector<8x16xf32> to vector<8x16xbf16>
    %cst_79 = arith.constant dense<0.000000e+00> : vector<8x8xf32>
    %185 = tpu.matmul %184, %171, %cst_79 {dimension_numbers = #tpu.dot_dimension_numbers<[1], [0], [0], [1], [0, 0, 1, 1], [], []>} : vector<8x16xbf16>, vector<16x8xbf16>, vector<8x8xf32> -> vector<8x8xf32>
    %186 = vector.extract_strided_slice %130 {offsets = [0, 24], sizes = [8, 8], strides = [1, 1]} : vector<8x32xbf16> to vector<8x8xbf16>
    %187 = vector.extract_strided_slice %131 {offsets = [0, 24], sizes = [16, 8], strides = [1, 1]} : vector<16x32xbf16> to vector<16x8xbf16>
    %188 = vector.extract_strided_slice %132 {offsets = [0, 24], sizes = [16, 8], strides = [1, 1]} : vector<16x32xbf16> to vector<16x8xbf16>
    %cst_80 = arith.constant dense<0.000000e+00> : vector<8x16xf32>
    %189 = tpu.matmul %186, %187, %cst_80 {dimension_numbers = #tpu.dot_dimension_numbers<[1], [1], [0], [0], [0, 0, 1, 0], [], []>} : vector<8x8xbf16>, vector<16x8xbf16>, vector<8x16xf32> -> vector<8x16xf32>
    %190 = arith.addf %189, %134 : vector<8x16xf32>
    %cst_81 = arith.constant dense<0xFF800000> : vector<8xf32>
    %191 = vector.multi_reduction <maximumf>, %190, %cst_81 [1] : vector<8x16xf32> to vector<8xf32>
    %192 = vector.shape_cast %191 : vector<8xf32> to vector<8x1xf32>
    %193 = vector.broadcast %192 : vector<8x1xf32> to vector<8x16xf32>
    %194 = arith.subf %190, %193 : vector<8x16xf32>
    %195 = math.exp %194 : vector<8x16xf32>
    %cst_82 = arith.constant dense<0.000000e+00> : vector<8xf32>
    %196 = vector.multi_reduction <add>, %195, %cst_82 [1] : vector<8x16xf32> to vector<8xf32>
    %197 = vector.shape_cast %196 : vector<8xf32> to vector<8x1xf32>
    %198 = tpu.reciprocal %197 {approx = true} : vector<8x1xf32> -> vector<8x1xf32>
    %199 = vector.broadcast %198 : vector<8x1xf32> to vector<8x16xf32>
    %200 = arith.mulf %195, %199 : vector<8x16xf32>
    %201 = arith.truncf %200 : vector<8x16xf32> to vector<8x16xbf16>
    %cst_83 = arith.constant dense<0.000000e+00> : vector<8x8xf32>
    %202 = tpu.matmul %201, %188, %cst_83 {dimension_numbers = #tpu.dot_dimension_numbers<[1], [0], [0], [1], [0, 0, 1, 1], [], []>} : vector<8x16xbf16>, vector<16x8xbf16>, vector<8x8xf32> -> vector<8x8xf32>
    %203 = tpu.concatenate %151, %168, %185, %202 in 1 : vector<8x8xf32>, vector<8x8xf32>, vector<8x8xf32>, vector<8x8xf32> -> vector<8x32xf32>
    %204 = arith.truncf %203 : vector<8x32xf32> to vector<8x32xbf16>
    %c0_84 = arith.constant 0 : index
    %c0_85 = arith.constant 0 : index
    %205 = vector.load %arg22[%c0_84, %c0_85] : memref<32x32xbf16, #tpu.memory_space<vmem>>, vector<32x32xbf16>
    %cst_86 = arith.constant dense<0.000000e+00> : vector<8x32xf32>
    %206 = tpu.matmul %204, %205, %cst_86 {dimension_numbers = #tpu.dot_dimension_numbers<[1], [0], [0], [1], [0, 0, 1, 1], [], []>} : vector<8x32xbf16>, vector<32x32xbf16>, vector<8x32xf32> -> vector<8x32xf32>
    %c0_87 = arith.constant 0 : index
    %c0_88 = arith.constant 0 : index
    %207 = vector.load %arg23[%c0_87, %c0_88] : memref<1x32xf32, #tpu.memory_space<vmem>>, vector<1x32xf32>
    %208 = vector.broadcast %207 : vector<1x32xf32> to vector<8x32xf32>
    %209 = arith.addf %206, %208 : vector<8x32xf32>
    %210 = arith.addf %109, %209 : vector<8x32xf32>
    %c0_89 = arith.constant 0 : index
    %c0_90 = arith.constant 0 : index
    %211 = vector.load %arg24[%c0_89, %c0_90] : memref<1x32xf32, #tpu.memory_space<vmem>>, vector<1x32xf32>
    %212 = vector.broadcast %211 : vector<1x32xf32> to vector<8x32xf32>
    %213 = arith.mulf %210, %212 : vector<8x32xf32>
    %c0_91 = arith.constant 0 : index
    %c0_92 = arith.constant 0 : index
    %214 = vector.load %arg25[%c0_91, %c0_92] : memref<1x32xf32, #tpu.memory_space<vmem>>, vector<1x32xf32>
    %215 = vector.broadcast %214 : vector<1x32xf32> to vector<8x32xf32>
    %216 = arith.addf %213, %215 : vector<8x32xf32>
    %217 = arith.truncf %216 : vector<8x32xf32> to vector<8x32xbf16>
    %c0_93 = arith.constant 0 : index
    %c0_94 = arith.constant 0 : index
    %218 = vector.load %arg26[%c0_93, %c0_94] : memref<32x64xbf16, #tpu.memory_space<vmem>>, vector<32x64xbf16>
    %cst_95 = arith.constant dense<0.000000e+00> : vector<8x64xf32>
    %219 = tpu.matmul %217, %218, %cst_95 {dimension_numbers = #tpu.dot_dimension_numbers<[1], [0], [0], [1], [0, 0, 1, 1], [], []>} : vector<8x32xbf16>, vector<32x64xbf16>, vector<8x64xf32> -> vector<8x64xf32>
    %c0_96 = arith.constant 0 : index
    %c0_97 = arith.constant 0 : index
    %220 = vector.load %arg27[%c0_96, %c0_97] : memref<1x64xf32, #tpu.memory_space<vmem>>, vector<1x64xf32>
    %221 = vector.broadcast %220 : vector<1x64xf32> to vector<8x64xf32>
    %222 = arith.addf %219, %221 : vector<8x64xf32>
    %cst_98 = arith.constant 0.000000e+00 : f32
    %223 = vector.broadcast %cst_98 : f32 to vector<8x64xf32>
    %224 = arith.maximumf %222, %223 : vector<8x64xf32>
    %225 = arith.truncf %224 : vector<8x64xf32> to vector<8x64xbf16>
    %c0_99 = arith.constant 0 : index
    %c0_100 = arith.constant 0 : index
    %226 = vector.load %arg28[%c0_99, %c0_100] : memref<64x32xbf16, #tpu.memory_space<vmem>>, vector<64x32xbf16>
    %cst_101 = arith.constant dense<0.000000e+00> : vector<8x32xf32>
    %227 = tpu.matmul %225, %226, %cst_101 {dimension_numbers = #tpu.dot_dimension_numbers<[1], [0], [0], [1], [0, 0, 1, 1], [], []>} : vector<8x64xbf16>, vector<64x32xbf16>, vector<8x32xf32> -> vector<8x32xf32>
    %c0_102 = arith.constant 0 : index
    %c0_103 = arith.constant 0 : index
    %228 = vector.load %arg29[%c0_102, %c0_103] : memref<1x32xf32, #tpu.memory_space<vmem>>, vector<1x32xf32>
    %229 = vector.broadcast %228 : vector<1x32xf32> to vector<8x32xf32>
    %230 = arith.addf %227, %229 : vector<8x32xf32>
    %231 = arith.addf %216, %230 : vector<8x32xf32>
    %c0_104 = arith.constant 0 : index
    %c0_105 = arith.constant 0 : index
    %232 = vector.load %arg30[%c0_104, %c0_105] : memref<1x32xf32, #tpu.memory_space<vmem>>, vector<1x32xf32>
    %233 = vector.broadcast %232 : vector<1x32xf32> to vector<8x32xf32>
    %234 = arith.mulf %231, %233 : vector<8x32xf32>
    %c0_106 = arith.constant 0 : index
    %c0_107 = arith.constant 0 : index
    %235 = vector.load %arg31[%c0_106, %c0_107] : memref<1x32xf32, #tpu.memory_space<vmem>>, vector<1x32xf32>
    %236 = vector.broadcast %235 : vector<1x32xf32> to vector<8x32xf32>
    %237 = arith.addf %234, %236 : vector<8x32xf32>
    %c0_108 = arith.constant 0 : index
    %c0_109 = arith.constant 0 : index
    %c0_110 = arith.constant 0 : index
    %238 = vector.load %arg32[%c0_108, %c0_109, %c0_110] : memref<1x8x32xf32, #tpu.memory_space<vmem>>, vector<1x8x32xf32>
    %239 = vector.shape_cast %238 : vector<1x8x32xf32> to vector<8x32xf32>
    %240 = vector.shape_cast %237 : vector<8x32xf32> to vector<1x8x32xf32>
    tpu.vector_store %arg32[%c0_108, %c0_109, %c0_110], %240 {strides = array<i32>} : memref<1x8x32xf32, #tpu.memory_space<vmem>>, vector<1x8x32xf32>,
    return
  }
  func.func @transform_0(%arg0: i32) -> (i32, i32, i32) {
    %c0_i32 = arith.constant 0 : i32
    %c0_i32_0 = arith.constant 0 : i32
    %c0_i32_1 = arith.constant 0 : i32
    return %arg0, %c0_i32, %c0_i32_0 : i32, i32, i32
  }
  func.func @transform_1(%arg0: i32) -> (i32, i32, i32) {
    %c0_i32 = arith.constant 0 : i32
    %c0_i32_0 = arith.constant 0 : i32
    %c0_i32_1 = arith.constant 0 : i32
    return %arg0, %c0_i32, %c0_i32_0 : i32, i32, i32
  }
  func.func @transform_2(%arg0: i32) -> (i32, i32, i32) {
    %c0_i32 = arith.constant 0 : i32
    %c0_i32_0 = arith.constant 0 : i32
    %c0_i32_1 = arith.constant 0 : i32
    return %arg0, %c0_i32, %c0_i32_0 : i32, i32, i32
  }
  func.func @transform_3(%arg0: i32) -> (i32, i32, i32) {
    %c0_i32 = arith.constant 0 : i32
    %c0_i32_0 = arith.constant 0 : i32
    %c0_i32_1 = arith.constant 0 : i32
    return %arg0, %c0_i32, %c0_i32_0 : i32, i32, i32
  }
  func.func @transform_4(%arg0: i32) -> (i32, i32, i32) {
    %c0_i32 = arith.constant 0 : i32
    %c0_i32_0 = arith.constant 0 : i32
    %c0_i32_1 = arith.constant 0 : i32
    return %arg0, %c0_i32, %c0_i32_0 : i32, i32, i32
  }
  func.func @transform_5(%arg0: i32) -> (i32, i32) {
    %c0_i32 = arith.constant 0 : i32
    %c0_i32_0 = arith.constant 0 : i32
    %c0_i32_1 = arith.constant 0 : i32
    return %c0_i32, %c0_i32_0 : i32, i32
  }
  func.func @transform_6(%arg0: i32) -> (i32, i32) {
    %c0_i32 = arith.constant 0 : i32
    %c0_i32_0 = arith.constant 0 : i32
    %c0_i32_1 = arith.constant 0 : i32
    return %c0_i32, %c0_i32_0 : i32, i32
  }
  func.func @transform_7(%arg0: i32) -> (i32, i32) {
    %c0_i32 = arith.constant 0 : i32
    %c0_i32_0 = arith.constant 0 : i32
    %c0_i32_1 = arith.constant 0 : i32
    return %c0_i32, %c0_i32_0 : i32, i32
  }
  func.func @transform_8(%arg0: i32) -> (i32, i32) {
    %c0_i32 = arith.constant 0 : i32
    %c0_i32_0 = arith.constant 0 : i32
    %c0_i32_1 = arith.constant 0 : i32
    return %c0_i32, %c0_i32_0 : i32, i32
  }
  func.func @transform_9(%arg0: i32) -> (i32, i32) {
    %c0_i32 = arith.constant 0 : i32
    %c0_i32_0 = arith.constant 0 : i32
    %c0_i32_1 = arith.constant 0 : i32
    return %c0_i32, %c0_i32_0 : i32, i32
  }
  func.func @transform_10(%arg0: i32) -> (i32, i32) {
    %c0_i32 = arith.constant 0 : i32
    %c0_i32_0 = arith.constant 0 : i32
    %c0_i32_1 = arith.constant 0 : i32
    return %c0_i32, %c0_i32_0 : i32, i32
  }
  func.func @transform_11(%arg0: i32) -> (i32, i32) {
    %c0_i32 = arith.constant 0 : i32
    %c0_i32_0 = arith.constant 0 : i32
    %c0_i32_1 = arith.constant 0 : i32
    return %c0_i32, %c0_i32_0 : i32, i32
  }
  func.func @transform_12(%arg0: i32) -> (i32, i32) {
    %c0_i32 = arith.constant 0 : i32
    %c0_i32_0 = arith.constant 0 : i32
    %c0_i32_1 = arith.constant 0 : i32
    return %c0_i32, %c0_i32_0 : i32, i32
  }
  func.func @transform_13(%arg0: i32) -> (i32, i32) {
    %c0_i32 = arith.constant 0 : i32
    %c0_i32_0 = arith.constant 0 : i32
    %c0_i32_1 = arith.constant 0 : i32
    return %c0_i32, %c0_i32_0 : i32, i32
  }
  func.func @transform_14(%arg0: i32) -> (i32, i32) {
    %c0_i32 = arith.constant 0 : i32
    %c0_i32_0 = arith.constant 0 : i32
    %c0_i32_1 = arith.constant 0 : i32
    return %c0_i32, %c0_i32_0 : i32, i32
  }
  func.func @transform_15(%arg0: i32) -> (i32, i32) {
    %c0_i32 = arith.constant 0 : i32
    %c0_i32_0 = arith.constant 0 : i32
    %c0_i32_1 = arith.constant 0 : i32
    return %c0_i32, %c0_i32_0 : i32, i32
  }
  func.func @transform_16(%arg0: i32) -> (i32, i32) {
    %c0_i32 = arith.constant 0 : i32
    %c0_i32_0 = arith.constant 0 : i32
    %c0_i32_1 = arith.constant 0 : i32
    return %c0_i32, %c0_i32_0 : i32, i32
  }
  func.func @transform_17(%arg0: i32) -> (i32, i32) {
    %c0_i32 = arith.constant 0 : i32
    %c0_i32_0 = arith.constant 0 : i32
    %c0_i32_1 = arith.constant 0 : i32
    return %c0_i32, %c0_i32_0 : i32, i32
  }
  func.func @transform_18(%arg0: i32) -> (i32, i32) {
    %c0_i32 = arith.constant 0 : i32
    %c0_i32_0 = arith.constant 0 : i32
    %c0_i32_1 = arith.constant 0 : i32
    return %c0_i32, %c0_i32_0 : i32, i32
  }
  func.func @transform_19(%arg0: i32) -> (i32, i32) {
    %c0_i32 = arith.constant 0 : i32
    %c0_i32_0 = arith.constant 0 : i32
    %c0_i32_1 = arith.constant 0 : i32
    return %c0_i32, %c0_i32_0 : i32, i32
  }
  func.func @transform_20(%arg0: i32) -> (i32, i32) {
    %c0_i32 = arith.constant 0 : i32
    %c0_i32_0 = arith.constant 0 : i32
    %c0_i32_1 = arith.constant 0 : i32
    return %c0_i32, %c0_i32_0 : i32, i32
  }
  func.func @transform_21(%arg0: i32) -> (i32, i32) {
    %c0_i32 = arith.constant 0 : i32
    %c0_i32_0 = arith.constant 0 : i32
    %c0_i32_1 = arith.constant 0 : i32
    return %c0_i32, %c0_i32_0 : i32, i32
  }
  func.func @transform_22(%arg0: i32) -> (i32, i32) {
    %c0_i32 = arith.constant 0 : i32
    %c0_i32_0 = arith.constant 0 : i32
    %c0_i32_1 = arith.constant 0 : i32
    return %c0_i32, %c0_i32_0 : i32, i32
  }
  func.func @transform_23(%arg0: i32) -> (i32, i32) {
    %c0_i32 = arith.constant 0 : i32
    %c0_i32_0 = arith.constant 0 : i32
    %c0_i32_1 = arith.constant 0 : i32
    return %c0_i32, %c0_i32_0 : i32, i32
  }
  func.func @transform_24(%arg0: i32) -> (i32, i32) {
    %c0_i32 = arith.constant 0 : i32
    %c0_i32_0 = arith.constant 0 : i32
    %c0_i32_1 = arith.constant 0 : i32
    return %c0_i32, %c0_i32_0 : i32, i32
  }
  func.func @transform_25(%arg0: i32) -> (i32, i32) {
    %c0_i32 = arith.constant 0 : i32
    %c0_i32_0 = arith.constant 0 : i32
    %c0_i32_1 = arith.constant 0 : i32
    return %c0_i32, %c0_i32_0 : i32, i32
  }
  func.func @transform_26(%arg0: i32) -> (i32, i32) {
    %c0_i32 = arith.constant 0 : i32
    %c0_i32_0 = arith.constant 0 : i32
    %c0_i32_1 = arith.constant 0 : i32
    return %c0_i32, %c0_i32_0 : i32, i32
  }
  func.func @transform_27(%arg0: i32) -> (i32, i32) {
    %c0_i32 = arith.constant 0 : i32
    %c0_i32_0 = arith.constant 0 : i32
    %c0_i32_1 = arith.constant 0 : i32
    return %c0_i32, %c0_i32_0 : i32, i32
  }
  func.func @transform_28(%arg0: i32) -> (i32, i32) {
    %c0_i32 = arith.constant 0 : i32
    %c0_i32_0 = arith.constant 0 : i32
    %c0_i32_1 = arith.constant 0 : i32
    return %c0_i32, %c0_i32_0 : i32, i32
  }
  func.func @transform_29(%arg0: i32) -> (i32, i32) {
    %c0_i32 = arith.constant 0 : i32
    %c0_i32_0 = arith.constant 0 : i32
    %c0_i32_1 = arith.constant 0 : i32
    return %c0_i32, %c0_i32_0 : i32, i32
  }
  func.func @transform_30(%arg0: i32) -> (i32, i32) {
    %c0_i32 = arith.constant 0 : i32
    %c0_i32_0 = arith.constant 0 : i32
    %c0_i32_1 = arith.constant 0 : i32
    return %c0_i32, %c0_i32_0 : i32, i32
  }
  func.func @transform_31(%arg0: i32) -> (i32, i32, i32) {
    %c0_i32 = arith.constant 0 : i32
    %c0_i32_0 = arith.constant 0 : i32
    %c0_i32_1 = arith.constant 0 : i32
    return %arg0, %c0_i32, %c0_i32_0 : i32, i32, i32
  }
}

</mosaic_0001>

<llo_original>
// kernel: transformer_forward.7
$region0: #{transformer_forward.7}
  #allocation0 [shape = 'u32[]', space=smem, size = 0x4, offset = 0x4, fixed_abs, tag = 'smem constant byte address 0x4 - core index']
  #allocation1 [shape = 'u32[144,128]{1,0:T(1,128)}', space=vmem, size = 0x12000, scoped, tag = 'internal scratch']
  %s0 = inlined_call_operand.vmem [shape: f32[2,16,32], index: 0, kind: input, shape index: {}]
  %s1 = inlined_call_operand.vmem [shape: f32[2,16,1], index: 1, kind: input, shape index: {}]
  %s2 = inlined_call_operand.vmem [shape: bf16[32,64], index: 2, kind: input, shape index: {}]
  %s3 = inlined_call_operand.vmem [shape: bf16[32,64], index: 3, kind: input, shape index: {}]
  %s4 = inlined_call_operand.vmem [shape: f32[1,64], index: 4, kind: input, shape index: {}]
  %s5 = inlined_call_operand.vmem [shape: f32[1,64], index: 5, kind: input, shape index: {}]
  %s6 = inlined_call_operand.vmem [shape: bf16[64,32], index: 6, kind: input, shape index: {}]
  %s7 = inlined_call_operand.vmem [shape: f32[1,32], index: 7, kind: input, shape index: {}]
  %s8 = inlined_call_operand.vmem [shape: f32[2,1,32], index: 8, kind: output, shape index: {}]
  %s9 = sld [smem:[#allocation0]]
  $region65: #{transformer_forward.7} parent=0
    _
  %s11 = ssub.s32 1, %s9
  %s12 = scalar_select 0, %s11, %s9
  loop: start=0, step=1, limit=4
  $region2: #{transformer_forward.7} parent=0 // loop_pre_header
    _
  $region3: #{transformer_forward.7} parent=0 // loop_header
    %s14 = sphi 0, %s18
    %p15 = scmp.ge.s32.totalorder %s14, 4
    %s24 = sphi 0, %s26
    %s27 = sphi 0, %s24
    %s28 = sphi 0, %s27
    %s44 = sphi 0, %s28
    %s50 = sphi 0, %s52
    %s53 = sphi 0, %s50
    %s54 = sphi 0, %s53
    %s70 = sphi 0, %s54
    %s74 = sphi 0, %s74
    %s76 = sphi 0, %s74
    %s77 = sphi 0, %s76
    %s91 = sphi 0, %s77
    %s95 = sphi 0, %s95
    %s97 = sphi 0, %s95
    %s98 = sphi 0, %s97
    %s112 = sphi 0, %s98
    %s116 = sphi 0, %s116
    %s118 = sphi 0, %s116
    %s119 = sphi 0, %s118
    %s133 = sphi 0, %s119
    %s137 = sphi 0, %s137
    %s139 = sphi 0, %s137
    %s140 = sphi 0, %s139
    %s154 = sphi 0, %s140
    %s158 = sphi 0, %s158
    %s160 = sphi 0, %s158
    %s161 = sphi 0, %s160
    %s175 = sphi 0, %s161
    %s179 = sphi 0, %s179
    %s181 = sphi 0, %s179
    %s182 = sphi 0, %s181
    %s196 = sphi 0, %s182
    %s202 = sphi 0, %s204
    %s205 = sphi 0, %s202
    %s206 = sphi 0, %s205
    %s222 = sphi 0, %s206
  $region4: #{transformer_forward.7} parent=0 // loop_header_branch
    %17 = sbr.rel (%p15) target = $region8
  $region5: #{transformer_forward.7} parent=0 // loop_body
    %s19 = ssub.s32 %s14, 1
    %s20 = ssub.s32 %s14, 2
    %s21 = sadd.s32 %s14, 1
    %s22 = ssub.s32 %s14, %s21
    %p23 = scmp.eq.s32.totalorder %s22, 0
    %s25 = sadd.s32 %s24, 1
    %s26 = scalar_select %p23, %s24, %s25
    %p29 = pneg %p23
    %p30 = scmp.eq.s32.totalorder %s14, 1
    %p31 = por %p29, %p30
    %p32 = scmp.ne.s32.totalorder %s24, %s27
    %p33 = scmp.eq.s32.totalorder %s14, 0
    %p34 = por %p32, %p33
    %p35 = scmp.ne.s32.totalorder %s24, %s27
    %p36 = scmp.eq.s32.totalorder %s19, 1
    %p37 = por %p35, %p36
    %p38 = scmp.ne.s32.totalorder %s27, %s28
    %p39 = scmp.eq.s32.totalorder %s19, 0
    %p40 = por %p38, %p39
    %p41 = scmp.ne.s32.totalorder %s27, %s28
    %p42 = scmp.eq.s32.totalorder %s20, 1
    %p43 = por %p41, %p42
    %p45 = scmp.ne.s32.totalorder %s28, %s44
    %p46 = scmp.eq.s32.totalorder %s20, 0
    %p47 = por %p45, %p46
    %s48 = ssub.s32 %s14, %s21
    %p49 = scmp.eq.s32.totalorder %s48, 0
    %s51 = sadd.s32 %s50, 1
    %s52 = scalar_select %p49, %s50, %s51
    %p55 = pneg %p49
    %p56 = scmp.eq.s32.totalorder %s14, 1
    %p57 = por %p55, %p56
    %p58 = scmp.ne.s32.totalorder %s50, %s53
    %p59 = scmp.eq.s32.totalorder %s14, 0
    %p60 = por %p58, %p59
    %p61 = scmp.ne.s32.totalorder %s50, %s53
    %p62 = scmp.eq.s32.totalorder %s19, 1
    %p63 = por %p61, %p62
    %p64 = scmp.ne.s32.totalorder %s53, %s54
    %p65 = scmp.eq.s32.totalorder %s19, 0
    %p66 = por %p64, %p65
    %p67 = scmp.ne.s32.totalorder %s53, %s54
    %p68 = scmp.eq.s32.totalorder %s20, 1
    %p69 = por %p67, %p68
    %p71 = scmp.ne.s32.totalorder %s54, %s70
    %p72 = scmp.eq.s32.totalorder %s20, 0
    %p73 = por %p71, %p72
    %s75 = sadd.s32 %s74, 1
    %p78 = scmp.eq.s32.totalorder %s14, 1
    %p79 = scmp.ne.s32.totalorder %s74, %s76
    %p80 = scmp.eq.s32.totalorder %s14, 0
    %p81 = por %p79, %p80
    %p82 = scmp.ne.s32.totalorder %s74, %s76
    %p83 = scmp.eq.s32.totalorder %s19, 1
    %p84 = por %p82, %p83
    %p85 = scmp.ne.s32.totalorder %s76, %s77
    %p86 = scmp.eq.s32.totalorder %s19, 0
    %p87 = por %p85, %p86
    %p88 = scmp.ne.s32.totalorder %s76, %s77
    %p89 = scmp.eq.s32.totalorder %s20, 1
    %p90 = por %p88, %p89
    %p92 = scmp.ne.s32.totalorder %s77, %s91
    %p93 = scmp.eq.s32.totalorder %s20, 0
    %p94 = por %p92, %p93
    %s96 = sadd.s32 %s95, 1
    %p99 = scmp.eq.s32.totalorder %s14, 1
    %p100 = scmp.ne.s32.totalorder %s95, %s97
    %p101 = scmp.eq.s32.totalorder %s14, 0
    %p102 = por %p100, %p101
    %p103 = scmp.ne.s32.totalorder %s95, %s97
    %p104 = scmp.eq.s32.totalorder %s19, 1
    %p105 = por %p103, %p104
    %p106 = scmp.ne.s32.totalorder %s97, %s98
    %p107 = scmp.eq.s32.totalorder %s19, 0
    %p108 = por %p106, %p107
    %p109 = scmp.ne.s32.totalorder %s97, %s98
    %p110 = scmp.eq.s32.totalorder %s20, 1
    %p111 = por %p109, %p110
    %p113 = scmp.ne.s32.totalorder %s98, %s112
    %p114 = scmp.eq.s32.totalorder %s20, 0
    %p115 = por %p113, %p114
    %s117 = sadd.s32 %s116, 1
    %p120 = scmp.eq.s32.totalorder %s14, 1
    %p121 = scmp.ne.s32.totalorder %s116, %s118
    %p122 = scmp.eq.s32.totalorder %s14, 0
    %p123 = por %p121, %p122
    %p124 = scmp.ne.s32.totalorder %s116, %s118
    %p125 = scmp.eq.s32.totalorder %s19, 1
    %p126 = por %p124, %p125
    %p127 = scmp.ne.s32.totalorder %s118, %s119
    %p128 = scmp.eq.s32.totalorder %s19, 0
    %p129 = por %p127, %p128
    %p130 = scmp.ne.s32.totalorder %s118, %s119
    %p131 = scmp.eq.s32.totalorder %s20, 1
    %p132 = por %p130, %p131
    %p134 = scmp.ne.s32.totalorder %s119, %s133
    %p135 = scmp.eq.s32.totalorder %s20, 0
    %p136 = por %p134, %p135
    %s138 = sadd.s32 %s137, 1
    %p141 = scmp.eq.s32.totalorder %s14, 1
    %p142 = scmp.ne.s32.totalorder %s137, %s139
    %p143 = scmp.eq.s32.totalorder %s14, 0
    %p144 = por %p142, %p143
    %p145 = scmp.ne.s32.totalorder %s137, %s139
    %p146 = scmp.eq.s32.totalorder %s19, 1
    %p147 = por %p145, %p146
    %p148 = scmp.ne.s32.totalorder %s139, %s140
    %p149 = scmp.eq.s32.totalorder %s19, 0
    %p150 = por %p148, %p149
    %p151 = scmp.ne.s32.totalorder %s139, %s140
    %p152 = scmp.eq.s32.totalorder %s20, 1
    %p153 = por %p151, %p152
    %p155 = scmp.ne.s32.totalorder %s140, %s154
    %p156 = scmp.eq.s32.totalorder %s20, 0
    %p157 = por %p155, %p156
    %s159 = sadd.s32 %s158, 1
    %p162 = scmp.eq.s32.totalorder %s14, 1
    %p163 = scmp.ne.s32.totalorder %s158, %s160
    %p164 = scmp.eq.s32.totalorder %s14, 0
    %p165 = por %p163, %p164
    %p166 = scmp.ne.s32.totalorder %s158, %s160
    %p167 = scmp.eq.s32.totalorder %s19, 1
    %p168 = por %p166, %p167
    %p169 = scmp.ne.s32.totalorder %s160, %s161
    %p170 = scmp.eq.s32.totalorder %s19, 0
    %p171 = por %p169, %p170
    %p172 = scmp.ne.s32.totalorder %s160, %s161
    %p173 = scmp.eq.s32.totalorder %s20, 1
    %p174 = por %p172, %p173
    %p176 = scmp.ne.s32.totalorder %s161, %s175
    %p177 = scmp.eq.s32.totalorder %s20, 0
    %p178 = por %p176, %p177
    %s180 = sadd.s32 %s179, 1
    %p183 = scmp.eq.s32.totalorder %s14, 1
    %p184 = scmp.ne.s32.totalorder %s179, %s181
    %p185 = scmp.eq.s32.totalorder %s14, 0
    %p186 = por %p184, %p185
    %p187 = scmp.ne.s32.totalorder %s179, %s181
    %p188 = scmp.eq.s32.totalorder %s19, 1
    %p189 = por %p187, %p188
    %p190 = scmp.ne.s32.totalorder %s181, %s182
    %p191 = scmp.eq.s32.totalorder %s19, 0
    %p192 = por %p190, %p191
    %p193 = scmp.ne.s32.totalorder %s181, %s182
    %p194 = scmp.eq.s32.totalorder %s20, 1
    %p195 = por %p193, %p194
    %p197 = scmp.ne.s32.totalorder %s182, %s196
    %p198 = scmp.eq.s32.totalorder %s20, 0
    %p199 = por %p197, %p198
    %s200 = ssub.s32 %s14, %s21
    %p201 = scmp.eq.s32.totalorder %s200, 0
    %s203 = sadd.s32 %s202, 1
    %s204 = scalar_select %p201, %s202, %s203
    %p207 = pneg %p201
    %p208 = scmp.eq.s32.totalorder %s14, 1
    %p209 = por %p207, %p208
    %p210 = scmp.ne.s32.totalorder %s202, %s205
    %p211 = scmp.eq.s32.totalorder %s14, 0
    %p212 = por %p210, %p211
    %p213 = scmp.ne.s32.totalorder %s202, %s205
    %p214 = scmp.eq.s32.totalorder %s19, 1
    %p215 = por %p213, %p214
    %p216 = scmp.ne.s32.totalorder %s205, %s206
    %p217 = scmp.eq.s32.totalorder %s19, 0
    %p218 = por %p216, %p217
    %p219 = scmp.ne.s32.totalorder %s205, %s206
    %p220 = scmp.eq.s32.totalorder %s20, 1
    %p221 = por %p219, %p220
    %p223 = scmp.ne.s32.totalorder %s206, %s222
    %p224 = scmp.eq.s32.totalorder %s20, 0
    %p225 = por %p223, %p224
    %p226 = scmp.le.s32.totalorder 1, %s14
    %p227 = scmp.lt.s32.totalorder %s14, 3
    %p228 = pnand %p226, %p227
    %p229 = pneg %p228
    // Predicated region
    $region9: #{transformer_forward.7} parent=5 // pred_check
      _
    $region10: #{transformer_forward.7} parent=5 // pred_check_branch
      %231 = sbr.rel (%p228) target = $region12
    $region11: #{transformer_forward.7} parent=5 // pred_region
      %s232 = ssub.s32 %s14, 1
      // Predicated region
      $region13: #{transformer_forward.7} parent=11 // pred_check
        %p233 = pneg %p87
      $region14: #{transformer_forward.7} parent=11 // pred_check_branch
        %235 = sbr.rel (%p233) target = $region16
      $region15: #{transformer_forward.7} parent=11 // pred_region
        _
      $region16: #{transformer_forward.7} parent=11 // pred_fallthru
        _
      // Predicated region
      $region17: #{transformer_forward.7} parent=11 // pred_check
        %p236 = pneg %p108
      $region18: #{transformer_forward.7} parent=11 // pred_check_branch
        %238 = sbr.rel (%p236) target = $region20
      $region19: #{transformer_forward.7} parent=11 // pred_region
        _
      $region20: #{transformer_forward.7} parent=11 // pred_fallthru
        _
      // Predicated region
      $region21: #{transformer_forward.7} parent=11 // pred_check
        %p239 = pneg %p129
      $region22: #{transformer_forward.7} parent=11 // pred_check_branch
        %241 = sbr.rel (%p239) target = $region24
      $region23: #{transformer_forward.7} parent=11 // pred_region
        _
      $region24: #{transformer_forward.7} parent=11 // pred_fallthru
        _
      // Predicated region
      $region25: #{transformer_forward.7} parent=11 // pred_check
        %p242 = pneg %p150
      $region26: #{transformer_forward.7} parent=11 // pred_check_branch
        %244 = sbr.rel (%p242) target = $region28
      $region27: #{transformer_forward.7} parent=11 // pred_region
        _
      $region28: #{transformer_forward.7} parent=11 // pred_fallthru
        _
      // Predicated region
      $region29: #{transformer_forward.7} parent=11 // pred_check
        %p245 = pneg %p171
      $region30: #{transformer_forward.7} parent=11 // pred_check_branch
        %247 = sbr.rel (%p245) target = $region32
      $region31: #{transformer_forward.7} parent=11 // pred_region
        _
      $region32: #{transformer_forward.7} parent=11 // pred_fallthru
        _
      // Predicated region
      $region33: #{transformer_forward.7} parent=11 // pred_check
        %p248 = pneg %p192
      $region34: #{transformer_forward.7} parent=11 // pred_check_branch
        %250 = sbr.rel (%p248) target = $region36
      $region35: #{transformer_forward.7} parent=11 // pred_region
        _
      $region36: #{transformer_forward.7} parent=11 // pred_fallthru
        _
    $region12: #{transformer_forward.7} parent=5 // pred_fallthru
      _
    %p251 = scmp.lt.s32.totalorder %s14, 2
    // Predicated region
    $region37: #{transformer_forward.7} parent=5 // pred_check
      %p252 = pneg %p251
    $region38: #{transformer_forward.7} parent=5 // pred_check_branch
      %254 = sbr.rel (%p252) target = $region40
    $region39: #{transformer_forward.7} parent=5 // pred_region
      // Predicated region
      $region41: #{transformer_forward.7} parent=39 // pred_check
        %p255 = pneg %p34
      $region42: #{transformer_forward.7} parent=39 // pred_check_branch
        %257 = sbr.rel (%p255) target = $region44
      $region43: #{transformer_forward.7} parent=39 // pred_region
        %p258 = scmp.lt.s32.totalorder %s14, 1
        %s259 = scalar_select %p258, %s14, 1
        %s260 = smul.addr %s259, 2
        %s261 = smul.addr %s260, 8
        %s262 = scalar_lea.vmem %s0, %s261
      $region44: #{transformer_forward.7} parent=39 // pred_fallthru
        _
      // Predicated region
      $region45: #{transformer_forward.7} parent=39 // pred_check
        %p263 = pneg %p60
      $region46: #{transformer_forward.7} parent=39 // pred_check_branch
        %265 = sbr.rel (%p263) target = $region48
      $region47: #{transformer_forward.7} parent=39 // pred_region
        %p266 = scmp.lt.s32.totalorder %s14, 1
        %s267 = scalar_select %p266, %s14, 1
        %s268 = smul.addr %s267, 2
        %s269 = smul.addr %s268, 8
        %s270 = scalar_lea.vmem %s1, %s269
      $region48: #{transformer_forward.7} parent=39 // pred_fallthru
        _
    $region40: #{transformer_forward.7} parent=5 // pred_fallthru
      _
    %p271 = scmp.le.s32.totalorder 1, %s14
    %p272 = scmp.lt.s32.totalorder %s14, 3
    %p273 = pnand %p271, %p272
    %p274 = pneg %p273
    // Predicated region
    $region49: #{transformer_forward.7} parent=5 // pred_check
      _
    $region50: #{transformer_forward.7} parent=5 // pred_check_branch
      %276 = sbr.rel (%p273) target = $region52
    $region51: #{transformer_forward.7} parent=5 // pred_region
      %s277 = ssub.s32 %s14, 1
      %p278 = scmp.lt.s32.totalorder %s19, 1
      %s279 = scalar_select %p278, %s19, 1
      %s280 = smul.addr %s279, 2
      %s281 = smul.addr %s280, 8
      %s282 = scalar_lea.vmem %s0, %s281
      %p283 = pneg %p40
      %p284 = pneg %p37
      %p285 = scmp.lt.s32.totalorder %s19, 1
      %s286 = scalar_select %p285, %s19, 1
      %s287 = smul.addr %s286, 2
      %s288 = smul.addr %s287, 8
      %s289 = scalar_lea.vmem %s1, %s288
      %p290 = pneg %p66
      %p291 = pneg %p63
      %p292 = pneg %p87
      %p293 = pneg %p84
      %p294 = pneg %p108
      %p295 = pneg %p105
      %p296 = pneg %p129
      %p297 = pneg %p126
      %p298 = pneg %p150
      %p299 = pneg %p147
      %p300 = pneg %p171
      %p301 = pneg %p168
      %p302 = pneg %p192
      %p303 = pneg %p189
      %p304 = pneg %p218
      %p305 = pneg %p215
      %p306 = scmp.lt.s32.totalorder %s19, 1
      %s307 = scalar_select %p306, %s19, 1
      %s308 = scalar_lea.vmem %s8, %s307
      %p309 = scmp.lt.s32.totalorder %s19, 1
      %s310 = scalar_select %p309, %s19, 1
      %s311 = smul.addr %s310, 2
      %s312 = smul.addr %s311, 8
      %s313 = scalar_lea.vmem %s0, %s312
      %p314 = scmp.lt.s32.totalorder %s19, 1
      %s315 = scalar_select %p314, %s19, 1
      %s316 = smul.addr %s315, 2
      %s317 = smul.addr %s316, 8
      %s318 = scalar_lea.vmem %s1, %s317
      %p319 = scmp.lt.s32.totalorder %s19, 1
      %s320 = scalar_select %p319, %s19, 1
      %s321 = scalar_lea.vmem %s8, %s320
      %v323 = vld [vmem:[%s313] sm:$0xff]
      %v324 = vld [vmem:[%s313 + $0x8] sm:$0xff]
      %v325 = vld [vmem:[%s318] sm:$0xff]
      %v326 = vld [vmem:[%s318 + $0x8] sm:$0xff]
      %328 = vset.pattern.permute.xlu0 0
      %329 = vperm.xlu0 %328, %v325
      %v330 = vpop.permute.xlu0 %329
      %333 = vset.pattern.permute.xlu0 0
      %334 = vperm.xlu0 %333, %v326
      %v335 = vpop.permute.xlu0 %334
      %v337 = vmul.f32 %v323, %v330
      %v338 = vmul.f32 %v324, %v335
      %vm339 = vcmask 7168
      %v340 = vsel %vm339, %v325, 0.0
      %v341 = vsel %vm339, %v326, 0.0
      %v342 = vadd.f32 %v340, %v341
      %v343 = vrot.slane %v342, 4
      %v344 = vadd.f32 %v342, %v343
      %v345 = vrot.slane %v344, 2
      %v346 = vadd.f32 %v344, %v345
      %v347 = vrot.slane %v346, 1
      %v348 = vadd.f32 %v346, %v347
      %v349 = vmax.f32 %v348, 1.0
      %vm350 = vcmask 261120
      %v351 = vsel %vm350, %v337, 0.0
      %v352 = vsel %vm350, %v338, 0.0
      %v353 = vadd.f32 %v351, %v352
      %v354 = vrot.slane %v353, 4
      %v355 = vadd.f32 %v353, %v354
      %v356 = vrot.slane %v355, 2
      %v357 = vadd.f32 %v355, %v356
      %v358 = vrot.slane %v357, 1
      %v359 = vadd.f32 %v357, %v358
      %361 = vset.pattern.permute.xlu0 0
      %362 = vperm.xlu0 %361, %v349
      %v363 = vpop.permute.xlu0 %362
      %v365 = vrcp.pop %v363
      %v366 = vmul.f32 %v359, %v365
      %v367 = vsub.f32 %v337, %v366
      %v368 = vsub.f32 %v338, %v366
      %v369 = vmul.f32 %v367, %v367
      %v370 = vmul.f32 %v368, %v368
      %v371 = vsel %vm350, %v369, 0.0
      %v372 = vsel %vm350, %v370, 0.0
      %v373 = vadd.f32 %v371, %v372
      %v374 = vrot.slane %v373, 4
      %v375 = vadd.f32 %v373, %v374
      %v376 = vrot.slane %v375, 2
      %v377 = vadd.f32 %v375, %v376
      %v378 = vrot.slane %v377, 1
      %v379 = vadd.f32 %v377, %v378
      %v380 = vadd.f32 %v349, 1.0
      %382 = vset.pattern.permute.xlu0 0
      %383 = vperm.xlu0 %382, %v380
      %v384 = vpop.permute.xlu0 %383
      %v386 = vrcp.pop %v384
      %v387 = vmul.f32 %v379, %v386
      %v388 = vrsqrt.pop %v387
      %v389 = vmul.f32 %v387, %v388
      %vm390 = vcmp.eq.f32.partialorder %v387, inf
      %v391 = vsel %vm390, %v387, %v389
      %vm392 = vcmp.eq.f32.partialorder %v387, 0.0
      %v393 = vand.u32 %v387, 2147483648
      %v394 = vsel %vm392, %v393, %v391
      %v395 = vpack.c.bf16 %v366, %v366
      %v396 = vld [vmem:[%s2] sm:$0xf]
      %v397 = vld [vmem:[%s2 + $0x4] sm:$0xf]
      %v398 = vld [vmem:[%s2 + $0x8] sm:$0xf]
      %v399 = vld [vmem:[%s2 + $0xc] sm:$0xf]
      %v400 = vpack.c.bf16 %v394, %v394
      %v401 = vld [vmem:[%s3] sm:$0xf]
      %v402 = vld [vmem:[%s3 + $0x4] sm:$0xf]
      %v403 = vld [vmem:[%s3 + $0x8] sm:$0xf]
      %v404 = vld [vmem:[%s3 + $0xc] sm:$0xf]
      %v409 = vunpack.c.l.b16 %v401
      %v410 = vunpack.c.l.b16 %v402
      %v411 = vunpack.c.l.b16 %v403
      %v412 = vunpack.c.l.b16 %v404
      %v413 = vpack.c.b16 %v410, %v409
      %v414 = vpack.c.b16 %v412, %v411
      %v418 = vsel %vm350, %v400, 0
      %420 = vmatprep.subr.bf16.mxu0 0
      %421 = vmatpush1.bf16.msra.mxu0 %v413
      %422 = vmatprep.subr.bf16.mxu0 0
      %423 = vmatpush1.bf16.msra.mxu0 %v414
      %424 = vmatprep.subr.bf16.mxu0 0
      %425 = vmatpush1.bf16.msra.mxu0 0
      %426 = vmatprep.subr.bf16.mxu0 0
      %427 = vmatpush1.bf16.msra.mxu0 0
      %428 = vmatprep.subr.bf16.mxu0 0
      %429 = vmatpush1.bf16.msra.mxu0 0
      %430 = vmatprep.subr.bf16.mxu0 0
      %431 = vmatpush1.bf16.msra.mxu0 0
      %432 = vmatprep.subr.bf16.mxu0 0
      %433 = vmatpush1.bf16.msra.mxu0 0
      %434 = vmatprep.subr.bf16.mxu0 0
      %435 = vmatpush1.bf16.msra.mxu0 0
      %436 = vmatprep.subr.bf16.mxu0 0
      %437 = vmatpush1.bf16.msra.mxu0 0
      %438 = vmatprep.subr.bf16.mxu0 0
      %439 = vmatpush1.bf16.msra.mxu0 0
      %440 = vmatprep.subr.bf16.mxu0 0
      %441 = vmatpush1.bf16.msra.mxu0 0
      %442 = vmatprep.subr.bf16.mxu0 0
      %443 = vmatpush1.bf16.msra.mxu0 0
      %444 = vmatprep.subr.bf16.mxu0 0
      %445 = vmatpush1.bf16.msra.mxu0 0
      %446 = vmatprep.subr.bf16.mxu0 0
      %447 = vmatpush1.bf16.msra.mxu0 0
      %448 = vmatprep.subr.bf16.mxu0 0
      %449 = vmatpush1.bf16.msra.mxu0 0
      %450 = vmatprep.subr.bf16.mxu0 0
      %451 = vmatpush1.bf16.msra.mxu0 0
      %452 = vmatprep.mubr.bf16.mxu0 0
      %453 = vmatmul.mubr.bf16.gmra.mrb[0].mxu0 %v418
      %v454 = vpop.f32.mrb[0].mxu0
      %v455 = vadd.f32 0.0, %v454
      %v456 = vpop.f32.mrb[0].mxu0
      %v457 = vpop.f32.mrb[0].mxu0
      %v458 = vpop.f32.mrb[0].mxu0
      %459 = vdwg.mxu0
      %v464 = vunpack.c.l.b16 %v396
      %v465 = vunpack.c.l.b16 %v397
      %v466 = vunpack.c.l.b16 %v398
      %v467 = vunpack.c.l.b16 %v399
      %v468 = vpack.c.b16 %v465, %v464
      %v469 = vpack.c.b16 %v467, %v466
      %v473 = vsel %vm350, %v395, 0
      %475 = vmatprep.subr.bf16.mxu0 0
      %476 = vmatpush1.bf16.msra.mxu0 %v468
      %477 = vmatprep.subr.bf16.mxu0 0
      %478 = vmatpush1.bf16.msra.mxu0 %v469
      %479 = vmatprep.subr.bf16.mxu0 0
      %480 = vmatpush1.bf16.msra.mxu0 0
      %481 = vmatprep.subr.bf16.mxu0 0
      %482 = vmatpush1.bf16.msra.mxu0 0
      %483 = vmatprep.subr.bf16.mxu0 0
      %484 = vmatpush1.bf16.msra.mxu0 0
      %485 = vmatprep.subr.bf16.mxu0 0
      %486 = vmatpush1.bf16.msra.mxu0 0
      %487 = vmatprep.subr.bf16.mxu0 0
      %488 = vmatpush1.bf16.msra.mxu0 0
      %489 = vmatprep.subr.bf16.mxu0 0
      %490 = vmatpush1.bf16.msra.mxu0 0
      %491 = vmatprep.subr.bf16.mxu0 0
      %492 = vmatpush1.bf16.msra.mxu0 0
      %493 = vmatprep.subr.bf16.mxu0 0
      %494 = vmatpush1.bf16.msra.mxu0 0
      %495 = vmatprep.subr.bf16.mxu0 0
      %496 = vmatpush1.bf16.msra.mxu0 0
      %497 = vmatprep.subr.bf16.mxu0 0
      %498 = vmatpush1.bf16.msra.mxu0 0
      %499 = vmatprep.subr.bf16.mxu0 0
      %500 = vmatpush1.bf16.msra.mxu0 0
      %501 = vmatprep.subr.bf16.mxu0 0
      %502 = vmatpush1.bf16.msra.mxu0 0
      %503 = vmatprep.subr.bf16.mxu0 0
      %504 = vmatpush1.bf16.msra.mxu0 0
      %505 = vmatprep.subr.bf16.mxu0 0
      %506 = vmatpush1.bf16.msra.mxu0 0
      %507 = vmatprep.mubr.bf16.mxu0 0
      %508 = vmatmul.mubr.bf16.gmra.mrb[0].mxu0 %v473
      %v509 = vpop.f32.mrb[0].mxu0
      %v510 = vadd.f32 %v455, %v509
      %v511 = vpop.f32.mrb[0].mxu0
      %v512 = vpop.f32.mrb[0].mxu0
      %v513 = vpop.f32.mrb[0].mxu0
      %514 = vdwg.mxu0
      %v515 = vld [vmem:[%s4] sm:$0x1]
      %v516 = vmul.f32 %v510, %v515
      %v517 = vld [vmem:[%s5] sm:$0x1]
      %v518 = vadd.f32 %v516, %v517
      %v519 = vmax.f32 %v518, 0.0
      %v520 = vpack.c.bf16 %v519, %v519
      %v521 = vld [vmem:[%s6] sm:$0xf]
      %v522 = vld [vmem:[%s6 + $0x4] sm:$0xf]
      %v523 = vld [vmem:[%s6 + $0x8] sm:$0xf]
      %v524 = vld [vmem:[%s6 + $0xc] sm:$0xf]
      %v525 = vld [vmem:[%s6 + $0x10] sm:$0xf]
      %v526 = vld [vmem:[%s6 + $0x14] sm:$0xf]
      %v527 = vld [vmem:[%s6 + $0x18] sm:$0xf]
      %v528 = vld [vmem:[%s6 + $0x1c] sm:$0xf]
      %v529 = vld [vmem:[%s7] sm:$0x1]
      %v538 = vunpack.c.l.b16 %v521
      %v539 = vunpack.c.l.b16 %v522
      %v540 = vunpack.c.l.b16 %v523
      %v541 = vunpack.c.l.b16 %v524
      %v542 = vunpack.c.l.b16 %v525
      %v543 = vunpack.c.l.b16 %v526
      %v544 = vunpack.c.l.b16 %v527
      %v545 = vunpack.c.l.b16 %v528
      %v546 = vpack.c.b16 %v539, %v538
      %v547 = vpack.c.b16 %v541, %v540
      %v548 = vpack.c.b16 %v543, %v542
      %v549 = vpack.c.b16 %v545, %v544
      %vm554 = vcmask 523264
      %v556 = vsel %vm554, %v520, 0
      %558 = vmatprep.subr.bf16.mxu0 0
      %559 = vmatpush1.bf16.msra.mxu0 %v546
      %560 = vmatprep.subr.bf16.mxu0 0
      %561 = vmatpush1.bf16.msra.mxu0 %v547
      %562 = vmatprep.subr.bf16.mxu0 0
      %563 = vmatpush1.bf16.msra.mxu0 %v548
      %564 = vmatprep.subr.bf16.mxu0 0
      %565 = vmatpush1.bf16.msra.mxu0 %v549
      %566 = vmatprep.subr.bf16.mxu0 0
      %567 = vmatpush1.bf16.msra.mxu0 0
      %568 = vmatprep.subr.bf16.mxu0 0
      %569 = vmatpush1.bf16.msra.mxu0 0
      %570 = vmatprep.subr.bf16.mxu0 0
      %571 = vmatpush1.bf16.msra.mxu0 0
      %572 = vmatprep.subr.bf16.mxu0 0
      %573 = vmatpush1.bf16.msra.mxu0 0
      %574 = vmatprep.subr.bf16.mxu0 0
      %575 = vmatpush1.bf16.msra.mxu0 0
      %576 = vmatprep.subr.bf16.mxu0 0
      %577 = vmatpush1.bf16.msra.mxu0 0
      %578 = vmatprep.subr.bf16.mxu0 0
      %579 = vmatpush1.bf16.msra.mxu0 0
      %580 = vmatprep.subr.bf16.mxu0 0
      %581 = vmatpush1.bf16.msra.mxu0 0
      %582 = vmatprep.subr.bf16.mxu0 0
      %583 = vmatpush1.bf16.msra.mxu0 0
      %584 = vmatprep.subr.bf16.mxu0 0
      %585 = vmatpush1.bf16.msra.mxu0 0
      %586 = vmatprep.subr.bf16.mxu0 0
      %587 = vmatpush1.bf16.msra.mxu0 0
      %588 = vmatprep.subr.bf16.mxu0 0
      %589 = vmatpush1.bf16.msra.mxu0 0
      %590 = vmatprep.mubr.bf16.mxu0 0
      %591 = vmatmul.mubr.bf16.gmra.mrb[0].mxu0 %v556
      %v592 = vpop.f32.mrb[0].mxu0
      %v593 = vadd.f32 %v529, %v592
      %v594 = vpop.f32.mrb[0].mxu0
      %v595 = vpop.f32.mrb[0].mxu0
      %v596 = vpop.f32.mrb[0].mxu0
      %597 = vdwg.mxu0
      %vm598 = vcmask 253952
      %599 = vst.msk [vmem:[%s321] sm:$0x1] %vm598, %v593
      %p600 = scmp.lt.s32.totalorder %s19, 1
      %s601 = scalar_select %p600, %s19, 1
      %s602 = scalar_lea.vmem %s8, %s601
      // Predicated region
      $region53: #{transformer_forward.7} parent=51 // pred_check
        %p603 = pneg %p215
      $region54: #{transformer_forward.7} parent=51 // pred_check_branch
        %605 = sbr.rel (%p603) target = $region56
      $region55: #{transformer_forward.7} parent=51 // pred_region
        _
      $region56: #{transformer_forward.7} parent=51 // pred_fallthru
        _
    $region52: #{transformer_forward.7} parent=5 // pred_fallthru
      _
    %p606 = scmp.le.s32.totalorder 2, %s14
    // Predicated region
    $region57: #{transformer_forward.7} parent=5 // pred_check
      %p607 = pneg %p606
    $region58: #{transformer_forward.7} parent=5 // pred_check_branch
      %609 = sbr.rel (%p607) target = $region60
    $region59: #{transformer_forward.7} parent=5 // pred_region
      %s610 = ssub.s32 %s14, 2
      // Predicated region
      $region61: #{transformer_forward.7} parent=59 // pred_check
        %p611 = pneg %p221
      $region62: #{transformer_forward.7} parent=59 // pred_check_branch
        %613 = sbr.rel (%p611) target = $region64
      $region63: #{transformer_forward.7} parent=59 // pred_region
        %p614 = scmp.lt.s32.totalorder %s20, 1
        %s615 = scalar_select %p614, %s20, 1
        %s616 = scalar_lea.vmem %s8, %s615
      $region64: #{transformer_forward.7} parent=59 // pred_fallthru
        _
    $region60: #{transformer_forward.7} parent=5 // pred_fallthru
      _
  $region6: #{transformer_forward.7} parent=0 // loop_footer
    %s18 = sadd.s32 1, %s14
  $region7: #{transformer_forward.7} parent=0 // loop_footer_branch
    %13 = sbr.rel target = $region3
  $region8: #{transformer_forward.7} parent=0 // loop_exit
    _

// kernel: transformer_forward.5
$region0: #{transformer_forward.5}
  #allocation0 [shape = 'u32[]', space=smem, size = 0x4, offset = 0x4, fixed_abs, tag = 'smem constant byte address 0x4 - core index']
  #allocation1 [shape = 'u32[144,128]{1,0:T(1,128)}', space=vmem, size = 0x12000, scoped, tag = 'internal scratch']
  %s0 = inlined_call_operand.vmem [shape: f32[2,16,32], index: 0, kind: input, shape index: {}]
  %s1 = inlined_call_operand.vmem [shape: f32[2,16,32], index: 1, kind: input, shape index: {}]
  %s2 = inlined_call_operand.vmem [shape: f32[2,1,16], index: 2, kind: input, shape index: {}]
  %s3 = inlined_call_operand.vmem [shape: bf16[32,32], index: 3, kind: input, shape index: {}]
  %s4 = inlined_call_operand.vmem [shape: bf16[32,32], index: 4, kind: input, shape index: {}]
  %s5 = inlined_call_operand.vmem [shape: bf16[32,32], index: 5, kind: input, shape index: {}]
  %s6 = inlined_call_operand.vmem [shape: f32[1,32], index: 6, kind: input, shape index: {}]
  %s7 = inlined_call_operand.vmem [shape: f32[1,32], index: 7, kind: input, shape index: {}]
  %s8 = inlined_call_operand.vmem [shape: f32[1,32], index: 8, kind: input, shape index: {}]
  %s9 = inlined_call_operand.vmem [shape: bf16[32,32], index: 9, kind: input, shape index: {}]
  %s10 = inlined_call_operand.vmem [shape: f32[1,32], index: 10, kind: input, shape index: {}]
  %s11 = inlined_call_operand.vmem [shape: f32[1,32], index: 11, kind: input, shape index: {}]
  %s12 = inlined_call_operand.vmem [shape: f32[1,32], index: 12, kind: input, shape index: {}]
  %s13 = inlined_call_operand.vmem [shape: bf16[32,64], index: 13, kind: input, shape index: {}]
  %s14 = inlined_call_operand.vmem [shape: f32[1,64], index: 14, kind: input, shape index: {}]
  %s15 = inlined_call_operand.vmem [shape: bf16[64,32], index: 15, kind: input, shape index: {}]
  %s16 = inlined_call_operand.vmem [shape: f32[1,32], index: 16, kind: input, shape index: {}]
  %s17 = inlined_call_operand.vmem [shape: f32[1,32], index: 17, kind: input, shape index: {}]
  %s18 = inlined_call_operand.vmem [shape: f32[1,32], index: 18, kind: input, shape index: {}]
  %s19 = inlined_call_operand.vmem [shape: f32[2,16,32], index: 19, kind: output, shape index: {}]
  %s20 = sld [smem:[#allocation0]]
  $region109: #{transformer_forward.5} parent=0
    _
  %s22 = ssub.s32 1, %s20
  %s23 = scalar_select 0, %s22, %s20
  loop: start=0, step=1, limit=4
  $region2: #{transformer_forward.5} parent=0 // loop_pre_header
    _
  $region3: #{transformer_forward.5} parent=0 // loop_header
    %s25 = sphi 0, %s29
    %p26 = scmp.ge.s32.totalorder %s25, 4
    %s35 = sphi 0, %s37
    %s38 = sphi 0, %s35
    %s39 = sphi 0, %s38
    %s55 = sphi 0, %s39
    %s61 = sphi 0, %s63
    %s64 = sphi 0, %s61
    %s65 = sphi 0, %s64
    %s81 = sphi 0, %s65
    %s87 = sphi 0, %s89
    %s90 = sphi 0, %s87
    %s91 = sphi 0, %s90
    %s107 = sphi 0, %s91
    %s111 = sphi 0, %s111
    %s113 = sphi 0, %s111
    %s114 = sphi 0, %s113
    %s128 = sphi 0, %s114
    %s132 = sphi 0, %s132
    %s134 = sphi 0, %s132
    %s135 = sphi 0, %s134
    %s149 = sphi 0, %s135
    %s153 = sphi 0, %s153
    %s155 = sphi 0, %s153
    %s156 = sphi 0, %s155
    %s170 = sphi 0, %s156
    %s174 = sphi 0, %s174
    %s176 = sphi 0, %s174
    %s177 = sphi 0, %s176
    %s191 = sphi 0, %s177
    %s195 = sphi 0, %s195
    %s197 = sphi 0, %s195
    %s198 = sphi 0, %s197
    %s212 = sphi 0, %s198
    %s216 = sphi 0, %s216
    %s218 = sphi 0, %s216
    %s219 = sphi 0, %s218
    %s233 = sphi 0, %s219
    %s237 = sphi 0, %s237
    %s239 = sphi 0, %s237
    %s240 = sphi 0, %s239
    %s254 = sphi 0, %s240
    %s258 = sphi 0, %s258
    %s260 = sphi 0, %s258
    %s261 = sphi 0, %s260
    %s275 = sphi 0, %s261
    %s279 = sphi 0, %s279
    %s281 = sphi 0, %s279
    %s282 = sphi 0, %s281
    %s296 = sphi 0, %s282
    %s300 = sphi 0, %s300
    %s302 = sphi 0, %s300
    %s303 = sphi 0, %s302
    %s317 = sphi 0, %s303
    %s321 = sphi 0, %s321
    %s323 = sphi 0, %s321
    %s324 = sphi 0, %s323
    %s338 = sphi 0, %s324
    %s342 = sphi 0, %s342
    %s344 = sphi 0, %s342
    %s345 = sphi 0, %s344
    %s359 = sphi 0, %s345
    %s363 = sphi 0, %s363
    %s365 = sphi 0, %s363
    %s366 = sphi 0, %s365
    %s380 = sphi 0, %s366
    %s384 = sphi 0, %s384
    %s386 = sphi 0, %s384
    %s387 = sphi 0, %s386
    %s401 = sphi 0, %s387
    %s405 = sphi 0, %s405
    %s407 = sphi 0, %s405
    %s408 = sphi 0, %s407
    %s422 = sphi 0, %s408
    %s426 = sphi 0, %s426
    %s428 = sphi 0, %s426
    %s429 = sphi 0, %s428
    %s443 = sphi 0, %s429
    %s449 = sphi 0, %s451
    %s452 = sphi 0, %s449
    %s453 = sphi 0, %s452
    %s469 = sphi 0, %s453
  $region4: #{transformer_forward.5} parent=0 // loop_header_branch
    %28 = sbr.rel (%p26) target = $region8
  $region5: #{transformer_forward.5} parent=0 // loop_body
    %s30 = ssub.s32 %s25, 1
    %s31 = ssub.s32 %s25, 2
    %s32 = sadd.s32 %s25, 1
    %s33 = ssub.s32 %s25, %s32
    %p34 = scmp.eq.s32.totalorder %s33, 0
    %s36 = sadd.s32 %s35, 1
    %s37 = scalar_select %p34, %s35, %s36
    %p40 = pneg %p34
    %p41 = scmp.eq.s32.totalorder %s25, 1
    %p42 = por %p40, %p41
    %p43 = scmp.ne.s32.totalorder %s35, %s38
    %p44 = scmp.eq.s32.totalorder %s25, 0
    %p45 = por %p43, %p44
    %p46 = scmp.ne.s32.totalorder %s35, %s38
    %p47 = scmp.eq.s32.totalorder %s30, 1
    %p48 = por %p46, %p47
    %p49 = scmp.ne.s32.totalorder %s38, %s39
    %p50 = scmp.eq.s32.totalorder %s30, 0
    %p51 = por %p49, %p50
    %p52 = scmp.ne.s32.totalorder %s38, %s39
    %p53 = scmp.eq.s32.totalorder %s31, 1
    %p54 = por %p52, %p53
    %p56 = scmp.ne.s32.totalorder %s39, %s55
    %p57 = scmp.eq.s32.totalorder %s31, 0
    %p58 = por %p56, %p57
    %s59 = ssub.s32 %s25, %s32
    %p60 = scmp.eq.s32.totalorder %s59, 0
    %s62 = sadd.s32 %s61, 1
    %s63 = scalar_select %p60, %s61, %s62
    %p66 = pneg %p60
    %p67 = scmp.eq.s32.totalorder %s25, 1
    %p68 = por %p66, %p67
    %p69 = scmp.ne.s32.totalorder %s61, %s64
    %p70 = scmp.eq.s32.totalorder %s25, 0
    %p71 = por %p69, %p70
    %p72 = scmp.ne.s32.totalorder %s61, %s64
    %p73 = scmp.eq.s32.totalorder %s30, 1
    %p74 = por %p72, %p73
    %p75 = scmp.ne.s32.totalorder %s64, %s65
    %p76 = scmp.eq.s32.totalorder %s30, 0
    %p77 = por %p75, %p76
    %p78 = scmp.ne.s32.totalorder %s64, %s65
    %p79 = scmp.eq.s32.totalorder %s31, 1
    %p80 = por %p78, %p79
    %p82 = scmp.ne.s32.totalorder %s65, %s81
    %p83 = scmp.eq.s32.totalorder %s31, 0
    %p84 = por %p82, %p83
    %s85 = ssub.s32 %s25, %s32
    %p86 = scmp.eq.s32.totalorder %s85, 0
    %s88 = sadd.s32 %s87, 1
    %s89 = scalar_select %p86, %s87, %s88
    %p92 = pneg %p86
    %p93 = scmp.eq.s32.totalorder %s25, 1
    %p94 = por %p92, %p93
    %p95 = scmp.ne.s32.totalorder %s87, %s90
    %p96 = scmp.eq.s32.totalorder %s25, 0
    %p97 = por %p95, %p96
    %p98 = scmp.ne.s32.totalorder %s87, %s90
    %p99 = scmp.eq.s32.totalorder %s30, 1
    %p100 = por %p98, %p99
    %p101 = scmp.ne.s32.totalorder %s90, %s91
    %p102 = scmp.eq.s32.totalorder %s30, 0
    %p103 = por %p101, %p102
    %p104 = scmp.ne.s32.totalorder %s90, %s91
    %p105 = scmp.eq.s32.totalorder %s31, 1
    %p106 = por %p104, %p105
    %p108 = scmp.ne.s32.totalorder %s91, %s107
    %p109 = scmp.eq.s32.totalorder %s31, 0
    %p110 = por %p108, %p109
    %s112 = sadd.s32 %s111, 1
    %p115 = scmp.eq.s32.totalorder %s25, 1
    %p116 = scmp.ne.s32.totalorder %s111, %s113
    %p117 = scmp.eq.s32.totalorder %s25, 0
    %p118 = por %p116, %p117
    %p119 = scmp.ne.s32.totalorder %s111, %s113
    %p120 = scmp.eq.s32.totalorder %s30, 1
    %p121 = por %p119, %p120
    %p122 = scmp.ne.s32.totalorder %s113, %s114
    %p123 = scmp.eq.s32.totalorder %s30, 0
    %p124 = por %p122, %p123
    %p125 = scmp.ne.s32.totalorder %s113, %s114
    %p126 = scmp.eq.s32.totalorder %s31, 1
    %p127 = por %p125, %p126
    %p129 = scmp.ne.s32.totalorder %s114, %s128
    %p130 = scmp.eq.s32.totalorder %s31, 0
    %p131 = por %p129, %p130
    %s133 = sadd.s32 %s132, 1
    %p136 = scmp.eq.s32.totalorder %s25, 1
    %p137 = scmp.ne.s32.totalorder %s132, %s134
    %p138 = scmp.eq.s32.totalorder %s25, 0
    %p139 = por %p137, %p138
    %p140 = scmp.ne.s32.totalorder %s132, %s134
    %p141 = scmp.eq.s32.totalorder %s30, 1
    %p142 = por %p140, %p141
    %p143 = scmp.ne.s32.totalorder %s134, %s135
    %p144 = scmp.eq.s32.totalorder %s30, 0
    %p145 = por %p143, %p144
    %p146 = scmp.ne.s32.totalorder %s134, %s135
    %p147 = scmp.eq.s32.totalorder %s31, 1
    %p148 = por %p146, %p147
    %p150 = scmp.ne.s32.totalorder %s135, %s149
    %p151 = scmp.eq.s32.totalorder %s31, 0
    %p152 = por %p150, %p151
    %s154 = sadd.s32 %s153, 1
    %p157 = scmp.eq.s32.totalorder %s25, 1
    %p158 = scmp.ne.s32.totalorder %s153, %s155
    %p159 = scmp.eq.s32.totalorder %s25, 0
    %p160 = por %p158, %p159
    %p161 = scmp.ne.s32.totalorder %s153, %s155
    %p162 = scmp.eq.s32.totalorder %s30, 1
    %p163 = por %p161, %p162
    %p164 = scmp.ne.s32.totalorder %s155, %s156
    %p165 = scmp.eq.s32.totalorder %s30, 0
    %p166 = por %p164, %p165
    %p167 = scmp.ne.s32.totalorder %s155, %s156
    %p168 = scmp.eq.s32.totalorder %s31, 1
    %p169 = por %p167, %p168
    %p171 = scmp.ne.s32.totalorder %s156, %s170
    %p172 = scmp.eq.s32.totalorder %s31, 0
    %p173 = por %p171, %p172
    %s175 = sadd.s32 %s174, 1
    %p178 = scmp.eq.s32.totalorder %s25, 1
    %p179 = scmp.ne.s32.totalorder %s174, %s176
    %p180 = scmp.eq.s32.totalorder %s25, 0
    %p181 = por %p179, %p180
    %p182 = scmp.ne.s32.totalorder %s174, %s176
    %p183 = scmp.eq.s32.totalorder %s30, 1
    %p184 = por %p182, %p183
    %p185 = scmp.ne.s32.totalorder %s176, %s177
    %p186 = scmp.eq.s32.totalorder %s30, 0
    %p187 = por %p185, %p186
    %p188 = scmp.ne.s32.totalorder %s176, %s177
    %p189 = scmp.eq.s32.totalorder %s31, 1
    %p190 = por %p188, %p189
    %p192 = scmp.ne.s32.totalorder %s177, %s191
    %p193 = scmp.eq.s32.totalorder %s31, 0
    %p194 = por %p192, %p193
    %s196 = sadd.s32 %s195, 1
    %p199 = scmp.eq.s32.totalorder %s25, 1
    %p200 = scmp.ne.s32.totalorder %s195, %s197
    %p201 = scmp.eq.s32.totalorder %s25, 0
    %p202 = por %p200, %p201
    %p203 = scmp.ne.s32.totalorder %s195, %s197
    %p204 = scmp.eq.s32.totalorder %s30, 1
    %p205 = por %p203, %p204
    %p206 = scmp.ne.s32.totalorder %s197, %s198
    %p207 = scmp.eq.s32.totalorder %s30, 0
    %p208 = por %p206, %p207
    %p209 = scmp.ne.s32.totalorder %s197, %s198
    %p210 = scmp.eq.s32.totalorder %s31, 1
    %p211 = por %p209, %p210
    %p213 = scmp.ne.s32.totalorder %s198, %s212
    %p214 = scmp.eq.s32.totalorder %s31, 0
    %p215 = por %p213, %p214
    %s217 = sadd.s32 %s216, 1
    %p220 = scmp.eq.s32.totalorder %s25, 1
    %p221 = scmp.ne.s32.totalorder %s216, %s218
    %p222 = scmp.eq.s32.totalorder %s25, 0
    %p223 = por %p221, %p222
    %p224 = scmp.ne.s32.totalorder %s216, %s218
    %p225 = scmp.eq.s32.totalorder %s30, 1
    %p226 = por %p224, %p225
    %p227 = scmp.ne.s32.totalorder %s218, %s219
    %p228 = scmp.eq.s32.totalorder %s30, 0
    %p229 = por %p227, %p228
    %p230 = scmp.ne.s32.totalorder %s218, %s219
    %p231 = scmp.eq.s32.totalorder %s31, 1
    %p232 = por %p230, %p231
    %p234 = scmp.ne.s32.totalorder %s219, %s233
    %p235 = scmp.eq.s32.totalorder %s31, 0
    %p236 = por %p234, %p235
    %s238 = sadd.s32 %s237, 1
    %p241 = scmp.eq.s32.totalorder %s25, 1
    %p242 = scmp.ne.s32.totalorder %s237, %s239
    %p243 = scmp.eq.s32.totalorder %s25, 0
    %p244 = por %p242, %p243
    %p245 = scmp.ne.s32.totalorder %s237, %s239
    %p246 = scmp.eq.s32.totalorder %s30, 1
    %p247 = por %p245, %p246
    %p248 = scmp.ne.s32.totalorder %s239, %s240
    %p249 = scmp.eq.s32.totalorder %s30, 0
    %p250 = por %p248, %p249
    %p251 = scmp.ne.s32.totalorder %s239, %s240
    %p252 = scmp.eq.s32.totalorder %s31, 1
    %p253 = por %p251, %p252
    %p255 = scmp.ne.s32.totalorder %s240, %s254
    %p256 = scmp.eq.s32.totalorder %s31, 0
    %p257 = por %p255, %p256
    %s259 = sadd.s32 %s258, 1
    %p262 = scmp.eq.s32.totalorder %s25, 1
    %p263 = scmp.ne.s32.totalorder %s258, %s260
    %p264 = scmp.eq.s32.totalorder %s25, 0
    %p265 = por %p263, %p264
    %p266 = scmp.ne.s32.totalorder %s258, %s260
    %p267 = scmp.eq.s32.totalorder %s30, 1
    %p268 = por %p266, %p267
    %p269 = scmp.ne.s32.totalorder %s260, %s261
    %p270 = scmp.eq.s32.totalorder %s30, 0
    %p271 = por %p269, %p270
    %p272 = scmp.ne.s32.totalorder %s260, %s261
    %p273 = scmp.eq.s32.totalorder %s31, 1
    %p274 = por %p272, %p273
    %p276 = scmp.ne.s32.totalorder %s261, %s275
    %p277 = scmp.eq.s32.totalorder %s31, 0
    %p278 = por %p276, %p277
    %s280 = sadd.s32 %s279, 1
    %p283 = scmp.eq.s32.totalorder %s25, 1
    %p284 = scmp.ne.s32.totalorder %s279, %s281
    %p285 = scmp.eq.s32.totalorder %s25, 0
    %p286 = por %p284, %p285
    %p287 = scmp.ne.s32.totalorder %s279, %s281
    %p288 = scmp.eq.s32.totalorder %s30, 1
    %p289 = por %p287, %p288
    %p290 = scmp.ne.s32.totalorder %s281, %s282
    %p291 = scmp.eq.s32.totalorder %s30, 0
    %p292 = por %p290, %p291
    %p293 = scmp.ne.s32.totalorder %s281, %s282
    %p294 = scmp.eq.s32.totalorder %s31, 1
    %p295 = por %p293, %p294
    %p297 = scmp.ne.s32.totalorder %s282, %s296
    %p298 = scmp.eq.s32.totalorder %s31, 0
    %p299 = por %p297, %p298
    %s301 = sadd.s32 %s300, 1
    %p304 = scmp.eq.s32.totalorder %s25, 1
    %p305 = scmp.ne.s32.totalorder %s300, %s302
    %p306 = scmp.eq.s32.totalorder %s25, 0
    %p307 = por %p305, %p306
    %p308 = scmp.ne.s32.totalorder %s300, %s302
    %p309 = scmp.eq.s32.totalorder %s30, 1
    %p310 = por %p308, %p309
    %p311 = scmp.ne.s32.totalorder %s302, %s303
    %p312 = scmp.eq.s32.totalorder %s30, 0
    %p313 = por %p311, %p312
    %p314 = scmp.ne.s32.totalorder %s302, %s303
    %p315 = scmp.eq.s32.totalorder %s31, 1
    %p316 = por %p314, %p315
    %p318 = scmp.ne.s32.totalorder %s303, %s317
    %p319 = scmp.eq.s32.totalorder %s31, 0
    %p320 = por %p318, %p319
    %s322 = sadd.s32 %s321, 1
    %p325 = scmp.eq.s32.totalorder %s25, 1
    %p326 = scmp.ne.s32.totalorder %s321, %s323
    %p327 = scmp.eq.s32.totalorder %s25, 0
    %p328 = por %p326, %p327
    %p329 = scmp.ne.s32.totalorder %s321, %s323
    %p330 = scmp.eq.s32.totalorder %s30, 1
    %p331 = por %p329, %p330
    %p332 = scmp.ne.s32.totalorder %s323, %s324
    %p333 = scmp.eq.s32.totalorder %s30, 0
    %p334 = por %p332, %p333
    %p335 = scmp.ne.s32.totalorder %s323, %s324
    %p336 = scmp.eq.s32.totalorder %s31, 1
    %p337 = por %p335, %p336
    %p339 = scmp.ne.s32.totalorder %s324, %s338
    %p340 = scmp.eq.s32.totalorder %s31, 0
    %p341 = por %p339, %p340
    %s343 = sadd.s32 %s342, 1
    %p346 = scmp.eq.s32.totalorder %s25, 1
    %p347 = scmp.ne.s32.totalorder %s342, %s344
    %p348 = scmp.eq.s32.totalorder %s25, 0
    %p349 = por %p347, %p348
    %p350 = scmp.ne.s32.totalorder %s342, %s344
    %p351 = scmp.eq.s32.totalorder %s30, 1
    %p352 = por %p350, %p351
    %p353 = scmp.ne.s32.totalorder %s344, %s345
    %p354 = scmp.eq.s32.totalorder %s30, 0
    %p355 = por %p353, %p354
    %p356 = scmp.ne.s32.totalorder %s344, %s345
    %p357 = scmp.eq.s32.totalorder %s31, 1
    %p358 = por %p356, %p357
    %p360 = scmp.ne.s32.totalorder %s345, %s359
    %p361 = scmp.eq.s32.totalorder %s31, 0
    %p362 = por %p360, %p361
    %s364 = sadd.s32 %s363, 1
    %p367 = scmp.eq.s32.totalorder %s25, 1
    %p368 = scmp.ne.s32.totalorder %s363, %s365
    %p369 = scmp.eq.s32.totalorder %s25, 0
    %p370 = por %p368, %p369
    %p371 = scmp.ne.s32.totalorder %s363, %s365
    %p372 = scmp.eq.s32.totalorder %s30, 1
    %p373 = por %p371, %p372
    %p374 = scmp.ne.s32.totalorder %s365, %s366
    %p375 = scmp.eq.s32.totalorder %s30, 0
    %p376 = por %p374, %p375
    %p377 = scmp.ne.s32.totalorder %s365, %s366
    %p378 = scmp.eq.s32.totalorder %s31, 1
    %p379 = por %p377, %p378
    %p381 = scmp.ne.s32.totalorder %s366, %s380
    %p382 = scmp.eq.s32.totalorder %s31, 0
    %p383 = por %p381, %p382
    %s385 = sadd.s32 %s384, 1
    %p388 = scmp.eq.s32.totalorder %s25, 1
    %p389 = scmp.ne.s32.totalorder %s384, %s386
    %p390 = scmp.eq.s32.totalorder %s25, 0
    %p391 = por %p389, %p390
    %p392 = scmp.ne.s32.totalorder %s384, %s386
    %p393 = scmp.eq.s32.totalorder %s30, 1
    %p394 = por %p392, %p393
    %p395 = scmp.ne.s32.totalorder %s386, %s387
    %p396 = scmp.eq.s32.totalorder %s30, 0
    %p397 = por %p395, %p396
    %p398 = scmp.ne.s32.totalorder %s386, %s387
    %p399 = scmp.eq.s32.totalorder %s31, 1
    %p400 = por %p398, %p399
    %p402 = scmp.ne.s32.totalorder %s387, %s401
    %p403 = scmp.eq.s32.totalorder %s31, 0
    %p404 = por %p402, %p403
    %s406 = sadd.s32 %s405, 1
    %p409 = scmp.eq.s32.totalorder %s25, 1
    %p410 = scmp.ne.s32.totalorder %s405, %s407
    %p411 = scmp.eq.s32.totalorder %s25, 0
    %p412 = por %p410, %p411
    %p413 = scmp.ne.s32.totalorder %s405, %s407
    %p414 = scmp.eq.s32.totalorder %s30, 1
    %p415 = por %p413, %p414
    %p416 = scmp.ne.s32.totalorder %s407, %s408
    %p417 = scmp.eq.s32.totalorder %s30, 0
    %p418 = por %p416, %p417
    %p419 = scmp.ne.s32.totalorder %s407, %s408
    %p420 = scmp.eq.s32.totalorder %s31, 1
    %p421 = por %p419, %p420
    %p423 = scmp.ne.s32.totalorder %s408, %s422
    %p424 = scmp.eq.s32.totalorder %s31, 0
    %p425 = por %p423, %p424
    %s427 = sadd.s32 %s426, 1
    %p430 = scmp.eq.s32.totalorder %s25, 1
    %p431 = scmp.ne.s32.totalorder %s426, %s428
    %p432 = scmp.eq.s32.totalorder %s25, 0
    %p433 = por %p431, %p432
    %p434 = scmp.ne.s32.totalorder %s426, %s428
    %p435 = scmp.eq.s32.totalorder %s30, 1
    %p436 = por %p434, %p435
    %p437 = scmp.ne.s32.totalorder %s428, %s429
    %p438 = scmp.eq.s32.totalorder %s30, 0
    %p439 = por %p437, %p438
    %p440 = scmp.ne.s32.totalorder %s428, %s429
    %p441 = scmp.eq.s32.totalorder %s31, 1
    %p442 = por %p440, %p441
    %p444 = scmp.ne.s32.totalorder %s429, %s443
    %p445 = scmp.eq.s32.totalorder %s31, 0
    %p446 = por %p444, %p445
    %s447 = ssub.s32 %s25, %s32
    %p448 = scmp.eq.s32.totalorder %s447, 0
    %s450 = sadd.s32 %s449, 1
    %s451 = scalar_select %p448, %s449, %s450
    %p454 = pneg %p448
    %p455 = scmp.eq.s32.totalorder %s25, 1
    %p456 = por %p454, %p455
    %p457 = scmp.ne.s32.totalorder %s449, %s452
    %p458 = scmp.eq.s32.totalorder %s25, 0
    %p459 = por %p457, %p458
    %p460 = scmp.ne.s32.totalorder %s449, %s452
    %p461 = scmp.eq.s32.totalorder %s30, 1
    %p462 = por %p460, %p461
    %p463 = scmp.ne.s32.totalorder %s452, %s453
    %p464 = scmp.eq.s32.totalorder %s30, 0
    %p465 = por %p463, %p464
    %p466 = scmp.ne.s32.totalorder %s452, %s453
    %p467 = scmp.eq.s32.totalorder %s31, 1
    %p468 = por %p466, %p467
    %p470 = scmp.ne.s32.totalorder %s453, %s469
    %p471 = scmp.eq.s32.totalorder %s31, 0
    %p472 = por %p470, %p471
    %p473 = scmp.le.s32.totalorder 1, %s25
    %p474 = scmp.lt.s32.totalorder %s25, 3
    %p475 = pnand %p473, %p474
    %p476 = pneg %p475
    // Predicated region
    $region9: #{transformer_forward.5} parent=5 // pred_check
      _
    $region10: #{transformer_forward.5} parent=5 // pred_check_branch
      %478 = sbr.rel (%p475) target = $region12
    $region11: #{transformer_forward.5} parent=5 // pred_region
      %s479 = ssub.s32 %s25, 1
      // Predicated region
      $region13: #{transformer_forward.5} parent=11 // pred_check
        %p480 = pneg %p124
      $region14: #{transformer_forward.5} parent=11 // pred_check_branch
        %482 = sbr.rel (%p480) target = $region16
      $region15: #{transformer_forward.5} parent=11 // pred_region
        _
      $region16: #{transformer_forward.5} parent=11 // pred_fallthru
        _
      // Predicated region
      $region17: #{transformer_forward.5} parent=11 // pred_check
        %p483 = pneg %p145
      $region18: #{transformer_forward.5} parent=11 // pred_check_branch
        %485 = sbr.rel (%p483) target = $region20
      $region19: #{transformer_forward.5} parent=11 // pred_region
        _
      $region20: #{transformer_forward.5} parent=11 // pred_fallthru
        _
      // Predicated region
      $region21: #{transformer_forward.5} parent=11 // pred_check
        %p486 = pneg %p166
      $region22: #{transformer_forward.5} parent=11 // pred_check_branch
        %488 = sbr.rel (%p486) target = $region24
      $region23: #{transformer_forward.5} parent=11 // pred_region
        _
      $region24: #{transformer_forward.5} parent=11 // pred_fallthru
        _
      // Predicated region
      $region25: #{transformer_forward.5} parent=11 // pred_check
        %p489 = pneg %p187
      $region26: #{transformer_forward.5} parent=11 // pred_check_branch
        %491 = sbr.rel (%p489) target = $region28
      $region27: #{transformer_forward.5} parent=11 // pred_region
        _
      $region28: #{transformer_forward.5} parent=11 // pred_fallthru
        _
      // Predicated region
      $region29: #{transformer_forward.5} parent=11 // pred_check
        %p492 = pneg %p208
      $region30: #{transformer_forward.5} parent=11 // pred_check_branch
        %494 = sbr.rel (%p492) target = $region32
      $region31: #{transformer_forward.5} parent=11 // pred_region
        _
      $region32: #{transformer_forward.5} parent=11 // pred_fallthru
        _
      // Predicated region
      $region33: #{transformer_forward.5} parent=11 // pred_check
        %p495 = pneg %p229
      $region34: #{transformer_forward.5} parent=11 // pred_check_branch
        %497 = sbr.rel (%p495) target = $region36
      $region35: #{transformer_forward.5} parent=11 // pred_region
        _
      $region36: #{transformer_forward.5} parent=11 // pred_fallthru
        _
      // Predicated region
      $region37: #{transformer_forward.5} parent=11 // pred_check
        %p498 = pneg %p250
      $region38: #{transformer_forward.5} parent=11 // pred_check_branch
        %500 = sbr.rel (%p498) target = $region40
      $region39: #{transformer_forward.5} parent=11 // pred_region
        _
      $region40: #{transformer_forward.5} parent=11 // pred_fallthru
        _
      // Predicated region
      $region41: #{transformer_forward.5} parent=11 // pred_check
        %p501 = pneg %p271
      $region42: #{transformer_forward.5} parent=11 // pred_check_branch
        %503 = sbr.rel (%p501) target = $region44
      $region43: #{transformer_forward.5} parent=11 // pred_region
        _
      $region44: #{transformer_forward.5} parent=11 // pred_fallthru
        _
      // Predicated region
      $region45: #{transformer_forward.5} parent=11 // pred_check
        %p504 = pneg %p292
      $region46: #{transformer_forward.5} parent=11 // pred_check_branch
        %506 = sbr.rel (%p504) target = $region48
      $region47: #{transformer_forward.5} parent=11 // pred_region
        _
      $region48: #{transformer_forward.5} parent=11 // pred_fallthru
        _
      // Predicated region
      $region49: #{transformer_forward.5} parent=11 // pred_check
        %p507 = pneg %p313
      $region50: #{transformer_forward.5} parent=11 // pred_check_branch
        %509 = sbr.rel (%p507) target = $region52
      $region51: #{transformer_forward.5} parent=11 // pred_region
        _
      $region52: #{transformer_forward.5} parent=11 // pred_fallthru
        _
      // Predicated region
      $region53: #{transformer_forward.5} parent=11 // pred_check
        %p510 = pneg %p334
      $region54: #{transformer_forward.5} parent=11 // pred_check_branch
        %512 = sbr.rel (%p510) target = $region56
      $region55: #{transformer_forward.5} parent=11 // pred_region
        _
      $region56: #{transformer_forward.5} parent=11 // pred_fallthru
        _
      // Predicated region
      $region57: #{transformer_forward.5} parent=11 // pred_check
        %p513 = pneg %p355
      $region58: #{transformer_forward.5} parent=11 // pred_check_branch
        %515 = sbr.rel (%p513) target = $region60
      $region59: #{transformer_forward.5} parent=11 // pred_region
        _
      $region60: #{transformer_forward.5} parent=11 // pred_fallthru
        _
      // Predicated region
      $region61: #{transformer_forward.5} parent=11 // pred_check
        %p516 = pneg %p376
      $region62: #{transformer_forward.5} parent=11 // pred_check_branch
        %518 = sbr.rel (%p516) target = $region64
      $region63: #{transformer_forward.5} parent=11 // pred_region
        _
      $region64: #{transformer_forward.5} parent=11 // pred_fallthru
        _
      // Predicated region
      $region65: #{transformer_forward.5} parent=11 // pred_check
        %p519 = pneg %p397
      $region66: #{transformer_forward.5} parent=11 // pred_check_branch
        %521 = sbr.rel (%p519) target = $region68
      $region67: #{transformer_forward.5} parent=11 // pred_region
        _
      $region68: #{transformer_forward.5} parent=11 // pred_fallthru
        _
      // Predicated region
      $region69: #{transformer_forward.5} parent=11 // pred_check
        %p522 = pneg %p418
      $region70: #{transformer_forward.5} parent=11 // pred_check_branch
        %524 = sbr.rel (%p522) target = $region72
      $region71: #{transformer_forward.5} parent=11 // pred_region
        _
      $region72: #{transformer_forward.5} parent=11 // pred_fallthru
        _
      // Predicated region
      $region73: #{transformer_forward.5} parent=11 // pred_check
        %p525 = pneg %p439
      $region74: #{transformer_forward.5} parent=11 // pred_check_branch
        %527 = sbr.rel (%p525) target = $region76
      $region75: #{transformer_forward.5} parent=11 // pred_region
        _
      $region76: #{transformer_forward.5} parent=11 // pred_fallthru
        _
    $region12: #{transformer_forward.5} parent=5 // pred_fallthru
      _
    %p528 = scmp.lt.s32.totalorder %s25, 2
    // Predicated region
    $region77: #{transformer_forward.5} parent=5 // pred_check
      %p529 = pneg %p528
    $region78: #{transformer_forward.5} parent=5 // pred_check_branch
      %531 = sbr.rel (%p529) target = $region80
    $region79: #{transformer_forward.5} parent=5 // pred_region
      // Predicated region
      $region81: #{transformer_forward.5} parent=79 // pred_check
        %p532 = pneg %p45
      $region82: #{transformer_forward.5} parent=79 // pred_check_branch
        %534 = sbr.rel (%p532) target = $region84
      $region83: #{transformer_forward.5} parent=79 // pred_region
        %p535 = scmp.lt.s32.totalorder %s25, 1
        %s536 = scalar_select %p535, %s25, 1
        %s537 = smul.addr %s536, 2
        %s538 = smul.addr %s537, 8
        %s539 = scalar_lea.vmem %s0, %s538
      $region84: #{transformer_forward.5} parent=79 // pred_fallthru
        _
      // Predicated region
      $region85: #{transformer_forward.5} parent=79 // pred_check
        %p540 = pneg %p71
      $region86: #{transformer_forward.5} parent=79 // pred_check_branch
        %542 = sbr.rel (%p540) target = $region88
      $region87: #{transformer_forward.5} parent=79 // pred_region
        %p543 = scmp.lt.s32.totalorder %s25, 1
        %s544 = scalar_select %p543, %s25, 1
        %s545 = smul.addr %s544, 2
        %s546 = smul.addr %s545, 8
        %s547 = scalar_lea.vmem %s1, %s546
      $region88: #{transformer_forward.5} parent=79 // pred_fallthru
        _
      // Predicated region
      $region89: #{transformer_forward.5} parent=79 // pred_check
        %p548 = pneg %p97
      $region90: #{transformer_forward.5} parent=79 // pred_check_branch
        %550 = sbr.rel (%p548) target = $region92
      $region91: #{transformer_forward.5} parent=79 // pred_region
        %p551 = scmp.lt.s32.totalorder %s25, 1
        %s552 = scalar_select %p551, %s25, 1
        %s553 = scalar_lea.vmem %s2, %s552
      $region92: #{transformer_forward.5} parent=79 // pred_fallthru
        _
    $region80: #{transformer_forward.5} parent=5 // pred_fallthru
      _
    %p554 = scmp.le.s32.totalorder 1, %s25
    %p555 = scmp.lt.s32.totalorder %s25, 3
    %p556 = pnand %p554, %p555
    %p557 = pneg %p556
    // Predicated region
    $region93: #{transformer_forward.5} parent=5 // pred_check
      _
    $region94: #{transformer_forward.5} parent=5 // pred_check_branch
      %559 = sbr.rel (%p556) target = $region96
    $region95: #{transformer_forward.5} parent=5 // pred_region
      %s560 = ssub.s32 %s25, 1
      %p561 = scmp.lt.s32.totalorder %s30, 1
      %s562 = scalar_select %p561, %s30, 1
      %s563 = smul.addr %s562, 2
      %s564 = smul.addr %s563, 8
      %s565 = scalar_lea.vmem %s0, %s564
      %p566 = pneg %p51
      %p567 = pneg %p48
      %p568 = scmp.lt.s32.totalorder %s30, 1
      %s569 = scalar_select %p568, %s30, 1
      %s570 = smul.addr %s569, 2
      %s571 = smul.addr %s570, 8
      %s572 = scalar_lea.vmem %s1, %s571
      %p573 = pneg %p77
      %p574 = pneg %p74
      %p575 = scmp.lt.s32.totalorder %s30, 1
      %s576 = scalar_select %p575, %s30, 1
      %s577 = scalar_lea.vmem %s2, %s576
      %p578 = pneg %p103
      %p579 = pneg %p100
      %p580 = pneg %p124
      %p581 = pneg %p121
      %p582 = pneg %p145
      %p583 = pneg %p142
      %p584 = pneg %p166
      %p585 = pneg %p163
      %p586 = pneg %p187
      %p587 = pneg %p184
      %p588 = pneg %p208
      %p589 = pneg %p205
      %p590 = pneg %p229
      %p591 = pneg %p226
      %p592 = pneg %p250
      %p593 = pneg %p247
      %p594 = pneg %p271
      %p595 = pneg %p268
      %p596 = pneg %p292
      %p597 = pneg %p289
      %p598 = pneg %p313
      %p599 = pneg %p310
      %p600 = pneg %p334
      %p601 = pneg %p331
      %p602 = pneg %p355
      %p603 = pneg %p352
      %p604 = pneg %p376
      %p605 = pneg %p373
      %p606 = pneg %p397
      %p607 = pneg %p394
      %p608 = pneg %p418
      %p609 = pneg %p415
      %p610 = pneg %p439
      %p611 = pneg %p436
      %p612 = pneg %p465
      %p613 = pneg %p462
      %p614 = scmp.lt.s32.totalorder %s30, 1
      %s615 = scalar_select %p614, %s30, 1
      %s616 = smul.addr %s615, 2
      %s617 = smul.addr %s616, 8
      %s618 = scalar_lea.vmem %s19, %s617
      %p619 = scmp.lt.s32.totalorder %s30, 1
      %s620 = scalar_select %p619, %s30, 1
      %s621 = smul.addr %s620, 2
      %s622 = smul.addr %s621, 8
      %s623 = scalar_lea.vmem %s0, %s622
      %p624 = scmp.lt.s32.totalorder %s30, 1
      %s625 = scalar_select %p624, %s30, 1
      %s626 = smul.addr %s625, 2
      %s627 = smul.addr %s626, 8
      %s628 = scalar_lea.vmem %s1, %s627
      %p629 = scmp.lt.s32.totalorder %s30, 1
      %s630 = scalar_select %p629, %s30, 1
      %s631 = scalar_lea.vmem %s2, %s630
      %p632 = scmp.lt.s32.totalorder %s30, 1
      %s633 = scalar_select %p632, %s30, 1
      %s634 = smul.addr %s633, 2
      %s635 = smul.addr %s634, 8
      %s636 = scalar_lea.vmem %s19, %s635
      %v638 = vld [vmem:[%s623] sm:$0xff]
      %v639 = vld [vmem:[%s623 + $0x8] sm:$0xff]
      %v640 = vld [vmem:[%s628] sm:$0xff]
      %v641 = vld [vmem:[%s628 + $0x8] sm:$0xff]
      %v642 = vadd.f32 %v638, %v640
      %v643 = vadd.f32 %v639, %v641
      %v644 = vld [vmem:[%s631] sm:$0x1]
      %v645 = vpack.c.bf16 %v643, %v642
      %v646 = vld [vmem:[%s3] sm:$0xf]
      %v647 = vld [vmem:[%s3 + $0x4] sm:$0xf]
      %v648 = vld [vmem:[%s3 + $0x8] sm:$0xf]
      %v649 = vld [vmem:[%s3 + $0xc] sm:$0xf]
      %v650 = vld [vmem:[%s6] sm:$0x1]
      %v652 = vlaneseq
      %v653 = vshrl.u32 %v652, 7
      %v654 = vsub.s32 0, %v653
      %v655 = vrot.slane %v650, %v654
      %v661 = vunpack.c.l.b16 %v646
      %v662 = vunpack.c.l.b16 %v647
      %v663 = vunpack.c.l.b16 %v648
      %v664 = vunpack.c.l.b16 %v649
      %v665 = vpack.c.b16 %v662, %v661
      %v666 = vpack.c.b16 %v664, %v663
      %vm669 = vcmask 261120
      %v671 = vsel %vm669, %v645, 0
      %673 = vmatprep.subr.bf16.mxu0 0
      %674 = vmatpush1.bf16.msra.mxu0 %v665
      %675 = vmatprep.subr.bf16.mxu0 0
      %676 = vmatpush1.bf16.msra.mxu0 %v666
      %677 = vmatprep.subr.bf16.mxu0 0
      %678 = vmatpush1.bf16.msra.mxu0 0
      %679 = vmatprep.subr.bf16.mxu0 0
      %680 = vmatpush1.bf16.msra.mxu0 0
      %681 = vmatprep.subr.bf16.mxu0 0
      %682 = vmatpush1.bf16.msra.mxu0 0
      %683 = vmatprep.subr.bf16.mxu0 0
      %684 = vmatpush1.bf16.msra.mxu0 0
      %685 = vmatprep.subr.bf16.mxu0 0
      %686 = vmatpush1.bf16.msra.mxu0 0
      %687 = vmatprep.subr.bf16.mxu0 0
      %688 = vmatpush1.bf16.msra.mxu0 0
      %689 = vmatprep.subr.bf16.mxu0 0
      %690 = vmatpush1.bf16.msra.mxu0 0
      %691 = vmatprep.subr.bf16.mxu0 0
      %692 = vmatpush1.bf16.msra.mxu0 0
      %693 = vmatprep.subr.bf16.mxu0 0
      %694 = vmatpush1.bf16.msra.mxu0 0
      %695 = vmatprep.subr.bf16.mxu0 0
      %696 = vmatpush1.bf16.msra.mxu0 0
      %697 = vmatprep.subr.bf16.mxu0 0
      %698 = vmatpush1.bf16.msra.mxu0 0
      %699 = vmatprep.subr.bf16.mxu0 0
      %700 = vmatpush1.bf16.msra.mxu0 0
      %701 = vmatprep.subr.bf16.mxu0 0
      %702 = vmatpush1.bf16.msra.mxu0 0
      %703 = vmatprep.subr.bf16.mxu0 0
      %704 = vmatpush1.bf16.msra.mxu0 0
      %705 = vmatprep.mubr.bf16.mxu0 0
      %706 = vmatmul.mubr.bf16.gmra.mrb[0].mxu0 %v671
      %v707 = vpop.f32.mrb[0].mxu0
      %v708 = vadd.f32 %v655, %v707
      %v709 = vpop.f32.mrb[0].mxu0
      %v710 = vpop.f32.mrb[0].mxu0
      %v711 = vadd.f32 %v655, %v710
      %v712 = vpop.f32.mrb[0].mxu0
      %713 = vdwg.mxu0
      %v714 = vld [vmem:[%s4] sm:$0xf]
      %v715 = vld [vmem:[%s4 + $0x4] sm:$0xf]
      %v716 = vld [vmem:[%s4 + $0x8] sm:$0xf]
      %v717 = vld [vmem:[%s4 + $0xc] sm:$0xf]
      %v718 = vld [vmem:[%s7] sm:$0x1]
      %v720 = vlaneseq
      %v721 = vshrl.u32 %v720, 7
      %v722 = vsub.s32 0, %v721
      %v723 = vrot.slane %v718, %v722
      %v729 = vunpack.c.l.b16 %v714
      %v730 = vunpack.c.l.b16 %v715
      %v731 = vunpack.c.l.b16 %v716
      %v732 = vunpack.c.l.b16 %v717
      %v733 = vpack.c.b16 %v730, %v729
      %v734 = vpack.c.b16 %v732, %v731
      %737 = vmatprep.subr.bf16.mxu0 0
      %738 = vmatpush1.bf16.msra.mxu0 %v733
      %739 = vmatprep.subr.bf16.mxu0 0
      %740 = vmatpush1.bf16.msra.mxu0 %v734
      %741 = vmatprep.subr.bf16.mxu0 0
      %742 = vmatpush1.bf16.msra.mxu0 0
      %743 = vmatprep.subr.bf16.mxu0 0
      %744 = vmatpush1.bf16.msra.mxu0 0
      %745 = vmatprep.subr.bf16.mxu0 0
      %746 = vmatpush1.bf16.msra.mxu0 0
      %747 = vmatprep.subr.bf16.mxu0 0
      %748 = vmatpush1.bf16.msra.mxu0 0
      %749 = vmatprep.subr.bf16.mxu0 0
      %750 = vmatpush1.bf16.msra.mxu0 0
      %751 = vmatprep.subr.bf16.mxu0 0
      %752 = vmatpush1.bf16.msra.mxu0 0
      %753 = vmatprep.subr.bf16.mxu0 0
      %754 = vmatpush1.bf16.msra.mxu0 0
      %755 = vmatprep.subr.bf16.mxu0 0
      %756 = vmatpush1.bf16.msra.mxu0 0
      %757 = vmatprep.subr.bf16.mxu0 0
      %758 = vmatpush1.bf16.msra.mxu0 0
      %759 = vmatprep.subr.bf16.mxu0 0
      %760 = vmatpush1.bf16.msra.mxu0 0
      %761 = vmatprep.subr.bf16.mxu0 0
      %762 = vmatpush1.bf16.msra.mxu0 0
      %763 = vmatprep.subr.bf16.mxu0 0
      %764 = vmatpush1.bf16.msra.mxu0 0
      %765 = vmatprep.subr.bf16.mxu0 0
      %766 = vmatpush1.bf16.msra.mxu0 0
      %767 = vmatprep.subr.bf16.mxu0 0
      %768 = vmatpush1.bf16.msra.mxu0 0
      %769 = vmatprep.mubr.bf16.mxu0 0
      %770 = vmatmul.mubr.bf16.gmra.mrb[0].mxu0 %v671
      %v771 = vpop.f32.mrb[0].mxu0
      %v772 = vadd.f32 %v723, %v771
      %v773 = vpop.f32.mrb[0].mxu0
      %v774 = vpop.f32.mrb[0].mxu0
      %v775 = vadd.f32 %v723, %v774
      %v776 = vpop.f32.mrb[0].mxu0
      %777 = vdwg.mxu0
      %v778 = vpack.c.bf16 %v639, %v638
      %v779 = vld [vmem:[%s5] sm:$0xf]
      %v780 = vld [vmem:[%s5 + $0x4] sm:$0xf]
      %v781 = vld [vmem:[%s5 + $0x8] sm:$0xf]
      %v782 = vld [vmem:[%s5 + $0xc] sm:$0xf]
      %v783 = vld [vmem:[%s8] sm:$0x1]
      %v785 = vlaneseq
      %v786 = vshrl.u32 %v785, 7
      %v787 = vsub.s32 0, %v786
      %v788 = vrot.slane %v783, %v787
      %v794 = vunpack.c.l.b16 %v779
      %v795 = vunpack.c.l.b16 %v780
      %v796 = vunpack.c.l.b16 %v781
      %v797 = vunpack.c.l.b16 %v782
      %v798 = vpack.c.b16 %v795, %v794
      %v799 = vpack.c.b16 %v797, %v796
      %v803 = vsel %vm669, %v778, 0
      %805 = vmatprep.subr.bf16.mxu0 0
      %806 = vmatpush1.bf16.msra.mxu0 %v798
      %807 = vmatprep.subr.bf16.mxu0 0
      %808 = vmatpush1.bf16.msra.mxu0 %v799
      %809 = vmatprep.subr.bf16.mxu0 0
      %810 = vmatpush1.bf16.msra.mxu0 0
      %811 = vmatprep.subr.bf16.mxu0 0
      %812 = vmatpush1.bf16.msra.mxu0 0
      %813 = vmatprep.subr.bf16.mxu0 0
      %814 = vmatpush1.bf16.msra.mxu0 0
      %815 = vmatprep.subr.bf16.mxu0 0
      %816 = vmatpush1.bf16.msra.mxu0 0
      %817 = vmatprep.subr.bf16.mxu0 0
      %818 = vmatpush1.bf16.msra.mxu0 0
      %819 = vmatprep.subr.bf16.mxu0 0
      %820 = vmatpush1.bf16.msra.mxu0 0
      %821 = vmatprep.subr.bf16.mxu0 0
      %822 = vmatpush1.bf16.msra.mxu0 0
      %823 = vmatprep.subr.bf16.mxu0 0
      %824 = vmatpush1.bf16.msra.mxu0 0
      %825 = vmatprep.subr.bf16.mxu0 0
      %826 = vmatpush1.bf16.msra.mxu0 0
      %827 = vmatprep.subr.bf16.mxu0 0
      %828 = vmatpush1.bf16.msra.mxu0 0
      %829 = vmatprep.subr.bf16.mxu0 0
      %830 = vmatpush1.bf16.msra.mxu0 0
      %831 = vmatprep.subr.bf16.mxu0 0
      %832 = vmatpush1.bf16.msra.mxu0 0
      %833 = vmatprep.subr.bf16.mxu0 0
      %834 = vmatpush1.bf16.msra.mxu0 0
      %835 = vmatprep.subr.bf16.mxu0 0
      %836 = vmatpush1.bf16.msra.mxu0 0
      %837 = vmatprep.mubr.bf16.mxu0 0
      %838 = vmatmul.mubr.bf16.gmra.mrb[0].mxu0 %v803
      %v839 = vpop.f32.mrb[0].mxu0
      %v840 = vadd.f32 %v788, %v839
      %v841 = vpop.f32.mrb[0].mxu0
      %v842 = vpop.f32.mrb[0].mxu0
      %v843 = vadd.f32 %v788, %v842
      %v844 = vpop.f32.mrb[0].mxu0
      %845 = vdwg.mxu0
      %v846 = vpack.c.bf16 %v711, %v708
      %v847 = vpack.c.bf16 %v775, %v772
      %v848 = vpack.c.bf16 %v843, %v840
      %v850 = vlaneseq
      %v851 = vshrl.u32 %v850, 7
      %v852 = vsub.s32 0, %v851
      %v853 = vrot.slane %v644, %v852
      %vm855 = vcmask 64512
      %v857 = vsel %vm855, %v846, 0
      %v860 = vsel %vm855, %v847, 0
      %862 = vmatprep.subr.bf16.mxu0 0
      %863 = vmatpush1.bf16.xpose.msra.mxu0 %v860
      %864 = vmatprep.subr.bf16.mxu0 0
      %865 = vmatpush1.bf16.xpose.msra.mxu0 0
      %866 = vmatprep.subr.bf16.mxu0 0
      %867 = vmatpush1.bf16.xpose.msra.mxu0 0
      %868 = vmatprep.subr.bf16.mxu0 0
      %869 = vmatpush1.bf16.xpose.msra.mxu0 0
      %870 = vmatprep.subr.bf16.mxu0 0
      %871 = vmatpush1.bf16.xpose.msra.mxu0 0
      %872 = vmatprep.subr.bf16.mxu0 0
      %873 = vmatpush1.bf16.xpose.msra.mxu0 0
      %874 = vmatprep.subr.bf16.mxu0 0
      %875 = vmatpush1.bf16.xpose.msra.mxu0 0
      %876 = vmatprep.subr.bf16.mxu0 0
      %877 = vmatpush1.bf16.xpose.msra.mxu0 0
      %878 = vmatprep.subr.bf16.mxu0 0
      %879 = vmatpush1.bf16.xpose.msra.mxu0 0
      %880 = vmatprep.subr.bf16.mxu0 0
      %881 = vmatpush1.bf16.xpose.msra.mxu0 0
      %882 = vmatprep.subr.bf16.mxu0 0
      %883 = vmatpush1.bf16.xpose.msra.mxu0 0
      %884 = vmatprep.subr.bf16.mxu0 0
      %885 = vmatpush1.bf16.xpose.msra.mxu0 0
      %886 = vmatprep.subr.bf16.mxu0 0
      %887 = vmatpush1.bf16.xpose.msra.mxu0 0
      %888 = vmatprep.subr.bf16.mxu0 0
      %889 = vmatpush1.bf16.xpose.msra.mxu0 0
      %890 = vmatprep.subr.bf16.mxu0 0
      %891 = vmatpush1.bf16.xpose.msra.mxu0 0
      %892 = vmatprep.subr.bf16.mxu0 0
      %893 = vmatpush1.bf16.xpose.msra.mxu0 0
      %894 = vmatprep.mubr.bf16.mxu0 0
      %895 = vmatmul.mubr.bf16.gmra.mrb[0].mxu0 %v857
      %v896 = vpop.f32.mrb[0].mxu0
      %v897 = vadd.f32 %v853, %v896
      %v898 = vpop.f32.mrb[0].mxu0
      %v899 = vpop.f32.mrb[0].mxu0
      %v900 = vadd.f32 %v853, %v899
      %v901 = vpop.f32.mrb[0].mxu0
      %902 = vdwg.mxu0
      %vm903 = vcmask 130048
      %v904 = vsel %vm903, %v897, -inf
      %905 = vmax.xlane.f32.xlu0 %v904
      %v906 = vpop.xlane.xlu0 %905
      %v907 = vsel %vm903, %v900, -inf
      %908 = vmax.xlane.f32.xlu0 %v907
      %v909 = vpop.xlane.xlu0 %908
      %v910 = vsub.f32 %v897, %v906
      %v911 = vsub.f32 %v900, %v909
      %v912 = vmul.f32 %v910, 1.442695
      %v913 = vpow.pop %v912
      %v914 = vmul.f32 %v911, 1.442695
      %v915 = vpow.pop %v914
      %v916 = vsel %vm903, %v913, 0.0
      %917 = vadd.xlane.f32.xlu0 %v916
      %v918 = vpop.xlane.xlu0 %917
      %v919 = vsel %vm903, %v915, 0.0
      %920 = vadd.xlane.f32.xlu0 %v919
      %v921 = vpop.xlane.xlu0 %920
      %v922 = vrcp.pop %v918
      %v923 = vrcp.pop %v921
      %v924 = vmul.f32 %v913, %v922
      %v925 = vmul.f32 %v915, %v923
      %v926 = vpack.c.bf16 %v925, %v924
      %v928 = vsel %vm903, %v926, 0
      %930 = vmatprep.subr.bf16.mxu0 0
      %931 = vmatpush1.bf16.msra.mxu0 %v848
      %932 = vmatprep.subr.bf16.mxu0 0
      %933 = vmatpush1.bf16.msra.mxu0 0
      %934 = vmatprep.subr.bf16.mxu0 0
      %935 = vmatpush1.bf16.msra.mxu0 0
      %936 = vmatprep.subr.bf16.mxu0 0
      %937 = vmatpush1.bf16.msra.mxu0 0
      %938 = vmatprep.subr.bf16.mxu0 0
      %939 = vmatpush1.bf16.msra.mxu0 0
      %940 = vmatprep.subr.bf16.mxu0 0
      %941 = vmatpush1.bf16.msra.mxu0 0
      %942 = vmatprep.subr.bf16.mxu0 0
      %943 = vmatpush1.bf16.msra.mxu0 0
      %944 = vmatprep.subr.bf16.mxu0 0
      %945 = vmatpush1.bf16.msra.mxu0 0
      %946 = vmatprep.subr.bf16.mxu0 0
      %947 = vmatpush1.bf16.msra.mxu0 0
      %948 = vmatprep.subr.bf16.mxu0 0
      %949 = vmatpush1.bf16.msra.mxu0 0
      %950 = vmatprep.subr.bf16.mxu0 0
      %951 = vmatpush1.bf16.msra.mxu0 0
      %952 = vmatprep.subr.bf16.mxu0 0
      %953 = vmatpush1.bf16.msra.mxu0 0
      %954 = vmatprep.subr.bf16.mxu0 0
      %955 = vmatpush1.bf16.msra.mxu0 0
      %956 = vmatprep.subr.bf16.mxu0 0
      %957 = vmatpush1.bf16.msra.mxu0 0
      %958 = vmatprep.subr.bf16.mxu0 0
      %959 = vmatpush1.bf16.msra.mxu0 0
      %960 = vmatprep.subr.bf16.mxu0 0
      %961 = vmatpush1.bf16.msra.mxu0 0
      %962 = vmatprep.mubr.bf16.mxu0 0
      %963 = vmatmul.mubr.bf16.gmra.mrb[0].mxu0 %v928
      %v964 = vpop.f32.mrb[0].mxu0
      %v965 = vadd.f32 0.0, %v964
      %v966 = vpop.f32.mrb[0].mxu0
      %v967 = vpop.f32.mrb[0].mxu0
      %v968 = vadd.f32 0.0, %v967
      %v969 = vpop.f32.mrb[0].mxu0
      %970 = vdwg.mxu0
      %972 = vrot.lane.b32.xlu0 %v846, 120
      %v973 = vpop.permute.xlu0 %972
      %975 = vrot.lane.b32.xlu0 %v847, 120
      %v976 = vpop.permute.xlu0 %975
      %v978 = vsel %vm855, %v973, 0
      %v981 = vsel %vm855, %v976, 0
      %983 = vmatprep.subr.bf16.mxu0 0
      %984 = vmatpush1.bf16.xpose.msra.mxu0 %v981
      %985 = vmatprep.subr.bf16.mxu0 0
      %986 = vmatpush1.bf16.xpose.msra.mxu0 0
      %987 = vmatprep.subr.bf16.mxu0 0
      %988 = vmatpush1.bf16.xpose.msra.mxu0 0
      %989 = vmatprep.subr.bf16.mxu0 0
      %990 = vmatpush1.bf16.xpose.msra.mxu0 0
      %991 = vmatprep.subr.bf16.mxu0 0
      %992 = vmatpush1.bf16.xpose.msra.mxu0 0
      %993 = vmatprep.subr.bf16.mxu0 0
      %994 = vmatpush1.bf16.xpose.msra.mxu0 0
      %995 = vmatprep.subr.bf16.mxu0 0
      %996 = vmatpush1.bf16.xpose.msra.mxu0 0
      %997 = vmatprep.subr.bf16.mxu0 0
      %998 = vmatpush1.bf16.xpose.msra.mxu0 0
      %999 = vmatprep.subr.bf16.mxu0 0
      %1000 = vmatpush1.bf16.xpose.msra.mxu0 0
      %1001 = vmatprep.subr.bf16.mxu0 0
      %1002 = vmatpush1.bf16.xpose.msra.mxu0 0
      %1003 = vmatprep.subr.bf16.mxu0 0
      %1004 = vmatpush1.bf16.xpose.msra.mxu0 0
      %1005 = vmatprep.subr.bf16.mxu0 0
      %1006 = vmatpush1.bf16.xpose.msra.mxu0 0
      %1007 = vmatprep.subr.bf16.mxu0 0
      %1008 = vmatpush1.bf16.xpose.msra.mxu0 0
      %1009 = vmatprep.subr.bf16.mxu0 0
      %1010 = vmatpush1.bf16.xpose.msra.mxu0 0
      %1011 = vmatprep.subr.bf16.mxu0 0
      %1012 = vmatpush1.bf16.xpose.msra.mxu0 0
      %1013 = vmatprep.subr.bf16.mxu0 0
      %1014 = vmatpush1.bf16.xpose.msra.mxu0 0
      %1015 = vmatprep.mubr.bf16.mxu0 0
      %1016 = vmatmul.mubr.bf16.gmra.mrb[0].mxu0 %v978
      %v1017 = vpop.f32.mrb[0].mxu0
      %v1018 = vadd.f32 %v853, %v1017
      %v1019 = vpop.f32.mrb[0].mxu0
      %v1020 = vpop.f32.mrb[0].mxu0
      %v1021 = vadd.f32 %v853, %v1020
      %v1022 = vpop.f32.mrb[0].mxu0
      %1023 = vdwg.mxu0
      %v1024 = vsel %vm903, %v1018, -inf
      %1025 = vmax.xlane.f32.xlu0 %v1024
      %v1026 = vpop.xlane.xlu0 %1025
      %v1027 = vsel %vm903, %v1021, -inf
      %1028 = vmax.xlane.f32.xlu0 %v1027
      %v1029 = vpop.xlane.xlu0 %1028
      %v1030 = vsub.f32 %v1018, %v1026
      %v1031 = vsub.f32 %v1021, %v1029
      %v1032 = vmul.f32 %v1030, 1.442695
      %v1033 = vpow.pop %v1032
      %v1034 = vmul.f32 %v1031, 1.442695
      %v1035 = vpow.pop %v1034
      %v1036 = vsel %vm903, %v1033, 0.0
      %1037 = vadd.xlane.f32.xlu0 %v1036
      %v1038 = vpop.xlane.xlu0 %1037
      %v1039 = vsel %vm903, %v1035, 0.0
      %1040 = vadd.xlane.f32.xlu0 %v1039
      %v1041 = vpop.xlane.xlu0 %1040
      %v1042 = vrcp.pop %v1038
      %v1043 = vrcp.pop %v1041
      %v1044 = vmul.f32 %v1033, %v1042
      %v1045 = vmul.f32 %v1035, %v1043
      %v1046 = vpack.c.bf16 %v1045, %v1044
      %1048 = vrot.lane.b32.xlu0 %v848, 120
      %v1049 = vpop.permute.xlu0 %1048
      %v1052 = vsel %vm903, %v1046, 0
      %1054 = vmatprep.subr.bf16.mxu0 0
      %1055 = vmatpush1.bf16.msra.mxu0 %v1049
      %1056 = vmatprep.subr.bf16.mxu0 0
      %1057 = vmatpush1.bf16.msra.mxu0 0
      %1058 = vmatprep.subr.bf16.mxu0 0
      %1059 = vmatpush1.bf16.msra.mxu0 0
      %1060 = vmatprep.subr.bf16.mxu0 0
      %1061 = vmatpush1.bf16.msra.mxu0 0
      %1062 = vmatprep.subr.bf16.mxu0 0
      %1063 = vmatpush1.bf16.msra.mxu0 0
      %1064 = vmatprep.subr.bf16.mxu0 0
      %1065 = vmatpush1.bf16.msra.mxu0 0
      %1066 = vmatprep.subr.bf16.mxu0 0
      %1067 = vmatpush1.bf16.msra.mxu0 0
      %1068 = vmatprep.subr.bf16.mxu0 0
      %1069 = vmatpush1.bf16.msra.mxu0 0
      %1070 = vmatprep.subr.bf16.mxu0 0
      %1071 = vmatpush1.bf16.msra.mxu0 0
      %1072 = vmatprep.subr.bf16.mxu0 0
      %1073 = vmatpush1.bf16.msra.mxu0 0
      %1074 = vmatprep.subr.bf16.mxu0 0
      %1075 = vmatpush1.bf16.msra.mxu0 0
      %1076 = vmatprep.subr.bf16.mxu0 0
      %1077 = vmatpush1.bf16.msra.mxu0 0
      %1078 = vmatprep.subr.bf16.mxu0 0
      %1079 = vmatpush1.bf16.msra.mxu0 0
      %1080 = vmatprep.subr.bf16.mxu0 0
      %1081 = vmatpush1.bf16.msra.mxu0 0
      %1082 = vmatprep.subr.bf16.mxu0 0
      %1083 = vmatpush1.bf16.msra.mxu0 0
      %1084 = vmatprep.subr.bf16.mxu0 0
      %1085 = vmatpush1.bf16.msra.mxu0 0
      %1086 = vmatprep.mubr.bf16.mxu0 0
      %1087 = vmatmul.mubr.bf16.gmra.mrb[0].mxu0 %v1052
      %v1088 = vpop.f32.mrb[0].mxu0
      %v1089 = vadd.f32 0.0, %v1088
      %v1090 = vpop.f32.mrb[0].mxu0
      %v1091 = vpop.f32.mrb[0].mxu0
      %v1092 = vadd.f32 0.0, %v1091
      %v1093 = vpop.f32.mrb[0].mxu0
      %1094 = vdwg.mxu0
      %1095 = vrot.lane.b32.xlu0 %v846, 112
      %v1096 = vpop.permute.xlu0 %1095
      %1097 = vrot.lane.b32.xlu0 %v847, 112
      %v1098 = vpop.permute.xlu0 %1097
      %v1100 = vsel %vm855, %v1096, 0
      %v1103 = vsel %vm855, %v1098, 0
      %1105 = vmatprep.subr.bf16.mxu0 0
      %1106 = vmatpush1.bf16.xpose.msra.mxu0 %v1103
      %1107 = vmatprep.subr.bf16.mxu0 0
      %1108 = vmatpush1.bf16.xpose.msra.mxu0 0
      %1109 = vmatprep.subr.bf16.mxu0 0
      %1110 = vmatpush1.bf16.xpose.msra.mxu0 0
      %1111 = vmatprep.subr.bf16.mxu0 0
      %1112 = vmatpush1.bf16.xpose.msra.mxu0 0
      %1113 = vmatprep.subr.bf16.mxu0 0
      %1114 = vmatpush1.bf16.xpose.msra.mxu0 0
      %1115 = vmatprep.subr.bf16.mxu0 0
      %1116 = vmatpush1.bf16.xpose.msra.mxu0 0
      %1117 = vmatprep.subr.bf16.mxu0 0
      %1118 = vmatpush1.bf16.xpose.msra.mxu0 0
      %1119 = vmatprep.subr.bf16.mxu0 0
      %1120 = vmatpush1.bf16.xpose.msra.mxu0 0
      %1121 = vmatprep.subr.bf16.mxu0 0
      %1122 = vmatpush1.bf16.xpose.msra.mxu0 0
      %1123 = vmatprep.subr.bf16.mxu0 0
      %1124 = vmatpush1.bf16.xpose.msra.mxu0 0
      %1125 = vmatprep.subr.bf16.mxu0 0
      %1126 = vmatpush1.bf16.xpose.msra.mxu0 0
      %1127 = vmatprep.subr.bf16.mxu0 0
      %1128 = vmatpush1.bf16.xpose.msra.mxu0 0
      %1129 = vmatprep.subr.bf16.mxu0 0
      %1130 = vmatpush1.bf16.xpose.msra.mxu0 0
      %1131 = vmatprep.subr.bf16.mxu0 0
      %1132 = vmatpush1.bf16.xpose.msra.mxu0 0
      %1133 = vmatprep.subr.bf16.mxu0 0
      %1134 = vmatpush1.bf16.xpose.msra.mxu0 0
      %1135 = vmatprep.subr.bf16.mxu0 0
      %1136 = vmatpush1.bf16.xpose.msra.mxu0 0
      %1137 = vmatprep.mubr.bf16.mxu0 0
      %1138 = vmatmul.mubr.bf16.gmra.mrb[0].mxu0 %v1100
      %v1139 = vpop.f32.mrb[0].mxu0
      %v1140 = vadd.f32 %v853, %v1139
      %v1141 = vpop.f32.mrb[0].mxu0
      %v1142 = vpop.f32.mrb[0].mxu0
      %v1143 = vadd.f32 %v853, %v1142
      %v1144 = vpop.f32.mrb[0].mxu0
      %1145 = vdwg.mxu0
      %v1146 = vsel %vm903, %v1140, -inf
      %1147 = vmax.xlane.f32.xlu0 %v1146
      %v1148 = vpop.xlane.xlu0 %1147
      %v1149 = vsel %vm903, %v1143, -inf
      %1150 = vmax.xlane.f32.xlu0 %v1149
      %v1151 = vpop.xlane.xlu0 %1150
      %v1152 = vsub.f32 %v1140, %v1148
      %v1153 = vsub.f32 %v1143, %v1151
      %v1154 = vmul.f32 %v1152, 1.442695
      %v1155 = vpow.pop %v1154
      %v1156 = vmul.f32 %v1153, 1.442695
      %v1157 = vpow.pop %v1156
      %v1158 = vsel %vm903, %v1155, 0.0
      %1159 = vadd.xlane.f32.xlu0 %v1158
      %v1160 = vpop.xlane.xlu0 %1159
      %v1161 = vsel %vm903, %v1157, 0.0
      %1162 = vadd.xlane.f32.xlu0 %v1161
      %v1163 = vpop.xlane.xlu0 %1162
      %v1164 = vrcp.pop %v1160
      %v1165 = vrcp.pop %v1163
      %v1166 = vmul.f32 %v1155, %v1164
      %v1167 = vmul.f32 %v1157, %v1165
      %v1168 = vpack.c.bf16 %v1167, %v1166
      %1169 = vrot.lane.b32.xlu0 %v848, 112
      %v1170 = vpop.permute.xlu0 %1169
      %v1173 = vsel %vm903, %v1168, 0
      %1175 = vmatprep.subr.bf16.mxu0 0
      %1176 = vmatpush1.bf16.msra.mxu0 %v1170
      %1177 = vmatprep.subr.bf16.mxu0 0
      %1178 = vmatpush1.bf16.msra.mxu0 0
      %1179 = vmatprep.subr.bf16.mxu0 0
      %1180 = vmatpush1.bf16.msra.mxu0 0
      %1181 = vmatprep.subr.bf16.mxu0 0
      %1182 = vmatpush1.bf16.msra.mxu0 0
      %1183 = vmatprep.subr.bf16.mxu0 0
      %1184 = vmatpush1.bf16.msra.mxu0 0
      %1185 = vmatprep.subr.bf16.mxu0 0
      %1186 = vmatpush1.bf16.msra.mxu0 0
      %1187 = vmatprep.subr.bf16.mxu0 0
      %1188 = vmatpush1.bf16.msra.mxu0 0
      %1189 = vmatprep.subr.bf16.mxu0 0
      %1190 = vmatpush1.bf16.msra.mxu0 0
      %1191 = vmatprep.subr.bf16.mxu0 0
      %1192 = vmatpush1.bf16.msra.mxu0 0
      %1193 = vmatprep.subr.bf16.mxu0 0
      %1194 = vmatpush1.bf16.msra.mxu0 0
      %1195 = vmatprep.subr.bf16.mxu0 0
      %1196 = vmatpush1.bf16.msra.mxu0 0
      %1197 = vmatprep.subr.bf16.mxu0 0
      %1198 = vmatpush1.bf16.msra.mxu0 0
      %1199 = vmatprep.subr.bf16.mxu0 0
      %1200 = vmatpush1.bf16.msra.mxu0 0
      %1201 = vmatprep.subr.bf16.mxu0 0
      %1202 = vmatpush1.bf16.msra.mxu0 0
      %1203 = vmatprep.subr.bf16.mxu0 0
      %1204 = vmatpush1.bf16.msra.mxu0 0
      %1205 = vmatprep.subr.bf16.mxu0 0
      %1206 = vmatpush1.bf16.msra.mxu0 0
      %1207 = vmatprep.mubr.bf16.mxu0 0
      %1208 = vmatmul.mubr.bf16.gmra.mrb[0].mxu0 %v1173
      %v1209 = vpop.f32.mrb[0].mxu0
      %v1210 = vadd.f32 0.0, %v1209
      %v1211 = vpop.f32.mrb[0].mxu0
      %v1212 = vpop.f32.mrb[0].mxu0
      %v1213 = vadd.f32 0.0, %v1212
      %v1214 = vpop.f32.mrb[0].mxu0
      %1215 = vdwg.mxu0
      %1216 = vrot.lane.b32.xlu0 %v846, 104
      %v1217 = vpop.permute.xlu0 %1216
      %1218 = vrot.lane.b32.xlu0 %v847, 104
      %v1219 = vpop.permute.xlu0 %1218
      %v1221 = vsel %vm855, %v1217, 0
      %v1224 = vsel %vm855, %v1219, 0
      %1226 = vmatprep.subr.bf16.mxu0 0
      %1227 = vmatpush1.bf16.xpose.msra.mxu0 %v1224
      %1228 = vmatprep.subr.bf16.mxu0 0
      %1229 = vmatpush1.bf16.xpose.msra.mxu0 0
      %1230 = vmatprep.subr.bf16.mxu0 0
      %1231 = vmatpush1.bf16.xpose.msra.mxu0 0
      %1232 = vmatprep.subr.bf16.mxu0 0
      %1233 = vmatpush1.bf16.xpose.msra.mxu0 0
      %1234 = vmatprep.subr.bf16.mxu0 0
      %1235 = vmatpush1.bf16.xpose.msra.mxu0 0
      %1236 = vmatprep.subr.bf16.mxu0 0
      %1237 = vmatpush1.bf16.xpose.msra.mxu0 0
      %1238 = vmatprep.subr.bf16.mxu0 0
      %1239 = vmatpush1.bf16.xpose.msra.mxu0 0
      %1240 = vmatprep.subr.bf16.mxu0 0
      %1241 = vmatpush1.bf16.xpose.msra.mxu0 0
      %1242 = vmatprep.subr.bf16.mxu0 0
      %1243 = vmatpush1.bf16.xpose.msra.mxu0 0
      %1244 = vmatprep.subr.bf16.mxu0 0
      %1245 = vmatpush1.bf16.xpose.msra.mxu0 0
      %1246 = vmatprep.subr.bf16.mxu0 0
      %1247 = vmatpush1.bf16.xpose.msra.mxu0 0
      %1248 = vmatprep.subr.bf16.mxu0 0
      %1249 = vmatpush1.bf16.xpose.msra.mxu0 0
      %1250 = vmatprep.subr.bf16.mxu0 0
      %1251 = vmatpush1.bf16.xpose.msra.mxu0 0
      %1252 = vmatprep.subr.bf16.mxu0 0
      %1253 = vmatpush1.bf16.xpose.msra.mxu0 0
      %1254 = vmatprep.subr.bf16.mxu0 0
      %1255 = vmatpush1.bf16.xpose.msra.mxu0 0
      %1256 = vmatprep.subr.bf16.mxu0 0
      %1257 = vmatpush1.bf16.xpose.msra.mxu0 0
      %1258 = vmatprep.mubr.bf16.mxu0 0
      %1259 = vmatmul.mubr.bf16.gmra.mrb[0].mxu0 %v1221
      %v1260 = vpop.f32.mrb[0].mxu0
      %v1261 = vadd.f32 %v853, %v1260
      %v1262 = vpop.f32.mrb[0].mxu0
      %v1263 = vpop.f32.mrb[0].mxu0
      %v1264 = vadd.f32 %v853, %v1263
      %v1265 = vpop.f32.mrb[0].mxu0
      %1266 = vdwg.mxu0
      %v1267 = vsel %vm903, %v1261, -inf
      %1268 = vmax.xlane.f32.xlu0 %v1267
      %v1269 = vpop.xlane.xlu0 %1268
      %v1270 = vsel %vm903, %v1264, -inf
      %1271 = vmax.xlane.f32.xlu0 %v1270
      %v1272 = vpop.xlane.xlu0 %1271
      %v1273 = vsub.f32 %v1261, %v1269
      %v1274 = vsub.f32 %v1264, %v1272
      %v1275 = vmul.f32 %v1273, 1.442695
      %v1276 = vpow.pop %v1275
      %v1277 = vmul.f32 %v1274, 1.442695
      %v1278 = vpow.pop %v1277
      %v1279 = vsel %vm903, %v1276, 0.0
      %1280 = vadd.xlane.f32.xlu0 %v1279
      %v1281 = vpop.xlane.xlu0 %1280
      %v1282 = vsel %vm903, %v1278, 0.0
      %1283 = vadd.xlane.f32.xlu0 %v1282
      %v1284 = vpop.xlane.xlu0 %1283
      %v1285 = vrcp.pop %v1281
      %v1286 = vrcp.pop %v1284
      %v1287 = vmul.f32 %v1276, %v1285
      %v1288 = vmul.f32 %v1278, %v1286
      %v1289 = vpack.c.bf16 %v1288, %v1287
      %1290 = vrot.lane.b32.xlu0 %v848, 104
      %v1291 = vpop.permute.xlu0 %1290
      %v1294 = vsel %vm903, %v1289, 0
      %1296 = vmatprep.subr.bf16.mxu0 0
      %1297 = vmatpush1.bf16.msra.mxu0 %v1291
      %1298 = vmatprep.subr.bf16.mxu0 0
      %1299 = vmatpush1.bf16.msra.mxu0 0
      %1300 = vmatprep.subr.bf16.mxu0 0
      %1301 = vmatpush1.bf16.msra.mxu0 0
      %1302 = vmatprep.subr.bf16.mxu0 0
      %1303 = vmatpush1.bf16.msra.mxu0 0
      %1304 = vmatprep.subr.bf16.mxu0 0
      %1305 = vmatpush1.bf16.msra.mxu0 0
      %1306 = vmatprep.subr.bf16.mxu0 0
      %1307 = vmatpush1.bf16.msra.mxu0 0
      %1308 = vmatprep.subr.bf16.mxu0 0
      %1309 = vmatpush1.bf16.msra.mxu0 0
      %1310 = vmatprep.subr.bf16.mxu0 0
      %1311 = vmatpush1.bf16.msra.mxu0 0
      %1312 = vmatprep.subr.bf16.mxu0 0
      %1313 = vmatpush1.bf16.msra.mxu0 0
      %1314 = vmatprep.subr.bf16.mxu0 0
      %1315 = vmatpush1.bf16.msra.mxu0 0
      %1316 = vmatprep.subr.bf16.mxu0 0
      %1317 = vmatpush1.bf16.msra.mxu0 0
      %1318 = vmatprep.subr.bf16.mxu0 0
      %1319 = vmatpush1.bf16.msra.mxu0 0
      %1320 = vmatprep.subr.bf16.mxu0 0
      %1321 = vmatpush1.bf16.msra.mxu0 0
      %1322 = vmatprep.subr.bf16.mxu0 0
      %1323 = vmatpush1.bf16.msra.mxu0 0
      %1324 = vmatprep.subr.bf16.mxu0 0
      %1325 = vmatpush1.bf16.msra.mxu0 0
      %1326 = vmatprep.subr.bf16.mxu0 0
      %1327 = vmatpush1.bf16.msra.mxu0 0
      %1328 = vmatprep.mubr.bf16.mxu0 0
      %1329 = vmatmul.mubr.bf16.gmra.mrb[0].mxu0 %v1294
      %v1330 = vpop.f32.mrb[0].mxu0
      %v1331 = vadd.f32 0.0, %v1330
      %v1332 = vpop.f32.mrb[0].mxu0
      %v1333 = vpop.f32.mrb[0].mxu0
      %v1334 = vadd.f32 0.0, %v1333
      %v1335 = vpop.f32.mrb[0].mxu0
      %1336 = vdwg.mxu0
      %1339 = vrot.lane.b32.xlu0 %v1089, 8
      %v1340 = vpop.permute.xlu0 %1339
      %1341 = vrot.lane.b32.xlu0 %v1092, 8
      %v1342 = vpop.permute.xlu0 %1341
      %1347 = vrot.lane.b32.xlu0 %v1210, 16
      %v1348 = vpop.permute.xlu0 %1347
      %1349 = vrot.lane.b32.xlu0 %v1213, 16
      %v1350 = vpop.permute.xlu0 %1349
      %1355 = vrot.lane.b32.xlu0 %v1331, 24
      %v1356 = vpop.permute.xlu0 %1355
      %1357 = vrot.lane.b32.xlu0 %v1334, 24
      %v1358 = vpop.permute.xlu0 %1357
      %v1361 = vsel %vm855, %v965, %v1340
      %v1362 = vsel %vm855, %v968, %v1342
      %v1363 = vsel %vm903, %v1361, %v1348
      %v1364 = vsel %vm903, %v1362, %v1350
      %vm1365 = vcmask 195584
      %v1366 = vsel %vm1365, %v1363, %v1356
      %v1367 = vsel %vm1365, %v1364, %v1358
      %v1368 = vpack.c.bf16 %v1367, %v1366
      %v1369 = vld [vmem:[%s9] sm:$0xf]
      %v1370 = vld [vmem:[%s9 + $0x4] sm:$0xf]
      %v1371 = vld [vmem:[%s9 + $0x8] sm:$0xf]
      %v1372 = vld [vmem:[%s9 + $0xc] sm:$0xf]
      %v1373 = vld [vmem:[%s10] sm:$0x1]
      %v1375 = vlaneseq
      %v1376 = vshrl.u32 %v1375, 7
      %v1377 = vsub.s32 0, %v1376
      %v1378 = vrot.slane %v1373, %v1377
      %v1384 = vunpack.c.l.b16 %v1369
      %v1385 = vunpack.c.l.b16 %v1370
      %v1386 = vunpack.c.l.b16 %v1371
      %v1387 = vunpack.c.l.b16 %v1372
      %v1388 = vpack.c.b16 %v1385, %v1384
      %v1389 = vpack.c.b16 %v1387, %v1386
      %v1393 = vsel %vm669, %v1368, 0
      %1395 = vmatprep.subr.bf16.mxu0 0
      %1396 = vmatpush1.bf16.msra.mxu0 %v1388
      %1397 = vmatprep.subr.bf16.mxu0 0
      %1398 = vmatpush1.bf16.msra.mxu0 %v1389
      %1399 = vmatprep.subr.bf16.mxu0 0
      %1400 = vmatpush1.bf16.msra.mxu0 0
      %1401 = vmatprep.subr.bf16.mxu0 0
      %1402 = vmatpush1.bf16.msra.mxu0 0
      %1403 = vmatprep.subr.bf16.mxu0 0
      %1404 = vmatpush1.bf16.msra.mxu0 0
      %1405 = vmatprep.subr.bf16.mxu0 0
      %1406 = vmatpush1.bf16.msra.mxu0 0
      %1407 = vmatprep.subr.bf16.mxu0 0
      %1408 = vmatpush1.bf16.msra.mxu0 0
      %1409 = vmatprep.subr.bf16.mxu0 0
      %1410 = vmatpush1.bf16.msra.mxu0 0
      %1411 = vmatprep.subr.bf16.mxu0 0
      %1412 = vmatpush1.bf16.msra.mxu0 0
      %1413 = vmatprep.subr.bf16.mxu0 0
      %1414 = vmatpush1.bf16.msra.mxu0 0
      %1415 = vmatprep.subr.bf16.mxu0 0
      %1416 = vmatpush1.bf16.msra.mxu0 0
      %1417 = vmatprep.subr.bf16.mxu0 0
      %1418 = vmatpush1.bf16.msra.mxu0 0
      %1419 = vmatprep.subr.bf16.mxu0 0
      %1420 = vmatpush1.bf16.msra.mxu0 0
      %1421 = vmatprep.subr.bf16.mxu0 0
      %1422 = vmatpush1.bf16.msra.mxu0 0
      %1423 = vmatprep.subr.bf16.mxu0 0
      %1424 = vmatpush1.bf16.msra.mxu0 0
      %1425 = vmatprep.subr.bf16.mxu0 0
      %1426 = vmatpush1.bf16.msra.mxu0 0
      %1427 = vmatprep.mubr.bf16.mxu0 0
      %1428 = vmatmul.mubr.bf16.gmra.mrb[0].mxu0 %v1393
      %v1429 = vpop.f32.mrb[0].mxu0
      %v1430 = vadd.f32 %v1378, %v1429
      %v1431 = vpop.f32.mrb[0].mxu0
      %v1432 = vpop.f32.mrb[0].mxu0
      %v1433 = vadd.f32 %v1378, %v1432
      %v1434 = vpop.f32.mrb[0].mxu0
      %1435 = vdwg.mxu0
      %v1436 = vadd.f32 %v638, %v1430
      %v1437 = vadd.f32 %v639, %v1433
      %v1438 = vld [vmem:[%s11] sm:$0x1]
      %v1440 = vlaneseq
      %v1441 = vshrl.u32 %v1440, 7
      %v1442 = vsub.s32 0, %v1441
      %v1443 = vrot.slane %v1438, %v1442
      %v1445 = vmul.f32 %v1436, %v1443
      %v1446 = vmul.f32 %v1437, %v1443
      %v1447 = vld [vmem:[%s12] sm:$0x1]
      %v1449 = vlaneseq
      %v1450 = vshrl.u32 %v1449, 7
      %v1451 = vsub.s32 0, %v1450
      %v1452 = vrot.slane %v1447, %v1451
      %v1454 = vadd.f32 %v1445, %v1452
      %v1455 = vadd.f32 %v1446, %v1452
      %v1456 = vpack.c.bf16 %v1455, %v1454
      %v1457 = vld [vmem:[%s13] sm:$0xf]
      %v1458 = vld [vmem:[%s13 + $0x4] sm:$0xf]
      %v1459 = vld [vmem:[%s13 + $0x8] sm:$0xf]
      %v1460 = vld [vmem:[%s13 + $0xc] sm:$0xf]
      %v1461 = vld [vmem:[%s14] sm:$0x1]
      %v1463 = vlaneseq
      %v1464 = vshrl.u32 %v1463, 7
      %v1465 = vsub.s32 0, %v1464
      %v1466 = vrot.slane %v1461, %v1465
      %v1472 = vunpack.c.l.b16 %v1457
      %v1473 = vunpack.c.l.b16 %v1458
      %v1474 = vunpack.c.l.b16 %v1459
      %v1475 = vunpack.c.l.b16 %v1460
      %v1476 = vpack.c.b16 %v1473, %v1472
      %v1477 = vpack.c.b16 %v1475, %v1474
      %v1481 = vsel %vm669, %v1456, 0
      %1483 = vmatprep.subr.bf16.mxu0 0
      %1484 = vmatpush1.bf16.msra.mxu0 %v1476
      %1485 = vmatprep.subr.bf16.mxu0 0
      %1486 = vmatpush1.bf16.msra.mxu0 %v1477
      %1487 = vmatprep.subr.bf16.mxu0 0
      %1488 = vmatpush1.bf16.msra.mxu0 0
      %1489 = vmatprep.subr.bf16.mxu0 0
      %1490 = vmatpush1.bf16.msra.mxu0 0
      %1491 = vmatprep.subr.bf16.mxu0 0
      %1492 = vmatpush1.bf16.msra.mxu0 0
      %1493 = vmatprep.subr.bf16.mxu0 0
      %1494 = vmatpush1.bf16.msra.mxu0 0
      %1495 = vmatprep.subr.bf16.mxu0 0
      %1496 = vmatpush1.bf16.msra.mxu0 0
      %1497 = vmatprep.subr.bf16.mxu0 0
      %1498 = vmatpush1.bf16.msra.mxu0 0
      %1499 = vmatprep.subr.bf16.mxu0 0
      %1500 = vmatpush1.bf16.msra.mxu0 0
      %1501 = vmatprep.subr.bf16.mxu0 0
      %1502 = vmatpush1.bf16.msra.mxu0 0
      %1503 = vmatprep.subr.bf16.mxu0 0
      %1504 = vmatpush1.bf16.msra.mxu0 0
      %1505 = vmatprep.subr.bf16.mxu0 0
      %1506 = vmatpush1.bf16.msra.mxu0 0
      %1507 = vmatprep.subr.bf16.mxu0 0
      %1508 = vmatpush1.bf16.msra.mxu0 0
      %1509 = vmatprep.subr.bf16.mxu0 0
      %1510 = vmatpush1.bf16.msra.mxu0 0
      %1511 = vmatprep.subr.bf16.mxu0 0
      %1512 = vmatpush1.bf16.msra.mxu0 0
      %1513 = vmatprep.subr.bf16.mxu0 0
      %1514 = vmatpush1.bf16.msra.mxu0 0
      %1515 = vmatprep.mubr.bf16.mxu0 0
      %1516 = vmatmul.mubr.bf16.gmra.mrb[0].mxu0 %v1481
      %v1517 = vpop.f32.mrb[0].mxu0
      %v1518 = vadd.f32 %v1466, %v1517
      %v1519 = vpop.f32.mrb[0].mxu0
      %v1520 = vpop.f32.mrb[0].mxu0
      %v1521 = vadd.f32 %v1466, %v1520
      %v1522 = vpop.f32.mrb[0].mxu0
      %1523 = vdwg.mxu0
      %v1524 = vmax.f32 %v1518, 0.0
      %v1525 = vmax.f32 %v1521, 0.0
      %v1526 = vpack.c.bf16 %v1525, %v1524
      %v1527 = vld [vmem:[%s15] sm:$0xf]
      %v1528 = vld [vmem:[%s15 + $0x4] sm:$0xf]
      %v1529 = vld [vmem:[%s15 + $0x8] sm:$0xf]
      %v1530 = vld [vmem:[%s15 + $0xc] sm:$0xf]
      %v1531 = vld [vmem:[%s15 + $0x10] sm:$0xf]
      %v1532 = vld [vmem:[%s15 + $0x14] sm:$0xf]
      %v1533 = vld [vmem:[%s15 + $0x18] sm:$0xf]
      %v1534 = vld [vmem:[%s15 + $0x1c] sm:$0xf]
      %v1535 = vld [vmem:[%s16] sm:$0x1]
      %v1537 = vlaneseq
      %v1538 = vshrl.u32 %v1537, 7
      %v1539 = vsub.s32 0, %v1538
      %v1540 = vrot.slane %v1535, %v1539
      %v1550 = vunpack.c.l.b16 %v1527
      %v1551 = vunpack.c.l.b16 %v1528
      %v1552 = vunpack.c.l.b16 %v1529
      %v1553 = vunpack.c.l.b16 %v1530
      %v1554 = vunpack.c.l.b16 %v1531
      %v1555 = vunpack.c.l.b16 %v1532
      %v1556 = vunpack.c.l.b16 %v1533
      %v1557 = vunpack.c.l.b16 %v1534
      %v1558 = vpack.c.b16 %v1551, %v1550
      %v1559 = vpack.c.b16 %v1553, %v1552
      %v1560 = vpack.c.b16 %v1555, %v1554
      %v1561 = vpack.c.b16 %v1557, %v1556
      %vm1566 = vcmask 523264
      %v1568 = vsel %vm1566, %v1526, 0
      %1570 = vmatprep.subr.bf16.mxu0 0
      %1571 = vmatpush1.bf16.msra.mxu0 %v1558
      %1572 = vmatprep.subr.bf16.mxu0 0
      %1573 = vmatpush1.bf16.msra.mxu0 %v1559
      %1574 = vmatprep.subr.bf16.mxu0 0
      %1575 = vmatpush1.bf16.msra.mxu0 %v1560
      %1576 = vmatprep.subr.bf16.mxu0 0
      %1577 = vmatpush1.bf16.msra.mxu0 %v1561
      %1578 = vmatprep.subr.bf16.mxu0 0
      %1579 = vmatpush1.bf16.msra.mxu0 0
      %1580 = vmatprep.subr.bf16.mxu0 0
      %1581 = vmatpush1.bf16.msra.mxu0 0
      %1582 = vmatprep.subr.bf16.mxu0 0
      %1583 = vmatpush1.bf16.msra.mxu0 0
      %1584 = vmatprep.subr.bf16.mxu0 0
      %1585 = vmatpush1.bf16.msra.mxu0 0
      %1586 = vmatprep.subr.bf16.mxu0 0
      %1587 = vmatpush1.bf16.msra.mxu0 0
      %1588 = vmatprep.subr.bf16.mxu0 0
      %1589 = vmatpush1.bf16.msra.mxu0 0
      %1590 = vmatprep.subr.bf16.mxu0 0
      %1591 = vmatpush1.bf16.msra.mxu0 0
      %1592 = vmatprep.subr.bf16.mxu0 0
      %1593 = vmatpush1.bf16.msra.mxu0 0
      %1594 = vmatprep.subr.bf16.mxu0 0
      %1595 = vmatpush1.bf16.msra.mxu0 0
      %1596 = vmatprep.subr.bf16.mxu0 0
      %1597 = vmatpush1.bf16.msra.mxu0 0
      %1598 = vmatprep.subr.bf16.mxu0 0
      %1599 = vmatpush1.bf16.msra.mxu0 0
      %1600 = vmatprep.subr.bf16.mxu0 0
      %1601 = vmatpush1.bf16.msra.mxu0 0
      %1602 = vmatprep.mubr.bf16.mxu0 0
      %1603 = vmatmul.mubr.bf16.gmra.mrb[0].mxu0 %v1568
      %v1604 = vpop.f32.mrb[0].mxu0
      %v1605 = vadd.f32 %v1540, %v1604
      %v1606 = vpop.f32.mrb[0].mxu0
      %v1607 = vpop.f32.mrb[0].mxu0
      %v1608 = vadd.f32 %v1540, %v1607
      %v1609 = vpop.f32.mrb[0].mxu0
      %1610 = vdwg.mxu0
      %v1611 = vadd.f32 %v1454, %v1605
      %v1612 = vadd.f32 %v1455, %v1608
      %v1613 = vld [vmem:[%s17] sm:$0x1]
      %v1615 = vlaneseq
      %v1616 = vshrl.u32 %v1615, 7
      %v1617 = vsub.s32 0, %v1616
      %v1618 = vrot.slane %v1613, %v1617
      %v1620 = vmul.f32 %v1611, %v1618
      %v1621 = vmul.f32 %v1612, %v1618
      %v1622 = vld [vmem:[%s18] sm:$0x1]
      %v1624 = vlaneseq
      %v1625 = vshrl.u32 %v1624, 7
      %v1626 = vsub.s32 0, %v1625
      %v1627 = vrot.slane %v1622, %v1626
      %v1629 = vadd.f32 %v1620, %v1627
      %v1630 = vadd.f32 %v1621, %v1627
      %1631 = vst.msk [vmem:[%s636] sm:$0xff] %vm669, %v1629
      %1632 = vst.msk [vmem:[%s636 + $0x8] sm:$0xff] %vm669, %v1630
      %p1633 = scmp.lt.s32.totalorder %s30, 1
      %s1634 = scalar_select %p1633, %s30, 1
      %s1635 = smul.addr %s1634, 2
      %s1636 = smul.addr %s1635, 8
      %s1637 = scalar_lea.vmem %s19, %s1636
      // Predicated region
      $region97: #{transformer_forward.5} parent=95 // pred_check
        %p1638 = pneg %p462
      $region98: #{transformer_forward.5} parent=95 // pred_check_branch
        %1640 = sbr.rel (%p1638) target = $region100
      $region99: #{transformer_forward.5} parent=95 // pred_region
        _
      $region100: #{transformer_forward.5} parent=95 // pred_fallthru
        _
    $region96: #{transformer_forward.5} parent=5 // pred_fallthru
      _
    %p1641 = scmp.le.s32.totalorder 2, %s25
    // Predicated region
    $region101: #{transformer_forward.5} parent=5 // pred_check
      %p1642 = pneg %p1641
    $region102: #{transformer_forward.5} parent=5 // pred_check_branch
      %1644 = sbr.rel (%p1642) target = $region104
    $region103: #{transformer_forward.5} parent=5 // pred_region
      %s1645 = ssub.s32 %s25, 2
      // Predicated region
      $region105: #{transformer_forward.5} parent=103 // pred_check
        %p1646 = pneg %p468
      $region106: #{transformer_forward.5} parent=103 // pred_check_branch
        %1648 = sbr.rel (%p1646) target = $region108
      $region107: #{transformer_forward.5} parent=103 // pred_region
        %p1649 = scmp.lt.s32.totalorder %s31, 1
        %s1650 = scalar_select %p1649, %s31, 1
        %s1651 = smul.addr %s1650, 2
        %s1652 = smul.addr %s1651, 8
        %s1653 = scalar_lea.vmem %s19, %s1652
      $region108: #{transformer_forward.5} parent=103 // pred_fallthru
        _
    $region104: #{transformer_forward.5} parent=5 // pred_fallthru
      _
  $region6: #{transformer_forward.5} parent=0 // loop_footer
    %s29 = sadd.s32 1, %s25
  $region7: #{transformer_forward.5} parent=0 // loop_footer_branch
    %24 = sbr.rel target = $region3
  $region8: #{transformer_forward.5} parent=0 // loop_exit
    _

// kernel: transformer_forward.8
$region0: #{transformer_forward.8}
  #allocation0 [shape = 'u32[]', space=smem, size = 0x4, offset = 0x4, fixed_abs, tag = 'smem constant byte address 0x4 - core index']
  #allocation1 [shape = 'u32[144,128]{1,0:T(1,128)}', space=vmem, size = 0x12000, scoped, tag = 'internal scratch']
  %s0 = inlined_call_operand.smem [shape: u32[32], index: -1, kind: input, shape index: {}]
  %s1 = sld [smem:[%s0]]
  %s2 = scalar_lea.smem %s0, 1
  %s3 = sld [smem:[%s2]]
  %s4 = scalar_lea.smem %s0, 2
  %s5 = sld [smem:[%s4]]
  %s6 = scalar_lea.smem %s0, 3
  %s7 = sld [smem:[%s6]]
  %s8 = scalar_lea.smem %s0, 4
  %s9 = sld [smem:[%s8]]
  %s10 = scalar_lea.smem %s0, 5
  %s11 = sld [smem:[%s10]]
  %s12 = scalar_lea.smem %s0, 6
  %s13 = sld [smem:[%s12]]
  %s14 = scalar_lea.smem %s0, 7
  %s15 = sld [smem:[%s14]]
  %s16 = scalar_lea.smem %s0, 8
  %s17 = sld [smem:[%s16]]
  %s18 = scalar_lea.smem %s0, 9
  %s19 = sld [smem:[%s18]]
  %s20 = scalar_lea.smem %s0, 10
  %s21 = sld [smem:[%s20]]
  %s22 = scalar_lea.smem %s0, 11
  %s23 = sld [smem:[%s22]]
  %s24 = scalar_lea.smem %s0, 12
  %s25 = sld [smem:[%s24]]
  %s26 = scalar_lea.smem %s0, 13
  %s27 = sld [smem:[%s26]]
  %s28 = scalar_lea.smem %s0, 14
  %s29 = sld [smem:[%s28]]
  %s30 = scalar_lea.smem %s0, 15
  %s31 = sld [smem:[%s30]]
  %s32 = scalar_lea.smem %s0, 16
  %s33 = sld [smem:[%s32]]
  %s34 = scalar_lea.smem %s0, 17
  %s35 = sld [smem:[%s34]]
  %s36 = scalar_lea.smem %s0, 18
  %s37 = sld [smem:[%s36]]
  %s38 = scalar_lea.smem %s0, 19
  %s39 = sld [smem:[%s38]]
  %s40 = scalar_lea.smem %s0, 20
  %s41 = sld [smem:[%s40]]
  %s42 = scalar_lea.smem %s0, 21
  %s43 = sld [smem:[%s42]]
  %s44 = scalar_lea.smem %s0, 22
  %s45 = sld [smem:[%s44]]
  %s46 = scalar_lea.smem %s0, 23
  %s47 = sld [smem:[%s46]]
  %s48 = scalar_lea.smem %s0, 24
  %s49 = sld [smem:[%s48]]
  %s50 = scalar_lea.smem %s0, 25
  %s51 = sld [smem:[%s50]]
  %s52 = scalar_lea.smem %s0, 26
  %s53 = sld [smem:[%s52]]
  %s54 = scalar_lea.smem %s0, 27
  %s55 = sld [smem:[%s54]]
  %s56 = scalar_lea.smem %s0, 28
  %s57 = sld [smem:[%s56]]
  %s58 = scalar_lea.smem %s0, 29
  %s59 = sld [smem:[%s58]]
  %s60 = scalar_lea.smem %s0, 30
  %s61 = sld [smem:[%s60]]
  %s62 = scalar_lea.smem %s0, 31
  %s63 = sld [smem:[%s62]]
  %s64 = sld [smem:[#allocation0]]
  $region157: #{transformer_forward.8} parent=0
    _
  %s66 = ssub.s32 1, %s64
  %s67 = scalar_select 0, %s66, %s64
  loop: start=0, step=1, limit=4
  $region2: #{transformer_forward.8} parent=0 // loop_pre_header
    _
  $region3: #{transformer_forward.8} parent=0 // loop_header
    %s69 = sphi 0, %s73
    %p70 = scmp.ge.s32.totalorder %s69, 4
    %s79 = sphi 0, %s81
    %s82 = sphi 0, %s79
    %s83 = sphi 0, %s82
    %s99 = sphi 0, %s83
    %s105 = sphi 0, %s107
    %s108 = sphi 0, %s105
    %s109 = sphi 0, %s108
    %s125 = sphi 0, %s109
    %s131 = sphi 0, %s133
    %s134 = sphi 0, %s131
    %s135 = sphi 0, %s134
    %s151 = sphi 0, %s135
    %s157 = sphi 0, %s159
    %s160 = sphi 0, %s157
    %s161 = sphi 0, %s160
    %s177 = sphi 0, %s161
    %s183 = sphi 0, %s185
    %s186 = sphi 0, %s183
    %s187 = sphi 0, %s186
    %s203 = sphi 0, %s187
    %s207 = sphi 0, %s207
    %s209 = sphi 0, %s207
    %s210 = sphi 0, %s209
    %s224 = sphi 0, %s210
    %s228 = sphi 0, %s228
    %s230 = sphi 0, %s228
    %s231 = sphi 0, %s230
    %s245 = sphi 0, %s231
    %s249 = sphi 0, %s249
    %s251 = sphi 0, %s249
    %s252 = sphi 0, %s251
    %s266 = sphi 0, %s252
    %s270 = sphi 0, %s270
    %s272 = sphi 0, %s270
    %s273 = sphi 0, %s272
    %s287 = sphi 0, %s273
    %s291 = sphi 0, %s291
    %s293 = sphi 0, %s291
    %s294 = sphi 0, %s293
    %s308 = sphi 0, %s294
    %s312 = sphi 0, %s312
    %s314 = sphi 0, %s312
    %s315 = sphi 0, %s314
    %s329 = sphi 0, %s315
    %s333 = sphi 0, %s333
    %s335 = sphi 0, %s333
    %s336 = sphi 0, %s335
    %s350 = sphi 0, %s336
    %s354 = sphi 0, %s354
    %s356 = sphi 0, %s354
    %s357 = sphi 0, %s356
    %s371 = sphi 0, %s357
    %s375 = sphi 0, %s375
    %s377 = sphi 0, %s375
    %s378 = sphi 0, %s377
    %s392 = sphi 0, %s378
    %s396 = sphi 0, %s396
    %s398 = sphi 0, %s396
    %s399 = sphi 0, %s398
    %s413 = sphi 0, %s399
    %s417 = sphi 0, %s417
    %s419 = sphi 0, %s417
    %s420 = sphi 0, %s419
    %s434 = sphi 0, %s420
    %s438 = sphi 0, %s438
    %s440 = sphi 0, %s438
    %s441 = sphi 0, %s440
    %s455 = sphi 0, %s441
    %s459 = sphi 0, %s459
    %s461 = sphi 0, %s459
    %s462 = sphi 0, %s461
    %s476 = sphi 0, %s462
    %s480 = sphi 0, %s480
    %s482 = sphi 0, %s480
    %s483 = sphi 0, %s482
    %s497 = sphi 0, %s483
    %s501 = sphi 0, %s501
    %s503 = sphi 0, %s501
    %s504 = sphi 0, %s503
    %s518 = sphi 0, %s504
    %s522 = sphi 0, %s522
    %s524 = sphi 0, %s522
    %s525 = sphi 0, %s524
    %s539 = sphi 0, %s525
    %s543 = sphi 0, %s543
    %s545 = sphi 0, %s543
    %s546 = sphi 0, %s545
    %s560 = sphi 0, %s546
    %s564 = sphi 0, %s564
    %s566 = sphi 0, %s564
    %s567 = sphi 0, %s566
    %s581 = sphi 0, %s567
    %s585 = sphi 0, %s585
    %s587 = sphi 0, %s585
    %s588 = sphi 0, %s587
    %s602 = sphi 0, %s588
    %s606 = sphi 0, %s606
    %s608 = sphi 0, %s606
    %s609 = sphi 0, %s608
    %s623 = sphi 0, %s609
    %s627 = sphi 0, %s627
    %s629 = sphi 0, %s627
    %s630 = sphi 0, %s629
    %s644 = sphi 0, %s630
    %s648 = sphi 0, %s648
    %s650 = sphi 0, %s648
    %s651 = sphi 0, %s650
    %s665 = sphi 0, %s651
    %s669 = sphi 0, %s669
    %s671 = sphi 0, %s669
    %s672 = sphi 0, %s671
    %s686 = sphi 0, %s672
    %s690 = sphi 0, %s690
    %s692 = sphi 0, %s690
    %s693 = sphi 0, %s692
    %s707 = sphi 0, %s693
    %s711 = sphi 0, %s711
    %s713 = sphi 0, %s711
    %s714 = sphi 0, %s713
    %s728 = sphi 0, %s714
    %s732 = sphi 0, %s732
    %s734 = sphi 0, %s732
    %s735 = sphi 0, %s734
    %s749 = sphi 0, %s735
    %s755 = sphi 0, %s757
    %s758 = sphi 0, %s755
    %s759 = sphi 0, %s758
    %s775 = sphi 0, %s759
  $region4: #{transformer_forward.8} parent=0 // loop_header_branch
    %72 = sbr.rel (%p70) target = $region8
  $region5: #{transformer_forward.8} parent=0 // loop_body
    %s74 = ssub.s32 %s69, 1
    %s75 = ssub.s32 %s69, 2
    %s76 = sadd.s32 %s69, 1
    %s77 = ssub.s32 %s69, %s76
    %p78 = scmp.eq.s32.totalorder %s77, 0
    %s80 = sadd.s32 %s79, 1
    %s81 = scalar_select %p78, %s79, %s80
    %p84 = pneg %p78
    %p85 = scmp.eq.s32.totalorder %s69, 1
    %p86 = por %p84, %p85
    %p87 = scmp.ne.s32.totalorder %s79, %s82
    %p88 = scmp.eq.s32.totalorder %s69, 0
    %p89 = por %p87, %p88
    %p90 = scmp.ne.s32.totalorder %s79, %s82
    %p91 = scmp.eq.s32.totalorder %s74, 1
    %p92 = por %p90, %p91
    %p93 = scmp.ne.s32.totalorder %s82, %s83
    %p94 = scmp.eq.s32.totalorder %s74, 0
    %p95 = por %p93, %p94
    %p96 = scmp.ne.s32.totalorder %s82, %s83
    %p97 = scmp.eq.s32.totalorder %s75, 1
    %p98 = por %p96, %p97
    %p100 = scmp.ne.s32.totalorder %s83, %s99
    %p101 = scmp.eq.s32.totalorder %s75, 0
    %p102 = por %p100, %p101
    %s103 = ssub.s32 %s69, %s76
    %p104 = scmp.eq.s32.totalorder %s103, 0
    %s106 = sadd.s32 %s105, 1
    %s107 = scalar_select %p104, %s105, %s106
    %p110 = pneg %p104
    %p111 = scmp.eq.s32.totalorder %s69, 1
    %p112 = por %p110, %p111
    %p113 = scmp.ne.s32.totalorder %s105, %s108
    %p114 = scmp.eq.s32.totalorder %s69, 0
    %p115 = por %p113, %p114
    %p116 = scmp.ne.s32.totalorder %s105, %s108
    %p117 = scmp.eq.s32.totalorder %s74, 1
    %p118 = por %p116, %p117
    %p119 = scmp.ne.s32.totalorder %s108, %s109
    %p120 = scmp.eq.s32.totalorder %s74, 0
    %p121 = por %p119, %p120
    %p122 = scmp.ne.s32.totalorder %s108, %s109
    %p123 = scmp.eq.s32.totalorder %s75, 1
    %p124 = por %p122, %p123
    %p126 = scmp.ne.s32.totalorder %s109, %s125
    %p127 = scmp.eq.s32.totalorder %s75, 0
    %p128 = por %p126, %p127
    %s129 = ssub.s32 %s69, %s76
    %p130 = scmp.eq.s32.totalorder %s129, 0
    %s132 = sadd.s32 %s131, 1
    %s133 = scalar_select %p130, %s131, %s132
    %p136 = pneg %p130
    %p137 = scmp.eq.s32.totalorder %s69, 1
    %p138 = por %p136, %p137
    %p139 = scmp.ne.s32.totalorder %s131, %s134
    %p140 = scmp.eq.s32.totalorder %s69, 0
    %p141 = por %p139, %p140
    %p142 = scmp.ne.s32.totalorder %s131, %s134
    %p143 = scmp.eq.s32.totalorder %s74, 1
    %p144 = por %p142, %p143
    %p145 = scmp.ne.s32.totalorder %s134, %s135
    %p146 = scmp.eq.s32.totalorder %s74, 0
    %p147 = por %p145, %p146
    %p148 = scmp.ne.s32.totalorder %s134, %s135
    %p149 = scmp.eq.s32.totalorder %s75, 1
    %p150 = por %p148, %p149
    %p152 = scmp.ne.s32.totalorder %s135, %s151
    %p153 = scmp.eq.s32.totalorder %s75, 0
    %p154 = por %p152, %p153
    %s155 = ssub.s32 %s69, %s76
    %p156 = scmp.eq.s32.totalorder %s155, 0
    %s158 = sadd.s32 %s157, 1
    %s159 = scalar_select %p156, %s157, %s158
    %p162 = pneg %p156
    %p163 = scmp.eq.s32.totalorder %s69, 1
    %p164 = por %p162, %p163
    %p165 = scmp.ne.s32.totalorder %s157, %s160
    %p166 = scmp.eq.s32.totalorder %s69, 0
    %p167 = por %p165, %p166
    %p168 = scmp.ne.s32.totalorder %s157, %s160
    %p169 = scmp.eq.s32.totalorder %s74, 1
    %p170 = por %p168, %p169
    %p171 = scmp.ne.s32.totalorder %s160, %s161
    %p172 = scmp.eq.s32.totalorder %s74, 0
    %p173 = por %p171, %p172
    %p174 = scmp.ne.s32.totalorder %s160, %s161
    %p175 = scmp.eq.s32.totalorder %s75, 1
    %p176 = por %p174, %p175
    %p178 = scmp.ne.s32.totalorder %s161, %s177
    %p179 = scmp.eq.s32.totalorder %s75, 0
    %p180 = por %p178, %p179
    %s181 = ssub.s32 %s69, %s76
    %p182 = scmp.eq.s32.totalorder %s181, 0
    %s184 = sadd.s32 %s183, 1
    %s185 = scalar_select %p182, %s183, %s184
    %p188 = pneg %p182
    %p189 = scmp.eq.s32.totalorder %s69, 1
    %p190 = por %p188, %p189
    %p191 = scmp.ne.s32.totalorder %s183, %s186
    %p192 = scmp.eq.s32.totalorder %s69, 0
    %p193 = por %p191, %p192
    %p194 = scmp.ne.s32.totalorder %s183, %s186
    %p195 = scmp.eq.s32.totalorder %s74, 1
    %p196 = por %p194, %p195
    %p197 = scmp.ne.s32.totalorder %s186, %s187
    %p198 = scmp.eq.s32.totalorder %s74, 0
    %p199 = por %p197, %p198
    %p200 = scmp.ne.s32.totalorder %s186, %s187
    %p201 = scmp.eq.s32.totalorder %s75, 1
    %p202 = por %p200, %p201
    %p204 = scmp.ne.s32.totalorder %s187, %s203
    %p205 = scmp.eq.s32.totalorder %s75, 0
    %p206 = por %p204, %p205
    %s208 = sadd.s32 %s207, 1
    %p211 = scmp.eq.s32.totalorder %s69, 1
    %p212 = scmp.ne.s32.totalorder %s207, %s209
    %p213 = scmp.eq.s32.totalorder %s69, 0
    %p214 = por %p212, %p213
    %p215 = scmp.ne.s32.totalorder %s207, %s209
    %p216 = scmp.eq.s32.totalorder %s74, 1
    %p217 = por %p215, %p216
    %p218 = scmp.ne.s32.totalorder %s209, %s210
    %p219 = scmp.eq.s32.totalorder %s74, 0
    %p220 = por %p218, %p219
    %p221 = scmp.ne.s32.totalorder %s209, %s210
    %p222 = scmp.eq.s32.totalorder %s75, 1
    %p223 = por %p221, %p222
    %p225 = scmp.ne.s32.totalorder %s210, %s224
    %p226 = scmp.eq.s32.totalorder %s75, 0
    %p227 = por %p225, %p226
    %s229 = sadd.s32 %s228, 1
    %p232 = scmp.eq.s32.totalorder %s69, 1
    %p233 = scmp.ne.s32.totalorder %s228, %s230
    %p234 = scmp.eq.s32.totalorder %s69, 0
    %p235 = por %p233, %p234
    %p236 = scmp.ne.s32.totalorder %s228, %s230
    %p237 = scmp.eq.s32.totalorder %s74, 1
    %p238 = por %p236, %p237
    %p239 = scmp.ne.s32.totalorder %s230, %s231
    %p240 = scmp.eq.s32.totalorder %s74, 0
    %p241 = por %p239, %p240
    %p242 = scmp.ne.s32.totalorder %s230, %s231
    %p243 = scmp.eq.s32.totalorder %s75, 1
    %p244 = por %p242, %p243
    %p246 = scmp.ne.s32.totalorder %s231, %s245
    %p247 = scmp.eq.s32.totalorder %s75, 0
    %p248 = por %p246, %p247
    %s250 = sadd.s32 %s249, 1
    %p253 = scmp.eq.s32.totalorder %s69, 1
    %p254 = scmp.ne.s32.totalorder %s249, %s251
    %p255 = scmp.eq.s32.totalorder %s69, 0
    %p256 = por %p254, %p255
    %p257 = scmp.ne.s32.totalorder %s249, %s251
    %p258 = scmp.eq.s32.totalorder %s74, 1
    %p259 = por %p257, %p258
    %p260 = scmp.ne.s32.totalorder %s251, %s252
    %p261 = scmp.eq.s32.totalorder %s74, 0
    %p262 = por %p260, %p261
    %p263 = scmp.ne.s32.totalorder %s251, %s252
    %p264 = scmp.eq.s32.totalorder %s75, 1
    %p265 = por %p263, %p264
    %p267 = scmp.ne.s32.totalorder %s252, %s266
    %p268 = scmp.eq.s32.totalorder %s75, 0
    %p269 = por %p267, %p268
    %s271 = sadd.s32 %s270, 1
    %p274 = scmp.eq.s32.totalorder %s69, 1
    %p275 = scmp.ne.s32.totalorder %s270, %s272
    %p276 = scmp.eq.s32.totalorder %s69, 0
    %p277 = por %p275, %p276
    %p278 = scmp.ne.s32.totalorder %s270, %s272
    %p279 = scmp.eq.s32.totalorder %s74, 1
    %p280 = por %p278, %p279
    %p281 = scmp.ne.s32.totalorder %s272, %s273
    %p282 = scmp.eq.s32.totalorder %s74, 0
    %p283 = por %p281, %p282
    %p284 = scmp.ne.s32.totalorder %s272, %s273
    %p285 = scmp.eq.s32.totalorder %s75, 1
    %p286 = por %p284, %p285
    %p288 = scmp.ne.s32.totalorder %s273, %s287
    %p289 = scmp.eq.s32.totalorder %s75, 0
    %p290 = por %p288, %p289
    %s292 = sadd.s32 %s291, 1
    %p295 = scmp.eq.s32.totalorder %s69, 1
    %p296 = scmp.ne.s32.totalorder %s291, %s293
    %p297 = scmp.eq.s32.totalorder %s69, 0
    %p298 = por %p296, %p297
    %p299 = scmp.ne.s32.totalorder %s291, %s293
    %p300 = scmp.eq.s32.totalorder %s74, 1
    %p301 = por %p299, %p300
    %p302 = scmp.ne.s32.totalorder %s293, %s294
    %p303 = scmp.eq.s32.totalorder %s74, 0
    %p304 = por %p302, %p303
    %p305 = scmp.ne.s32.totalorder %s293, %s294
    %p306 = scmp.eq.s32.totalorder %s75, 1
    %p307 = por %p305, %p306
    %p309 = scmp.ne.s32.totalorder %s294, %s308
    %p310 = scmp.eq.s32.totalorder %s75, 0
    %p311 = por %p309, %p310
    %s313 = sadd.s32 %s312, 1
    %p316 = scmp.eq.s32.totalorder %s69, 1
    %p317 = scmp.ne.s32.totalorder %s312, %s314
    %p318 = scmp.eq.s32.totalorder %s69, 0
    %p319 = por %p317, %p318
    %p320 = scmp.ne.s32.totalorder %s312, %s314
    %p321 = scmp.eq.s32.totalorder %s74, 1
    %p322 = por %p320, %p321
    %p323 = scmp.ne.s32.totalorder %s314, %s315
    %p324 = scmp.eq.s32.totalorder %s74, 0
    %p325 = por %p323, %p324
    %p326 = scmp.ne.s32.totalorder %s314, %s315
    %p327 = scmp.eq.s32.totalorder %s75, 1
    %p328 = por %p326, %p327
    %p330 = scmp.ne.s32.totalorder %s315, %s329
    %p331 = scmp.eq.s32.totalorder %s75, 0
    %p332 = por %p330, %p331
    %s334 = sadd.s32 %s333, 1
    %p337 = scmp.eq.s32.totalorder %s69, 1
    %p338 = scmp.ne.s32.totalorder %s333, %s335
    %p339 = scmp.eq.s32.totalorder %s69, 0
    %p340 = por %p338, %p339
    %p341 = scmp.ne.s32.totalorder %s333, %s335
    %p342 = scmp.eq.s32.totalorder %s74, 1
    %p343 = por %p341, %p342
    %p344 = scmp.ne.s32.totalorder %s335, %s336
    %p345 = scmp.eq.s32.totalorder %s74, 0
    %p346 = por %p344, %p345
    %p347 = scmp.ne.s32.totalorder %s335, %s336
    %p348 = scmp.eq.s32.totalorder %s75, 1
    %p349 = por %p347, %p348
    %p351 = scmp.ne.s32.totalorder %s336, %s350
    %p352 = scmp.eq.s32.totalorder %s75, 0
    %p353 = por %p351, %p352
    %s355 = sadd.s32 %s354, 1
    %p358 = scmp.eq.s32.totalorder %s69, 1
    %p359 = scmp.ne.s32.totalorder %s354, %s356
    %p360 = scmp.eq.s32.totalorder %s69, 0
    %p361 = por %p359, %p360
    %p362 = scmp.ne.s32.totalorder %s354, %s356
    %p363 = scmp.eq.s32.totalorder %s74, 1
    %p364 = por %p362, %p363
    %p365 = scmp.ne.s32.totalorder %s356, %s357
    %p366 = scmp.eq.s32.totalorder %s74, 0
    %p367 = por %p365, %p366
    %p368 = scmp.ne.s32.totalorder %s356, %s357
    %p369 = scmp.eq.s32.totalorder %s75, 1
    %p370 = por %p368, %p369
    %p372 = scmp.ne.s32.totalorder %s357, %s371
    %p373 = scmp.eq.s32.totalorder %s75, 0
    %p374 = por %p372, %p373
    %s376 = sadd.s32 %s375, 1
    %p379 = scmp.eq.s32.totalorder %s69, 1
    %p380 = scmp.ne.s32.totalorder %s375, %s377
    %p381 = scmp.eq.s32.totalorder %s69, 0
    %p382 = por %p380, %p381
    %p383 = scmp.ne.s32.totalorder %s375, %s377
    %p384 = scmp.eq.s32.totalorder %s74, 1
    %p385 = por %p383, %p384
    %p386 = scmp.ne.s32.totalorder %s377, %s378
    %p387 = scmp.eq.s32.totalorder %s74, 0
    %p388 = por %p386, %p387
    %p389 = scmp.ne.s32.totalorder %s377, %s378
    %p390 = scmp.eq.s32.totalorder %s75, 1
    %p391 = por %p389, %p390
    %p393 = scmp.ne.s32.totalorder %s378, %s392
    %p394 = scmp.eq.s32.totalorder %s75, 0
    %p395 = por %p393, %p394
    %s397 = sadd.s32 %s396, 1
    %p400 = scmp.eq.s32.totalorder %s69, 1
    %p401 = scmp.ne.s32.totalorder %s396, %s398
    %p402 = scmp.eq.s32.totalorder %s69, 0
    %p403 = por %p401, %p402
    %p404 = scmp.ne.s32.totalorder %s396, %s398
    %p405 = scmp.eq.s32.totalorder %s74, 1
    %p406 = por %p404, %p405
    %p407 = scmp.ne.s32.totalorder %s398, %s399
    %p408 = scmp.eq.s32.totalorder %s74, 0
    %p409 = por %p407, %p408
    %p410 = scmp.ne.s32.totalorder %s398, %s399
    %p411 = scmp.eq.s32.totalorder %s75, 1
    %p412 = por %p410, %p411
    %p414 = scmp.ne.s32.totalorder %s399, %s413
    %p415 = scmp.eq.s32.totalorder %s75, 0
    %p416 = por %p414, %p415
    %s418 = sadd.s32 %s417, 1
    %p421 = scmp.eq.s32.totalorder %s69, 1
    %p422 = scmp.ne.s32.totalorder %s417, %s419
    %p423 = scmp.eq.s32.totalorder %s69, 0
    %p424 = por %p422, %p423
    %p425 = scmp.ne.s32.totalorder %s417, %s419
    %p426 = scmp.eq.s32.totalorder %s74, 1
    %p427 = por %p425, %p426
    %p428 = scmp.ne.s32.totalorder %s419, %s420
    %p429 = scmp.eq.s32.totalorder %s74, 0
    %p430 = por %p428, %p429
    %p431 = scmp.ne.s32.totalorder %s419, %s420
    %p432 = scmp.eq.s32.totalorder %s75, 1
    %p433 = por %p431, %p432
    %p435 = scmp.ne.s32.totalorder %s420, %s434
    %p436 = scmp.eq.s32.totalorder %s75, 0
    %p437 = por %p435, %p436
    %s439 = sadd.s32 %s438, 1
    %p442 = scmp.eq.s32.totalorder %s69, 1
    %p443 = scmp.ne.s32.totalorder %s438, %s440
    %p444 = scmp.eq.s32.totalorder %s69, 0
    %p445 = por %p443, %p444
    %p446 = scmp.ne.s32.totalorder %s438, %s440
    %p447 = scmp.eq.s32.totalorder %s74, 1
    %p448 = por %p446, %p447
    %p449 = scmp.ne.s32.totalorder %s440, %s441
    %p450 = scmp.eq.s32.totalorder %s74, 0
    %p451 = por %p449, %p450
    %p452 = scmp.ne.s32.totalorder %s440, %s441
    %p453 = scmp.eq.s32.totalorder %s75, 1
    %p454 = por %p452, %p453
    %p456 = scmp.ne.s32.totalorder %s441, %s455
    %p457 = scmp.eq.s32.totalorder %s75, 0
    %p458 = por %p456, %p457
    %s460 = sadd.s32 %s459, 1
    %p463 = scmp.eq.s32.totalorder %s69, 1
    %p464 = scmp.ne.s32.totalorder %s459, %s461
    %p465 = scmp.eq.s32.totalorder %s69, 0
    %p466 = por %p464, %p465
    %p467 = scmp.ne.s32.totalorder %s459, %s461
    %p468 = scmp.eq.s32.totalorder %s74, 1
    %p469 = por %p467, %p468
    %p470 = scmp.ne.s32.totalorder %s461, %s462
    %p471 = scmp.eq.s32.totalorder %s74, 0
    %p472 = por %p470, %p471
    %p473 = scmp.ne.s32.totalorder %s461, %s462
    %p474 = scmp.eq.s32.totalorder %s75, 1
    %p475 = por %p473, %p474
    %p477 = scmp.ne.s32.totalorder %s462, %s476
    %p478 = scmp.eq.s32.totalorder %s75, 0
    %p479 = por %p477, %p478
    %s481 = sadd.s32 %s480, 1
    %p484 = scmp.eq.s32.totalorder %s69, 1
    %p485 = scmp.ne.s32.totalorder %s480, %s482
    %p486 = scmp.eq.s32.totalorder %s69, 0
    %p487 = por %p485, %p486
    %p488 = scmp.ne.s32.totalorder %s480, %s482
    %p489 = scmp.eq.s32.totalorder %s74, 1
    %p490 = por %p488, %p489
    %p491 = scmp.ne.s32.totalorder %s482, %s483
    %p492 = scmp.eq.s32.totalorder %s74, 0
    %p493 = por %p491, %p492
    %p494 = scmp.ne.s32.totalorder %s482, %s483
    %p495 = scmp.eq.s32.totalorder %s75, 1
    %p496 = por %p494, %p495
    %p498 = scmp.ne.s32.totalorder %s483, %s497
    %p499 = scmp.eq.s32.totalorder %s75, 0
    %p500 = por %p498, %p499
    %s502 = sadd.s32 %s501, 1
    %p505 = scmp.eq.s32.totalorder %s69, 1
    %p506 = scmp.ne.s32.totalorder %s501, %s503
    %p507 = scmp.eq.s32.totalorder %s69, 0
    %p508 = por %p506, %p507
    %p509 = scmp.ne.s32.totalorder %s501, %s503
    %p510 = scmp.eq.s32.totalorder %s74, 1
    %p511 = por %p509, %p510
    %p512 = scmp.ne.s32.totalorder %s503, %s504
    %p513 = scmp.eq.s32.totalorder %s74, 0
    %p514 = por %p512, %p513
    %p515 = scmp.ne.s32.totalorder %s503, %s504
    %p516 = scmp.eq.s32.totalorder %s75, 1
    %p517 = por %p515, %p516
    %p519 = scmp.ne.s32.totalorder %s504, %s518
    %p520 = scmp.eq.s32.totalorder %s75, 0
    %p521 = por %p519, %p520
    %s523 = sadd.s32 %s522, 1
    %p526 = scmp.eq.s32.totalorder %s69, 1
    %p527 = scmp.ne.s32.totalorder %s522, %s524
    %p528 = scmp.eq.s32.totalorder %s69, 0
    %p529 = por %p527, %p528
    %p530 = scmp.ne.s32.totalorder %s522, %s524
    %p531 = scmp.eq.s32.totalorder %s74, 1
    %p532 = por %p530, %p531
    %p533 = scmp.ne.s32.totalorder %s524, %s525
    %p534 = scmp.eq.s32.totalorder %s74, 0
    %p535 = por %p533, %p534
    %p536 = scmp.ne.s32.totalorder %s524, %s525
    %p537 = scmp.eq.s32.totalorder %s75, 1
    %p538 = por %p536, %p537
    %p540 = scmp.ne.s32.totalorder %s525, %s539
    %p541 = scmp.eq.s32.totalorder %s75, 0
    %p542 = por %p540, %p541
    %s544 = sadd.s32 %s543, 1
    %p547 = scmp.eq.s32.totalorder %s69, 1
    %p548 = scmp.ne.s32.totalorder %s543, %s545
    %p549 = scmp.eq.s32.totalorder %s69, 0
    %p550 = por %p548, %p549
    %p551 = scmp.ne.s32.totalorder %s543, %s545
    %p552 = scmp.eq.s32.totalorder %s74, 1
    %p553 = por %p551, %p552
    %p554 = scmp.ne.s32.totalorder %s545, %s546
    %p555 = scmp.eq.s32.totalorder %s74, 0
    %p556 = por %p554, %p555
    %p557 = scmp.ne.s32.totalorder %s545, %s546
    %p558 = scmp.eq.s32.totalorder %s75, 1
    %p559 = por %p557, %p558
    %p561 = scmp.ne.s32.totalorder %s546, %s560
    %p562 = scmp.eq.s32.totalorder %s75, 0
    %p563 = por %p561, %p562
    %s565 = sadd.s32 %s564, 1
    %p568 = scmp.eq.s32.totalorder %s69, 1
    %p569 = scmp.ne.s32.totalorder %s564, %s566
    %p570 = scmp.eq.s32.totalorder %s69, 0
    %p571 = por %p569, %p570
    %p572 = scmp.ne.s32.totalorder %s564, %s566
    %p573 = scmp.eq.s32.totalorder %s74, 1
    %p574 = por %p572, %p573
    %p575 = scmp.ne.s32.totalorder %s566, %s567
    %p576 = scmp.eq.s32.totalorder %s74, 0
    %p577 = por %p575, %p576
    %p578 = scmp.ne.s32.totalorder %s566, %s567
    %p579 = scmp.eq.s32.totalorder %s75, 1
    %p580 = por %p578, %p579
    %p582 = scmp.ne.s32.totalorder %s567, %s581
    %p583 = scmp.eq.s32.totalorder %s75, 0
    %p584 = por %p582, %p583
    %s586 = sadd.s32 %s585, 1
    %p589 = scmp.eq.s32.totalorder %s69, 1
    %p590 = scmp.ne.s32.totalorder %s585, %s587
    %p591 = scmp.eq.s32.totalorder %s69, 0
    %p592 = por %p590, %p591
    %p593 = scmp.ne.s32.totalorder %s585, %s587
    %p594 = scmp.eq.s32.totalorder %s74, 1
    %p595 = por %p593, %p594
    %p596 = scmp.ne.s32.totalorder %s587, %s588
    %p597 = scmp.eq.s32.totalorder %s74, 0
    %p598 = por %p596, %p597
    %p599 = scmp.ne.s32.totalorder %s587, %s588
    %p600 = scmp.eq.s32.totalorder %s75, 1
    %p601 = por %p599, %p600
    %p603 = scmp.ne.s32.totalorder %s588, %s602
    %p604 = scmp.eq.s32.totalorder %s75, 0
    %p605 = por %p603, %p604
    %s607 = sadd.s32 %s606, 1
    %p610 = scmp.eq.s32.totalorder %s69, 1
    %p611 = scmp.ne.s32.totalorder %s606, %s608
    %p612 = scmp.eq.s32.totalorder %s69, 0
    %p613 = por %p611, %p612
    %p614 = scmp.ne.s32.totalorder %s606, %s608
    %p615 = scmp.eq.s32.totalorder %s74, 1
    %p616 = por %p614, %p615
    %p617 = scmp.ne.s32.totalorder %s608, %s609
    %p618 = scmp.eq.s32.totalorder %s74, 0
    %p619 = por %p617, %p618
    %p620 = scmp.ne.s32.totalorder %s608, %s609
    %p621 = scmp.eq.s32.totalorder %s75, 1
    %p622 = por %p620, %p621
    %p624 = scmp.ne.s32.totalorder %s609, %s623
    %p625 = scmp.eq.s32.totalorder %s75, 0
    %p626 = por %p624, %p625
    %s628 = sadd.s32 %s627, 1
    %p631 = scmp.eq.s32.totalorder %s69, 1
    %p632 = scmp.ne.s32.totalorder %s627, %s629
    %p633 = scmp.eq.s32.totalorder %s69, 0
    %p634 = por %p632, %p633
    %p635 = scmp.ne.s32.totalorder %s627, %s629
    %p636 = scmp.eq.s32.totalorder %s74, 1
    %p637 = por %p635, %p636
    %p638 = scmp.ne.s32.totalorder %s629, %s630
    %p639 = scmp.eq.s32.totalorder %s74, 0
    %p640 = por %p638, %p639
    %p641 = scmp.ne.s32.totalorder %s629, %s630
    %p642 = scmp.eq.s32.totalorder %s75, 1
    %p643 = por %p641, %p642
    %p645 = scmp.ne.s32.totalorder %s630, %s644
    %p646 = scmp.eq.s32.totalorder %s75, 0
    %p647 = por %p645, %p646
    %s649 = sadd.s32 %s648, 1
    %p652 = scmp.eq.s32.totalorder %s69, 1
    %p653 = scmp.ne.s32.totalorder %s648, %s650
    %p654 = scmp.eq.s32.totalorder %s69, 0
    %p655 = por %p653, %p654
    %p656 = scmp.ne.s32.totalorder %s648, %s650
    %p657 = scmp.eq.s32.totalorder %s74, 1
    %p658 = por %p656, %p657
    %p659 = scmp.ne.s32.totalorder %s650, %s651
    %p660 = scmp.eq.s32.totalorder %s74, 0
    %p661 = por %p659, %p660
    %p662 = scmp.ne.s32.totalorder %s650, %s651
    %p663 = scmp.eq.s32.totalorder %s75, 1
    %p664 = por %p662, %p663
    %p666 = scmp.ne.s32.totalorder %s651, %s665
    %p667 = scmp.eq.s32.totalorder %s75, 0
    %p668 = por %p666, %p667
    %s670 = sadd.s32 %s669, 1
    %p673 = scmp.eq.s32.totalorder %s69, 1
    %p674 = scmp.ne.s32.totalorder %s669, %s671
    %p675 = scmp.eq.s32.totalorder %s69, 0
    %p676 = por %p674, %p675
    %p677 = scmp.ne.s32.totalorder %s669, %s671
    %p678 = scmp.eq.s32.totalorder %s74, 1
    %p679 = por %p677, %p678
    %p680 = scmp.ne.s32.totalorder %s671, %s672
    %p681 = scmp.eq.s32.totalorder %s74, 0
    %p682 = por %p680, %p681
    %p683 = scmp.ne.s32.totalorder %s671, %s672
    %p684 = scmp.eq.s32.totalorder %s75, 1
    %p685 = por %p683, %p684
    %p687 = scmp.ne.s32.totalorder %s672, %s686
    %p688 = scmp.eq.s32.totalorder %s75, 0
    %p689 = por %p687, %p688
    %s691 = sadd.s32 %s690, 1
    %p694 = scmp.eq.s32.totalorder %s69, 1
    %p695 = scmp.ne.s32.totalorder %s690, %s692
    %p696 = scmp.eq.s32.totalorder %s69, 0
    %p697 = por %p695, %p696
    %p698 = scmp.ne.s32.totalorder %s690, %s692
    %p699 = scmp.eq.s32.totalorder %s74, 1
    %p700 = por %p698, %p699
    %p701 = scmp.ne.s32.totalorder %s692, %s693
    %p702 = scmp.eq.s32.totalorder %s74, 0
    %p703 = por %p701, %p702
    %p704 = scmp.ne.s32.totalorder %s692, %s693
    %p705 = scmp.eq.s32.totalorder %s75, 1
    %p706 = por %p704, %p705
    %p708 = scmp.ne.s32.totalorder %s693, %s707
    %p709 = scmp.eq.s32.totalorder %s75, 0
    %p710 = por %p708, %p709
    %s712 = sadd.s32 %s711, 1
    %p715 = scmp.eq.s32.totalorder %s69, 1
    %p716 = scmp.ne.s32.totalorder %s711, %s713
    %p717 = scmp.eq.s32.totalorder %s69, 0
    %p718 = por %p716, %p717
    %p719 = scmp.ne.s32.totalorder %s711, %s713
    %p720 = scmp.eq.s32.totalorder %s74, 1
    %p721 = por %p719, %p720
    %p722 = scmp.ne.s32.totalorder %s713, %s714
    %p723 = scmp.eq.s32.totalorder %s74, 0
    %p724 = por %p722, %p723
    %p725 = scmp.ne.s32.totalorder %s713, %s714
    %p726 = scmp.eq.s32.totalorder %s75, 1
    %p727 = por %p725, %p726
    %p729 = scmp.ne.s32.totalorder %s714, %s728
    %p730 = scmp.eq.s32.totalorder %s75, 0
    %p731 = por %p729, %p730
    %s733 = sadd.s32 %s732, 1
    %p736 = scmp.eq.s32.totalorder %s69, 1
    %p737 = scmp.ne.s32.totalorder %s732, %s734
    %p738 = scmp.eq.s32.totalorder %s69, 0
    %p739 = por %p737, %p738
    %p740 = scmp.ne.s32.totalorder %s732, %s734
    %p741 = scmp.eq.s32.totalorder %s74, 1
    %p742 = por %p740, %p741
    %p743 = scmp.ne.s32.totalorder %s734, %s735
    %p744 = scmp.eq.s32.totalorder %s74, 0
    %p745 = por %p743, %p744
    %p746 = scmp.ne.s32.totalorder %s734, %s735
    %p747 = scmp.eq.s32.totalorder %s75, 1
    %p748 = por %p746, %p747
    %p750 = scmp.ne.s32.totalorder %s735, %s749
    %p751 = scmp.eq.s32.totalorder %s75, 0
    %p752 = por %p750, %p751
    %s753 = ssub.s32 %s69, %s76
    %p754 = scmp.eq.s32.totalorder %s753, 0
    %s756 = sadd.s32 %s755, 1
    %s757 = scalar_select %p754, %s755, %s756
    %p760 = pneg %p754
    %p761 = scmp.eq.s32.totalorder %s69, 1
    %p762 = por %p760, %p761
    %p763 = scmp.ne.s32.totalorder %s755, %s758
    %p764 = scmp.eq.s32.totalorder %s69, 0
    %p765 = por %p763, %p764
    %p766 = scmp.ne.s32.totalorder %s755, %s758
    %p767 = scmp.eq.s32.totalorder %s74, 1
    %p768 = por %p766, %p767
    %p769 = scmp.ne.s32.totalorder %s758, %s759
    %p770 = scmp.eq.s32.totalorder %s74, 0
    %p771 = por %p769, %p770
    %p772 = scmp.ne.s32.totalorder %s758, %s759
    %p773 = scmp.eq.s32.totalorder %s75, 1
    %p774 = por %p772, %p773
    %p776 = scmp.ne.s32.totalorder %s759, %s775
    %p777 = scmp.eq.s32.totalorder %s75, 0
    %p778 = por %p776, %p777
    %p779 = scmp.le.s32.totalorder 1, %s69
    %p780 = scmp.lt.s32.totalorder %s69, 3
    %p781 = pnand %p779, %p780
    %p782 = pneg %p781
    // Predicated region
    $region9: #{transformer_forward.8} parent=5 // pred_check
      _
    $region10: #{transformer_forward.8} parent=5 // pred_check_branch
      %784 = sbr.rel (%p781) target = $region12
    $region11: #{transformer_forward.8} parent=5 // pred_region
      %s785 = ssub.s32 %s69, 1
      // Predicated region
      $region13: #{transformer_forward.8} parent=11 // pred_check
        %p786 = pneg %p220
      $region14: #{transformer_forward.8} parent=11 // pred_check_branch
        %788 = sbr.rel (%p786) target = $region16
      $region15: #{transformer_forward.8} parent=11 // pred_region
        _
      $region16: #{transformer_forward.8} parent=11 // pred_fallthru
        _
      // Predicated region
      $region17: #{transformer_forward.8} parent=11 // pred_check
        %p789 = pneg %p241
      $region18: #{transformer_forward.8} parent=11 // pred_check_branch
        %791 = sbr.rel (%p789) target = $region20
      $region19: #{transformer_forward.8} parent=11 // pred_region
        _
      $region20: #{transformer_forward.8} parent=11 // pred_fallthru
        _
      // Predicated region
      $region21: #{transformer_forward.8} parent=11 // pred_check
        %p792 = pneg %p262
      $region22: #{transformer_forward.8} parent=11 // pred_check_branch
        %794 = sbr.rel (%p792) target = $region24
      $region23: #{transformer_forward.8} parent=11 // pred_region
        _
      $region24: #{transformer_forward.8} parent=11 // pred_fallthru
        _
      // Predicated region
      $region25: #{transformer_forward.8} parent=11 // pred_check
        %p795 = pneg %p283
      $region26: #{transformer_forward.8} parent=11 // pred_check_branch
        %797 = sbr.rel (%p795) target = $region28
      $region27: #{transformer_forward.8} parent=11 // pred_region
        _
      $region28: #{transformer_forward.8} parent=11 // pred_fallthru
        _
      // Predicated region
      $region29: #{transformer_forward.8} parent=11 // pred_check
        %p798 = pneg %p304
      $region30: #{transformer_forward.8} parent=11 // pred_check_branch
        %800 = sbr.rel (%p798) target = $region32
      $region31: #{transformer_forward.8} parent=11 // pred_region
        _
      $region32: #{transformer_forward.8} parent=11 // pred_fallthru
        _
      // Predicated region
      $region33: #{transformer_forward.8} parent=11 // pred_check
        %p801 = pneg %p325
      $region34: #{transformer_forward.8} parent=11 // pred_check_branch
        %803 = sbr.rel (%p801) target = $region36
      $region35: #{transformer_forward.8} parent=11 // pred_region
        _
      $region36: #{transformer_forward.8} parent=11 // pred_fallthru
        _
      // Predicated region
      $region37: #{transformer_forward.8} parent=11 // pred_check
        %p804 = pneg %p346
      $region38: #{transformer_forward.8} parent=11 // pred_check_branch
        %806 = sbr.rel (%p804) target = $region40
      $region39: #{transformer_forward.8} parent=11 // pred_region
        _
      $region40: #{transformer_forward.8} parent=11 // pred_fallthru
        _
      // Predicated region
      $region41: #{transformer_forward.8} parent=11 // pred_check
        %p807 = pneg %p367
      $region42: #{transformer_forward.8} parent=11 // pred_check_branch
        %809 = sbr.rel (%p807) target = $region44
      $region43: #{transformer_forward.8} parent=11 // pred_region
        _
      $region44: #{transformer_forward.8} parent=11 // pred_fallthru
        _
      // Predicated region
      $region45: #{transformer_forward.8} parent=11 // pred_check
        %p810 = pneg %p388
      $region46: #{transformer_forward.8} parent=11 // pred_check_branch
        %812 = sbr.rel (%p810) target = $region48
      $region47: #{transformer_forward.8} parent=11 // pred_region
        _
      $region48: #{transformer_forward.8} parent=11 // pred_fallthru
        _
      // Predicated region
      $region49: #{transformer_forward.8} parent=11 // pred_check
        %p813 = pneg %p409
      $region50: #{transformer_forward.8} parent=11 // pred_check_branch
        %815 = sbr.rel (%p813) target = $region52
      $region51: #{transformer_forward.8} parent=11 // pred_region
        _
      $region52: #{transformer_forward.8} parent=11 // pred_fallthru
        _
      // Predicated region
      $region53: #{transformer_forward.8} parent=11 // pred_check
        %p816 = pneg %p430
      $region54: #{transformer_forward.8} parent=11 // pred_check_branch
        %818 = sbr.rel (%p816) target = $region56
      $region55: #{transformer_forward.8} parent=11 // pred_region
        _
      $region56: #{transformer_forward.8} parent=11 // pred_fallthru
        _
      // Predicated region
      $region57: #{transformer_forward.8} parent=11 // pred_check
        %p819 = pneg %p451
      $region58: #{transformer_forward.8} parent=11 // pred_check_branch
        %821 = sbr.rel (%p819) target = $region60
      $region59: #{transformer_forward.8} parent=11 // pred_region
        _
      $region60: #{transformer_forward.8} parent=11 // pred_fallthru
        _
      // Predicated region
      $region61: #{transformer_forward.8} parent=11 // pred_check
        %p822 = pneg %p472
      $region62: #{transformer_forward.8} parent=11 // pred_check_branch
        %824 = sbr.rel (%p822) target = $region64
      $region63: #{transformer_forward.8} parent=11 // pred_region
        _
      $region64: #{transformer_forward.8} parent=11 // pred_fallthru
        _
      // Predicated region
      $region65: #{transformer_forward.8} parent=11 // pred_check
        %p825 = pneg %p493
      $region66: #{transformer_forward.8} parent=11 // pred_check_branch
        %827 = sbr.rel (%p825) target = $region68
      $region67: #{transformer_forward.8} parent=11 // pred_region
        _
      $region68: #{transformer_forward.8} parent=11 // pred_fallthru
        _
      // Predicated region
      $region69: #{transformer_forward.8} parent=11 // pred_check
        %p828 = pneg %p514
      $region70: #{transformer_forward.8} parent=11 // pred_check_branch
        %830 = sbr.rel (%p828) target = $region72
      $region71: #{transformer_forward.8} parent=11 // pred_region
        _
      $region72: #{transformer_forward.8} parent=11 // pred_fallthru
        _
      // Predicated region
      $region73: #{transformer_forward.8} parent=11 // pred_check
        %p831 = pneg %p535
      $region74: #{transformer_forward.8} parent=11 // pred_check_branch
        %833 = sbr.rel (%p831) target = $region76
      $region75: #{transformer_forward.8} parent=11 // pred_region
        _
      $region76: #{transformer_forward.8} parent=11 // pred_fallthru
        _
      // Predicated region
      $region77: #{transformer_forward.8} parent=11 // pred_check
        %p834 = pneg %p556
      $region78: #{transformer_forward.8} parent=11 // pred_check_branch
        %836 = sbr.rel (%p834) target = $region80
      $region79: #{transformer_forward.8} parent=11 // pred_region
        _
      $region80: #{transformer_forward.8} parent=11 // pred_fallthru
        _
      // Predicated region
      $region81: #{transformer_forward.8} parent=11 // pred_check
        %p837 = pneg %p577
      $region82: #{transformer_forward.8} parent=11 // pred_check_branch
        %839 = sbr.rel (%p837) target = $region84
      $region83: #{transformer_forward.8} parent=11 // pred_region
        _
      $region84: #{transformer_forward.8} parent=11 // pred_fallthru
        _
      // Predicated region
      $region85: #{transformer_forward.8} parent=11 // pred_check
        %p840 = pneg %p598
      $region86: #{transformer_forward.8} parent=11 // pred_check_branch
        %842 = sbr.rel (%p840) target = $region88
      $region87: #{transformer_forward.8} parent=11 // pred_region
        _
      $region88: #{transformer_forward.8} parent=11 // pred_fallthru
        _
      // Predicated region
      $region89: #{transformer_forward.8} parent=11 // pred_check
        %p843 = pneg %p619
      $region90: #{transformer_forward.8} parent=11 // pred_check_branch
        %845 = sbr.rel (%p843) target = $region92
      $region91: #{transformer_forward.8} parent=11 // pred_region
        _
      $region92: #{transformer_forward.8} parent=11 // pred_fallthru
        _
      // Predicated region
      $region93: #{transformer_forward.8} parent=11 // pred_check
        %p846 = pneg %p640
      $region94: #{transformer_forward.8} parent=11 // pred_check_branch
        %848 = sbr.rel (%p846) target = $region96
      $region95: #{transformer_forward.8} parent=11 // pred_region
        _
      $region96: #{transformer_forward.8} parent=11 // pred_fallthru
        _
      // Predicated region
      $region97: #{transformer_forward.8} parent=11 // pred_check
        %p849 = pneg %p661
      $region98: #{transformer_forward.8} parent=11 // pred_check_branch
        %851 = sbr.rel (%p849) target = $region100
      $region99: #{transformer_forward.8} parent=11 // pred_region
        _
      $region100: #{transformer_forward.8} parent=11 // pred_fallthru
        _
      // Predicated region
      $region101: #{transformer_forward.8} parent=11 // pred_check
        %p852 = pneg %p682
      $region102: #{transformer_forward.8} parent=11 // pred_check_branch
        %854 = sbr.rel (%p852) target = $region104
      $region103: #{transformer_forward.8} parent=11 // pred_region
        _
      $region104: #{transformer_forward.8} parent=11 // pred_fallthru
        _
      // Predicated region
      $region105: #{transformer_forward.8} parent=11 // pred_check
        %p855 = pneg %p703
      $region106: #{transformer_forward.8} parent=11 // pred_check_branch
        %857 = sbr.rel (%p855) target = $region108
      $region107: #{transformer_forward.8} parent=11 // pred_region
        _
      $region108: #{transformer_forward.8} parent=11 // pred_fallthru
        _
      // Predicated region
      $region109: #{transformer_forward.8} parent=11 // pred_check
        %p858 = pneg %p724
      $region110: #{transformer_forward.8} parent=11 // pred_check_branch
        %860 = sbr.rel (%p858) target = $region112
      $region111: #{transformer_forward.8} parent=11 // pred_region
        _
      $region112: #{transformer_forward.8} parent=11 // pred_fallthru
        _
      // Predicated region
      $region113: #{transformer_forward.8} parent=11 // pred_check
        %p861 = pneg %p745
      $region114: #{transformer_forward.8} parent=11 // pred_check_branch
        %863 = sbr.rel (%p861) target = $region116
      $region115: #{transformer_forward.8} parent=11 // pred_region
        _
      $region116: #{transformer_forward.8} parent=11 // pred_fallthru
        _
    $region12: #{transformer_forward.8} parent=5 // pred_fallthru
      _
    %p864 = scmp.lt.s32.totalorder %s69, 2
    // Predicated region
    $region117: #{transformer_forward.8} parent=5 // pred_check
      %p865 = pneg %p864
    $region118: #{transformer_forward.8} parent=5 // pred_check_branch
      %867 = sbr.rel (%p865) target = $region120
    $region119: #{transformer_forward.8} parent=5 // pred_region
      // Predicated region
      $region121: #{transformer_forward.8} parent=119 // pred_check
        %p868 = pneg %p89
      $region122: #{transformer_forward.8} parent=119 // pred_check_branch
        %870 = sbr.rel (%p868) target = $region124
      $region123: #{transformer_forward.8} parent=119 // pred_region
        %p871 = scmp.lt.s32.totalorder %s69, 1
        %s872 = scalar_select %p871, %s69, 1
        %s873 = smul.addr %s872, 8
        %s874 = scalar_lea.vmem %s1, %s873
      $region124: #{transformer_forward.8} parent=119 // pred_fallthru
        _
      // Predicated region
      $region125: #{transformer_forward.8} parent=119 // pred_check
        %p875 = pneg %p115
      $region126: #{transformer_forward.8} parent=119 // pred_check_branch
        %877 = sbr.rel (%p875) target = $region128
      $region127: #{transformer_forward.8} parent=119 // pred_region
        %p878 = scmp.lt.s32.totalorder %s69, 1
        %s879 = scalar_select %p878, %s69, 1
        %s880 = smul.addr %s879, 2
        %s881 = smul.addr %s880, 8
        %s882 = scalar_lea.vmem %s3, %s881
      $region128: #{transformer_forward.8} parent=119 // pred_fallthru
        _
      // Predicated region
      $region129: #{transformer_forward.8} parent=119 // pred_check
        %p883 = pneg %p141
      $region130: #{transformer_forward.8} parent=119 // pred_check_branch
        %885 = sbr.rel (%p883) target = $region132
      $region131: #{transformer_forward.8} parent=119 // pred_region
        %p886 = scmp.lt.s32.totalorder %s69, 1
        %s887 = scalar_select %p886, %s69, 1
        %s888 = smul.addr %s887, 8
        %s889 = scalar_lea.vmem %s5, %s888
      $region132: #{transformer_forward.8} parent=119 // pred_fallthru
        _
      // Predicated region
      $region133: #{transformer_forward.8} parent=119 // pred_check
        %p890 = pneg %p167
      $region134: #{transformer_forward.8} parent=119 // pred_check_branch
        %892 = sbr.rel (%p890) target = $region136
      $region135: #{transformer_forward.8} parent=119 // pred_region
        %p893 = scmp.lt.s32.totalorder %s69, 1
        %s894 = scalar_select %p893, %s69, 1
        %s895 = smul.addr %s894, 2
        %s896 = smul.addr %s895, 8
        %s897 = scalar_lea.vmem %s7, %s896
      $region136: #{transformer_forward.8} parent=119 // pred_fallthru
        _
      // Predicated region
      $region137: #{transformer_forward.8} parent=119 // pred_check
        %p898 = pneg %p193
      $region138: #{transformer_forward.8} parent=119 // pred_check_branch
        %900 = sbr.rel (%p898) target = $region140
      $region139: #{transformer_forward.8} parent=119 // pred_region
        %p901 = scmp.lt.s32.totalorder %s69, 1
        %s902 = scalar_select %p901, %s69, 1
        %s903 = scalar_lea.vmem %s9, %s902
      $region140: #{transformer_forward.8} parent=119 // pred_fallthru
        _
    $region120: #{transformer_forward.8} parent=5 // pred_fallthru
      _
    %p904 = scmp.le.s32.totalorder 1, %s69
    %p905 = scmp.lt.s32.totalorder %s69, 3
    %p906 = pnand %p904, %p905
    %p907 = pneg %p906
    // Predicated region
    $region141: #{transformer_forward.8} parent=5 // pred_check
      _
    $region142: #{transformer_forward.8} parent=5 // pred_check_branch
      %909 = sbr.rel (%p906) target = $region144
    $region143: #{transformer_forward.8} parent=5 // pred_region
      %s910 = ssub.s32 %s69, 1
      %p911 = scmp.lt.s32.totalorder %s74, 1
      %s912 = scalar_select %p911, %s74, 1
      %s913 = smul.addr %s912, 8
      %s914 = scalar_lea.vmem %s1, %s913
      %p915 = pneg %p95
      %p916 = pneg %p92
      %p917 = scmp.lt.s32.totalorder %s74, 1
      %s918 = scalar_select %p917, %s74, 1
      %s919 = smul.addr %s918, 2
      %s920 = smul.addr %s919, 8
      %s921 = scalar_lea.vmem %s3, %s920
      %p922 = pneg %p121
      %p923 = pneg %p118
      %p924 = scmp.lt.s32.totalorder %s74, 1
      %s925 = scalar_select %p924, %s74, 1
      %s926 = smul.addr %s925, 8
      %s927 = scalar_lea.vmem %s5, %s926
      %p928 = pneg %p147
      %p929 = pneg %p144
      %p930 = scmp.lt.s32.totalorder %s74, 1
      %s931 = scalar_select %p930, %s74, 1
      %s932 = smul.addr %s931, 2
      %s933 = smul.addr %s932, 8
      %s934 = scalar_lea.vmem %s7, %s933
      %p935 = pneg %p173
      %p936 = pneg %p170
      %p937 = scmp.lt.s32.totalorder %s74, 1
      %s938 = scalar_select %p937, %s74, 1
      %s939 = scalar_lea.vmem %s9, %s938
      %p940 = pneg %p199
      %p941 = pneg %p196
      %p942 = pneg %p220
      %p943 = pneg %p217
      %p944 = pneg %p241
      %p945 = pneg %p238
      %p946 = pneg %p262
      %p947 = pneg %p259
      %p948 = pneg %p283
      %p949 = pneg %p280
      %p950 = pneg %p304
      %p951 = pneg %p301
      %p952 = pneg %p325
      %p953 = pneg %p322
      %p954 = pneg %p346
      %p955 = pneg %p343
      %p956 = pneg %p367
      %p957 = pneg %p364
      %p958 = pneg %p388
      %p959 = pneg %p385
      %p960 = pneg %p409
      %p961 = pneg %p406
      %p962 = pneg %p430
      %p963 = pneg %p427
      %p964 = pneg %p451
      %p965 = pneg %p448
      %p966 = pneg %p472
      %p967 = pneg %p469
      %p968 = pneg %p493
      %p969 = pneg %p490
      %p970 = pneg %p514
      %p971 = pneg %p511
      %p972 = pneg %p535
      %p973 = pneg %p532
      %p974 = pneg %p556
      %p975 = pneg %p553
      %p976 = pneg %p577
      %p977 = pneg %p574
      %p978 = pneg %p598
      %p979 = pneg %p595
      %p980 = pneg %p619
      %p981 = pneg %p616
      %p982 = pneg %p640
      %p983 = pneg %p637
      %p984 = pneg %p661
      %p985 = pneg %p658
      %p986 = pneg %p682
      %p987 = pneg %p679
      %p988 = pneg %p703
      %p989 = pneg %p700
      %p990 = pneg %p724
      %p991 = pneg %p721
      %p992 = pneg %p745
      %p993 = pneg %p742
      %p994 = pneg %p771
      %p995 = pneg %p768
      %p996 = scmp.lt.s32.totalorder %s74, 1
      %s997 = scalar_select %p996, %s74, 1
      %s998 = smul.addr %s997, 8
      %s999 = scalar_lea.vmem %s63, %s998
      %p1000 = scmp.lt.s32.totalorder %s74, 1
      %s1001 = scalar_select %p1000, %s74, 1
      %s1002 = smul.addr %s1001, 8
      %s1003 = scalar_lea.vmem %s1, %s1002
      %p1004 = scmp.lt.s32.totalorder %s74, 1
      %s1005 = scalar_select %p1004, %s74, 1
      %s1006 = smul.addr %s1005, 2
      %s1007 = smul.addr %s1006, 8
      %s1008 = scalar_lea.vmem %s3, %s1007
      %p1009 = scmp.lt.s32.totalorder %s74, 1
      %s1010 = scalar_select %p1009, %s74, 1
      %s1011 = smul.addr %s1010, 8
      %s1012 = scalar_lea.vmem %s5, %s1011
      %p1013 = scmp.lt.s32.totalorder %s74, 1
      %s1014 = scalar_select %p1013, %s74, 1
      %s1015 = smul.addr %s1014, 2
      %s1016 = smul.addr %s1015, 8
      %s1017 = scalar_lea.vmem %s7, %s1016
      %p1018 = scmp.lt.s32.totalorder %s74, 1
      %s1019 = scalar_select %p1018, %s74, 1
      %s1020 = scalar_lea.vmem %s9, %s1019
      %p1021 = scmp.lt.s32.totalorder %s74, 1
      %s1022 = scalar_select %p1021, %s74, 1
      %s1023 = smul.addr %s1022, 8
      %s1024 = scalar_lea.vmem %s63, %s1023
      %v1026 = vld [vmem:[%s1003] sm:$0xff]
      %v1027 = vld [vmem:[%s1008] sm:$0xff]
      %v1028 = vld [vmem:[%s1008 + $0x8] sm:$0xff]
      %v1029 = vld [vmem:[%s1012] sm:$0xff]
      %v1030 = vld [vmem:[%s1017] sm:$0xff]
      %v1031 = vld [vmem:[%s1017 + $0x8] sm:$0xff]
      %v1032 = vld [vmem:[%s1020] sm:$0x1]
      %v1033 = vadd.f32 %v1026, %v1029
      %v1034 = vpack.c.bf16 %v1033, %v1033
      %v1035 = vld [vmem:[%s11] sm:$0xf]
      %v1036 = vld [vmem:[%s11 + $0x4] sm:$0xf]
      %v1037 = vld [vmem:[%s11 + $0x8] sm:$0xf]
      %v1038 = vld [vmem:[%s11 + $0xc] sm:$0xf]
      %v1039 = vld [vmem:[%s17] sm:$0x1]
      %v1041 = vlaneseq
      %v1042 = vshrl.u32 %v1041, 7
      %v1043 = vsub.s32 0, %v1042
      %v1044 = vrot.slane %v1039, %v1043
      %v1050 = vunpack.c.l.b16 %v1035
      %v1051 = vunpack.c.l.b16 %v1036
      %v1052 = vunpack.c.l.b16 %v1037
      %v1053 = vunpack.c.l.b16 %v1038
      %v1054 = vpack.c.b16 %v1051, %v1050
      %v1055 = vpack.c.b16 %v1053, %v1052
      %vm1058 = vcmask 261120
      %v1060 = vsel %vm1058, %v1034, 0
      %1062 = vmatprep.subr.bf16.mxu0 0
      %1063 = vmatpush1.bf16.msra.mxu0 %v1054
      %1064 = vmatprep.subr.bf16.mxu0 0
      %1065 = vmatpush1.bf16.msra.mxu0 %v1055
      %1066 = vmatprep.subr.bf16.mxu0 0
      %1067 = vmatpush1.bf16.msra.mxu0 0
      %1068 = vmatprep.subr.bf16.mxu0 0
      %1069 = vmatpush1.bf16.msra.mxu0 0
      %1070 = vmatprep.subr.bf16.mxu0 0
      %1071 = vmatpush1.bf16.msra.mxu0 0
      %1072 = vmatprep.subr.bf16.mxu0 0
      %1073 = vmatpush1.bf16.msra.mxu0 0
      %1074 = vmatprep.subr.bf16.mxu0 0
      %1075 = vmatpush1.bf16.msra.mxu0 0
      %1076 = vmatprep.subr.bf16.mxu0 0
      %1077 = vmatpush1.bf16.msra.mxu0 0
      %1078 = vmatprep.subr.bf16.mxu0 0
      %1079 = vmatpush1.bf16.msra.mxu0 0
      %1080 = vmatprep.subr.bf16.mxu0 0
      %1081 = vmatpush1.bf16.msra.mxu0 0
      %1082 = vmatprep.subr.bf16.mxu0 0
      %1083 = vmatpush1.bf16.msra.mxu0 0
      %1084 = vmatprep.subr.bf16.mxu0 0
      %1085 = vmatpush1.bf16.msra.mxu0 0
      %1086 = vmatprep.subr.bf16.mxu0 0
      %1087 = vmatpush1.bf16.msra.mxu0 0
      %1088 = vmatprep.subr.bf16.mxu0 0
      %1089 = vmatpush1.bf16.msra.mxu0 0
      %1090 = vmatprep.subr.bf16.mxu0 0
      %1091 = vmatpush1.bf16.msra.mxu0 0
      %1092 = vmatprep.subr.bf16.mxu0 0
      %1093 = vmatpush1.bf16.msra.mxu0 0
      %1094 = vmatprep.mubr.bf16.mxu0 0
      %1095 = vmatmul.mubr.bf16.gmra.mrb[0].mxu0 %v1060
      %v1096 = vpop.f32.mrb[0].mxu0
      %v1097 = vadd.f32 %v1044, %v1096
      %v1098 = vpop.f32.mrb[0].mxu0
      %v1099 = vpop.f32.mrb[0].mxu0
      %v1100 = vpop.f32.mrb[0].mxu0
      %1101 = vdwg.mxu0
      %v1102 = vld [vmem:[%s13] sm:$0xf]
      %v1103 = vld [vmem:[%s13 + $0x4] sm:$0xf]
      %v1104 = vld [vmem:[%s13 + $0x8] sm:$0xf]
      %v1105 = vld [vmem:[%s13 + $0xc] sm:$0xf]
      %v1106 = vld [vmem:[%s19] sm:$0x1]
      %v1108 = vlaneseq
      %v1109 = vshrl.u32 %v1108, 7
      %v1110 = vsub.s32 0, %v1109
      %v1111 = vrot.slane %v1106, %v1110
      %v1117 = vunpack.c.l.b16 %v1102
      %v1118 = vunpack.c.l.b16 %v1103
      %v1119 = vunpack.c.l.b16 %v1104
      %v1120 = vunpack.c.l.b16 %v1105
      %v1121 = vpack.c.b16 %v1118, %v1117
      %v1122 = vpack.c.b16 %v1120, %v1119
      %1125 = vmatprep.subr.bf16.mxu0 0
      %1126 = vmatpush1.bf16.msra.mxu0 %v1121
      %1127 = vmatprep.subr.bf16.mxu0 0
      %1128 = vmatpush1.bf16.msra.mxu0 %v1122
      %1129 = vmatprep.subr.bf16.mxu0 0
      %1130 = vmatpush1.bf16.msra.mxu0 0
      %1131 = vmatprep.subr.bf16.mxu0 0
      %1132 = vmatpush1.bf16.msra.mxu0 0
      %1133 = vmatprep.subr.bf16.mxu0 0
      %1134 = vmatpush1.bf16.msra.mxu0 0
      %1135 = vmatprep.subr.bf16.mxu0 0
      %1136 = vmatpush1.bf16.msra.mxu0 0
      %1137 = vmatprep.subr.bf16.mxu0 0
      %1138 = vmatpush1.bf16.msra.mxu0 0
      %1139 = vmatprep.subr.bf16.mxu0 0
      %1140 = vmatpush1.bf16.msra.mxu0 0
      %1141 = vmatprep.subr.bf16.mxu0 0
      %1142 = vmatpush1.bf16.msra.mxu0 0
      %1143 = vmatprep.subr.bf16.mxu0 0
      %1144 = vmatpush1.bf16.msra.mxu0 0
      %1145 = vmatprep.subr.bf16.mxu0 0
      %1146 = vmatpush1.bf16.msra.mxu0 0
      %1147 = vmatprep.subr.bf16.mxu0 0
      %1148 = vmatpush1.bf16.msra.mxu0 0
      %1149 = vmatprep.subr.bf16.mxu0 0
      %1150 = vmatpush1.bf16.msra.mxu0 0
      %1151 = vmatprep.subr.bf16.mxu0 0
      %1152 = vmatpush1.bf16.msra.mxu0 0
      %1153 = vmatprep.subr.bf16.mxu0 0
      %1154 = vmatpush1.bf16.msra.mxu0 0
      %1155 = vmatprep.subr.bf16.mxu0 0
      %1156 = vmatpush1.bf16.msra.mxu0 0
      %1157 = vmatprep.mubr.bf16.mxu0 0
      %1158 = vmatmul.mubr.bf16.gmra.mrb[0].mxu0 %v1060
      %v1159 = vpop.f32.mrb[0].mxu0
      %v1160 = vadd.f32 %v1111, %v1159
      %v1161 = vpop.f32.mrb[0].mxu0
      %v1162 = vpop.f32.mrb[0].mxu0
      %v1163 = vpop.f32.mrb[0].mxu0
      %1164 = vdwg.mxu0
      %v1165 = vpack.c.bf16 %v1026, %v1026
      %v1166 = vld [vmem:[%s15] sm:$0xf]
      %v1167 = vld [vmem:[%s15 + $0x4] sm:$0xf]
      %v1168 = vld [vmem:[%s15 + $0x8] sm:$0xf]
      %v1169 = vld [vmem:[%s15 + $0xc] sm:$0xf]
      %v1170 = vld [vmem:[%s21] sm:$0x1]
      %v1172 = vlaneseq
      %v1173 = vshrl.u32 %v1172, 7
      %v1174 = vsub.s32 0, %v1173
      %v1175 = vrot.slane %v1170, %v1174
      %v1181 = vunpack.c.l.b16 %v1166
      %v1182 = vunpack.c.l.b16 %v1167
      %v1183 = vunpack.c.l.b16 %v1168
      %v1184 = vunpack.c.l.b16 %v1169
      %v1185 = vpack.c.b16 %v1182, %v1181
      %v1186 = vpack.c.b16 %v1184, %v1183
      %v1190 = vsel %vm1058, %v1165, 0
      %1192 = vmatprep.subr.bf16.mxu0 0
      %1193 = vmatpush1.bf16.msra.mxu0 %v1185
      %1194 = vmatprep.subr.bf16.mxu0 0
      %1195 = vmatpush1.bf16.msra.mxu0 %v1186
      %1196 = vmatprep.subr.bf16.mxu0 0
      %1197 = vmatpush1.bf16.msra.mxu0 0
      %1198 = vmatprep.subr.bf16.mxu0 0
      %1199 = vmatpush1.bf16.msra.mxu0 0
      %1200 = vmatprep.subr.bf16.mxu0 0
      %1201 = vmatpush1.bf16.msra.mxu0 0
      %1202 = vmatprep.subr.bf16.mxu0 0
      %1203 = vmatpush1.bf16.msra.mxu0 0
      %1204 = vmatprep.subr.bf16.mxu0 0
      %1205 = vmatpush1.bf16.msra.mxu0 0
      %1206 = vmatprep.subr.bf16.mxu0 0
      %1207 = vmatpush1.bf16.msra.mxu0 0
      %1208 = vmatprep.subr.bf16.mxu0 0
      %1209 = vmatpush1.bf16.msra.mxu0 0
      %1210 = vmatprep.subr.bf16.mxu0 0
      %1211 = vmatpush1.bf16.msra.mxu0 0
      %1212 = vmatprep.subr.bf16.mxu0 0
      %1213 = vmatpush1.bf16.msra.mxu0 0
      %1214 = vmatprep.subr.bf16.mxu0 0
      %1215 = vmatpush1.bf16.msra.mxu0 0
      %1216 = vmatprep.subr.bf16.mxu0 0
      %1217 = vmatpush1.bf16.msra.mxu0 0
      %1218 = vmatprep.subr.bf16.mxu0 0
      %1219 = vmatpush1.bf16.msra.mxu0 0
      %1220 = vmatprep.subr.bf16.mxu0 0
      %1221 = vmatpush1.bf16.msra.mxu0 0
      %1222 = vmatprep.subr.bf16.mxu0 0
      %1223 = vmatpush1.bf16.msra.mxu0 0
      %1224 = vmatprep.mubr.bf16.mxu0 0
      %1225 = vmatmul.mubr.bf16.gmra.mrb[0].mxu0 %v1190
      %v1226 = vpop.f32.mrb[0].mxu0
      %v1227 = vadd.f32 %v1175, %v1226
      %v1228 = vpop.f32.mrb[0].mxu0
      %v1229 = vpop.f32.mrb[0].mxu0
      %v1230 = vpop.f32.mrb[0].mxu0
      %1231 = vdwg.mxu0
      %v1232 = vpack.c.bf16 %v1097, %v1097
      %v1233 = vpack.c.bf16 %v1160, %v1160
      %v1234 = vpack.c.bf16 %v1227, %v1227
      %vm1235 = vcmask 64512
      %v1237 = vsel %vm1235, %v1232, 0
      %v1240 = vsel %vm1235, %v1233, 0
      %1242 = vmatprep.subr.bf16.mxu0 0
      %1243 = vmatpush1.bf16.xpose.msra.mxu0 %v1240
      %1244 = vmatprep.subr.bf16.mxu0 0
      %1245 = vmatpush1.bf16.xpose.msra.mxu0 0
      %1246 = vmatprep.subr.bf16.mxu0 0
      %1247 = vmatpush1.bf16.xpose.msra.mxu0 0
      %1248 = vmatprep.subr.bf16.mxu0 0
      %1249 = vmatpush1.bf16.xpose.msra.mxu0 0
      %1250 = vmatprep.subr.bf16.mxu0 0
      %1251 = vmatpush1.bf16.xpose.msra.mxu0 0
      %1252 = vmatprep.subr.bf16.mxu0 0
      %1253 = vmatpush1.bf16.xpose.msra.mxu0 0
      %1254 = vmatprep.subr.bf16.mxu0 0
      %1255 = vmatpush1.bf16.xpose.msra.mxu0 0
      %1256 = vmatprep.subr.bf16.mxu0 0
      %1257 = vmatpush1.bf16.xpose.msra.mxu0 0
      %1258 = vmatprep.subr.bf16.mxu0 0
      %1259 = vmatpush1.bf16.xpose.msra.mxu0 0
      %1260 = vmatprep.subr.bf16.mxu0 0
      %1261 = vmatpush1.bf16.xpose.msra.mxu0 0
      %1262 = vmatprep.subr.bf16.mxu0 0
      %1263 = vmatpush1.bf16.xpose.msra.mxu0 0
      %1264 = vmatprep.subr.bf16.mxu0 0
      %1265 = vmatpush1.bf16.xpose.msra.mxu0 0
      %1266 = vmatprep.subr.bf16.mxu0 0
      %1267 = vmatpush1.bf16.xpose.msra.mxu0 0
      %1268 = vmatprep.subr.bf16.mxu0 0
      %1269 = vmatpush1.bf16.xpose.msra.mxu0 0
      %1270 = vmatprep.subr.bf16.mxu0 0
      %1271 = vmatpush1.bf16.xpose.msra.mxu0 0
      %1272 = vmatprep.subr.bf16.mxu0 0
      %1273 = vmatpush1.bf16.xpose.msra.mxu0 0
      %1274 = vmatprep.mubr.bf16.mxu0 0
      %1275 = vmatmul.mubr.bf16.gmra.mrb[0].mxu0 %v1237
      %v1276 = vpop.f32.mrb[0].mxu0
      %v1277 = vadd.f32 0.0, %v1276
      %v1278 = vpop.f32.mrb[0].mxu0
      %v1279 = vpop.f32.mrb[0].mxu0
      %v1280 = vpop.f32.mrb[0].mxu0
      %1281 = vdwg.mxu0
      %v1282 = vsel %vm1235, %v1277, -inf
      %1283 = vmax.xlane.f32.xlu0 %v1282
      %v1284 = vpop.xlane.xlu0 %1283
      %v1285 = vsub.f32 %v1277, %v1284
      %v1286 = vmul.f32 %v1285, 1.442695
      %v1287 = vpow.pop %v1286
      %v1288 = vsel %vm1235, %v1287, 0.0
      %1289 = vadd.xlane.f32.xlu0 %v1288
      %v1290 = vpop.xlane.xlu0 %1289
      %v1291 = vrcp.pop %v1290
      %v1292 = vmul.f32 %v1287, %v1291
      %v1293 = vpack.c.bf16 %v1292, %v1292
      %v1295 = vsel %vm1235, %v1293, 0
      %vm1297 = vcmask 1043456
      %v1299 = vsel %vm1297, %v1234, 0
      %1301 = vmatprep.subr.bf16.mxu0 0
      %1302 = vmatpush1.bf16.msra.mxu0 %v1299
      %1303 = vmatprep.subr.bf16.mxu0 0
      %1304 = vmatpush1.bf16.msra.mxu0 0
      %1305 = vmatprep.subr.bf16.mxu0 0
      %1306 = vmatpush1.bf16.msra.mxu0 0
      %1307 = vmatprep.subr.bf16.mxu0 0
      %1308 = vmatpush1.bf16.msra.mxu0 0
      %1309 = vmatprep.subr.bf16.mxu0 0
      %1310 = vmatpush1.bf16.msra.mxu0 0
      %1311 = vmatprep.subr.bf16.mxu0 0
      %1312 = vmatpush1.bf16.msra.mxu0 0
      %1313 = vmatprep.subr.bf16.mxu0 0
      %1314 = vmatpush1.bf16.msra.mxu0 0
      %1315 = vmatprep.subr.bf16.mxu0 0
      %1316 = vmatpush1.bf16.msra.mxu0 0
      %1317 = vmatprep.subr.bf16.mxu0 0
      %1318 = vmatpush1.bf16.msra.mxu0 0
      %1319 = vmatprep.subr.bf16.mxu0 0
      %1320 = vmatpush1.bf16.msra.mxu0 0
      %1321 = vmatprep.subr.bf16.mxu0 0
      %1322 = vmatpush1.bf16.msra.mxu0 0
      %1323 = vmatprep.subr.bf16.mxu0 0
      %1324 = vmatpush1.bf16.msra.mxu0 0
      %1325 = vmatprep.subr.bf16.mxu0 0
      %1326 = vmatpush1.bf16.msra.mxu0 0
      %1327 = vmatprep.subr.bf16.mxu0 0
      %1328 = vmatpush1.bf16.msra.mxu0 0
      %1329 = vmatprep.subr.bf16.mxu0 0
      %1330 = vmatpush1.bf16.msra.mxu0 0
      %1331 = vmatprep.subr.bf16.mxu0 0
      %1332 = vmatpush1.bf16.msra.mxu0 0
      %1333 = vmatprep.mubr.bf16.mxu0 0
      %1334 = vmatmul.mubr.bf16.gmra.mrb[0].mxu0 %v1295
      %v1335 = vpop.f32.mrb[0].mxu0
      %v1336 = vadd.f32 0.0, %v1335
      %v1337 = vpop.f32.mrb[0].mxu0
      %v1338 = vpop.f32.mrb[0].mxu0
      %v1339 = vpop.f32.mrb[0].mxu0
      %1340 = vdwg.mxu0
      %1342 = vrot.lane.b32.xlu0 %v1232, 120
      %v1343 = vpop.permute.xlu0 %1342
      %1345 = vrot.lane.b32.xlu0 %v1233, 120
      %v1346 = vpop.permute.xlu0 %1345
      %v1348 = vsel %vm1235, %v1343, 0
      %v1351 = vsel %vm1235, %v1346, 0
      %1353 = vmatprep.subr.bf16.mxu0 0
      %1354 = vmatpush1.bf16.xpose.msra.mxu0 %v1351
      %1355 = vmatprep.subr.bf16.mxu0 0
      %1356 = vmatpush1.bf16.xpose.msra.mxu0 0
      %1357 = vmatprep.subr.bf16.mxu0 0
      %1358 = vmatpush1.bf16.xpose.msra.mxu0 0
      %1359 = vmatprep.subr.bf16.mxu0 0
      %1360 = vmatpush1.bf16.xpose.msra.mxu0 0
      %1361 = vmatprep.subr.bf16.mxu0 0
      %1362 = vmatpush1.bf16.xpose.msra.mxu0 0
      %1363 = vmatprep.subr.bf16.mxu0 0
      %1364 = vmatpush1.bf16.xpose.msra.mxu0 0
      %1365 = vmatprep.subr.bf16.mxu0 0
      %1366 = vmatpush1.bf16.xpose.msra.mxu0 0
      %1367 = vmatprep.subr.bf16.mxu0 0
      %1368 = vmatpush1.bf16.xpose.msra.mxu0 0
      %1369 = vmatprep.subr.bf16.mxu0 0
      %1370 = vmatpush1.bf16.xpose.msra.mxu0 0
      %1371 = vmatprep.subr.bf16.mxu0 0
      %1372 = vmatpush1.bf16.xpose.msra.mxu0 0
      %1373 = vmatprep.subr.bf16.mxu0 0
      %1374 = vmatpush1.bf16.xpose.msra.mxu0 0
      %1375 = vmatprep.subr.bf16.mxu0 0
      %1376 = vmatpush1.bf16.xpose.msra.mxu0 0
      %1377 = vmatprep.subr.bf16.mxu0 0
      %1378 = vmatpush1.bf16.xpose.msra.mxu0 0
      %1379 = vmatprep.subr.bf16.mxu0 0
      %1380 = vmatpush1.bf16.xpose.msra.mxu0 0
      %1381 = vmatprep.subr.bf16.mxu0 0
      %1382 = vmatpush1.bf16.xpose.msra.mxu0 0
      %1383 = vmatprep.subr.bf16.mxu0 0
      %1384 = vmatpush1.bf16.xpose.msra.mxu0 0
      %1385 = vmatprep.mubr.bf16.mxu0 0
      %1386 = vmatmul.mubr.bf16.gmra.mrb[0].mxu0 %v1348
      %v1387 = vpop.f32.mrb[0].mxu0
      %v1388 = vadd.f32 0.0, %v1387
      %v1389 = vpop.f32.mrb[0].mxu0
      %v1390 = vpop.f32.mrb[0].mxu0
      %v1391 = vpop.f32.mrb[0].mxu0
      %1392 = vdwg.mxu0
      %v1393 = vsel %vm1235, %v1388, -inf
      %1394 = vmax.xlane.f32.xlu0 %v1393
      %v1395 = vpop.xlane.xlu0 %1394
      %v1396 = vsub.f32 %v1388, %v1395
      %v1397 = vmul.f32 %v1396, 1.442695
      %v1398 = vpow.pop %v1397
      %v1399 = vsel %vm1235, %v1398, 0.0
      %1400 = vadd.xlane.f32.xlu0 %v1399
      %v1401 = vpop.xlane.xlu0 %1400
      %v1402 = vrcp.pop %v1401
      %v1403 = vmul.f32 %v1398, %v1402
      %v1404 = vpack.c.bf16 %v1403, %v1403
      %1406 = vrot.lane.b32.xlu0 %v1234, 120
      %v1407 = vpop.permute.xlu0 %1406
      %v1409 = vsel %vm1235, %v1404, 0
      %v1412 = vsel %vm1297, %v1407, 0
      %1414 = vmatprep.subr.bf16.mxu0 0
      %1415 = vmatpush1.bf16.msra.mxu0 %v1412
      %1416 = vmatprep.subr.bf16.mxu0 0
      %1417 = vmatpush1.bf16.msra.mxu0 0
      %1418 = vmatprep.subr.bf16.mxu0 0
      %1419 = vmatpush1.bf16.msra.mxu0 0
      %1420 = vmatprep.subr.bf16.mxu0 0
      %1421 = vmatpush1.bf16.msra.mxu0 0
      %1422 = vmatprep.subr.bf16.mxu0 0
      %1423 = vmatpush1.bf16.msra.mxu0 0
      %1424 = vmatprep.subr.bf16.mxu0 0
      %1425 = vmatpush1.bf16.msra.mxu0 0
      %1426 = vmatprep.subr.bf16.mxu0 0
      %1427 = vmatpush1.bf16.msra.mxu0 0
      %1428 = vmatprep.subr.bf16.mxu0 0
      %1429 = vmatpush1.bf16.msra.mxu0 0
      %1430 = vmatprep.subr.bf16.mxu0 0
      %1431 = vmatpush1.bf16.msra.mxu0 0
      %1432 = vmatprep.subr.bf16.mxu0 0
      %1433 = vmatpush1.bf16.msra.mxu0 0
      %1434 = vmatprep.subr.bf16.mxu0 0
      %1435 = vmatpush1.bf16.msra.mxu0 0
      %1436 = vmatprep.subr.bf16.mxu0 0
      %1437 = vmatpush1.bf16.msra.mxu0 0
      %1438 = vmatprep.subr.bf16.mxu0 0
      %1439 = vmatpush1.bf16.msra.mxu0 0
      %1440 = vmatprep.subr.bf16.mxu0 0
      %1441 = vmatpush1.bf16.msra.mxu0 0
      %1442 = vmatprep.subr.bf16.mxu0 0
      %1443 = vmatpush1.bf16.msra.mxu0 0
      %1444 = vmatprep.subr.bf16.mxu0 0
      %1445 = vmatpush1.bf16.msra.mxu0 0
      %1446 = vmatprep.mubr.bf16.mxu0 0
      %1447 = vmatmul.mubr.bf16.gmra.mrb[0].mxu0 %v1409
      %v1448 = vpop.f32.mrb[0].mxu0
      %v1449 = vadd.f32 0.0, %v1448
      %v1450 = vpop.f32.mrb[0].mxu0
      %v1451 = vpop.f32.mrb[0].mxu0
      %v1452 = vpop.f32.mrb[0].mxu0
      %1453 = vdwg.mxu0
      %1454 = vrot.lane.b32.xlu0 %v1232, 112
      %v1455 = vpop.permute.xlu0 %1454
      %1456 = vrot.lane.b32.xlu0 %v1233, 112
      %v1457 = vpop.permute.xlu0 %1456
      %v1459 = vsel %vm1235, %v1455, 0
      %v1462 = vsel %vm1235, %v1457, 0
      %1464 = vmatprep.subr.bf16.mxu0 0
      %1465 = vmatpush1.bf16.xpose.msra.mxu0 %v1462
      %1466 = vmatprep.subr.bf16.mxu0 0
      %1467 = vmatpush1.bf16.xpose.msra.mxu0 0
      %1468 = vmatprep.subr.bf16.mxu0 0
      %1469 = vmatpush1.bf16.xpose.msra.mxu0 0
      %1470 = vmatprep.subr.bf16.mxu0 0
      %1471 = vmatpush1.bf16.xpose.msra.mxu0 0
      %1472 = vmatprep.subr.bf16.mxu0 0
      %1473 = vmatpush1.bf16.xpose.msra.mxu0 0
      %1474 = vmatprep.subr.bf16.mxu0 0
      %1475 = vmatpush1.bf16.xpose.msra.mxu0 0
      %1476 = vmatprep.subr.bf16.mxu0 0
      %1477 = vmatpush1.bf16.xpose.msra.mxu0 0
      %1478 = vmatprep.subr.bf16.mxu0 0
      %1479 = vmatpush1.bf16.xpose.msra.mxu0 0
      %1480 = vmatprep.subr.bf16.mxu0 0
      %1481 = vmatpush1.bf16.xpose.msra.mxu0 0
      %1482 = vmatprep.subr.bf16.mxu0 0
      %1483 = vmatpush1.bf16.xpose.msra.mxu0 0
      %1484 = vmatprep.subr.bf16.mxu0 0
      %1485 = vmatpush1.bf16.xpose.msra.mxu0 0
      %1486 = vmatprep.subr.bf16.mxu0 0
      %1487 = vmatpush1.bf16.xpose.msra.mxu0 0
      %1488 = vmatprep.subr.bf16.mxu0 0
      %1489 = vmatpush1.bf16.xpose.msra.mxu0 0
      %1490 = vmatprep.subr.bf16.mxu0 0
      %1491 = vmatpush1.bf16.xpose.msra.mxu0 0
      %1492 = vmatprep.subr.bf16.mxu0 0
      %1493 = vmatpush1.bf16.xpose.msra.mxu0 0
      %1494 = vmatprep.subr.bf16.mxu0 0
      %1495 = vmatpush1.bf16.xpose.msra.mxu0 0
      %1496 = vmatprep.mubr.bf16.mxu0 0
      %1497 = vmatmul.mubr.bf16.gmra.mrb[0].mxu0 %v1459
      %v1498 = vpop.f32.mrb[0].mxu0
      %v1499 = vadd.f32 0.0, %v1498
      %v1500 = vpop.f32.mrb[0].mxu0
      %v1501 = vpop.f32.mrb[0].mxu0
      %v1502 = vpop.f32.mrb[0].mxu0
      %1503 = vdwg.mxu0
      %v1504 = vsel %vm1235, %v1499, -inf
      %1505 = vmax.xlane.f32.xlu0 %v1504
      %v1506 = vpop.xlane.xlu0 %1505
      %v1507 = vsub.f32 %v1499, %v1506
      %v1508 = vmul.f32 %v1507, 1.442695
      %v1509 = vpow.pop %v1508
      %v1510 = vsel %vm1235, %v1509, 0.0
      %1511 = vadd.xlane.f32.xlu0 %v1510
      %v1512 = vpop.xlane.xlu0 %1511
      %v1513 = vrcp.pop %v1512
      %v1514 = vmul.f32 %v1509, %v1513
      %v1515 = vpack.c.bf16 %v1514, %v1514
      %1516 = vrot.lane.b32.xlu0 %v1234, 112
      %v1517 = vpop.permute.xlu0 %1516
      %v1519 = vsel %vm1235, %v1515, 0
      %v1522 = vsel %vm1297, %v1517, 0
      %1524 = vmatprep.subr.bf16.mxu0 0
      %1525 = vmatpush1.bf16.msra.mxu0 %v1522
      %1526 = vmatprep.subr.bf16.mxu0 0
      %1527 = vmatpush1.bf16.msra.mxu0 0
      %1528 = vmatprep.subr.bf16.mxu0 0
      %1529 = vmatpush1.bf16.msra.mxu0 0
      %1530 = vmatprep.subr.bf16.mxu0 0
      %1531 = vmatpush1.bf16.msra.mxu0 0
      %1532 = vmatprep.subr.bf16.mxu0 0
      %1533 = vmatpush1.bf16.msra.mxu0 0
      %1534 = vmatprep.subr.bf16.mxu0 0
      %1535 = vmatpush1.bf16.msra.mxu0 0
      %1536 = vmatprep.subr.bf16.mxu0 0
      %1537 = vmatpush1.bf16.msra.mxu0 0
      %1538 = vmatprep.subr.bf16.mxu0 0
      %1539 = vmatpush1.bf16.msra.mxu0 0
      %1540 = vmatprep.subr.bf16.mxu0 0
      %1541 = vmatpush1.bf16.msra.mxu0 0
      %1542 = vmatprep.subr.bf16.mxu0 0
      %1543 = vmatpush1.bf16.msra.mxu0 0
      %1544 = vmatprep.subr.bf16.mxu0 0
      %1545 = vmatpush1.bf16.msra.mxu0 0
      %1546 = vmatprep.subr.bf16.mxu0 0
      %1547 = vmatpush1.bf16.msra.mxu0 0
      %1548 = vmatprep.subr.bf16.mxu0 0
      %1549 = vmatpush1.bf16.msra.mxu0 0
      %1550 = vmatprep.subr.bf16.mxu0 0
      %1551 = vmatpush1.bf16.msra.mxu0 0
      %1552 = vmatprep.subr.bf16.mxu0 0
      %1553 = vmatpush1.bf16.msra.mxu0 0
      %1554 = vmatprep.subr.bf16.mxu0 0
      %1555 = vmatpush1.bf16.msra.mxu0 0
      %1556 = vmatprep.mubr.bf16.mxu0 0
      %1557 = vmatmul.mubr.bf16.gmra.mrb[0].mxu0 %v1519
      %v1558 = vpop.f32.mrb[0].mxu0
      %v1559 = vadd.f32 0.0, %v1558
      %v1560 = vpop.f32.mrb[0].mxu0
      %v1561 = vpop.f32.mrb[0].mxu0
      %v1562 = vpop.f32.mrb[0].mxu0
      %1563 = vdwg.mxu0
      %1564 = vrot.lane.b32.xlu0 %v1232, 104
      %v1565 = vpop.permute.xlu0 %1564
      %1566 = vrot.lane.b32.xlu0 %v1233, 104
      %v1567 = vpop.permute.xlu0 %1566
      %v1569 = vsel %vm1235, %v1565, 0
      %v1572 = vsel %vm1235, %v1567, 0
      %1574 = vmatprep.subr.bf16.mxu0 0
      %1575 = vmatpush1.bf16.xpose.msra.mxu0 %v1572
      %1576 = vmatprep.subr.bf16.mxu0 0
      %1577 = vmatpush1.bf16.xpose.msra.mxu0 0
      %1578 = vmatprep.subr.bf16.mxu0 0
      %1579 = vmatpush1.bf16.xpose.msra.mxu0 0
      %1580 = vmatprep.subr.bf16.mxu0 0
      %1581 = vmatpush1.bf16.xpose.msra.mxu0 0
      %1582 = vmatprep.subr.bf16.mxu0 0
      %1583 = vmatpush1.bf16.xpose.msra.mxu0 0
      %1584 = vmatprep.subr.bf16.mxu0 0
      %1585 = vmatpush1.bf16.xpose.msra.mxu0 0
      %1586 = vmatprep.subr.bf16.mxu0 0
      %1587 = vmatpush1.bf16.xpose.msra.mxu0 0
      %1588 = vmatprep.subr.bf16.mxu0 0
      %1589 = vmatpush1.bf16.xpose.msra.mxu0 0
      %1590 = vmatprep.subr.bf16.mxu0 0
      %1591 = vmatpush1.bf16.xpose.msra.mxu0 0
      %1592 = vmatprep.subr.bf16.mxu0 0
      %1593 = vmatpush1.bf16.xpose.msra.mxu0 0
      %1594 = vmatprep.subr.bf16.mxu0 0
      %1595 = vmatpush1.bf16.xpose.msra.mxu0 0
      %1596 = vmatprep.subr.bf16.mxu0 0
      %1597 = vmatpush1.bf16.xpose.msra.mxu0 0
      %1598 = vmatprep.subr.bf16.mxu0 0
      %1599 = vmatpush1.bf16.xpose.msra.mxu0 0
      %1600 = vmatprep.subr.bf16.mxu0 0
      %1601 = vmatpush1.bf16.xpose.msra.mxu0 0
      %1602 = vmatprep.subr.bf16.mxu0 0
      %1603 = vmatpush1.bf16.xpose.msra.mxu0 0
      %1604 = vmatprep.subr.bf16.mxu0 0
      %1605 = vmatpush1.bf16.xpose.msra.mxu0 0
      %1606 = vmatprep.mubr.bf16.mxu0 0
      %1607 = vmatmul.mubr.bf16.gmra.mrb[0].mxu0 %v1569
      %v1608 = vpop.f32.mrb[0].mxu0
      %v1609 = vadd.f32 0.0, %v1608
      %v1610 = vpop.f32.mrb[0].mxu0
      %v1611 = vpop.f32.mrb[0].mxu0
      %v1612 = vpop.f32.mrb[0].mxu0
      %1613 = vdwg.mxu0
      %v1614 = vsel %vm1235, %v1609, -inf
      %1615 = vmax.xlane.f32.xlu0 %v1614
      %v1616 = vpop.xlane.xlu0 %1615
      %v1617 = vsub.f32 %v1609, %v1616
      %v1618 = vmul.f32 %v1617, 1.442695
      %v1619 = vpow.pop %v1618
      %v1620 = vsel %vm1235, %v1619, 0.0
      %1621 = vadd.xlane.f32.xlu0 %v1620
      %v1622 = vpop.xlane.xlu0 %1621
      %v1623 = vrcp.pop %v1622
      %v1624 = vmul.f32 %v1619, %v1623
      %v1625 = vpack.c.bf16 %v1624, %v1624
      %1626 = vrot.lane.b32.xlu0 %v1234, 104
      %v1627 = vpop.permute.xlu0 %1626
      %v1629 = vsel %vm1235, %v1625, 0
      %v1632 = vsel %vm1297, %v1627, 0
      %1634 = vmatprep.subr.bf16.mxu0 0
      %1635 = vmatpush1.bf16.msra.mxu0 %v1632
      %1636 = vmatprep.subr.bf16.mxu0 0
      %1637 = vmatpush1.bf16.msra.mxu0 0
      %1638 = vmatprep.subr.bf16.mxu0 0
      %1639 = vmatpush1.bf16.msra.mxu0 0
      %1640 = vmatprep.subr.bf16.mxu0 0
      %1641 = vmatpush1.bf16.msra.mxu0 0
      %1642 = vmatprep.subr.bf16.mxu0 0
      %1643 = vmatpush1.bf16.msra.mxu0 0
      %1644 = vmatprep.subr.bf16.mxu0 0
      %1645 = vmatpush1.bf16.msra.mxu0 0
      %1646 = vmatprep.subr.bf16.mxu0 0
      %1647 = vmatpush1.bf16.msra.mxu0 0
      %1648 = vmatprep.subr.bf16.mxu0 0
      %1649 = vmatpush1.bf16.msra.mxu0 0
      %1650 = vmatprep.subr.bf16.mxu0 0
      %1651 = vmatpush1.bf16.msra.mxu0 0
      %1652 = vmatprep.subr.bf16.mxu0 0
      %1653 = vmatpush1.bf16.msra.mxu0 0
      %1654 = vmatprep.subr.bf16.mxu0 0
      %1655 = vmatpush1.bf16.msra.mxu0 0
      %1656 = vmatprep.subr.bf16.mxu0 0
      %1657 = vmatpush1.bf16.msra.mxu0 0
      %1658 = vmatprep.subr.bf16.mxu0 0
      %1659 = vmatpush1.bf16.msra.mxu0 0
      %1660 = vmatprep.subr.bf16.mxu0 0
      %1661 = vmatpush1.bf16.msra.mxu0 0
      %1662 = vmatprep.subr.bf16.mxu0 0
      %1663 = vmatpush1.bf16.msra.mxu0 0
      %1664 = vmatprep.subr.bf16.mxu0 0
      %1665 = vmatpush1.bf16.msra.mxu0 0
      %1666 = vmatprep.mubr.bf16.mxu0 0
      %1667 = vmatmul.mubr.bf16.gmra.mrb[0].mxu0 %v1629
      %v1668 = vpop.f32.mrb[0].mxu0
      %v1669 = vadd.f32 0.0, %v1668
      %v1670 = vpop.f32.mrb[0].mxu0
      %v1671 = vpop.f32.mrb[0].mxu0
      %v1672 = vpop.f32.mrb[0].mxu0
      %1673 = vdwg.mxu0
      %1675 = vrot.lane.b32.xlu0 %v1449, 8
      %v1676 = vpop.permute.xlu0 %1675
      %1679 = vrot.lane.b32.xlu0 %v1559, 16
      %v1680 = vpop.permute.xlu0 %1679
      %1683 = vrot.lane.b32.xlu0 %v1669, 24
      %v1684 = vpop.permute.xlu0 %1683
      %v1686 = vsel %vm1235, %v1336, %v1676
      %vm1687 = vcmask 130048
      %v1688 = vsel %vm1687, %v1686, %v1680
      %vm1689 = vcmask 195584
      %v1690 = vsel %vm1689, %v1688, %v1684
      %v1691 = vpack.c.bf16 %v1690, %v1690
      %v1692 = vld [vmem:[%s23] sm:$0xf]
      %v1693 = vld [vmem:[%s23 + $0x4] sm:$0xf]
      %v1694 = vld [vmem:[%s23 + $0x8] sm:$0xf]
      %v1695 = vld [vmem:[%s23 + $0xc] sm:$0xf]
      %v1696 = vld [vmem:[%s25] sm:$0x1]
      %v1698 = vlaneseq
      %v1699 = vshrl.u32 %v1698, 7
      %v1700 = vsub.s32 0, %v1699
      %v1701 = vrot.slane %v1696, %v1700
      %v1707 = vunpack.c.l.b16 %v1692
      %v1708 = vunpack.c.l.b16 %v1693
      %v1709 = vunpack.c.l.b16 %v1694
      %v1710 = vunpack.c.l.b16 %v1695
      %v1711 = vpack.c.b16 %v1708, %v1707
      %v1712 = vpack.c.b16 %v1710, %v1709
      %v1716 = vsel %vm1058, %v1691, 0
      %1718 = vmatprep.subr.bf16.mxu0 0
      %1719 = vmatpush1.bf16.msra.mxu0 %v1711
      %1720 = vmatprep.subr.bf16.mxu0 0
      %1721 = vmatpush1.bf16.msra.mxu0 %v1712
      %1722 = vmatprep.subr.bf16.mxu0 0
      %1723 = vmatpush1.bf16.msra.mxu0 0
      %1724 = vmatprep.subr.bf16.mxu0 0
      %1725 = vmatpush1.bf16.msra.mxu0 0
      %1726 = vmatprep.subr.bf16.mxu0 0
      %1727 = vmatpush1.bf16.msra.mxu0 0
      %1728 = vmatprep.subr.bf16.mxu0 0
      %1729 = vmatpush1.bf16.msra.mxu0 0
      %1730 = vmatprep.subr.bf16.mxu0 0
      %1731 = vmatpush1.bf16.msra.mxu0 0
      %1732 = vmatprep.subr.bf16.mxu0 0
      %1733 = vmatpush1.bf16.msra.mxu0 0
      %1734 = vmatprep.subr.bf16.mxu0 0
      %1735 = vmatpush1.bf16.msra.mxu0 0
      %1736 = vmatprep.subr.bf16.mxu0 0
      %1737 = vmatpush1.bf16.msra.mxu0 0
      %1738 = vmatprep.subr.bf16.mxu0 0
      %1739 = vmatpush1.bf16.msra.mxu0 0
      %1740 = vmatprep.subr.bf16.mxu0 0
      %1741 = vmatpush1.bf16.msra.mxu0 0
      %1742 = vmatprep.subr.bf16.mxu0 0
      %1743 = vmatpush1.bf16.msra.mxu0 0
      %1744 = vmatprep.subr.bf16.mxu0 0
      %1745 = vmatpush1.bf16.msra.mxu0 0
      %1746 = vmatprep.subr.bf16.mxu0 0
      %1747 = vmatpush1.bf16.msra.mxu0 0
      %1748 = vmatprep.subr.bf16.mxu0 0
      %1749 = vmatpush1.bf16.msra.mxu0 0
      %1750 = vmatprep.mubr.bf16.mxu0 0
      %1751 = vmatmul.mubr.bf16.gmra.mrb[0].mxu0 %v1716
      %v1752 = vpop.f32.mrb[0].mxu0
      %v1753 = vadd.f32 %v1701, %v1752
      %v1754 = vpop.f32.mrb[0].mxu0
      %v1755 = vpop.f32.mrb[0].mxu0
      %v1756 = vpop.f32.mrb[0].mxu0
      %1757 = vdwg.mxu0
      %v1758 = vadd.f32 %v1026, %v1753
      %v1759 = vld [vmem:[%s27] sm:$0x1]
      %v1761 = vlaneseq
      %v1762 = vshrl.u32 %v1761, 7
      %v1763 = vsub.s32 0, %v1762
      %v1764 = vrot.slane %v1759, %v1763
      %v1766 = vmul.f32 %v1758, %v1764
      %v1767 = vld [vmem:[%s29] sm:$0x1]
      %v1769 = vlaneseq
      %v1770 = vshrl.u32 %v1769, 7
      %v1771 = vsub.s32 0, %v1770
      %v1772 = vrot.slane %v1767, %v1771
      %v1774 = vadd.f32 %v1766, %v1772
      %v1775 = vadd.f32 %v1774, %v1029
      %v1776 = vadd.f32 %v1027, %v1030
      %v1777 = vadd.f32 %v1028, %v1031
      %v1778 = vpack.c.bf16 %v1775, %v1775
      %v1779 = vld [vmem:[%s31] sm:$0xf]
      %v1780 = vld [vmem:[%s31 + $0x4] sm:$0xf]
      %v1781 = vld [vmem:[%s31 + $0x8] sm:$0xf]
      %v1782 = vld [vmem:[%s31 + $0xc] sm:$0xf]
      %v1783 = vld [vmem:[%s37] sm:$0x1]
      %v1785 = vlaneseq
      %v1786 = vshrl.u32 %v1785, 7
      %v1787 = vsub.s32 0, %v1786
      %v1788 = vrot.slane %v1783, %v1787
      %v1794 = vunpack.c.l.b16 %v1779
      %v1795 = vunpack.c.l.b16 %v1780
      %v1796 = vunpack.c.l.b16 %v1781
      %v1797 = vunpack.c.l.b16 %v1782
      %v1798 = vpack.c.b16 %v1795, %v1794
      %v1799 = vpack.c.b16 %v1797, %v1796
      %v1803 = vsel %vm1058, %v1778, 0
      %1805 = vmatprep.subr.bf16.mxu0 0
      %1806 = vmatpush1.bf16.msra.mxu0 %v1798
      %1807 = vmatprep.subr.bf16.mxu0 0
      %1808 = vmatpush1.bf16.msra.mxu0 %v1799
      %1809 = vmatprep.subr.bf16.mxu0 0
      %1810 = vmatpush1.bf16.msra.mxu0 0
      %1811 = vmatprep.subr.bf16.mxu0 0
      %1812 = vmatpush1.bf16.msra.mxu0 0
      %1813 = vmatprep.subr.bf16.mxu0 0
      %1814 = vmatpush1.bf16.msra.mxu0 0
      %1815 = vmatprep.subr.bf16.mxu0 0
      %1816 = vmatpush1.bf16.msra.mxu0 0
      %1817 = vmatprep.subr.bf16.mxu0 0
      %1818 = vmatpush1.bf16.msra.mxu0 0
      %1819 = vmatprep.subr.bf16.mxu0 0
      %1820 = vmatpush1.bf16.msra.mxu0 0
      %1821 = vmatprep.subr.bf16.mxu0 0
      %1822 = vmatpush1.bf16.msra.mxu0 0
      %1823 = vmatprep.subr.bf16.mxu0 0
      %1824 = vmatpush1.bf16.msra.mxu0 0
      %1825 = vmatprep.subr.bf16.mxu0 0
      %1826 = vmatpush1.bf16.msra.mxu0 0
      %1827 = vmatprep.subr.bf16.mxu0 0
      %1828 = vmatpush1.bf16.msra.mxu0 0
      %1829 = vmatprep.subr.bf16.mxu0 0
      %1830 = vmatpush1.bf16.msra.mxu0 0
      %1831 = vmatprep.subr.bf16.mxu0 0
      %1832 = vmatpush1.bf16.msra.mxu0 0
      %1833 = vmatprep.subr.bf16.mxu0 0
      %1834 = vmatpush1.bf16.msra.mxu0 0
      %1835 = vmatprep.subr.bf16.mxu0 0
      %1836 = vmatpush1.bf16.msra.mxu0 0
      %1837 = vmatprep.mubr.bf16.mxu0 0
      %1838 = vmatmul.mubr.bf16.gmra.mrb[0].mxu0 %v1803
      %v1839 = vpop.f32.mrb[0].mxu0
      %v1840 = vadd.f32 %v1788, %v1839
      %v1841 = vpop.f32.mrb[0].mxu0
      %v1842 = vpop.f32.mrb[0].mxu0
      %v1843 = vpop.f32.mrb[0].mxu0
      %1844 = vdwg.mxu0
      %v1845 = vpack.c.bf16 %v1777, %v1776
      %v1846 = vld [vmem:[%s33] sm:$0xf]
      %v1847 = vld [vmem:[%s33 + $0x4] sm:$0xf]
      %v1848 = vld [vmem:[%s33 + $0x8] sm:$0xf]
      %v1849 = vld [vmem:[%s33 + $0xc] sm:$0xf]
      %v1850 = vld [vmem:[%s39] sm:$0x1]
      %v1852 = vlaneseq
      %v1853 = vshrl.u32 %v1852, 7
      %v1854 = vsub.s32 0, %v1853
      %v1855 = vrot.slane %v1850, %v1854
      %v1861 = vunpack.c.l.b16 %v1846
      %v1862 = vunpack.c.l.b16 %v1847
      %v1863 = vunpack.c.l.b16 %v1848
      %v1864 = vunpack.c.l.b16 %v1849
      %v1865 = vpack.c.b16 %v1862, %v1861
      %v1866 = vpack.c.b16 %v1864, %v1863
      %v1870 = vsel %vm1058, %v1845, 0
      %1872 = vmatprep.subr.bf16.mxu0 0
      %1873 = vmatpush1.bf16.msra.mxu0 %v1865
      %1874 = vmatprep.subr.bf16.mxu0 0
      %1875 = vmatpush1.bf16.msra.mxu0 %v1866
      %1876 = vmatprep.subr.bf16.mxu0 0
      %1877 = vmatpush1.bf16.msra.mxu0 0
      %1878 = vmatprep.subr.bf16.mxu0 0
      %1879 = vmatpush1.bf16.msra.mxu0 0
      %1880 = vmatprep.subr.bf16.mxu0 0
      %1881 = vmatpush1.bf16.msra.mxu0 0
      %1882 = vmatprep.subr.bf16.mxu0 0
      %1883 = vmatpush1.bf16.msra.mxu0 0
      %1884 = vmatprep.subr.bf16.mxu0 0
      %1885 = vmatpush1.bf16.msra.mxu0 0
      %1886 = vmatprep.subr.bf16.mxu0 0
      %1887 = vmatpush1.bf16.msra.mxu0 0
      %1888 = vmatprep.subr.bf16.mxu0 0
      %1889 = vmatpush1.bf16.msra.mxu0 0
      %1890 = vmatprep.subr.bf16.mxu0 0
      %1891 = vmatpush1.bf16.msra.mxu0 0
      %1892 = vmatprep.subr.bf16.mxu0 0
      %1893 = vmatpush1.bf16.msra.mxu0 0
      %1894 = vmatprep.subr.bf16.mxu0 0
      %1895 = vmatpush1.bf16.msra.mxu0 0
      %1896 = vmatprep.subr.bf16.mxu0 0
      %1897 = vmatpush1.bf16.msra.mxu0 0
      %1898 = vmatprep.subr.bf16.mxu0 0
      %1899 = vmatpush1.bf16.msra.mxu0 0
      %1900 = vmatprep.subr.bf16.mxu0 0
      %1901 = vmatpush1.bf16.msra.mxu0 0
      %1902 = vmatprep.subr.bf16.mxu0 0
      %1903 = vmatpush1.bf16.msra.mxu0 0
      %1904 = vmatprep.mubr.bf16.mxu0 0
      %1905 = vmatmul.mubr.bf16.gmra.mrb[0].mxu0 %v1870
      %v1906 = vpop.f32.mrb[0].mxu0
      %v1907 = vadd.f32 %v1855, %v1906
      %v1908 = vpop.f32.mrb[0].mxu0
      %v1909 = vpop.f32.mrb[0].mxu0
      %v1910 = vadd.f32 %v1855, %v1909
      %v1911 = vpop.f32.mrb[0].mxu0
      %1912 = vdwg.mxu0
      %v1913 = vpack.c.bf16 %v1028, %v1027
      %v1914 = vld [vmem:[%s35] sm:$0xf]
      %v1915 = vld [vmem:[%s35 + $0x4] sm:$0xf]
      %v1916 = vld [vmem:[%s35 + $0x8] sm:$0xf]
      %v1917 = vld [vmem:[%s35 + $0xc] sm:$0xf]
      %v1918 = vld [vmem:[%s41] sm:$0x1]
      %v1920 = vlaneseq
      %v1921 = vshrl.u32 %v1920, 7
      %v1922 = vsub.s32 0, %v1921
      %v1923 = vrot.slane %v1918, %v1922
      %v1929 = vunpack.c.l.b16 %v1914
      %v1930 = vunpack.c.l.b16 %v1915
      %v1931 = vunpack.c.l.b16 %v1916
      %v1932 = vunpack.c.l.b16 %v1917
      %v1933 = vpack.c.b16 %v1930, %v1929
      %v1934 = vpack.c.b16 %v1932, %v1931
      %v1938 = vsel %vm1058, %v1913, 0
      %1940 = vmatprep.subr.bf16.mxu0 0
      %1941 = vmatpush1.bf16.msra.mxu0 %v1933
      %1942 = vmatprep.subr.bf16.mxu0 0
      %1943 = vmatpush1.bf16.msra.mxu0 %v1934
      %1944 = vmatprep.subr.bf16.mxu0 0
      %1945 = vmatpush1.bf16.msra.mxu0 0
      %1946 = vmatprep.subr.bf16.mxu0 0
      %1947 = vmatpush1.bf16.msra.mxu0 0
      %1948 = vmatprep.subr.bf16.mxu0 0
      %1949 = vmatpush1.bf16.msra.mxu0 0
      %1950 = vmatprep.subr.bf16.mxu0 0
      %1951 = vmatpush1.bf16.msra.mxu0 0
      %1952 = vmatprep.subr.bf16.mxu0 0
      %1953 = vmatpush1.bf16.msra.mxu0 0
      %1954 = vmatprep.subr.bf16.mxu0 0
      %1955 = vmatpush1.bf16.msra.mxu0 0
      %1956 = vmatprep.subr.bf16.mxu0 0
      %1957 = vmatpush1.bf16.msra.mxu0 0
      %1958 = vmatprep.subr.bf16.mxu0 0
      %1959 = vmatpush1.bf16.msra.mxu0 0
      %1960 = vmatprep.subr.bf16.mxu0 0
      %1961 = vmatpush1.bf16.msra.mxu0 0
      %1962 = vmatprep.subr.bf16.mxu0 0
      %1963 = vmatpush1.bf16.msra.mxu0 0
      %1964 = vmatprep.subr.bf16.mxu0 0
      %1965 = vmatpush1.bf16.msra.mxu0 0
      %1966 = vmatprep.subr.bf16.mxu0 0
      %1967 = vmatpush1.bf16.msra.mxu0 0
      %1968 = vmatprep.subr.bf16.mxu0 0
      %1969 = vmatpush1.bf16.msra.mxu0 0
      %1970 = vmatprep.subr.bf16.mxu0 0
      %1971 = vmatpush1.bf16.msra.mxu0 0
      %1972 = vmatprep.mubr.bf16.mxu0 0
      %1973 = vmatmul.mubr.bf16.gmra.mrb[0].mxu0 %v1938
      %v1974 = vpop.f32.mrb[0].mxu0
      %v1975 = vadd.f32 %v1923, %v1974
      %v1976 = vpop.f32.mrb[0].mxu0
      %v1977 = vpop.f32.mrb[0].mxu0
      %v1978 = vadd.f32 %v1923, %v1977
      %v1979 = vpop.f32.mrb[0].mxu0
      %1980 = vdwg.mxu0
      %v1981 = vpack.c.bf16 %v1840, %v1840
      %v1982 = vpack.c.bf16 %v1910, %v1907
      %v1983 = vpack.c.bf16 %v1978, %v1975
      %v1985 = vlaneseq
      %v1986 = vshrl.u32 %v1985, 7
      %v1987 = vsub.s32 0, %v1986
      %v1988 = vrot.slane %v1032, %v1987
      %v1991 = vsel %vm1235, %v1981, 0
      %v1994 = vsel %vm1235, %v1982, 0
      %1996 = vmatprep.subr.bf16.mxu0 0
      %1997 = vmatpush1.bf16.xpose.msra.mxu0 %v1994
      %1998 = vmatprep.subr.bf16.mxu0 0
      %1999 = vmatpush1.bf16.xpose.msra.mxu0 0
      %2000 = vmatprep.subr.bf16.mxu0 0
      %2001 = vmatpush1.bf16.xpose.msra.mxu0 0
      %2002 = vmatprep.subr.bf16.mxu0 0
      %2003 = vmatpush1.bf16.xpose.msra.mxu0 0
      %2004 = vmatprep.subr.bf16.mxu0 0
      %2005 = vmatpush1.bf16.xpose.msra.mxu0 0
      %2006 = vmatprep.subr.bf16.mxu0 0
      %2007 = vmatpush1.bf16.xpose.msra.mxu0 0
      %2008 = vmatprep.subr.bf16.mxu0 0
      %2009 = vmatpush1.bf16.xpose.msra.mxu0 0
      %2010 = vmatprep.subr.bf16.mxu0 0
      %2011 = vmatpush1.bf16.xpose.msra.mxu0 0
      %2012 = vmatprep.subr.bf16.mxu0 0
      %2013 = vmatpush1.bf16.xpose.msra.mxu0 0
      %2014 = vmatprep.subr.bf16.mxu0 0
      %2015 = vmatpush1.bf16.xpose.msra.mxu0 0
      %2016 = vmatprep.subr.bf16.mxu0 0
      %2017 = vmatpush1.bf16.xpose.msra.mxu0 0
      %2018 = vmatprep.subr.bf16.mxu0 0
      %2019 = vmatpush1.bf16.xpose.msra.mxu0 0
      %2020 = vmatprep.subr.bf16.mxu0 0
      %2021 = vmatpush1.bf16.xpose.msra.mxu0 0
      %2022 = vmatprep.subr.bf16.mxu0 0
      %2023 = vmatpush1.bf16.xpose.msra.mxu0 0
      %2024 = vmatprep.subr.bf16.mxu0 0
      %2025 = vmatpush1.bf16.xpose.msra.mxu0 0
      %2026 = vmatprep.subr.bf16.mxu0 0
      %2027 = vmatpush1.bf16.xpose.msra.mxu0 0
      %2028 = vmatprep.mubr.bf16.mxu0 0
      %2029 = vmatmul.mubr.bf16.gmra.mrb[0].mxu0 %v1991
      %v2030 = vpop.f32.mrb[0].mxu0
      %v2031 = vadd.f32 %v1988, %v2030
      %v2032 = vpop.f32.mrb[0].mxu0
      %v2033 = vpop.f32.mrb[0].mxu0
      %v2034 = vpop.f32.mrb[0].mxu0
      %2035 = vdwg.mxu0
      %v2036 = vsel %vm1687, %v2031, -inf
      %2037 = vmax.xlane.f32.xlu0 %v2036
      %v2038 = vpop.xlane.xlu0 %2037
      %v2039 = vsub.f32 %v2031, %v2038
      %v2040 = vmul.f32 %v2039, 1.442695
      %v2041 = vpow.pop %v2040
      %v2042 = vsel %vm1687, %v2041, 0.0
      %2043 = vadd.xlane.f32.xlu0 %v2042
      %v2044 = vpop.xlane.xlu0 %2043
      %v2045 = vrcp.pop %v2044
      %v2046 = vmul.f32 %v2041, %v2045
      %v2047 = vpack.c.bf16 %v2046, %v2046
      %v2049 = vsel %vm1687, %v2047, 0
      %2051 = vmatprep.subr.bf16.mxu0 0
      %2052 = vmatpush1.bf16.msra.mxu0 %v1983
      %2053 = vmatprep.subr.bf16.mxu0 0
      %2054 = vmatpush1.bf16.msra.mxu0 0
      %2055 = vmatprep.subr.bf16.mxu0 0
      %2056 = vmatpush1.bf16.msra.mxu0 0
      %2057 = vmatprep.subr.bf16.mxu0 0
      %2058 = vmatpush1.bf16.msra.mxu0 0
      %2059 = vmatprep.subr.bf16.mxu0 0
      %2060 = vmatpush1.bf16.msra.mxu0 0
      %2061 = vmatprep.subr.bf16.mxu0 0
      %2062 = vmatpush1.bf16.msra.mxu0 0
      %2063 = vmatprep.subr.bf16.mxu0 0
      %2064 = vmatpush1.bf16.msra.mxu0 0
      %2065 = vmatprep.subr.bf16.mxu0 0
      %2066 = vmatpush1.bf16.msra.mxu0 0
      %2067 = vmatprep.subr.bf16.mxu0 0
      %2068 = vmatpush1.bf16.msra.mxu0 0
      %2069 = vmatprep.subr.bf16.mxu0 0
      %2070 = vmatpush1.bf16.msra.mxu0 0
      %2071 = vmatprep.subr.bf16.mxu0 0
      %2072 = vmatpush1.bf16.msra.mxu0 0
      %2073 = vmatprep.subr.bf16.mxu0 0
      %2074 = vmatpush1.bf16.msra.mxu0 0
      %2075 = vmatprep.subr.bf16.mxu0 0
      %2076 = vmatpush1.bf16.msra.mxu0 0
      %2077 = vmatprep.subr.bf16.mxu0 0
      %2078 = vmatpush1.bf16.msra.mxu0 0
      %2079 = vmatprep.subr.bf16.mxu0 0
      %2080 = vmatpush1.bf16.msra.mxu0 0
      %2081 = vmatprep.subr.bf16.mxu0 0
      %2082 = vmatpush1.bf16.msra.mxu0 0
      %2083 = vmatprep.mubr.bf16.mxu0 0
      %2084 = vmatmul.mubr.bf16.gmra.mrb[0].mxu0 %v2049
      %v2085 = vpop.f32.mrb[0].mxu0
      %v2086 = vadd.f32 0.0, %v2085
      %v2087 = vpop.f32.mrb[0].mxu0
      %v2088 = vpop.f32.mrb[0].mxu0
      %v2089 = vpop.f32.mrb[0].mxu0
      %2090 = vdwg.mxu0
      %2092 = vrot.lane.b32.xlu0 %v1981, 120
      %v2093 = vpop.permute.xlu0 %2092
      %2095 = vrot.lane.b32.xlu0 %v1982, 120
      %v2096 = vpop.permute.xlu0 %2095
      %v2098 = vsel %vm1235, %v2093, 0
      %v2101 = vsel %vm1235, %v2096, 0
      %2103 = vmatprep.subr.bf16.mxu0 0
      %2104 = vmatpush1.bf16.xpose.msra.mxu0 %v2101
      %2105 = vmatprep.subr.bf16.mxu0 0
      %2106 = vmatpush1.bf16.xpose.msra.mxu0 0
      %2107 = vmatprep.subr.bf16.mxu0 0
      %2108 = vmatpush1.bf16.xpose.msra.mxu0 0
      %2109 = vmatprep.subr.bf16.mxu0 0
      %2110 = vmatpush1.bf16.xpose.msra.mxu0 0
      %2111 = vmatprep.subr.bf16.mxu0 0
      %2112 = vmatpush1.bf16.xpose.msra.mxu0 0
      %2113 = vmatprep.subr.bf16.mxu0 0
      %2114 = vmatpush1.bf16.xpose.msra.mxu0 0
      %2115 = vmatprep.subr.bf16.mxu0 0
      %2116 = vmatpush1.bf16.xpose.msra.mxu0 0
      %2117 = vmatprep.subr.bf16.mxu0 0
      %2118 = vmatpush1.bf16.xpose.msra.mxu0 0
      %2119 = vmatprep.subr.bf16.mxu0 0
      %2120 = vmatpush1.bf16.xpose.msra.mxu0 0
      %2121 = vmatprep.subr.bf16.mxu0 0
      %2122 = vmatpush1.bf16.xpose.msra.mxu0 0
      %2123 = vmatprep.subr.bf16.mxu0 0
      %2124 = vmatpush1.bf16.xpose.msra.mxu0 0
      %2125 = vmatprep.subr.bf16.mxu0 0
      %2126 = vmatpush1.bf16.xpose.msra.mxu0 0
      %2127 = vmatprep.subr.bf16.mxu0 0
      %2128 = vmatpush1.bf16.xpose.msra.mxu0 0
      %2129 = vmatprep.subr.bf16.mxu0 0
      %2130 = vmatpush1.bf16.xpose.msra.mxu0 0
      %2131 = vmatprep.subr.bf16.mxu0 0
      %2132 = vmatpush1.bf16.xpose.msra.mxu0 0
      %2133 = vmatprep.subr.bf16.mxu0 0
      %2134 = vmatpush1.bf16.xpose.msra.mxu0 0
      %2135 = vmatprep.mubr.bf16.mxu0 0
      %2136 = vmatmul.mubr.bf16.gmra.mrb[0].mxu0 %v2098
      %v2137 = vpop.f32.mrb[0].mxu0
      %v2138 = vadd.f32 %v1988, %v2137
      %v2139 = vpop.f32.mrb[0].mxu0
      %v2140 = vpop.f32.mrb[0].mxu0
      %v2141 = vpop.f32.mrb[0].mxu0
      %2142 = vdwg.mxu0
      %v2143 = vsel %vm1687, %v2138, -inf
      %2144 = vmax.xlane.f32.xlu0 %v2143
      %v2145 = vpop.xlane.xlu0 %2144
      %v2146 = vsub.f32 %v2138, %v2145
      %v2147 = vmul.f32 %v2146, 1.442695
      %v2148 = vpow.pop %v2147
      %v2149 = vsel %vm1687, %v2148, 0.0
      %2150 = vadd.xlane.f32.xlu0 %v2149
      %v2151 = vpop.xlane.xlu0 %2150
      %v2152 = vrcp.pop %v2151
      %v2153 = vmul.f32 %v2148, %v2152
      %v2154 = vpack.c.bf16 %v2153, %v2153
      %2156 = vrot.lane.b32.xlu0 %v1983, 120
      %v2157 = vpop.permute.xlu0 %2156
      %v2160 = vsel %vm1687, %v2154, 0
      %2162 = vmatprep.subr.bf16.mxu0 0
      %2163 = vmatpush1.bf16.msra.mxu0 %v2157
      %2164 = vmatprep.subr.bf16.mxu0 0
      %2165 = vmatpush1.bf16.msra.mxu0 0
      %2166 = vmatprep.subr.bf16.mxu0 0
      %2167 = vmatpush1.bf16.msra.mxu0 0
      %2168 = vmatprep.subr.bf16.mxu0 0
      %2169 = vmatpush1.bf16.msra.mxu0 0
      %2170 = vmatprep.subr.bf16.mxu0 0
      %2171 = vmatpush1.bf16.msra.mxu0 0
      %2172 = vmatprep.subr.bf16.mxu0 0
      %2173 = vmatpush1.bf16.msra.mxu0 0
      %2174 = vmatprep.subr.bf16.mxu0 0
      %2175 = vmatpush1.bf16.msra.mxu0 0
      %2176 = vmatprep.subr.bf16.mxu0 0
      %2177 = vmatpush1.bf16.msra.mxu0 0
      %2178 = vmatprep.subr.bf16.mxu0 0
      %2179 = vmatpush1.bf16.msra.mxu0 0
      %2180 = vmatprep.subr.bf16.mxu0 0
      %2181 = vmatpush1.bf16.msra.mxu0 0
      %2182 = vmatprep.subr.bf16.mxu0 0
      %2183 = vmatpush1.bf16.msra.mxu0 0
      %2184 = vmatprep.subr.bf16.mxu0 0
      %2185 = vmatpush1.bf16.msra.mxu0 0
      %2186 = vmatprep.subr.bf16.mxu0 0
      %2187 = vmatpush1.bf16.msra.mxu0 0
      %2188 = vmatprep.subr.bf16.mxu0 0
      %2189 = vmatpush1.bf16.msra.mxu0 0
      %2190 = vmatprep.subr.bf16.mxu0 0
      %2191 = vmatpush1.bf16.msra.mxu0 0
      %2192 = vmatprep.subr.bf16.mxu0 0
      %2193 = vmatpush1.bf16.msra.mxu0 0
      %2194 = vmatprep.mubr.bf16.mxu0 0
      %2195 = vmatmul.mubr.bf16.gmra.mrb[0].mxu0 %v2160
      %v2196 = vpop.f32.mrb[0].mxu0
      %v2197 = vadd.f32 0.0, %v2196
      %v2198 = vpop.f32.mrb[0].mxu0
      %v2199 = vpop.f32.mrb[0].mxu0
      %v2200 = vpop.f32.mrb[0].mxu0
      %2201 = vdwg.mxu0
      %2202 = vrot.lane.b32.xlu0 %v1981, 112
      %v2203 = vpop.permute.xlu0 %2202
      %2204 = vrot.lane.b32.xlu0 %v1982, 112
      %v2205 = vpop.permute.xlu0 %2204
      %v2207 = vsel %vm1235, %v2203, 0
      %v2210 = vsel %vm1235, %v2205, 0
      %2212 = vmatprep.subr.bf16.mxu0 0
      %2213 = vmatpush1.bf16.xpose.msra.mxu0 %v2210
      %2214 = vmatprep.subr.bf16.mxu0 0
      %2215 = vmatpush1.bf16.xpose.msra.mxu0 0
      %2216 = vmatprep.subr.bf16.mxu0 0
      %2217 = vmatpush1.bf16.xpose.msra.mxu0 0
      %2218 = vmatprep.subr.bf16.mxu0 0
      %2219 = vmatpush1.bf16.xpose.msra.mxu0 0
      %2220 = vmatprep.subr.bf16.mxu0 0
      %2221 = vmatpush1.bf16.xpose.msra.mxu0 0
      %2222 = vmatprep.subr.bf16.mxu0 0
      %2223 = vmatpush1.bf16.xpose.msra.mxu0 0
      %2224 = vmatprep.subr.bf16.mxu0 0
      %2225 = vmatpush1.bf16.xpose.msra.mxu0 0
      %2226 = vmatprep.subr.bf16.mxu0 0
      %2227 = vmatpush1.bf16.xpose.msra.mxu0 0
      %2228 = vmatprep.subr.bf16.mxu0 0
      %2229 = vmatpush1.bf16.xpose.msra.mxu0 0
      %2230 = vmatprep.subr.bf16.mxu0 0
      %2231 = vmatpush1.bf16.xpose.msra.mxu0 0
      %2232 = vmatprep.subr.bf16.mxu0 0
      %2233 = vmatpush1.bf16.xpose.msra.mxu0 0
      %2234 = vmatprep.subr.bf16.mxu0 0
      %2235 = vmatpush1.bf16.xpose.msra.mxu0 0
      %2236 = vmatprep.subr.bf16.mxu0 0
      %2237 = vmatpush1.bf16.xpose.msra.mxu0 0
      %2238 = vmatprep.subr.bf16.mxu0 0
      %2239 = vmatpush1.bf16.xpose.msra.mxu0 0
      %2240 = vmatprep.subr.bf16.mxu0 0
      %2241 = vmatpush1.bf16.xpose.msra.mxu0 0
      %2242 = vmatprep.subr.bf16.mxu0 0
      %2243 = vmatpush1.bf16.xpose.msra.mxu0 0
      %2244 = vmatprep.mubr.bf16.mxu0 0
      %2245 = vmatmul.mubr.bf16.gmra.mrb[0].mxu0 %v2207
      %v2246 = vpop.f32.mrb[0].mxu0
      %v2247 = vadd.f32 %v1988, %v2246
      %v2248 = vpop.f32.mrb[0].mxu0
      %v2249 = vpop.f32.mrb[0].mxu0
      %v2250 = vpop.f32.mrb[0].mxu0
      %2251 = vdwg.mxu0
      %v2252 = vsel %vm1687, %v2247, -inf
      %2253 = vmax.xlane.f32.xlu0 %v2252
      %v2254 = vpop.xlane.xlu0 %2253
      %v2255 = vsub.f32 %v2247, %v2254
      %v2256 = vmul.f32 %v2255, 1.442695
      %v2257 = vpow.pop %v2256
      %v2258 = vsel %vm1687, %v2257, 0.0
      %2259 = vadd.xlane.f32.xlu0 %v2258
      %v2260 = vpop.xlane.xlu0 %2259
      %v2261 = vrcp.pop %v2260
      %v2262 = vmul.f32 %v2257, %v2261
      %v2263 = vpack.c.bf16 %v2262, %v2262
      %2264 = vrot.lane.b32.xlu0 %v1983, 112
      %v2265 = vpop.permute.xlu0 %2264
      %v2268 = vsel %vm1687, %v2263, 0
      %2270 = vmatprep.subr.bf16.mxu0 0
      %2271 = vmatpush1.bf16.msra.mxu0 %v2265
      %2272 = vmatprep.subr.bf16.mxu0 0
      %2273 = vmatpush1.bf16.msra.mxu0 0
      %2274 = vmatprep.subr.bf16.mxu0 0
      %2275 = vmatpush1.bf16.msra.mxu0 0
      %2276 = vmatprep.subr.bf16.mxu0 0
      %2277 = vmatpush1.bf16.msra.mxu0 0
      %2278 = vmatprep.subr.bf16.mxu0 0
      %2279 = vmatpush1.bf16.msra.mxu0 0
      %2280 = vmatprep.subr.bf16.mxu0 0
      %2281 = vmatpush1.bf16.msra.mxu0 0
      %2282 = vmatprep.subr.bf16.mxu0 0
      %2283 = vmatpush1.bf16.msra.mxu0 0
      %2284 = vmatprep.subr.bf16.mxu0 0
      %2285 = vmatpush1.bf16.msra.mxu0 0
      %2286 = vmatprep.subr.bf16.mxu0 0
      %2287 = vmatpush1.bf16.msra.mxu0 0
      %2288 = vmatprep.subr.bf16.mxu0 0
      %2289 = vmatpush1.bf16.msra.mxu0 0
      %2290 = vmatprep.subr.bf16.mxu0 0
      %2291 = vmatpush1.bf16.msra.mxu0 0
      %2292 = vmatprep.subr.bf16.mxu0 0
      %2293 = vmatpush1.bf16.msra.mxu0 0
      %2294 = vmatprep.subr.bf16.mxu0 0
      %2295 = vmatpush1.bf16.msra.mxu0 0
      %2296 = vmatprep.subr.bf16.mxu0 0
      %2297 = vmatpush1.bf16.msra.mxu0 0
      %2298 = vmatprep.subr.bf16.mxu0 0
      %2299 = vmatpush1.bf16.msra.mxu0 0
      %2300 = vmatprep.subr.bf16.mxu0 0
      %2301 = vmatpush1.bf16.msra.mxu0 0
      %2302 = vmatprep.mubr.bf16.mxu0 0
      %2303 = vmatmul.mubr.bf16.gmra.mrb[0].mxu0 %v2268
      %v2304 = vpop.f32.mrb[0].mxu0
      %v2305 = vadd.f32 0.0, %v2304
      %v2306 = vpop.f32.mrb[0].mxu0
      %v2307 = vpop.f32.mrb[0].mxu0
      %v2308 = vpop.f32.mrb[0].mxu0
      %2309 = vdwg.mxu0
      %2310 = vrot.lane.b32.xlu0 %v1981, 104
      %v2311 = vpop.permute.xlu0 %2310
      %2312 = vrot.lane.b32.xlu0 %v1982, 104
      %v2313 = vpop.permute.xlu0 %2312
      %v2315 = vsel %vm1235, %v2311, 0
      %v2318 = vsel %vm1235, %v2313, 0
      %2320 = vmatprep.subr.bf16.mxu0 0
      %2321 = vmatpush1.bf16.xpose.msra.mxu0 %v2318
      %2322 = vmatprep.subr.bf16.mxu0 0
      %2323 = vmatpush1.bf16.xpose.msra.mxu0 0
      %2324 = vmatprep.subr.bf16.mxu0 0
      %2325 = vmatpush1.bf16.xpose.msra.mxu0 0
      %2326 = vmatprep.subr.bf16.mxu0 0
      %2327 = vmatpush1.bf16.xpose.msra.mxu0 0
      %2328 = vmatprep.subr.bf16.mxu0 0
      %2329 = vmatpush1.bf16.xpose.msra.mxu0 0
      %2330 = vmatprep.subr.bf16.mxu0 0
      %2331 = vmatpush1.bf16.xpose.msra.mxu0 0
      %2332 = vmatprep.subr.bf16.mxu0 0
      %2333 = vmatpush1.bf16.xpose.msra.mxu0 0
      %2334 = vmatprep.subr.bf16.mxu0 0
      %2335 = vmatpush1.bf16.xpose.msra.mxu0 0
      %2336 = vmatprep.subr.bf16.mxu0 0
      %2337 = vmatpush1.bf16.xpose.msra.mxu0 0
      %2338 = vmatprep.subr.bf16.mxu0 0
      %2339 = vmatpush1.bf16.xpose.msra.mxu0 0
      %2340 = vmatprep.subr.bf16.mxu0 0
      %2341 = vmatpush1.bf16.xpose.msra.mxu0 0
      %2342 = vmatprep.subr.bf16.mxu0 0
      %2343 = vmatpush1.bf16.xpose.msra.mxu0 0
      %2344 = vmatprep.subr.bf16.mxu0 0
      %2345 = vmatpush1.bf16.xpose.msra.mxu0 0
      %2346 = vmatprep.subr.bf16.mxu0 0
      %2347 = vmatpush1.bf16.xpose.msra.mxu0 0
      %2348 = vmatprep.subr.bf16.mxu0 0
      %2349 = vmatpush1.bf16.xpose.msra.mxu0 0
      %2350 = vmatprep.subr.bf16.mxu0 0
      %2351 = vmatpush1.bf16.xpose.msra.mxu0 0
      %2352 = vmatprep.mubr.bf16.mxu0 0
      %2353 = vmatmul.mubr.bf16.gmra.mrb[0].mxu0 %v2315
      %v2354 = vpop.f32.mrb[0].mxu0
      %v2355 = vadd.f32 %v1988, %v2354
      %v2356 = vpop.f32.mrb[0].mxu0
      %v2357 = vpop.f32.mrb[0].mxu0
      %v2358 = vpop.f32.mrb[0].mxu0
      %2359 = vdwg.mxu0
      %v2360 = vsel %vm1687, %v2355, -inf
      %2361 = vmax.xlane.f32.xlu0 %v2360
      %v2362 = vpop.xlane.xlu0 %2361
      %v2363 = vsub.f32 %v2355, %v2362
      %v2364 = vmul.f32 %v2363, 1.442695
      %v2365 = vpow.pop %v2364
      %v2366 = vsel %vm1687, %v2365, 0.0
      %2367 = vadd.xlane.f32.xlu0 %v2366
      %v2368 = vpop.xlane.xlu0 %2367
      %v2369 = vrcp.pop %v2368
      %v2370 = vmul.f32 %v2365, %v2369
      %v2371 = vpack.c.bf16 %v2370, %v2370
      %2372 = vrot.lane.b32.xlu0 %v1983, 104
      %v2373 = vpop.permute.xlu0 %2372
      %v2376 = vsel %vm1687, %v2371, 0
      %2378 = vmatprep.subr.bf16.mxu0 0
      %2379 = vmatpush1.bf16.msra.mxu0 %v2373
      %2380 = vmatprep.subr.bf16.mxu0 0
      %2381 = vmatpush1.bf16.msra.mxu0 0
      %2382 = vmatprep.subr.bf16.mxu0 0
      %2383 = vmatpush1.bf16.msra.mxu0 0
      %2384 = vmatprep.subr.bf16.mxu0 0
      %2385 = vmatpush1.bf16.msra.mxu0 0
      %2386 = vmatprep.subr.bf16.mxu0 0
      %2387 = vmatpush1.bf16.msra.mxu0 0
      %2388 = vmatprep.subr.bf16.mxu0 0
      %2389 = vmatpush1.bf16.msra.mxu0 0
      %2390 = vmatprep.subr.bf16.mxu0 0
      %2391 = vmatpush1.bf16.msra.mxu0 0
      %2392 = vmatprep.subr.bf16.mxu0 0
      %2393 = vmatpush1.bf16.msra.mxu0 0
      %2394 = vmatprep.subr.bf16.mxu0 0
      %2395 = vmatpush1.bf16.msra.mxu0 0
      %2396 = vmatprep.subr.bf16.mxu0 0
      %2397 = vmatpush1.bf16.msra.mxu0 0
      %2398 = vmatprep.subr.bf16.mxu0 0
      %2399 = vmatpush1.bf16.msra.mxu0 0
      %2400 = vmatprep.subr.bf16.mxu0 0
      %2401 = vmatpush1.bf16.msra.mxu0 0
      %2402 = vmatprep.subr.bf16.mxu0 0
      %2403 = vmatpush1.bf16.msra.mxu0 0
      %2404 = vmatprep.subr.bf16.mxu0 0
      %2405 = vmatpush1.bf16.msra.mxu0 0
      %2406 = vmatprep.subr.bf16.mxu0 0
      %2407 = vmatpush1.bf16.msra.mxu0 0
      %2408 = vmatprep.subr.bf16.mxu0 0
      %2409 = vmatpush1.bf16.msra.mxu0 0
      %2410 = vmatprep.mubr.bf16.mxu0 0
      %2411 = vmatmul.mubr.bf16.gmra.mrb[0].mxu0 %v2376
      %v2412 = vpop.f32.mrb[0].mxu0
      %v2413 = vadd.f32 0.0, %v2412
      %v2414 = vpop.f32.mrb[0].mxu0
      %v2415 = vpop.f32.mrb[0].mxu0
      %v2416 = vpop.f32.mrb[0].mxu0
      %2417 = vdwg.mxu0
      %2419 = vrot.lane.b32.xlu0 %v2197, 8
      %v2420 = vpop.permute.xlu0 %2419
      %2423 = vrot.lane.b32.xlu0 %v2305, 16
      %v2424 = vpop.permute.xlu0 %2423
      %2427 = vrot.lane.b32.xlu0 %v2413, 24
      %v2428 = vpop.permute.xlu0 %2427
      %v2430 = vsel %vm1235, %v2086, %v2420
      %v2431 = vsel %vm1687, %v2430, %v2424
      %v2432 = vsel %vm1689, %v2431, %v2428
      %v2433 = vpack.c.bf16 %v2432, %v2432
      %v2434 = vld [vmem:[%s43] sm:$0xf]
      %v2435 = vld [vmem:[%s43 + $0x4] sm:$0xf]
      %v2436 = vld [vmem:[%s43 + $0x8] sm:$0xf]
      %v2437 = vld [vmem:[%s43 + $0xc] sm:$0xf]
      %v2438 = vld [vmem:[%s45] sm:$0x1]
      %v2440 = vlaneseq
      %v2441 = vshrl.u32 %v2440, 7
      %v2442 = vsub.s32 0, %v2441
      %v2443 = vrot.slane %v2438, %v2442
      %v2449 = vunpack.c.l.b16 %v2434
      %v2450 = vunpack.c.l.b16 %v2435
      %v2451 = vunpack.c.l.b16 %v2436
      %v2452 = vunpack.c.l.b16 %v2437
      %v2453 = vpack.c.b16 %v2450, %v2449
      %v2454 = vpack.c.b16 %v2452, %v2451
      %v2458 = vsel %vm1058, %v2433, 0
      %2460 = vmatprep.subr.bf16.mxu0 0
      %2461 = vmatpush1.bf16.msra.mxu0 %v2453
      %2462 = vmatprep.subr.bf16.mxu0 0
      %2463 = vmatpush1.bf16.msra.mxu0 %v2454
      %2464 = vmatprep.subr.bf16.mxu0 0
      %2465 = vmatpush1.bf16.msra.mxu0 0
      %2466 = vmatprep.subr.bf16.mxu0 0
      %2467 = vmatpush1.bf16.msra.mxu0 0
      %2468 = vmatprep.subr.bf16.mxu0 0
      %2469 = vmatpush1.bf16.msra.mxu0 0
      %2470 = vmatprep.subr.bf16.mxu0 0
      %2471 = vmatpush1.bf16.msra.mxu0 0
      %2472 = vmatprep.subr.bf16.mxu0 0
      %2473 = vmatpush1.bf16.msra.mxu0 0
      %2474 = vmatprep.subr.bf16.mxu0 0
      %2475 = vmatpush1.bf16.msra.mxu0 0
      %2476 = vmatprep.subr.bf16.mxu0 0
      %2477 = vmatpush1.bf16.msra.mxu0 0
      %2478 = vmatprep.subr.bf16.mxu0 0
      %2479 = vmatpush1.bf16.msra.mxu0 0
      %2480 = vmatprep.subr.bf16.mxu0 0
      %2481 = vmatpush1.bf16.msra.mxu0 0
      %2482 = vmatprep.subr.bf16.mxu0 0
      %2483 = vmatpush1.bf16.msra.mxu0 0
      %2484 = vmatprep.subr.bf16.mxu0 0
      %2485 = vmatpush1.bf16.msra.mxu0 0
      %2486 = vmatprep.subr.bf16.mxu0 0
      %2487 = vmatpush1.bf16.msra.mxu0 0
      %2488 = vmatprep.subr.bf16.mxu0 0
      %2489 = vmatpush1.bf16.msra.mxu0 0
      %2490 = vmatprep.subr.bf16.mxu0 0
      %2491 = vmatpush1.bf16.msra.mxu0 0
      %2492 = vmatprep.mubr.bf16.mxu0 0
      %2493 = vmatmul.mubr.bf16.gmra.mrb[0].mxu0 %v2458
      %v2494 = vpop.f32.mrb[0].mxu0
      %v2495 = vadd.f32 %v2443, %v2494
      %v2496 = vpop.f32.mrb[0].mxu0
      %v2497 = vpop.f32.mrb[0].mxu0
      %v2498 = vpop.f32.mrb[0].mxu0
      %2499 = vdwg.mxu0
      %v2500 = vadd.f32 %v1774, %v2495
      %v2501 = vld [vmem:[%s47] sm:$0x1]
      %v2503 = vlaneseq
      %v2504 = vshrl.u32 %v2503, 7
      %v2505 = vsub.s32 0, %v2504
      %v2506 = vrot.slane %v2501, %v2505
      %v2508 = vmul.f32 %v2500, %v2506
      %v2509 = vld [vmem:[%s49] sm:$0x1]
      %v2511 = vlaneseq
      %v2512 = vshrl.u32 %v2511, 7
      %v2513 = vsub.s32 0, %v2512
      %v2514 = vrot.slane %v2509, %v2513
      %v2516 = vadd.f32 %v2508, %v2514
      %v2517 = vpack.c.bf16 %v2516, %v2516
      %v2518 = vld [vmem:[%s51] sm:$0xf]
      %v2519 = vld [vmem:[%s51 + $0x4] sm:$0xf]
      %v2520 = vld [vmem:[%s51 + $0x8] sm:$0xf]
      %v2521 = vld [vmem:[%s51 + $0xc] sm:$0xf]
      %v2522 = vld [vmem:[%s53] sm:$0x1]
      %v2524 = vlaneseq
      %v2525 = vshrl.u32 %v2524, 7
      %v2526 = vsub.s32 0, %v2525
      %v2527 = vrot.slane %v2522, %v2526
      %v2533 = vunpack.c.l.b16 %v2518
      %v2534 = vunpack.c.l.b16 %v2519
      %v2535 = vunpack.c.l.b16 %v2520
      %v2536 = vunpack.c.l.b16 %v2521
      %v2537 = vpack.c.b16 %v2534, %v2533
      %v2538 = vpack.c.b16 %v2536, %v2535
      %v2542 = vsel %vm1058, %v2517, 0
      %2544 = vmatprep.subr.bf16.mxu0 0
      %2545 = vmatpush1.bf16.msra.mxu0 %v2537
      %2546 = vmatprep.subr.bf16.mxu0 0
      %2547 = vmatpush1.bf16.msra.mxu0 %v2538
      %2548 = vmatprep.subr.bf16.mxu0 0
      %2549 = vmatpush1.bf16.msra.mxu0 0
      %2550 = vmatprep.subr.bf16.mxu0 0
      %2551 = vmatpush1.bf16.msra.mxu0 0
      %2552 = vmatprep.subr.bf16.mxu0 0
      %2553 = vmatpush1.bf16.msra.mxu0 0
      %2554 = vmatprep.subr.bf16.mxu0 0
      %2555 = vmatpush1.bf16.msra.mxu0 0
      %2556 = vmatprep.subr.bf16.mxu0 0
      %2557 = vmatpush1.bf16.msra.mxu0 0
      %2558 = vmatprep.subr.bf16.mxu0 0
      %2559 = vmatpush1.bf16.msra.mxu0 0
      %2560 = vmatprep.subr.bf16.mxu0 0
      %2561 = vmatpush1.bf16.msra.mxu0 0
      %2562 = vmatprep.subr.bf16.mxu0 0
      %2563 = vmatpush1.bf16.msra.mxu0 0
      %2564 = vmatprep.subr.bf16.mxu0 0
      %2565 = vmatpush1.bf16.msra.mxu0 0
      %2566 = vmatprep.subr.bf16.mxu0 0
      %2567 = vmatpush1.bf16.msra.mxu0 0
      %2568 = vmatprep.subr.bf16.mxu0 0
      %2569 = vmatpush1.bf16.msra.mxu0 0
      %2570 = vmatprep.subr.bf16.mxu0 0
      %2571 = vmatpush1.bf16.msra.mxu0 0
      %2572 = vmatprep.subr.bf16.mxu0 0
      %2573 = vmatpush1.bf16.msra.mxu0 0
      %2574 = vmatprep.subr.bf16.mxu0 0
      %2575 = vmatpush1.bf16.msra.mxu0 0
      %2576 = vmatprep.mubr.bf16.mxu0 0
      %2577 = vmatmul.mubr.bf16.gmra.mrb[0].mxu0 %v2542
      %v2578 = vpop.f32.mrb[0].mxu0
      %v2579 = vadd.f32 %v2527, %v2578
      %v2580 = vpop.f32.mrb[0].mxu0
      %v2581 = vpop.f32.mrb[0].mxu0
      %v2582 = vpop.f32.mrb[0].mxu0
      %2583 = vdwg.mxu0
      %v2584 = vmax.f32 %v2579, 0.0
      %v2585 = vpack.c.bf16 %v2584, %v2584
      %v2586 = vld [vmem:[%s55] sm:$0xf]
      %v2587 = vld [vmem:[%s55 + $0x4] sm:$0xf]
      %v2588 = vld [vmem:[%s55 + $0x8] sm:$0xf]
      %v2589 = vld [vmem:[%s55 + $0xc] sm:$0xf]
      %v2590 = vld [vmem:[%s55 + $0x10] sm:$0xf]
      %v2591 = vld [vmem:[%s55 + $0x14] sm:$0xf]
      %v2592 = vld [vmem:[%s55 + $0x18] sm:$0xf]
      %v2593 = vld [vmem:[%s55 + $0x1c] sm:$0xf]
      %v2594 = vld [vmem:[%s57] sm:$0x1]
      %v2596 = vlaneseq
      %v2597 = vshrl.u32 %v2596, 7
      %v2598 = vsub.s32 0, %v2597
      %v2599 = vrot.slane %v2594, %v2598
      %v2609 = vunpack.c.l.b16 %v2586
      %v2610 = vunpack.c.l.b16 %v2587
      %v2611 = vunpack.c.l.b16 %v2588
      %v2612 = vunpack.c.l.b16 %v2589
      %v2613 = vunpack.c.l.b16 %v2590
      %v2614 = vunpack.c.l.b16 %v2591
      %v2615 = vunpack.c.l.b16 %v2592
      %v2616 = vunpack.c.l.b16 %v2593
      %v2617 = vpack.c.b16 %v2610, %v2609
      %v2618 = vpack.c.b16 %v2612, %v2611
      %v2619 = vpack.c.b16 %v2614, %v2613
      %v2620 = vpack.c.b16 %v2616, %v2615
      %vm2625 = vcmask 523264
      %v2627 = vsel %vm2625, %v2585, 0
      %2629 = vmatprep.subr.bf16.mxu0 0
      %2630 = vmatpush1.bf16.msra.mxu0 %v2617
      %2631 = vmatprep.subr.bf16.mxu0 0
      %2632 = vmatpush1.bf16.msra.mxu0 %v2618
      %2633 = vmatprep.subr.bf16.mxu0 0
      %2634 = vmatpush1.bf16.msra.mxu0 %v2619
      %2635 = vmatprep.subr.bf16.mxu0 0
      %2636 = vmatpush1.bf16.msra.mxu0 %v2620
      %2637 = vmatprep.subr.bf16.mxu0 0
      %2638 = vmatpush1.bf16.msra.mxu0 0
      %2639 = vmatprep.subr.bf16.mxu0 0
      %2640 = vmatpush1.bf16.msra.mxu0 0
      %2641 = vmatprep.subr.bf16.mxu0 0
      %2642 = vmatpush1.bf16.msra.mxu0 0
      %2643 = vmatprep.subr.bf16.mxu0 0
      %2644 = vmatpush1.bf16.msra.mxu0 0
      %2645 = vmatprep.subr.bf16.mxu0 0
      %2646 = vmatpush1.bf16.msra.mxu0 0
      %2647 = vmatprep.subr.bf16.mxu0 0
      %2648 = vmatpush1.bf16.msra.mxu0 0
      %2649 = vmatprep.subr.bf16.mxu0 0
      %2650 = vmatpush1.bf16.msra.mxu0 0
      %2651 = vmatprep.subr.bf16.mxu0 0
      %2652 = vmatpush1.bf16.msra.mxu0 0
      %2653 = vmatprep.subr.bf16.mxu0 0
      %2654 = vmatpush1.bf16.msra.mxu0 0
      %2655 = vmatprep.subr.bf16.mxu0 0
      %2656 = vmatpush1.bf16.msra.mxu0 0
      %2657 = vmatprep.subr.bf16.mxu0 0
      %2658 = vmatpush1.bf16.msra.mxu0 0
      %2659 = vmatprep.subr.bf16.mxu0 0
      %2660 = vmatpush1.bf16.msra.mxu0 0
      %2661 = vmatprep.mubr.bf16.mxu0 0
      %2662 = vmatmul.mubr.bf16.gmra.mrb[0].mxu0 %v2627
      %v2663 = vpop.f32.mrb[0].mxu0
      %v2664 = vadd.f32 %v2599, %v2663
      %v2665 = vpop.f32.mrb[0].mxu0
      %v2666 = vpop.f32.mrb[0].mxu0
      %v2667 = vpop.f32.mrb[0].mxu0
      %2668 = vdwg.mxu0
      %v2669 = vadd.f32 %v2516, %v2664
      %v2670 = vld [vmem:[%s59] sm:$0x1]
      %v2672 = vlaneseq
      %v2673 = vshrl.u32 %v2672, 7
      %v2674 = vsub.s32 0, %v2673
      %v2675 = vrot.slane %v2670, %v2674
      %v2677 = vmul.f32 %v2669, %v2675
      %v2678 = vld [vmem:[%s61] sm:$0x1]
      %v2680 = vlaneseq
      %v2681 = vshrl.u32 %v2680, 7
      %v2682 = vsub.s32 0, %v2681
      %v2683 = vrot.slane %v2678, %v2682
      %v2685 = vadd.f32 %v2677, %v2683
      %2686 = vst.msk [vmem:[%s1024] sm:$0xff] %vm1058, %v2685
      %p2687 = scmp.lt.s32.totalorder %s74, 1
      %s2688 = scalar_select %p2687, %s74, 1
      %s2689 = smul.addr %s2688, 8
      %s2690 = scalar_lea.vmem %s63, %s2689
      // Predicated region
      $region145: #{transformer_forward.8} parent=143 // pred_check
        %p2691 = pneg %p768
      $region146: #{transformer_forward.8} parent=143 // pred_check_branch
        %2693 = sbr.rel (%p2691) target = $region148
      $region147: #{transformer_forward.8} parent=143 // pred_region
        _
      $region148: #{transformer_forward.8} parent=143 // pred_fallthru
        _
    $region144: #{transformer_forward.8} parent=5 // pred_fallthru
      _
    %p2694 = scmp.le.s32.totalorder 2, %s69
    // Predicated region
    $region149: #{transformer_forward.8} parent=5 // pred_check
      %p2695 = pneg %p2694
    $region150: #{transformer_forward.8} parent=5 // pred_check_branch
      %2697 = sbr.rel (%p2695) target = $region152
    $region151: #{transformer_forward.8} parent=5 // pred_region
      %s2698 = ssub.s32 %s69, 2
      // Predicated region
      $region153: #{transformer_forward.8} parent=151 // pred_check
        %p2699 = pneg %p774
      $region154: #{transformer_forward.8} parent=151 // pred_check_branch
        %2701 = sbr.rel (%p2699) target = $region156
      $region155: #{transformer_forward.8} parent=151 // pred_region
        %p2702 = scmp.lt.s32.totalorder %s75, 1
        %s2703 = scalar_select %p2702, %s75, 1
        %s2704 = smul.addr %s2703, 8
        %s2705 = scalar_lea.vmem %s63, %s2704
      $region156: #{transformer_forward.8} parent=151 // pred_fallthru
        _
    $region152: #{transformer_forward.8} parent=5 // pred_fallthru
      _
  $region6: #{transformer_forward.8} parent=0 // loop_footer
    %s73 = sadd.s32 1, %s69
  $region7: #{transformer_forward.8} parent=0 // loop_footer_branch
    %68 = sbr.rel target = $region3
  $region8: #{transformer_forward.8} parent=0 // loop_exit
    _

// kernel: transformer_forward.9
$region0: #{transformer_forward.9}
  #allocation0 [shape = 'u32[]', space=smem, size = 0x4, offset = 0x4, fixed_abs, tag = 'smem constant byte address 0x4 - core index']
  #allocation1 [shape = 'u32[144,128]{1,0:T(1,128)}', space=vmem, size = 0x12000, scoped, tag = 'internal scratch']
  %s0 = inlined_call_operand.smem [shape: u32[32], index: -1, kind: input, shape index: {}]
  %s1 = sld [smem:[%s0]]
  %s2 = scalar_lea.smem %s0, 1
  %s3 = sld [smem:[%s2]]
  %s4 = scalar_lea.smem %s0, 2
  %s5 = sld [smem:[%s4]]
  %s6 = scalar_lea.smem %s0, 3
  %s7 = sld [smem:[%s6]]
  %s8 = scalar_lea.smem %s0, 4
  %s9 = sld [smem:[%s8]]
  %s10 = scalar_lea.smem %s0, 5
  %s11 = sld [smem:[%s10]]
  %s12 = scalar_lea.smem %s0, 6
  %s13 = sld [smem:[%s12]]
  %s14 = scalar_lea.smem %s0, 7
  %s15 = sld [smem:[%s14]]
  %s16 = scalar_lea.smem %s0, 8
  %s17 = sld [smem:[%s16]]
  %s18 = scalar_lea.smem %s0, 9
  %s19 = sld [smem:[%s18]]
  %s20 = scalar_lea.smem %s0, 10
  %s21 = sld [smem:[%s20]]
  %s22 = scalar_lea.smem %s0, 11
  %s23 = sld [smem:[%s22]]
  %s24 = scalar_lea.smem %s0, 12
  %s25 = sld [smem:[%s24]]
  %s26 = scalar_lea.smem %s0, 13
  %s27 = sld [smem:[%s26]]
  %s28 = scalar_lea.smem %s0, 14
  %s29 = sld [smem:[%s28]]
  %s30 = scalar_lea.smem %s0, 15
  %s31 = sld [smem:[%s30]]
  %s32 = scalar_lea.smem %s0, 16
  %s33 = sld [smem:[%s32]]
  %s34 = scalar_lea.smem %s0, 17
  %s35 = sld [smem:[%s34]]
  %s36 = scalar_lea.smem %s0, 18
  %s37 = sld [smem:[%s36]]
  %s38 = scalar_lea.smem %s0, 19
  %s39 = sld [smem:[%s38]]
  %s40 = scalar_lea.smem %s0, 20
  %s41 = sld [smem:[%s40]]
  %s42 = scalar_lea.smem %s0, 21
  %s43 = sld [smem:[%s42]]
  %s44 = scalar_lea.smem %s0, 22
  %s45 = sld [smem:[%s44]]
  %s46 = scalar_lea.smem %s0, 23
  %s47 = sld [smem:[%s46]]
  %s48 = scalar_lea.smem %s0, 24
  %s49 = sld [smem:[%s48]]
  %s50 = scalar_lea.smem %s0, 25
  %s51 = sld [smem:[%s50]]
  %s52 = scalar_lea.smem %s0, 26
  %s53 = sld [smem:[%s52]]
  %s54 = scalar_lea.smem %s0, 27
  %s55 = sld [smem:[%s54]]
  %s56 = scalar_lea.smem %s0, 28
  %s57 = sld [smem:[%s56]]
  %s58 = scalar_lea.smem %s0, 29
  %s59 = sld [smem:[%s58]]
  %s60 = scalar_lea.smem %s0, 30
  %s61 = sld [smem:[%s60]]
  %s62 = scalar_lea.smem %s0, 31
  %s63 = sld [smem:[%s62]]
  %s64 = sld [smem:[#allocation0]]
  $region205: #{transformer_forward.9} parent=0
    _
  %s66 = ssub.s32 1, %s64
  %s67 = scalar_select 0, %s66, %s64
  $region1: #{transformer_forward.9} parent=0
    #allocation2 [shape = 'u8[512]{0}', space=vmem, size = 0x400, scoped, tag = 'input window, operand 13, single buffered']
    #allocation3 [shape = 's32[2]{0}', space=sflag, size = 0x8, scoped, tag = 'scoped memory for transformer_forward.9']
    #allocation4 [shape = 's32[2]{0}', space=sflag, size = 0x8, scoped, tag = 'scoped memory for transformer_forward.9']
    #allocation5 [shape = 'u8[512]{0}', space=vmem, size = 0x400, scoped, tag = 'input window, operand 14, single buffered']
    #allocation6 [shape = 's32[1]{0}', space=sflag, size = 0x4, scoped, tag = 'scoped memory for transformer_forward.9']
    #allocation7 [shape = 'u8[512]{0}', space=vmem, size = 0x400, scoped, tag = 'input window, operand 18, single buffered']
    #allocation8 [shape = 'u8[512]{0}', space=vmem, size = 0x400, scoped, tag = 'input window, operand 19, single buffered']
    #allocation9 [shape = 's32[1]{0}', space=sflag, size = 0x4, scoped, tag = 'scoped memory for transformer_forward.9']
    #allocation10 [shape = 'u8[512]{0}', space=vmem, size = 0x400, scoped, tag = 'input window, operand 20, single buffered']
    #allocation11 [shape = 'u8[512]{0}', space=vmem, size = 0x400, scoped, tag = 'input window, operand 22, single buffered']
    #allocation12 [shape = 's32[1]{0}', space=sflag, size = 0x4, scoped, tag = 'scoped memory for transformer_forward.9']
    #allocation13 [shape = 'u8[512]{0}', space=vmem, size = 0x400, scoped, tag = 'input window, operand 23, single buffered']
    #allocation14 [shape = 'u8[512]{0}', space=vmem, size = 0x400, scoped, tag = 'input window, operand 24, single buffered']
    #allocation15 [shape = 's32[1]{0}', space=sflag, size = 0x4, scoped, tag = 'scoped memory for transformer_forward.9']
    #allocation16 [shape = 'u8[512]{0}', space=vmem, size = 0x400, scoped, tag = 'input window, operand 26, single buffered']
    #allocation17 [shape = 'u8[512]{0}', space=vmem, size = 0x400, scoped, tag = 'input window, operand 28, single buffered']
    #allocation18 [shape = 's32[1]{0}', space=sflag, size = 0x4, scoped, tag = 'scoped memory for transformer_forward.9']
    #allocation19 [shape = 'u8[512]{0}', space=vmem, size = 0x400, scoped, tag = 'input window, operand 29, single buffered']
    #allocation20 [shape = 'u8[512]{0}', space=vmem, size = 0x400, scoped, tag = 'input window, operand 30, single buffered']
    #allocation21 [shape = 's32[1]{0}', space=sflag, size = 0x4, scoped, tag = 'scoped memory for transformer_forward.9']
    #allocation22 [shape = 'u8[8192]{0}', space=vmem, size = 0x2000, scoped, tag = 'output window, operand 0']
    %68 = vsyncpa [#allocation3], 0
    %69 = vsyncpa [#allocation6], 0
    %70 = vsyncpa [#allocation9], 0
    %71 = vsyncpa [#allocation12], 0
    %72 = vsyncpa [#allocation15], 0
    %73 = vsyncpa [#allocation18], 0
    %74 = vsyncpa [#allocation21], 0
    %75 = vsyncpa [#allocation4], 0
    %s76 = scalar_lea.sflag [#allocation4], 1
    %77 = vsyncpa %s76, 0
    loop: start=0, step=1, limit=4
    $region2: #{transformer_forward.9} parent=1 // loop_pre_header
      _
    $region3: #{transformer_forward.9} parent=1 // loop_header
      %s79 = sphi 0, %s83
      %p80 = scmp.ge.s32.totalorder %s79, 4
      %s89 = sphi 0, %s91
      %s92 = sphi 0, %s89
      %s93 = sphi 0, %s92
      %s109 = sphi 0, %s93
      %s115 = sphi 0, %s117
      %s118 = sphi 0, %s115
      %s119 = sphi 0, %s118
      %s135 = sphi 0, %s119
      %s141 = sphi 0, %s143
      %s144 = sphi 0, %s141
      %s145 = sphi 0, %s144
      %s161 = sphi 0, %s145
      %s167 = sphi 0, %s169
      %s170 = sphi 0, %s167
      %s171 = sphi 0, %s170
      %s187 = sphi 0, %s171
      %s193 = sphi 0, %s195
      %s196 = sphi 0, %s193
      %s197 = sphi 0, %s196
      %s213 = sphi 0, %s197
      %s217 = sphi 0, %s217
      %s219 = sphi 0, %s217
      %s220 = sphi 0, %s219
      %s234 = sphi 0, %s220
      %s238 = sphi 0, %s238
      %s240 = sphi 0, %s238
      %s241 = sphi 0, %s240
      %s255 = sphi 0, %s241
      %s259 = sphi 0, %s259
      %s261 = sphi 0, %s259
      %s262 = sphi 0, %s261
      %s276 = sphi 0, %s262
      %s280 = sphi 0, %s280
      %s282 = sphi 0, %s280
      %s283 = sphi 0, %s282
      %s297 = sphi 0, %s283
      %s301 = sphi 0, %s301
      %s303 = sphi 0, %s301
      %s304 = sphi 0, %s303
      %s318 = sphi 0, %s304
      %s322 = sphi 0, %s322
      %s324 = sphi 0, %s322
      %s325 = sphi 0, %s324
      %s339 = sphi 0, %s325
      %s343 = sphi 0, %s343
      %s345 = sphi 0, %s343
      %s346 = sphi 0, %s345
      %s360 = sphi 0, %s346
      %s364 = sphi 0, %s364
      %s366 = sphi 0, %s364
      %s367 = sphi 0, %s366
      %s381 = sphi 0, %s367
      %s385 = sphi 0, %s385
      %s387 = sphi 0, %s385
      %s388 = sphi 0, %s387
      %s402 = sphi 0, %s388
      %s406 = sphi 0, %s406
      %s408 = sphi 0, %s406
      %s409 = sphi 0, %s408
      %s423 = sphi 0, %s409
      %s427 = sphi 0, %s427
      %s429 = sphi 0, %s427
      %s430 = sphi 0, %s429
      %s444 = sphi 0, %s430
      %s448 = sphi 0, %s448
      %s450 = sphi 0, %s448
      %s451 = sphi 0, %s450
      %s465 = sphi 0, %s451
      %s469 = sphi 0, %s469
      %s471 = sphi 0, %s469
      %s472 = sphi 0, %s471
      %s486 = sphi 0, %s472
      %s490 = sphi 0, %s490
      %s492 = sphi 0, %s490
      %s493 = sphi 0, %s492
      %s507 = sphi 0, %s493
      %s511 = sphi 0, %s511
      %s513 = sphi 0, %s511
      %s514 = sphi 0, %s513
      %s528 = sphi 0, %s514
      %s532 = sphi 0, %s532
      %s534 = sphi 0, %s532
      %s535 = sphi 0, %s534
      %s549 = sphi 0, %s535
      %s553 = sphi 0, %s553
      %s555 = sphi 0, %s553
      %s556 = sphi 0, %s555
      %s570 = sphi 0, %s556
      %s574 = sphi 0, %s574
      %s576 = sphi 0, %s574
      %s577 = sphi 0, %s576
      %s591 = sphi 0, %s577
      %s595 = sphi 0, %s595
      %s597 = sphi 0, %s595
      %s598 = sphi 0, %s597
      %s612 = sphi 0, %s598
      %s616 = sphi 0, %s616
      %s618 = sphi 0, %s616
      %s619 = sphi 0, %s618
      %s633 = sphi 0, %s619
      %s637 = sphi 0, %s637
      %s639 = sphi 0, %s637
      %s640 = sphi 0, %s639
      %s654 = sphi 0, %s640
      %s658 = sphi 0, %s658
      %s660 = sphi 0, %s658
      %s661 = sphi 0, %s660
      %s675 = sphi 0, %s661
      %s679 = sphi 0, %s679
      %s681 = sphi 0, %s679
      %s682 = sphi 0, %s681
      %s696 = sphi 0, %s682
      %s700 = sphi 0, %s700
      %s702 = sphi 0, %s700
      %s703 = sphi 0, %s702
      %s717 = sphi 0, %s703
      %s721 = sphi 0, %s721
      %s723 = sphi 0, %s721
      %s724 = sphi 0, %s723
      %s738 = sphi 0, %s724
      %s742 = sphi 0, %s742
      %s744 = sphi 0, %s742
      %s745 = sphi 0, %s744
      %s759 = sphi 0, %s745
      %s765 = sphi 0, %s767
      %s768 = sphi 0, %s765
      %s769 = sphi 0, %s768
      %s785 = sphi 0, %s769
    $region4: #{transformer_forward.9} parent=1 // loop_header_branch
      %82 = sbr.rel (%p80) target = $region8
    $region5: #{transformer_forward.9} parent=1 // loop_body
      %s84 = ssub.s32 %s79, 1
      %s85 = ssub.s32 %s79, 2
      %s86 = sadd.s32 %s79, 1
      %s87 = ssub.s32 %s79, %s86
      %p88 = scmp.eq.s32.totalorder %s87, 0
      %s90 = sadd.s32 %s89, 1
      %s91 = scalar_select %p88, %s89, %s90
      %p94 = pneg %p88
      %p95 = scmp.eq.s32.totalorder %s79, 1
      %p96 = por %p94, %p95
      %p97 = scmp.ne.s32.totalorder %s89, %s92
      %p98 = scmp.eq.s32.totalorder %s79, 0
      %p99 = por %p97, %p98
      %p100 = scmp.ne.s32.totalorder %s89, %s92
      %p101 = scmp.eq.s32.totalorder %s84, 1
      %p102 = por %p100, %p101
      %p103 = scmp.ne.s32.totalorder %s92, %s93
      %p104 = scmp.eq.s32.totalorder %s84, 0
      %p105 = por %p103, %p104
      %p106 = scmp.ne.s32.totalorder %s92, %s93
      %p107 = scmp.eq.s32.totalorder %s85, 1
      %p108 = por %p106, %p107
      %p110 = scmp.ne.s32.totalorder %s93, %s109
      %p111 = scmp.eq.s32.totalorder %s85, 0
      %p112 = por %p110, %p111
      %s113 = ssub.s32 %s79, %s86
      %p114 = scmp.eq.s32.totalorder %s113, 0
      %s116 = sadd.s32 %s115, 1
      %s117 = scalar_select %p114, %s115, %s116
      %p120 = pneg %p114
      %p121 = scmp.eq.s32.totalorder %s79, 1
      %p122 = por %p120, %p121
      %p123 = scmp.ne.s32.totalorder %s115, %s118
      %p124 = scmp.eq.s32.totalorder %s79, 0
      %p125 = por %p123, %p124
      %p126 = scmp.ne.s32.totalorder %s115, %s118
      %p127 = scmp.eq.s32.totalorder %s84, 1
      %p128 = por %p126, %p127
      %p129 = scmp.ne.s32.totalorder %s118, %s119
      %p130 = scmp.eq.s32.totalorder %s84, 0
      %p131 = por %p129, %p130
      %p132 = scmp.ne.s32.totalorder %s118, %s119
      %p133 = scmp.eq.s32.totalorder %s85, 1
      %p134 = por %p132, %p133
      %p136 = scmp.ne.s32.totalorder %s119, %s135
      %p137 = scmp.eq.s32.totalorder %s85, 0
      %p138 = por %p136, %p137
      %s139 = ssub.s32 %s79, %s86
      %p140 = scmp.eq.s32.totalorder %s139, 0
      %s142 = sadd.s32 %s141, 1
      %s143 = scalar_select %p140, %s141, %s142
      %p146 = pneg %p140
      %p147 = scmp.eq.s32.totalorder %s79, 1
      %p148 = por %p146, %p147
      %p149 = scmp.ne.s32.totalorder %s141, %s144
      %p150 = scmp.eq.s32.totalorder %s79, 0
      %p151 = por %p149, %p150
      %p152 = scmp.ne.s32.totalorder %s141, %s144
      %p153 = scmp.eq.s32.totalorder %s84, 1
      %p154 = por %p152, %p153
      %p155 = scmp.ne.s32.totalorder %s144, %s145
      %p156 = scmp.eq.s32.totalorder %s84, 0
      %p157 = por %p155, %p156
      %p158 = scmp.ne.s32.totalorder %s144, %s145
      %p159 = scmp.eq.s32.totalorder %s85, 1
      %p160 = por %p158, %p159
      %p162 = scmp.ne.s32.totalorder %s145, %s161
      %p163 = scmp.eq.s32.totalorder %s85, 0
      %p164 = por %p162, %p163
      %s165 = ssub.s32 %s79, %s86
      %p166 = scmp.eq.s32.totalorder %s165, 0
      %s168 = sadd.s32 %s167, 1
      %s169 = scalar_select %p166, %s167, %s168
      %p172 = pneg %p166
      %p173 = scmp.eq.s32.totalorder %s79, 1
      %p174 = por %p172, %p173
      %p175 = scmp.ne.s32.totalorder %s167, %s170
      %p176 = scmp.eq.s32.totalorder %s79, 0
      %p177 = por %p175, %p176
      %p178 = scmp.ne.s32.totalorder %s167, %s170
      %p179 = scmp.eq.s32.totalorder %s84, 1
      %p180 = por %p178, %p179
      %p181 = scmp.ne.s32.totalorder %s170, %s171
      %p182 = scmp.eq.s32.totalorder %s84, 0
      %p183 = por %p181, %p182
      %p184 = scmp.ne.s32.totalorder %s170, %s171
      %p185 = scmp.eq.s32.totalorder %s85, 1
      %p186 = por %p184, %p185
      %p188 = scmp.ne.s32.totalorder %s171, %s187
      %p189 = scmp.eq.s32.totalorder %s85, 0
      %p190 = por %p188, %p189
      %s191 = ssub.s32 %s79, %s86
      %p192 = scmp.eq.s32.totalorder %s191, 0
      %s194 = sadd.s32 %s193, 1
      %s195 = scalar_select %p192, %s193, %s194
      %p198 = pneg %p192
      %p199 = scmp.eq.s32.totalorder %s79, 1
      %p200 = por %p198, %p199
      %p201 = scmp.ne.s32.totalorder %s193, %s196
      %p202 = scmp.eq.s32.totalorder %s79, 0
      %p203 = por %p201, %p202
      %p204 = scmp.ne.s32.totalorder %s193, %s196
      %p205 = scmp.eq.s32.totalorder %s84, 1
      %p206 = por %p204, %p205
      %p207 = scmp.ne.s32.totalorder %s196, %s197
      %p208 = scmp.eq.s32.totalorder %s84, 0
      %p209 = por %p207, %p208
      %p210 = scmp.ne.s32.totalorder %s196, %s197
      %p211 = scmp.eq.s32.totalorder %s85, 1
      %p212 = por %p210, %p211
      %p214 = scmp.ne.s32.totalorder %s197, %s213
      %p215 = scmp.eq.s32.totalorder %s85, 0
      %p216 = por %p214, %p215
      %s218 = sadd.s32 %s217, 1
      %p221 = scmp.eq.s32.totalorder %s79, 1
      %p222 = scmp.ne.s32.totalorder %s217, %s219
      %p223 = scmp.eq.s32.totalorder %s79, 0
      %p224 = por %p222, %p223
      %p225 = scmp.ne.s32.totalorder %s217, %s219
      %p226 = scmp.eq.s32.totalorder %s84, 1
      %p227 = por %p225, %p226
      %p228 = scmp.ne.s32.totalorder %s219, %s220
      %p229 = scmp.eq.s32.totalorder %s84, 0
      %p230 = por %p228, %p229
      %p231 = scmp.ne.s32.totalorder %s219, %s220
      %p232 = scmp.eq.s32.totalorder %s85, 1
      %p233 = por %p231, %p232
      %p235 = scmp.ne.s32.totalorder %s220, %s234
      %p236 = scmp.eq.s32.totalorder %s85, 0
      %p237 = por %p235, %p236
      %s239 = sadd.s32 %s238, 1
      %p242 = scmp.eq.s32.totalorder %s79, 1
      %p243 = scmp.ne.s32.totalorder %s238, %s240
      %p244 = scmp.eq.s32.totalorder %s79, 0
      %p245 = por %p243, %p244
      %p246 = scmp.ne.s32.totalorder %s238, %s240
      %p247 = scmp.eq.s32.totalorder %s84, 1
      %p248 = por %p246, %p247
      %p249 = scmp.ne.s32.totalorder %s240, %s241
      %p250 = scmp.eq.s32.totalorder %s84, 0
      %p251 = por %p249, %p250
      %p252 = scmp.ne.s32.totalorder %s240, %s241
      %p253 = scmp.eq.s32.totalorder %s85, 1
      %p254 = por %p252, %p253
      %p256 = scmp.ne.s32.totalorder %s241, %s255
      %p257 = scmp.eq.s32.totalorder %s85, 0
      %p258 = por %p256, %p257
      %s260 = sadd.s32 %s259, 1
      %p263 = scmp.eq.s32.totalorder %s79, 1
      %p264 = scmp.ne.s32.totalorder %s259, %s261
      %p265 = scmp.eq.s32.totalorder %s79, 0
      %p266 = por %p264, %p265
      %p267 = scmp.ne.s32.totalorder %s259, %s261
      %p268 = scmp.eq.s32.totalorder %s84, 1
      %p269 = por %p267, %p268
      %p270 = scmp.ne.s32.totalorder %s261, %s262
      %p271 = scmp.eq.s32.totalorder %s84, 0
      %p272 = por %p270, %p271
      %p273 = scmp.ne.s32.totalorder %s261, %s262
      %p274 = scmp.eq.s32.totalorder %s85, 1
      %p275 = por %p273, %p274
      %p277 = scmp.ne.s32.totalorder %s262, %s276
      %p278 = scmp.eq.s32.totalorder %s85, 0
      %p279 = por %p277, %p278
      %s281 = sadd.s32 %s280, 1
      %p284 = scmp.eq.s32.totalorder %s79, 1
      %p285 = scmp.ne.s32.totalorder %s280, %s282
      %p286 = scmp.eq.s32.totalorder %s79, 0
      %p287 = por %p285, %p286
      %p288 = scmp.ne.s32.totalorder %s280, %s282
      %p289 = scmp.eq.s32.totalorder %s84, 1
      %p290 = por %p288, %p289
      %p291 = scmp.ne.s32.totalorder %s282, %s283
      %p292 = scmp.eq.s32.totalorder %s84, 0
      %p293 = por %p291, %p292
      %p294 = scmp.ne.s32.totalorder %s282, %s283
      %p295 = scmp.eq.s32.totalorder %s85, 1
      %p296 = por %p294, %p295
      %p298 = scmp.ne.s32.totalorder %s283, %s297
      %p299 = scmp.eq.s32.totalorder %s85, 0
      %p300 = por %p298, %p299
      %s302 = sadd.s32 %s301, 1
      %p305 = scmp.eq.s32.totalorder %s79, 1
      %p306 = scmp.ne.s32.totalorder %s301, %s303
      %p307 = scmp.eq.s32.totalorder %s79, 0
      %p308 = por %p306, %p307
      %p309 = scmp.ne.s32.totalorder %s301, %s303
      %p310 = scmp.eq.s32.totalorder %s84, 1
      %p311 = por %p309, %p310
      %p312 = scmp.ne.s32.totalorder %s303, %s304
      %p313 = scmp.eq.s32.totalorder %s84, 0
      %p314 = por %p312, %p313
      %p315 = scmp.ne.s32.totalorder %s303, %s304
      %p316 = scmp.eq.s32.totalorder %s85, 1
      %p317 = por %p315, %p316
      %p319 = scmp.ne.s32.totalorder %s304, %s318
      %p320 = scmp.eq.s32.totalorder %s85, 0
      %p321 = por %p319, %p320
      %s323 = sadd.s32 %s322, 1
      %p326 = scmp.eq.s32.totalorder %s79, 1
      %p327 = scmp.ne.s32.totalorder %s322, %s324
      %p328 = scmp.eq.s32.totalorder %s79, 0
      %p329 = por %p327, %p328
      %p330 = scmp.ne.s32.totalorder %s322, %s324
      %p331 = scmp.eq.s32.totalorder %s84, 1
      %p332 = por %p330, %p331
      %p333 = scmp.ne.s32.totalorder %s324, %s325
      %p334 = scmp.eq.s32.totalorder %s84, 0
      %p335 = por %p333, %p334
      %p336 = scmp.ne.s32.totalorder %s324, %s325
      %p337 = scmp.eq.s32.totalorder %s85, 1
      %p338 = por %p336, %p337
      %p340 = scmp.ne.s32.totalorder %s325, %s339
      %p341 = scmp.eq.s32.totalorder %s85, 0
      %p342 = por %p340, %p341
      %s344 = sadd.s32 %s343, 1
      %p347 = scmp.eq.s32.totalorder %s79, 1
      %p348 = scmp.ne.s32.totalorder %s343, %s345
      %p349 = scmp.eq.s32.totalorder %s79, 0
      %p350 = por %p348, %p349
      %p351 = scmp.ne.s32.totalorder %s343, %s345
      %p352 = scmp.eq.s32.totalorder %s84, 1
      %p353 = por %p351, %p352
      %p354 = scmp.ne.s32.totalorder %s345, %s346
      %p355 = scmp.eq.s32.totalorder %s84, 0
      %p356 = por %p354, %p355
      %p357 = scmp.ne.s32.totalorder %s345, %s346
      %p358 = scmp.eq.s32.totalorder %s85, 1
      %p359 = por %p357, %p358
      %p361 = scmp.ne.s32.totalorder %s346, %s360
      %p362 = scmp.eq.s32.totalorder %s85, 0
      %p363 = por %p361, %p362
      %s365 = sadd.s32 %s364, 1
      %p368 = scmp.eq.s32.totalorder %s79, 1
      %p369 = scmp.ne.s32.totalorder %s364, %s366
      %p370 = scmp.eq.s32.totalorder %s79, 0
      %p371 = por %p369, %p370
      %p372 = scmp.ne.s32.totalorder %s364, %s366
      %p373 = scmp.eq.s32.totalorder %s84, 1
      %p374 = por %p372, %p373
      %p375 = scmp.ne.s32.totalorder %s366, %s367
      %p376 = scmp.eq.s32.totalorder %s84, 0
      %p377 = por %p375, %p376
      %p378 = scmp.ne.s32.totalorder %s366, %s367
      %p379 = scmp.eq.s32.totalorder %s85, 1
      %p380 = por %p378, %p379
      %p382 = scmp.ne.s32.totalorder %s367, %s381
      %p383 = scmp.eq.s32.totalorder %s85, 0
      %p384 = por %p382, %p383
      %s386 = sadd.s32 %s385, 1
      %p389 = scmp.eq.s32.totalorder %s79, 1
      %p390 = scmp.ne.s32.totalorder %s385, %s387
      %p391 = scmp.eq.s32.totalorder %s79, 0
      %p392 = por %p390, %p391
      %p393 = scmp.ne.s32.totalorder %s385, %s387
      %p394 = scmp.eq.s32.totalorder %s84, 1
      %p395 = por %p393, %p394
      %p396 = scmp.ne.s32.totalorder %s387, %s388
      %p397 = scmp.eq.s32.totalorder %s84, 0
      %p398 = por %p396, %p397
      %p399 = scmp.ne.s32.totalorder %s387, %s388
      %p400 = scmp.eq.s32.totalorder %s85, 1
      %p401 = por %p399, %p400
      %p403 = scmp.ne.s32.totalorder %s388, %s402
      %p404 = scmp.eq.s32.totalorder %s85, 0
      %p405 = por %p403, %p404
      %s407 = sadd.s32 %s406, 1
      %p410 = scmp.eq.s32.totalorder %s79, 1
      %p411 = scmp.ne.s32.totalorder %s406, %s408
      %p412 = scmp.eq.s32.totalorder %s79, 0
      %p413 = por %p411, %p412
      %p414 = scmp.ne.s32.totalorder %s406, %s408
      %p415 = scmp.eq.s32.totalorder %s84, 1
      %p416 = por %p414, %p415
      %p417 = scmp.ne.s32.totalorder %s408, %s409
      %p418 = scmp.eq.s32.totalorder %s84, 0
      %p419 = por %p417, %p418
      %p420 = scmp.ne.s32.totalorder %s408, %s409
      %p421 = scmp.eq.s32.totalorder %s85, 1
      %p422 = por %p420, %p421
      %p424 = scmp.ne.s32.totalorder %s409, %s423
      %p425 = scmp.eq.s32.totalorder %s85, 0
      %p426 = por %p424, %p425
      %s428 = sadd.s32 %s427, 1
      %p431 = scmp.eq.s32.totalorder %s79, 1
      %p432 = scmp.ne.s32.totalorder %s427, %s429
      %p433 = scmp.eq.s32.totalorder %s79, 0
      %p434 = por %p432, %p433
      %p435 = scmp.ne.s32.totalorder %s427, %s429
      %p436 = scmp.eq.s32.totalorder %s84, 1
      %p437 = por %p435, %p436
      %p438 = scmp.ne.s32.totalorder %s429, %s430
      %p439 = scmp.eq.s32.totalorder %s84, 0
      %p440 = por %p438, %p439
      %p441 = scmp.ne.s32.totalorder %s429, %s430
      %p442 = scmp.eq.s32.totalorder %s85, 1
      %p443 = por %p441, %p442
      %p445 = scmp.ne.s32.totalorder %s430, %s444
      %p446 = scmp.eq.s32.totalorder %s85, 0
      %p447 = por %p445, %p446
      %s449 = sadd.s32 %s448, 1
      %p452 = scmp.eq.s32.totalorder %s79, 1
      %p453 = scmp.ne.s32.totalorder %s448, %s450
      %p454 = scmp.eq.s32.totalorder %s79, 0
      %p455 = por %p453, %p454
      %p456 = scmp.ne.s32.totalorder %s448, %s450
      %p457 = scmp.eq.s32.totalorder %s84, 1
      %p458 = por %p456, %p457
      %p459 = scmp.ne.s32.totalorder %s450, %s451
      %p460 = scmp.eq.s32.totalorder %s84, 0
      %p461 = por %p459, %p460
      %p462 = scmp.ne.s32.totalorder %s450, %s451
      %p463 = scmp.eq.s32.totalorder %s85, 1
      %p464 = por %p462, %p463
      %p466 = scmp.ne.s32.totalorder %s451, %s465
      %p467 = scmp.eq.s32.totalorder %s85, 0
      %p468 = por %p466, %p467
      %s470 = sadd.s32 %s469, 1
      %p473 = scmp.eq.s32.totalorder %s79, 1
      %p474 = scmp.ne.s32.totalorder %s469, %s471
      %p475 = scmp.eq.s32.totalorder %s79, 0
      %p476 = por %p474, %p475
      %p477 = scmp.ne.s32.totalorder %s469, %s471
      %p478 = scmp.eq.s32.totalorder %s84, 1
      %p479 = por %p477, %p478
      %p480 = scmp.ne.s32.totalorder %s471, %s472
      %p481 = scmp.eq.s32.totalorder %s84, 0
      %p482 = por %p480, %p481
      %p483 = scmp.ne.s32.totalorder %s471, %s472
      %p484 = scmp.eq.s32.totalorder %s85, 1
      %p485 = por %p483, %p484
      %p487 = scmp.ne.s32.totalorder %s472, %s486
      %p488 = scmp.eq.s32.totalorder %s85, 0
      %p489 = por %p487, %p488
      %s491 = sadd.s32 %s490, 1
      %p494 = scmp.eq.s32.totalorder %s79, 1
      %p495 = scmp.ne.s32.totalorder %s490, %s492
      %p496 = scmp.eq.s32.totalorder %s79, 0
      %p497 = por %p495, %p496
      %p498 = scmp.ne.s32.totalorder %s490, %s492
      %p499 = scmp.eq.s32.totalorder %s84, 1
      %p500 = por %p498, %p499
      %p501 = scmp.ne.s32.totalorder %s492, %s493
      %p502 = scmp.eq.s32.totalorder %s84, 0
      %p503 = por %p501, %p502
      %p504 = scmp.ne.s32.totalorder %s492, %s493
      %p505 = scmp.eq.s32.totalorder %s85, 1
      %p506 = por %p504, %p505
      %p508 = scmp.ne.s32.totalorder %s493, %s507
      %p509 = scmp.eq.s32.totalorder %s85, 0
      %p510 = por %p508, %p509
      %s512 = sadd.s32 %s511, 1
      %p515 = scmp.eq.s32.totalorder %s79, 1
      %p516 = scmp.ne.s32.totalorder %s511, %s513
      %p517 = scmp.eq.s32.totalorder %s79, 0
      %p518 = por %p516, %p517
      %p519 = scmp.ne.s32.totalorder %s511, %s513
      %p520 = scmp.eq.s32.totalorder %s84, 1
      %p521 = por %p519, %p520
      %p522 = scmp.ne.s32.totalorder %s513, %s514
      %p523 = scmp.eq.s32.totalorder %s84, 0
      %p524 = por %p522, %p523
      %p525 = scmp.ne.s32.totalorder %s513, %s514
      %p526 = scmp.eq.s32.totalorder %s85, 1
      %p527 = por %p525, %p526
      %p529 = scmp.ne.s32.totalorder %s514, %s528
      %p530 = scmp.eq.s32.totalorder %s85, 0
      %p531 = por %p529, %p530
      %s533 = sadd.s32 %s532, 1
      %p536 = scmp.eq.s32.totalorder %s79, 1
      %p537 = scmp.ne.s32.totalorder %s532, %s534
      %p538 = scmp.eq.s32.totalorder %s79, 0
      %p539 = por %p537, %p538
      %p540 = scmp.ne.s32.totalorder %s532, %s534
      %p541 = scmp.eq.s32.totalorder %s84, 1
      %p542 = por %p540, %p541
      %p543 = scmp.ne.s32.totalorder %s534, %s535
      %p544 = scmp.eq.s32.totalorder %s84, 0
      %p545 = por %p543, %p544
      %p546 = scmp.ne.s32.totalorder %s534, %s535
      %p547 = scmp.eq.s32.totalorder %s85, 1
      %p548 = por %p546, %p547
      %p550 = scmp.ne.s32.totalorder %s535, %s549
      %p551 = scmp.eq.s32.totalorder %s85, 0
      %p552 = por %p550, %p551
      %s554 = sadd.s32 %s553, 1
      %p557 = scmp.eq.s32.totalorder %s79, 1
      %p558 = scmp.ne.s32.totalorder %s553, %s555
      %p559 = scmp.eq.s32.totalorder %s79, 0
      %p560 = por %p558, %p559
      %p561 = scmp.ne.s32.totalorder %s553, %s555
      %p562 = scmp.eq.s32.totalorder %s84, 1
      %p563 = por %p561, %p562
      %p564 = scmp.ne.s32.totalorder %s555, %s556
      %p565 = scmp.eq.s32.totalorder %s84, 0
      %p566 = por %p564, %p565
      %p567 = scmp.ne.s32.totalorder %s555, %s556
      %p568 = scmp.eq.s32.totalorder %s85, 1
      %p569 = por %p567, %p568
      %p571 = scmp.ne.s32.totalorder %s556, %s570
      %p572 = scmp.eq.s32.totalorder %s85, 0
      %p573 = por %p571, %p572
      %s575 = sadd.s32 %s574, 1
      %p578 = scmp.eq.s32.totalorder %s79, 1
      %p579 = scmp.ne.s32.totalorder %s574, %s576
      %p580 = scmp.eq.s32.totalorder %s79, 0
      %p581 = por %p579, %p580
      %p582 = scmp.ne.s32.totalorder %s574, %s576
      %p583 = scmp.eq.s32.totalorder %s84, 1
      %p584 = por %p582, %p583
      %p585 = scmp.ne.s32.totalorder %s576, %s577
      %p586 = scmp.eq.s32.totalorder %s84, 0
      %p587 = por %p585, %p586
      %p588 = scmp.ne.s32.totalorder %s576, %s577
      %p589 = scmp.eq.s32.totalorder %s85, 1
      %p590 = por %p588, %p589
      %p592 = scmp.ne.s32.totalorder %s577, %s591
      %p593 = scmp.eq.s32.totalorder %s85, 0
      %p594 = por %p592, %p593
      %s596 = sadd.s32 %s595, 1
      %p599 = scmp.eq.s32.totalorder %s79, 1
      %p600 = scmp.ne.s32.totalorder %s595, %s597
      %p601 = scmp.eq.s32.totalorder %s79, 0
      %p602 = por %p600, %p601
      %p603 = scmp.ne.s32.totalorder %s595, %s597
      %p604 = scmp.eq.s32.totalorder %s84, 1
      %p605 = por %p603, %p604
      %p606 = scmp.ne.s32.totalorder %s597, %s598
      %p607 = scmp.eq.s32.totalorder %s84, 0
      %p608 = por %p606, %p607
      %p609 = scmp.ne.s32.totalorder %s597, %s598
      %p610 = scmp.eq.s32.totalorder %s85, 1
      %p611 = por %p609, %p610
      %p613 = scmp.ne.s32.totalorder %s598, %s612
      %p614 = scmp.eq.s32.totalorder %s85, 0
      %p615 = por %p613, %p614
      %s617 = sadd.s32 %s616, 1
      %p620 = scmp.eq.s32.totalorder %s79, 1
      %p621 = scmp.ne.s32.totalorder %s616, %s618
      %p622 = scmp.eq.s32.totalorder %s79, 0
      %p623 = por %p621, %p622
      %p624 = scmp.ne.s32.totalorder %s616, %s618
      %p625 = scmp.eq.s32.totalorder %s84, 1
      %p626 = por %p624, %p625
      %p627 = scmp.ne.s32.totalorder %s618, %s619
      %p628 = scmp.eq.s32.totalorder %s84, 0
      %p629 = por %p627, %p628
      %p630 = scmp.ne.s32.totalorder %s618, %s619
      %p631 = scmp.eq.s32.totalorder %s85, 1
      %p632 = por %p630, %p631
      %p634 = scmp.ne.s32.totalorder %s619, %s633
      %p635 = scmp.eq.s32.totalorder %s85, 0
      %p636 = por %p634, %p635
      %s638 = sadd.s32 %s637, 1
      %p641 = scmp.eq.s32.totalorder %s79, 1
      %p642 = scmp.ne.s32.totalorder %s637, %s639
      %p643 = scmp.eq.s32.totalorder %s79, 0
      %p644 = por %p642, %p643
      %p645 = scmp.ne.s32.totalorder %s637, %s639
      %p646 = scmp.eq.s32.totalorder %s84, 1
      %p647 = por %p645, %p646
      %p648 = scmp.ne.s32.totalorder %s639, %s640
      %p649 = scmp.eq.s32.totalorder %s84, 0
      %p650 = por %p648, %p649
      %p651 = scmp.ne.s32.totalorder %s639, %s640
      %p652 = scmp.eq.s32.totalorder %s85, 1
      %p653 = por %p651, %p652
      %p655 = scmp.ne.s32.totalorder %s640, %s654
      %p656 = scmp.eq.s32.totalorder %s85, 0
      %p657 = por %p655, %p656
      %s659 = sadd.s32 %s658, 1
      %p662 = scmp.eq.s32.totalorder %s79, 1
      %p663 = scmp.ne.s32.totalorder %s658, %s660
      %p664 = scmp.eq.s32.totalorder %s79, 0
      %p665 = por %p663, %p664
      %p666 = scmp.ne.s32.totalorder %s658, %s660
      %p667 = scmp.eq.s32.totalorder %s84, 1
      %p668 = por %p666, %p667
      %p669 = scmp.ne.s32.totalorder %s660, %s661
      %p670 = scmp.eq.s32.totalorder %s84, 0
      %p671 = por %p669, %p670
      %p672 = scmp.ne.s32.totalorder %s660, %s661
      %p673 = scmp.eq.s32.totalorder %s85, 1
      %p674 = por %p672, %p673
      %p676 = scmp.ne.s32.totalorder %s661, %s675
      %p677 = scmp.eq.s32.totalorder %s85, 0
      %p678 = por %p676, %p677
      %s680 = sadd.s32 %s679, 1
      %p683 = scmp.eq.s32.totalorder %s79, 1
      %p684 = scmp.ne.s32.totalorder %s679, %s681
      %p685 = scmp.eq.s32.totalorder %s79, 0
      %p686 = por %p684, %p685
      %p687 = scmp.ne.s32.totalorder %s679, %s681
      %p688 = scmp.eq.s32.totalorder %s84, 1
      %p689 = por %p687, %p688
      %p690 = scmp.ne.s32.totalorder %s681, %s682
      %p691 = scmp.eq.s32.totalorder %s84, 0
      %p692 = por %p690, %p691
      %p693 = scmp.ne.s32.totalorder %s681, %s682
      %p694 = scmp.eq.s32.totalorder %s85, 1
      %p695 = por %p693, %p694
      %p697 = scmp.ne.s32.totalorder %s682, %s696
      %p698 = scmp.eq.s32.totalorder %s85, 0
      %p699 = por %p697, %p698
      %s701 = sadd.s32 %s700, 1
      %p704 = scmp.eq.s32.totalorder %s79, 1
      %p705 = scmp.ne.s32.totalorder %s700, %s702
      %p706 = scmp.eq.s32.totalorder %s79, 0
      %p707 = por %p705, %p706
      %p708 = scmp.ne.s32.totalorder %s700, %s702
      %p709 = scmp.eq.s32.totalorder %s84, 1
      %p710 = por %p708, %p709
      %p711 = scmp.ne.s32.totalorder %s702, %s703
      %p712 = scmp.eq.s32.totalorder %s84, 0
      %p713 = por %p711, %p712
      %p714 = scmp.ne.s32.totalorder %s702, %s703
      %p715 = scmp.eq.s32.totalorder %s85, 1
      %p716 = por %p714, %p715
      %p718 = scmp.ne.s32.totalorder %s703, %s717
      %p719 = scmp.eq.s32.totalorder %s85, 0
      %p720 = por %p718, %p719
      %s722 = sadd.s32 %s721, 1
      %p725 = scmp.eq.s32.totalorder %s79, 1
      %p726 = scmp.ne.s32.totalorder %s721, %s723
      %p727 = scmp.eq.s32.totalorder %s79, 0
      %p728 = por %p726, %p727
      %p729 = scmp.ne.s32.totalorder %s721, %s723
      %p730 = scmp.eq.s32.totalorder %s84, 1
      %p731 = por %p729, %p730
      %p732 = scmp.ne.s32.totalorder %s723, %s724
      %p733 = scmp.eq.s32.totalorder %s84, 0
      %p734 = por %p732, %p733
      %p735 = scmp.ne.s32.totalorder %s723, %s724
      %p736 = scmp.eq.s32.totalorder %s85, 1
      %p737 = por %p735, %p736
      %p739 = scmp.ne.s32.totalorder %s724, %s738
      %p740 = scmp.eq.s32.totalorder %s85, 0
      %p741 = por %p739, %p740
      %s743 = sadd.s32 %s742, 1
      %p746 = scmp.eq.s32.totalorder %s79, 1
      %p747 = scmp.ne.s32.totalorder %s742, %s744
      %p748 = scmp.eq.s32.totalorder %s79, 0
      %p749 = por %p747, %p748
      %p750 = scmp.ne.s32.totalorder %s742, %s744
      %p751 = scmp.eq.s32.totalorder %s84, 1
      %p752 = por %p750, %p751
      %p753 = scmp.ne.s32.totalorder %s744, %s745
      %p754 = scmp.eq.s32.totalorder %s84, 0
      %p755 = por %p753, %p754
      %p756 = scmp.ne.s32.totalorder %s744, %s745
      %p757 = scmp.eq.s32.totalorder %s85, 1
      %p758 = por %p756, %p757
      %p760 = scmp.ne.s32.totalorder %s745, %s759
      %p761 = scmp.eq.s32.totalorder %s85, 0
      %p762 = por %p760, %p761
      %s763 = ssub.s32 %s79, %s86
      %p764 = scmp.eq.s32.totalorder %s763, 0
      %s766 = sadd.s32 %s765, 1
      %s767 = scalar_select %p764, %s765, %s766
      %p770 = pneg %p764
      %p771 = scmp.eq.s32.totalorder %s79, 1
      %p772 = por %p770, %p771
      %p773 = scmp.ne.s32.totalorder %s765, %s768
      %p774 = scmp.eq.s32.totalorder %s79, 0
      %p775 = por %p773, %p774
      %p776 = scmp.ne.s32.totalorder %s765, %s768
      %p777 = scmp.eq.s32.totalorder %s84, 1
      %p778 = por %p776, %p777
      %p779 = scmp.ne.s32.totalorder %s768, %s769
      %p780 = scmp.eq.s32.totalorder %s84, 0
      %p781 = por %p779, %p780
      %p782 = scmp.ne.s32.totalorder %s768, %s769
      %p783 = scmp.eq.s32.totalorder %s85, 1
      %p784 = por %p782, %p783
      %p786 = scmp.ne.s32.totalorder %s769, %s785
      %p787 = scmp.eq.s32.totalorder %s85, 0
      %p788 = por %p786, %p787
      %p789 = scmp.le.s32.totalorder 1, %s79
      %p790 = scmp.lt.s32.totalorder %s79, 3
      %p791 = pnand %p789, %p790
      %p792 = pneg %p791
      // Predicated region
      $region9: #{transformer_forward.9} parent=5 // pred_check
        _
      $region10: #{transformer_forward.9} parent=5 // pred_check_branch
        %794 = sbr.rel (%p791) target = $region12
      $region11: #{transformer_forward.9} parent=5 // pred_region
        %s795 = ssub.s32 %s79, 1
        // Predicated region
        $region13: #{transformer_forward.9} parent=11 // pred_check
          %p796 = pneg %p230
        $region14: #{transformer_forward.9} parent=11 // pred_check_branch
          %798 = sbr.rel (%p796) target = $region16
        $region15: #{transformer_forward.9} parent=11 // pred_region
          _
        $region16: #{transformer_forward.9} parent=11 // pred_fallthru
          _
        // Predicated region
        $region17: #{transformer_forward.9} parent=11 // pred_check
          %p799 = pneg %p251
        $region18: #{transformer_forward.9} parent=11 // pred_check_branch
          %801 = sbr.rel (%p799) target = $region20
        $region19: #{transformer_forward.9} parent=11 // pred_region
          _
        $region20: #{transformer_forward.9} parent=11 // pred_fallthru
          _
        // Predicated region
        $region21: #{transformer_forward.9} parent=11 // pred_check
          %p802 = pneg %p272
        $region22: #{transformer_forward.9} parent=11 // pred_check_branch
          %804 = sbr.rel (%p802) target = $region24
        $region23: #{transformer_forward.9} parent=11 // pred_region
          _
        $region24: #{transformer_forward.9} parent=11 // pred_fallthru
          _
        // Predicated region
        $region25: #{transformer_forward.9} parent=11 // pred_check
          %p805 = pneg %p293
        $region26: #{transformer_forward.9} parent=11 // pred_check_branch
          %807 = sbr.rel (%p805) target = $region28
        $region27: #{transformer_forward.9} parent=11 // pred_region
          _
        $region28: #{transformer_forward.9} parent=11 // pred_fallthru
          _
        // Predicated region
        $region29: #{transformer_forward.9} parent=11 // pred_check
          %p808 = pneg %p314
        $region30: #{transformer_forward.9} parent=11 // pred_check_branch
          %810 = sbr.rel (%p808) target = $region32
        $region31: #{transformer_forward.9} parent=11 // pred_region
          _
        $region32: #{transformer_forward.9} parent=11 // pred_fallthru
          _
        // Predicated region
        $region33: #{transformer_forward.9} parent=11 // pred_check
          %p811 = pneg %p335
        $region34: #{transformer_forward.9} parent=11 // pred_check_branch
          %813 = sbr.rel (%p811) target = $region36
        $region35: #{transformer_forward.9} parent=11 // pred_region
          _
        $region36: #{transformer_forward.9} parent=11 // pred_fallthru
          _
        // Predicated region
        $region37: #{transformer_forward.9} parent=11 // pred_check
          %p814 = pneg %p356
        $region38: #{transformer_forward.9} parent=11 // pred_check_branch
          %816 = sbr.rel (%p814) target = $region40
        $region39: #{transformer_forward.9} parent=11 // pred_region
          _
        $region40: #{transformer_forward.9} parent=11 // pred_fallthru
          _
        // Predicated region
        $region41: #{transformer_forward.9} parent=11 // pred_check
          %p817 = pneg %p377
        $region42: #{transformer_forward.9} parent=11 // pred_check_branch
          %819 = sbr.rel (%p817) target = $region44
        $region43: #{transformer_forward.9} parent=11 // pred_region
          _
        $region44: #{transformer_forward.9} parent=11 // pred_fallthru
          _
        // Predicated region
        $region45: #{transformer_forward.9} parent=11 // pred_check
          %p820 = pneg %p398
        $region46: #{transformer_forward.9} parent=11 // pred_check_branch
          %822 = sbr.rel (%p820) target = $region48
        $region47: #{transformer_forward.9} parent=11 // pred_region
          %s824 = ssub.s32 16, 16
          %825 = vsyncadd [#allocation3], %s824
          %s827 = sshll.u32 [#allocation2], 4
          %s828 = int_to_ptr.vmem [resolvable:$true] %s827
          %830 = dma.hbm_to_vmem [thread:$0]  %s27, 16, %s828, [#allocation3]
        $region48: #{transformer_forward.9} parent=11 // pred_fallthru
          _
        // Predicated region
        $region49: #{transformer_forward.9} parent=11 // pred_check
          %p831 = pneg %p419
        $region50: #{transformer_forward.9} parent=11 // pred_check_branch
          %833 = sbr.rel (%p831) target = $region52
        $region51: #{transformer_forward.9} parent=11 // pred_region
          %s835 = ssub.s32 16, 16
          %836 = vsyncadd [#allocation6], %s835
          %s838 = sshll.u32 [#allocation5], 4
          %s839 = int_to_ptr.vmem [resolvable:$true] %s838
          %841 = dma.hbm_to_vmem [thread:$0]  %s29, 16, %s839, [#allocation6]
        $region52: #{transformer_forward.9} parent=11 // pred_fallthru
          _
        // Predicated region
        $region53: #{transformer_forward.9} parent=11 // pred_check
          %p842 = pneg %p440
        $region54: #{transformer_forward.9} parent=11 // pred_check_branch
          %844 = sbr.rel (%p842) target = $region56
        $region55: #{transformer_forward.9} parent=11 // pred_region
          _
        $region56: #{transformer_forward.9} parent=11 // pred_fallthru
          _
        // Predicated region
        $region57: #{transformer_forward.9} parent=11 // pred_check
          %p845 = pneg %p461
        $region58: #{transformer_forward.9} parent=11 // pred_check_branch
          %847 = sbr.rel (%p845) target = $region60
        $region59: #{transformer_forward.9} parent=11 // pred_region
          _
        $region60: #{transformer_forward.9} parent=11 // pred_fallthru
          _
        // Predicated region
        $region61: #{transformer_forward.9} parent=11 // pred_check
          %p848 = pneg %p482
        $region62: #{transformer_forward.9} parent=11 // pred_check_branch
          %850 = sbr.rel (%p848) target = $region64
        $region63: #{transformer_forward.9} parent=11 // pred_region
          _
        $region64: #{transformer_forward.9} parent=11 // pred_fallthru
          _
        // Predicated region
        $region65: #{transformer_forward.9} parent=11 // pred_check
          %p851 = pneg %p503
        $region66: #{transformer_forward.9} parent=11 // pred_check_branch
          %853 = sbr.rel (%p851) target = $region68
        $region67: #{transformer_forward.9} parent=11 // pred_region
          %s855 = ssub.s32 16, 16
          %856 = vsyncadd [#allocation6], %s855
          %s858 = sshll.u32 [#allocation7], 4
          %s859 = int_to_ptr.vmem [resolvable:$true] %s858
          %861 = dma.hbm_to_vmem [thread:$0]  %s37, 16, %s859, [#allocation6]
        $region68: #{transformer_forward.9} parent=11 // pred_fallthru
          _
        // Predicated region
        $region69: #{transformer_forward.9} parent=11 // pred_check
          %p862 = pneg %p524
        $region70: #{transformer_forward.9} parent=11 // pred_check_branch
          %864 = sbr.rel (%p862) target = $region72
        $region71: #{transformer_forward.9} parent=11 // pred_region
          %s866 = ssub.s32 16, 16
          %867 = vsyncadd [#allocation9], %s866
          %s869 = sshll.u32 [#allocation8], 4
          %s870 = int_to_ptr.vmem [resolvable:$true] %s869
          %872 = dma.hbm_to_vmem [thread:$0]  %s39, 16, %s870, [#allocation9]
        $region72: #{transformer_forward.9} parent=11 // pred_fallthru
          _
        // Predicated region
        $region73: #{transformer_forward.9} parent=11 // pred_check
          %p873 = pneg %p545
        $region74: #{transformer_forward.9} parent=11 // pred_check_branch
          %875 = sbr.rel (%p873) target = $region76
        $region75: #{transformer_forward.9} parent=11 // pred_region
          %s877 = ssub.s32 16, 16
          %878 = vsyncadd [#allocation9], %s877
          %s880 = sshll.u32 [#allocation10], 4
          %s881 = int_to_ptr.vmem [resolvable:$true] %s880
          %883 = dma.hbm_to_vmem [thread:$0]  %s41, 16, %s881, [#allocation9]
        $region76: #{transformer_forward.9} parent=11 // pred_fallthru
          _
        // Predicated region
        $region77: #{transformer_forward.9} parent=11 // pred_check
          %p884 = pneg %p566
        $region78: #{transformer_forward.9} parent=11 // pred_check_branch
          %886 = sbr.rel (%p884) target = $region80
        $region79: #{transformer_forward.9} parent=11 // pred_region
          _
        $region80: #{transformer_forward.9} parent=11 // pred_fallthru
          _
        // Predicated region
        $region81: #{transformer_forward.9} parent=11 // pred_check
          %p887 = pneg %p587
        $region82: #{transformer_forward.9} parent=11 // pred_check_branch
          %889 = sbr.rel (%p887) target = $region84
        $region83: #{transformer_forward.9} parent=11 // pred_region
          %s891 = ssub.s32 16, 16
          %892 = vsyncadd [#allocation12], %s891
          %s894 = sshll.u32 [#allocation11], 4
          %s895 = int_to_ptr.vmem [resolvable:$true] %s894
          %897 = dma.hbm_to_vmem [thread:$0]  %s45, 16, %s895, [#allocation12]
        $region84: #{transformer_forward.9} parent=11 // pred_fallthru
          _
        // Predicated region
        $region85: #{transformer_forward.9} parent=11 // pred_check
          %p898 = pneg %p608
        $region86: #{transformer_forward.9} parent=11 // pred_check_branch
          %900 = sbr.rel (%p898) target = $region88
        $region87: #{transformer_forward.9} parent=11 // pred_region
          %s902 = ssub.s32 16, 16
          %903 = vsyncadd [#allocation12], %s902
          %s905 = sshll.u32 [#allocation13], 4
          %s906 = int_to_ptr.vmem [resolvable:$true] %s905
          %908 = dma.hbm_to_vmem [thread:$0]  %s47, 16, %s906, [#allocation12]
        $region88: #{transformer_forward.9} parent=11 // pred_fallthru
          _
        // Predicated region
        $region89: #{transformer_forward.9} parent=11 // pred_check
          %p909 = pneg %p629
        $region90: #{transformer_forward.9} parent=11 // pred_check_branch
          %911 = sbr.rel (%p909) target = $region92
        $region91: #{transformer_forward.9} parent=11 // pred_region
          %s913 = ssub.s32 16, 16
          %914 = vsyncadd [#allocation15], %s913
          %s916 = sshll.u32 [#allocation14], 4
          %s917 = int_to_ptr.vmem [resolvable:$true] %s916
          %919 = dma.hbm_to_vmem [thread:$0]  %s49, 16, %s917, [#allocation15]
        $region92: #{transformer_forward.9} parent=11 // pred_fallthru
          _
        // Predicated region
        $region93: #{transformer_forward.9} parent=11 // pred_check
          %p920 = pneg %p650
        $region94: #{transformer_forward.9} parent=11 // pred_check_branch
          %922 = sbr.rel (%p920) target = $region96
        $region95: #{transformer_forward.9} parent=11 // pred_region
          _
        $region96: #{transformer_forward.9} parent=11 // pred_fallthru
          _
        // Predicated region
        $region97: #{transformer_forward.9} parent=11 // pred_check
          %p923 = pneg %p671
        $region98: #{transformer_forward.9} parent=11 // pred_check_branch
          %925 = sbr.rel (%p923) target = $region100
        $region99: #{transformer_forward.9} parent=11 // pred_region
          %s927 = ssub.s32 16, 16
          %928 = vsyncadd [#allocation15], %s927
          %s930 = sshll.u32 [#allocation16], 4
          %s931 = int_to_ptr.vmem [resolvable:$true] %s930
          %933 = dma.hbm_to_vmem [thread:$0]  %s53, 16, %s931, [#allocation15]
        $region100: #{transformer_forward.9} parent=11 // pred_fallthru
          _
        // Predicated region
        $region101: #{transformer_forward.9} parent=11 // pred_check
          %p934 = pneg %p692
        $region102: #{transformer_forward.9} parent=11 // pred_check_branch
          %936 = sbr.rel (%p934) target = $region104
        $region103: #{transformer_forward.9} parent=11 // pred_region
          _
        $region104: #{transformer_forward.9} parent=11 // pred_fallthru
          _
        // Predicated region
        $region105: #{transformer_forward.9} parent=11 // pred_check
          %p937 = pneg %p713
        $region106: #{transformer_forward.9} parent=11 // pred_check_branch
          %939 = sbr.rel (%p937) target = $region108
        $region107: #{transformer_forward.9} parent=11 // pred_region
          %s941 = ssub.s32 16, 16
          %942 = vsyncadd [#allocation18], %s941
          %s944 = sshll.u32 [#allocation17], 4
          %s945 = int_to_ptr.vmem [resolvable:$true] %s944
          %947 = dma.hbm_to_vmem [thread:$0]  %s57, 16, %s945, [#allocation18]
        $region108: #{transformer_forward.9} parent=11 // pred_fallthru
          _
        // Predicated region
        $region109: #{transformer_forward.9} parent=11 // pred_check
          %p948 = pneg %p734
        $region110: #{transformer_forward.9} parent=11 // pred_check_branch
          %950 = sbr.rel (%p948) target = $region112
        $region111: #{transformer_forward.9} parent=11 // pred_region
          %s952 = ssub.s32 16, 16
          %953 = vsyncadd [#allocation18], %s952
          %s955 = sshll.u32 [#allocation19], 4
          %s956 = int_to_ptr.vmem [resolvable:$true] %s955
          %958 = dma.hbm_to_vmem [thread:$0]  %s59, 16, %s956, [#allocation18]
        $region112: #{transformer_forward.9} parent=11 // pred_fallthru
          _
        // Predicated region
        $region113: #{transformer_forward.9} parent=11 // pred_check
          %p959 = pneg %p755
        $region114: #{transformer_forward.9} parent=11 // pred_check_branch
          %961 = sbr.rel (%p959) target = $region116
        $region115: #{transformer_forward.9} parent=11 // pred_region
          %s963 = ssub.s32 16, 16
          %964 = vsyncadd [#allocation21], %s963
          %s966 = sshll.u32 [#allocation20], 4
          %s967 = int_to_ptr.vmem [resolvable:$true] %s966
          %969 = dma.hbm_to_vmem [thread:$0]  %s61, 16, %s967, [#allocation21]
        $region116: #{transformer_forward.9} parent=11 // pred_fallthru
          _
      $region12: #{transformer_forward.9} parent=5 // pred_fallthru
        _
      %p970 = scmp.lt.s32.totalorder %s79, 2
      // Predicated region
      $region117: #{transformer_forward.9} parent=5 // pred_check
        %p971 = pneg %p970
      $region118: #{transformer_forward.9} parent=5 // pred_check_branch
        %973 = sbr.rel (%p971) target = $region120
      $region119: #{transformer_forward.9} parent=5 // pred_region
        // Predicated region
        $region121: #{transformer_forward.9} parent=119 // pred_check
          %p974 = pneg %p99
        $region122: #{transformer_forward.9} parent=119 // pred_check_branch
          %976 = sbr.rel (%p974) target = $region124
        $region123: #{transformer_forward.9} parent=119 // pred_region
          %p977 = scmp.lt.s32.totalorder %s79, 1
          %s978 = scalar_select %p977, %s79, 1
          %s979 = smul.addr %s978, 8
          %s980 = scalar_lea.vmem %s1, %s979
        $region124: #{transformer_forward.9} parent=119 // pred_fallthru
          _
        // Predicated region
        $region125: #{transformer_forward.9} parent=119 // pred_check
          %p981 = pneg %p125
        $region126: #{transformer_forward.9} parent=119 // pred_check_branch
          %983 = sbr.rel (%p981) target = $region128
        $region127: #{transformer_forward.9} parent=119 // pred_region
          %p984 = scmp.lt.s32.totalorder %s79, 1
          %s985 = scalar_select %p984, %s79, 1
          %s986 = smul.addr %s985, 2
          %s987 = smul.addr %s986, 8
          %s988 = scalar_lea.vmem %s3, %s987
        $region128: #{transformer_forward.9} parent=119 // pred_fallthru
          _
        // Predicated region
        $region129: #{transformer_forward.9} parent=119 // pred_check
          %p989 = pneg %p151
        $region130: #{transformer_forward.9} parent=119 // pred_check_branch
          %991 = sbr.rel (%p989) target = $region132
        $region131: #{transformer_forward.9} parent=119 // pred_region
          %p992 = scmp.lt.s32.totalorder %s79, 1
          %s993 = scalar_select %p992, %s79, 1
          %s994 = smul.addr %s993, 8
          %s995 = scalar_lea.vmem %s5, %s994
        $region132: #{transformer_forward.9} parent=119 // pred_fallthru
          _
        // Predicated region
        $region133: #{transformer_forward.9} parent=119 // pred_check
          %p996 = pneg %p177
        $region134: #{transformer_forward.9} parent=119 // pred_check_branch
          %998 = sbr.rel (%p996) target = $region136
        $region135: #{transformer_forward.9} parent=119 // pred_region
          %p999 = scmp.lt.s32.totalorder %s79, 1
          %s1000 = scalar_select %p999, %s79, 1
          %s1001 = smul.addr %s1000, 2
          %s1002 = smul.addr %s1001, 8
          %s1003 = scalar_lea.vmem %s7, %s1002
        $region136: #{transformer_forward.9} parent=119 // pred_fallthru
          _
        // Predicated region
        $region137: #{transformer_forward.9} parent=119 // pred_check
          %p1004 = pneg %p203
        $region138: #{transformer_forward.9} parent=119 // pred_check_branch
          %1006 = sbr.rel (%p1004) target = $region140
        $region139: #{transformer_forward.9} parent=119 // pred_region
          %p1007 = scmp.lt.s32.totalorder %s79, 1
          %s1008 = scalar_select %p1007, %s79, 1
          %s1009 = scalar_lea.vmem %s9, %s1008
        $region140: #{transformer_forward.9} parent=119 // pred_fallthru
          _
      $region120: #{transformer_forward.9} parent=5 // pred_fallthru
        _
      %p1010 = scmp.le.s32.totalorder 1, %s79
      %p1011 = scmp.lt.s32.totalorder %s79, 3
      %p1012 = pnand %p1010, %p1011
      %p1013 = pneg %p1012
      // Predicated region
      $region141: #{transformer_forward.9} parent=5 // pred_check
        _
      $region142: #{transformer_forward.9} parent=5 // pred_check_branch
        %1015 = sbr.rel (%p1012) target = $region144
      $region143: #{transformer_forward.9} parent=5 // pred_region
        %s1016 = ssub.s32 %s79, 1
        // Predicated region
        $region145: #{transformer_forward.9} parent=143 // pred_check
          %p1017 = pneg %p398
        $region146: #{transformer_forward.9} parent=143 // pred_check_branch
          %1019 = sbr.rel (%p1017) target = $region148
        $region147: #{transformer_forward.9} parent=143 // pred_region
          %1020 = dma.done [#allocation3], 16
        $region148: #{transformer_forward.9} parent=143 // pred_fallthru
          _
        // Predicated region
        $region149: #{transformer_forward.9} parent=143 // pred_check
          %p1021 = pneg %p419
        $region150: #{transformer_forward.9} parent=143 // pred_check_branch
          %1023 = sbr.rel (%p1021) target = $region152
        $region151: #{transformer_forward.9} parent=143 // pred_region
          %1024 = dma.done [#allocation6], 16
        $region152: #{transformer_forward.9} parent=143 // pred_fallthru
          _
        // Predicated region
        $region153: #{transformer_forward.9} parent=143 // pred_check
          %p1025 = pneg %p503
        $region154: #{transformer_forward.9} parent=143 // pred_check_branch
          %1027 = sbr.rel (%p1025) target = $region156
        $region155: #{transformer_forward.9} parent=143 // pred_region
          %1028 = dma.done [#allocation6], 16
        $region156: #{transformer_forward.9} parent=143 // pred_fallthru
          _
        // Predicated region
        $region157: #{transformer_forward.9} parent=143 // pred_check
          %p1029 = pneg %p524
        $region158: #{transformer_forward.9} parent=143 // pred_check_branch
          %1031 = sbr.rel (%p1029) target = $region160
        $region159: #{transformer_forward.9} parent=143 // pred_region
          %1032 = dma.done [#allocation9], 16
        $region160: #{transformer_forward.9} parent=143 // pred_fallthru
          _
        // Predicated region
        $region161: #{transformer_forward.9} parent=143 // pred_check
          %p1033 = pneg %p545
        $region162: #{transformer_forward.9} parent=143 // pred_check_branch
          %1035 = sbr.rel (%p1033) target = $region164
        $region163: #{transformer_forward.9} parent=143 // pred_region
          %1036 = dma.done [#allocation9], 16
        $region164: #{transformer_forward.9} parent=143 // pred_fallthru
          _
        // Predicated region
        $region165: #{transformer_forward.9} parent=143 // pred_check
          %p1037 = pneg %p587
        $region166: #{transformer_forward.9} parent=143 // pred_check_branch
          %1039 = sbr.rel (%p1037) target = $region168
        $region167: #{transformer_forward.9} parent=143 // pred_region
          %1040 = dma.done [#allocation12], 16
        $region168: #{transformer_forward.9} parent=143 // pred_fallthru
          _
        // Predicated region
        $region169: #{transformer_forward.9} parent=143 // pred_check
          %p1041 = pneg %p608
        $region170: #{transformer_forward.9} parent=143 // pred_check_branch
          %1043 = sbr.rel (%p1041) target = $region172
        $region171: #{transformer_forward.9} parent=143 // pred_region
          %1044 = dma.done [#allocation12], 16
        $region172: #{transformer_forward.9} parent=143 // pred_fallthru
          _
        // Predicated region
        $region173: #{transformer_forward.9} parent=143 // pred_check
          %p1045 = pneg %p629
        $region174: #{transformer_forward.9} parent=143 // pred_check_branch
          %1047 = sbr.rel (%p1045) target = $region176
        $region175: #{transformer_forward.9} parent=143 // pred_region
          %1048 = dma.done [#allocation15], 16
        $region176: #{transformer_forward.9} parent=143 // pred_fallthru
          _
        // Predicated region
        $region177: #{transformer_forward.9} parent=143 // pred_check
          %p1049 = pneg %p671
        $region178: #{transformer_forward.9} parent=143 // pred_check_branch
          %1051 = sbr.rel (%p1049) target = $region180
        $region179: #{transformer_forward.9} parent=143 // pred_region
          %1052 = dma.done [#allocation15], 16
        $region180: #{transformer_forward.9} parent=143 // pred_fallthru
          _
        // Predicated region
        $region181: #{transformer_forward.9} parent=143 // pred_check
          %p1053 = pneg %p713
        $region182: #{transformer_forward.9} parent=143 // pred_check_branch
          %1055 = sbr.rel (%p1053) target = $region184
        $region183: #{transformer_forward.9} parent=143 // pred_region
          %1056 = dma.done [#allocation18], 16
        $region184: #{transformer_forward.9} parent=143 // pred_fallthru
          _
        // Predicated region
        $region185: #{transformer_forward.9} parent=143 // pred_check
          %p1057 = pneg %p734
        $region186: #{transformer_forward.9} parent=143 // pred_check_branch
          %1059 = sbr.rel (%p1057) target = $region188
        $region187: #{transformer_forward.9} parent=143 // pred_region
          %1060 = dma.done [#allocation18], 16
        $region188: #{transformer_forward.9} parent=143 // pred_fallthru
          _
        // Predicated region
        $region189: #{transformer_forward.9} parent=143 // pred_check
          %p1061 = pneg %p755
        $region190: #{transformer_forward.9} parent=143 // pred_check_branch
          %1063 = sbr.rel (%p1061) target = $region192
        $region191: #{transformer_forward.9} parent=143 // pred_region
          %1064 = dma.done [#allocation21], 16
        $region192: #{transformer_forward.9} parent=143 // pred_fallthru
          _
        %p1065 = scmp.lt.s32.totalorder %s84, 1
        %s1066 = scalar_select %p1065, %s84, 1
        %s1067 = smul.addr %s1066, 8
        %s1068 = scalar_lea.vmem %s1, %s1067
        %p1069 = pneg %p105
        %p1070 = pneg %p102
        %p1071 = scmp.lt.s32.totalorder %s84, 1
        %s1072 = scalar_select %p1071, %s84, 1
        %s1073 = smul.addr %s1072, 2
        %s1074 = smul.addr %s1073, 8
        %s1075 = scalar_lea.vmem %s3, %s1074
        %p1076 = pneg %p131
        %p1077 = pneg %p128
        %p1078 = scmp.lt.s32.totalorder %s84, 1
        %s1079 = scalar_select %p1078, %s84, 1
        %s1080 = smul.addr %s1079, 8
        %s1081 = scalar_lea.vmem %s5, %s1080
        %p1082 = pneg %p157
        %p1083 = pneg %p154
        %p1084 = scmp.lt.s32.totalorder %s84, 1
        %s1085 = scalar_select %p1084, %s84, 1
        %s1086 = smul.addr %s1085, 2
        %s1087 = smul.addr %s1086, 8
        %s1088 = scalar_lea.vmem %s7, %s1087
        %p1089 = pneg %p183
        %p1090 = pneg %p180
        %p1091 = scmp.lt.s32.totalorder %s84, 1
        %s1092 = scalar_select %p1091, %s84, 1
        %s1093 = scalar_lea.vmem %s9, %s1092
        %p1094 = pneg %p209
        %p1095 = pneg %p206
        %p1096 = pneg %p230
        %p1097 = pneg %p227
        %p1098 = pneg %p251
        %p1099 = pneg %p248
        %p1100 = pneg %p272
        %p1101 = pneg %p269
        %p1102 = pneg %p293
        %p1103 = pneg %p290
        %p1104 = pneg %p314
        %p1105 = pneg %p311
        %p1106 = pneg %p335
        %p1107 = pneg %p332
        %p1108 = pneg %p356
        %p1109 = pneg %p353
        %p1110 = pneg %p377
        %p1111 = pneg %p374
        %p1112 = pneg %p398
        %p1113 = pneg %p395
        %p1114 = pneg %p419
        %p1115 = pneg %p416
        %p1116 = pneg %p440
        %p1117 = pneg %p437
        %p1118 = pneg %p461
        %p1119 = pneg %p458
        %p1120 = pneg %p482
        %p1121 = pneg %p479
        %p1122 = pneg %p503
        %p1123 = pneg %p500
        %p1124 = pneg %p524
        %p1125 = pneg %p521
        %p1126 = pneg %p545
        %p1127 = pneg %p542
        %p1128 = pneg %p566
        %p1129 = pneg %p563
        %p1130 = pneg %p587
        %p1131 = pneg %p584
        %p1132 = pneg %p608
        %p1133 = pneg %p605
        %p1134 = pneg %p629
        %p1135 = pneg %p626
        %p1136 = pneg %p650
        %p1137 = pneg %p647
        %p1138 = pneg %p671
        %p1139 = pneg %p668
        %p1140 = pneg %p692
        %p1141 = pneg %p689
        %p1142 = pneg %p713
        %p1143 = pneg %p710
        %p1144 = pneg %p734
        %p1145 = pneg %p731
        %p1146 = pneg %p755
        %p1147 = pneg %p752
        %p1148 = pneg %p781
        %p1149 = pneg %p778
        %s1150 = sand.u32 %s768, 1
        %s1151 = scalar_lea.sflag [#allocation4], %s1150
        %s1152 = sand.u32 %s768, 1
        %s1153 = smul.addr %s1152, 8
        %s1154 = scalar_lea.vmem [#allocation22], %s1153
        %p1155 = scmp.lt.s32.totalorder %s84, 1
        %s1156 = scalar_select %p1155, %s84, 1
        %s1157 = smul.addr %s1156, 8
        %s1158 = scalar_lea.vmem %s1, %s1157
        %p1159 = scmp.lt.s32.totalorder %s84, 1
        %s1160 = scalar_select %p1159, %s84, 1
        %s1161 = smul.addr %s1160, 2
        %s1162 = smul.addr %s1161, 8
        %s1163 = scalar_lea.vmem %s3, %s1162
        %p1164 = scmp.lt.s32.totalorder %s84, 1
        %s1165 = scalar_select %p1164, %s84, 1
        %s1166 = smul.addr %s1165, 8
        %s1167 = scalar_lea.vmem %s5, %s1166
        %p1168 = scmp.lt.s32.totalorder %s84, 1
        %s1169 = scalar_select %p1168, %s84, 1
        %s1170 = smul.addr %s1169, 2
        %s1171 = smul.addr %s1170, 8
        %s1172 = scalar_lea.vmem %s7, %s1171
        %p1173 = scmp.lt.s32.totalorder %s84, 1
        %s1174 = scalar_select %p1173, %s84, 1
        %s1175 = scalar_lea.vmem %s9, %s1174
        %v1177 = vld [vmem:[%s1158] sm:$0xff]
        %v1178 = vld [vmem:[%s1163] sm:$0xff]
        %v1179 = vld [vmem:[%s1163 + $0x8] sm:$0xff]
        %v1180 = vld [vmem:[%s1167] sm:$0xff]
        %v1181 = vld [vmem:[%s1172] sm:$0xff]
        %v1182 = vld [vmem:[%s1172 + $0x8] sm:$0xff]
        %v1183 = vld [vmem:[%s1175] sm:$0x1]
        %v1184 = vadd.f32 %v1177, %v1180
        %v1185 = vpack.c.bf16 %v1184, %v1184
        %v1186 = vld [vmem:[%s11] sm:$0xf]
        %v1187 = vld [vmem:[%s11 + $0x4] sm:$0xf]
        %v1188 = vld [vmem:[%s11 + $0x8] sm:$0xf]
        %v1189 = vld [vmem:[%s11 + $0xc] sm:$0xf]
        %v1190 = vld [vmem:[%s17] sm:$0x1]
        %v1192 = vlaneseq
        %v1193 = vshrl.u32 %v1192, 7
        %v1194 = vsub.s32 0, %v1193
        %v1195 = vrot.slane %v1190, %v1194
        %v1201 = vunpack.c.l.b16 %v1186
        %v1202 = vunpack.c.l.b16 %v1187
        %v1203 = vunpack.c.l.b16 %v1188
        %v1204 = vunpack.c.l.b16 %v1189
        %v1205 = vpack.c.b16 %v1202, %v1201
        %v1206 = vpack.c.b16 %v1204, %v1203
        %vm1209 = vcmask 261120
        %v1211 = vsel %vm1209, %v1185, 0
        %1213 = vmatprep.subr.bf16.mxu0 0
        %1214 = vmatpush1.bf16.msra.mxu0 %v1205
        %1215 = vmatprep.subr.bf16.mxu0 0
        %1216 = vmatpush1.bf16.msra.mxu0 %v1206
        %1217 = vmatprep.subr.bf16.mxu0 0
        %1218 = vmatpush1.bf16.msra.mxu0 0
        %1219 = vmatprep.subr.bf16.mxu0 0
        %1220 = vmatpush1.bf16.msra.mxu0 0
        %1221 = vmatprep.subr.bf16.mxu0 0
        %1222 = vmatpush1.bf16.msra.mxu0 0
        %1223 = vmatprep.subr.bf16.mxu0 0
        %1224 = vmatpush1.bf16.msra.mxu0 0
        %1225 = vmatprep.subr.bf16.mxu0 0
        %1226 = vmatpush1.bf16.msra.mxu0 0
        %1227 = vmatprep.subr.bf16.mxu0 0
        %1228 = vmatpush1.bf16.msra.mxu0 0
        %1229 = vmatprep.subr.bf16.mxu0 0
        %1230 = vmatpush1.bf16.msra.mxu0 0
        %1231 = vmatprep.subr.bf16.mxu0 0
        %1232 = vmatpush1.bf16.msra.mxu0 0
        %1233 = vmatprep.subr.bf16.mxu0 0
        %1234 = vmatpush1.bf16.msra.mxu0 0
        %1235 = vmatprep.subr.bf16.mxu0 0
        %1236 = vmatpush1.bf16.msra.mxu0 0
        %1237 = vmatprep.subr.bf16.mxu0 0
        %1238 = vmatpush1.bf16.msra.mxu0 0
        %1239 = vmatprep.subr.bf16.mxu0 0
        %1240 = vmatpush1.bf16.msra.mxu0 0
        %1241 = vmatprep.subr.bf16.mxu0 0
        %1242 = vmatpush1.bf16.msra.mxu0 0
        %1243 = vmatprep.subr.bf16.mxu0 0
        %1244 = vmatpush1.bf16.msra.mxu0 0
        %1245 = vmatprep.mubr.bf16.mxu0 0
        %1246 = vmatmul.mubr.bf16.gmra.mrb[0].mxu0 %v1211
        %v1247 = vpop.f32.mrb[0].mxu0
        %v1248 = vadd.f32 %v1195, %v1247
        %v1249 = vpop.f32.mrb[0].mxu0
        %v1250 = vpop.f32.mrb[0].mxu0
        %v1251 = vpop.f32.mrb[0].mxu0
        %1252 = vdwg.mxu0
        %v1253 = vld [vmem:[%s13] sm:$0xf]
        %v1254 = vld [vmem:[%s13 + $0x4] sm:$0xf]
        %v1255 = vld [vmem:[%s13 + $0x8] sm:$0xf]
        %v1256 = vld [vmem:[%s13 + $0xc] sm:$0xf]
        %v1257 = vld [vmem:[%s19] sm:$0x1]
        %v1259 = vlaneseq
        %v1260 = vshrl.u32 %v1259, 7
        %v1261 = vsub.s32 0, %v1260
        %v1262 = vrot.slane %v1257, %v1261
        %v1268 = vunpack.c.l.b16 %v1253
        %v1269 = vunpack.c.l.b16 %v1254
        %v1270 = vunpack.c.l.b16 %v1255
        %v1271 = vunpack.c.l.b16 %v1256
        %v1272 = vpack.c.b16 %v1269, %v1268
        %v1273 = vpack.c.b16 %v1271, %v1270
        %1276 = vmatprep.subr.bf16.mxu0 0
        %1277 = vmatpush1.bf16.msra.mxu0 %v1272
        %1278 = vmatprep.subr.bf16.mxu0 0
        %1279 = vmatpush1.bf16.msra.mxu0 %v1273
        %1280 = vmatprep.subr.bf16.mxu0 0
        %1281 = vmatpush1.bf16.msra.mxu0 0
        %1282 = vmatprep.subr.bf16.mxu0 0
        %1283 = vmatpush1.bf16.msra.mxu0 0
        %1284 = vmatprep.subr.bf16.mxu0 0
        %1285 = vmatpush1.bf16.msra.mxu0 0
        %1286 = vmatprep.subr.bf16.mxu0 0
        %1287 = vmatpush1.bf16.msra.mxu0 0
        %1288 = vmatprep.subr.bf16.mxu0 0
        %1289 = vmatpush1.bf16.msra.mxu0 0
        %1290 = vmatprep.subr.bf16.mxu0 0
        %1291 = vmatpush1.bf16.msra.mxu0 0
        %1292 = vmatprep.subr.bf16.mxu0 0
        %1293 = vmatpush1.bf16.msra.mxu0 0
        %1294 = vmatprep.subr.bf16.mxu0 0
        %1295 = vmatpush1.bf16.msra.mxu0 0
        %1296 = vmatprep.subr.bf16.mxu0 0
        %1297 = vmatpush1.bf16.msra.mxu0 0
        %1298 = vmatprep.subr.bf16.mxu0 0
        %1299 = vmatpush1.bf16.msra.mxu0 0
        %1300 = vmatprep.subr.bf16.mxu0 0
        %1301 = vmatpush1.bf16.msra.mxu0 0
        %1302 = vmatprep.subr.bf16.mxu0 0
        %1303 = vmatpush1.bf16.msra.mxu0 0
        %1304 = vmatprep.subr.bf16.mxu0 0
        %1305 = vmatpush1.bf16.msra.mxu0 0
        %1306 = vmatprep.subr.bf16.mxu0 0
        %1307 = vmatpush1.bf16.msra.mxu0 0
        %1308 = vmatprep.mubr.bf16.mxu0 0
        %1309 = vmatmul.mubr.bf16.gmra.mrb[0].mxu0 %v1211
        %v1310 = vpop.f32.mrb[0].mxu0
        %v1311 = vadd.f32 %v1262, %v1310
        %v1312 = vpop.f32.mrb[0].mxu0
        %v1313 = vpop.f32.mrb[0].mxu0
        %v1314 = vpop.f32.mrb[0].mxu0
        %1315 = vdwg.mxu0
        %v1316 = vpack.c.bf16 %v1177, %v1177
        %v1317 = vld [vmem:[%s15] sm:$0xf]
        %v1318 = vld [vmem:[%s15 + $0x4] sm:$0xf]
        %v1319 = vld [vmem:[%s15 + $0x8] sm:$0xf]
        %v1320 = vld [vmem:[%s15 + $0xc] sm:$0xf]
        %v1321 = vld [vmem:[%s21] sm:$0x1]
        %v1323 = vlaneseq
        %v1324 = vshrl.u32 %v1323, 7
        %v1325 = vsub.s32 0, %v1324
        %v1326 = vrot.slane %v1321, %v1325
        %v1332 = vunpack.c.l.b16 %v1317
        %v1333 = vunpack.c.l.b16 %v1318
        %v1334 = vunpack.c.l.b16 %v1319
        %v1335 = vunpack.c.l.b16 %v1320
        %v1336 = vpack.c.b16 %v1333, %v1332
        %v1337 = vpack.c.b16 %v1335, %v1334
        %v1341 = vsel %vm1209, %v1316, 0
        %1343 = vmatprep.subr.bf16.mxu0 0
        %1344 = vmatpush1.bf16.msra.mxu0 %v1336
        %1345 = vmatprep.subr.bf16.mxu0 0
        %1346 = vmatpush1.bf16.msra.mxu0 %v1337
        %1347 = vmatprep.subr.bf16.mxu0 0
        %1348 = vmatpush1.bf16.msra.mxu0 0
        %1349 = vmatprep.subr.bf16.mxu0 0
        %1350 = vmatpush1.bf16.msra.mxu0 0
        %1351 = vmatprep.subr.bf16.mxu0 0
        %1352 = vmatpush1.bf16.msra.mxu0 0
        %1353 = vmatprep.subr.bf16.mxu0 0
        %1354 = vmatpush1.bf16.msra.mxu0 0
        %1355 = vmatprep.subr.bf16.mxu0 0
        %1356 = vmatpush1.bf16.msra.mxu0 0
        %1357 = vmatprep.subr.bf16.mxu0 0
        %1358 = vmatpush1.bf16.msra.mxu0 0
        %1359 = vmatprep.subr.bf16.mxu0 0
        %1360 = vmatpush1.bf16.msra.mxu0 0
        %1361 = vmatprep.subr.bf16.mxu0 0
        %1362 = vmatpush1.bf16.msra.mxu0 0
        %1363 = vmatprep.subr.bf16.mxu0 0
        %1364 = vmatpush1.bf16.msra.mxu0 0
        %1365 = vmatprep.subr.bf16.mxu0 0
        %1366 = vmatpush1.bf16.msra.mxu0 0
        %1367 = vmatprep.subr.bf16.mxu0 0
        %1368 = vmatpush1.bf16.msra.mxu0 0
        %1369 = vmatprep.subr.bf16.mxu0 0
        %1370 = vmatpush1.bf16.msra.mxu0 0
        %1371 = vmatprep.subr.bf16.mxu0 0
        %1372 = vmatpush1.bf16.msra.mxu0 0
        %1373 = vmatprep.subr.bf16.mxu0 0
        %1374 = vmatpush1.bf16.msra.mxu0 0
        %1375 = vmatprep.mubr.bf16.mxu0 0
        %1376 = vmatmul.mubr.bf16.gmra.mrb[0].mxu0 %v1341
        %v1377 = vpop.f32.mrb[0].mxu0
        %v1378 = vadd.f32 %v1326, %v1377
        %v1379 = vpop.f32.mrb[0].mxu0
        %v1380 = vpop.f32.mrb[0].mxu0
        %v1381 = vpop.f32.mrb[0].mxu0
        %1382 = vdwg.mxu0
        %v1383 = vpack.c.bf16 %v1248, %v1248
        %v1384 = vpack.c.bf16 %v1311, %v1311
        %v1385 = vpack.c.bf16 %v1378, %v1378
        %vm1386 = vcmask 64512
        %v1388 = vsel %vm1386, %v1383, 0
        %v1391 = vsel %vm1386, %v1384, 0
        %1393 = vmatprep.subr.bf16.mxu0 0
        %1394 = vmatpush1.bf16.xpose.msra.mxu0 %v1391
        %1395 = vmatprep.subr.bf16.mxu0 0
        %1396 = vmatpush1.bf16.xpose.msra.mxu0 0
        %1397 = vmatprep.subr.bf16.mxu0 0
        %1398 = vmatpush1.bf16.xpose.msra.mxu0 0
        %1399 = vmatprep.subr.bf16.mxu0 0
        %1400 = vmatpush1.bf16.xpose.msra.mxu0 0
        %1401 = vmatprep.subr.bf16.mxu0 0
        %1402 = vmatpush1.bf16.xpose.msra.mxu0 0
        %1403 = vmatprep.subr.bf16.mxu0 0
        %1404 = vmatpush1.bf16.xpose.msra.mxu0 0
        %1405 = vmatprep.subr.bf16.mxu0 0
        %1406 = vmatpush1.bf16.xpose.msra.mxu0 0
        %1407 = vmatprep.subr.bf16.mxu0 0
        %1408 = vmatpush1.bf16.xpose.msra.mxu0 0
        %1409 = vmatprep.subr.bf16.mxu0 0
        %1410 = vmatpush1.bf16.xpose.msra.mxu0 0
        %1411 = vmatprep.subr.bf16.mxu0 0
        %1412 = vmatpush1.bf16.xpose.msra.mxu0 0
        %1413 = vmatprep.subr.bf16.mxu0 0
        %1414 = vmatpush1.bf16.xpose.msra.mxu0 0
        %1415 = vmatprep.subr.bf16.mxu0 0
        %1416 = vmatpush1.bf16.xpose.msra.mxu0 0
        %1417 = vmatprep.subr.bf16.mxu0 0
        %1418 = vmatpush1.bf16.xpose.msra.mxu0 0
        %1419 = vmatprep.subr.bf16.mxu0 0
        %1420 = vmatpush1.bf16.xpose.msra.mxu0 0
        %1421 = vmatprep.subr.bf16.mxu0 0
        %1422 = vmatpush1.bf16.xpose.msra.mxu0 0
        %1423 = vmatprep.subr.bf16.mxu0 0
        %1424 = vmatpush1.bf16.xpose.msra.mxu0 0
        %1425 = vmatprep.mubr.bf16.mxu0 0
        %1426 = vmatmul.mubr.bf16.gmra.mrb[0].mxu0 %v1388
        %v1427 = vpop.f32.mrb[0].mxu0
        %v1428 = vadd.f32 0.0, %v1427
        %v1429 = vpop.f32.mrb[0].mxu0
        %v1430 = vpop.f32.mrb[0].mxu0
        %v1431 = vpop.f32.mrb[0].mxu0
        %1432 = vdwg.mxu0
        %v1433 = vsel %vm1386, %v1428, -inf
        %1434 = vmax.xlane.f32.xlu0 %v1433
        %v1435 = vpop.xlane.xlu0 %1434
        %v1436 = vsub.f32 %v1428, %v1435
        %v1437 = vmul.f32 %v1436, 1.442695
        %v1438 = vpow.pop %v1437
        %v1439 = vsel %vm1386, %v1438, 0.0
        %1440 = vadd.xlane.f32.xlu0 %v1439
        %v1441 = vpop.xlane.xlu0 %1440
        %v1442 = vrcp.pop %v1441
        %v1443 = vmul.f32 %v1438, %v1442
        %v1444 = vpack.c.bf16 %v1443, %v1443
        %v1446 = vsel %vm1386, %v1444, 0
        %vm1448 = vcmask 1043456
        %v1450 = vsel %vm1448, %v1385, 0
        %1452 = vmatprep.subr.bf16.mxu0 0
        %1453 = vmatpush1.bf16.msra.mxu0 %v1450
        %1454 = vmatprep.subr.bf16.mxu0 0
        %1455 = vmatpush1.bf16.msra.mxu0 0
        %1456 = vmatprep.subr.bf16.mxu0 0
        %1457 = vmatpush1.bf16.msra.mxu0 0
        %1458 = vmatprep.subr.bf16.mxu0 0
        %1459 = vmatpush1.bf16.msra.mxu0 0
        %1460 = vmatprep.subr.bf16.mxu0 0
        %1461 = vmatpush1.bf16.msra.mxu0 0
        %1462 = vmatprep.subr.bf16.mxu0 0
        %1463 = vmatpush1.bf16.msra.mxu0 0
        %1464 = vmatprep.subr.bf16.mxu0 0
        %1465 = vmatpush1.bf16.msra.mxu0 0
        %1466 = vmatprep.subr.bf16.mxu0 0
        %1467 = vmatpush1.bf16.msra.mxu0 0
        %1468 = vmatprep.subr.bf16.mxu0 0
        %1469 = vmatpush1.bf16.msra.mxu0 0
        %1470 = vmatprep.subr.bf16.mxu0 0
        %1471 = vmatpush1.bf16.msra.mxu0 0
        %1472 = vmatprep.subr.bf16.mxu0 0
        %1473 = vmatpush1.bf16.msra.mxu0 0
        %1474 = vmatprep.subr.bf16.mxu0 0
        %1475 = vmatpush1.bf16.msra.mxu0 0
        %1476 = vmatprep.subr.bf16.mxu0 0
        %1477 = vmatpush1.bf16.msra.mxu0 0
        %1478 = vmatprep.subr.bf16.mxu0 0
        %1479 = vmatpush1.bf16.msra.mxu0 0
        %1480 = vmatprep.subr.bf16.mxu0 0
        %1481 = vmatpush1.bf16.msra.mxu0 0
        %1482 = vmatprep.subr.bf16.mxu0 0
        %1483 = vmatpush1.bf16.msra.mxu0 0
        %1484 = vmatprep.mubr.bf16.mxu0 0
        %1485 = vmatmul.mubr.bf16.gmra.mrb[0].mxu0 %v1446
        %v1486 = vpop.f32.mrb[0].mxu0
        %v1487 = vadd.f32 0.0, %v1486
        %v1488 = vpop.f32.mrb[0].mxu0
        %v1489 = vpop.f32.mrb[0].mxu0
        %v1490 = vpop.f32.mrb[0].mxu0
        %1491 = vdwg.mxu0
        %1493 = vrot.lane.b32.xlu0 %v1383, 120
        %v1494 = vpop.permute.xlu0 %1493
        %1496 = vrot.lane.b32.xlu0 %v1384, 120
        %v1497 = vpop.permute.xlu0 %1496
        %v1499 = vsel %vm1386, %v1494, 0
        %v1502 = vsel %vm1386, %v1497, 0
        %1504 = vmatprep.subr.bf16.mxu0 0
        %1505 = vmatpush1.bf16.xpose.msra.mxu0 %v1502
        %1506 = vmatprep.subr.bf16.mxu0 0
        %1507 = vmatpush1.bf16.xpose.msra.mxu0 0
        %1508 = vmatprep.subr.bf16.mxu0 0
        %1509 = vmatpush1.bf16.xpose.msra.mxu0 0
        %1510 = vmatprep.subr.bf16.mxu0 0
        %1511 = vmatpush1.bf16.xpose.msra.mxu0 0
        %1512 = vmatprep.subr.bf16.mxu0 0
        %1513 = vmatpush1.bf16.xpose.msra.mxu0 0
        %1514 = vmatprep.subr.bf16.mxu0 0
        %1515 = vmatpush1.bf16.xpose.msra.mxu0 0
        %1516 = vmatprep.subr.bf16.mxu0 0
        %1517 = vmatpush1.bf16.xpose.msra.mxu0 0
        %1518 = vmatprep.subr.bf16.mxu0 0
        %1519 = vmatpush1.bf16.xpose.msra.mxu0 0
        %1520 = vmatprep.subr.bf16.mxu0 0
        %1521 = vmatpush1.bf16.xpose.msra.mxu0 0
        %1522 = vmatprep.subr.bf16.mxu0 0
        %1523 = vmatpush1.bf16.xpose.msra.mxu0 0
        %1524 = vmatprep.subr.bf16.mxu0 0
        %1525 = vmatpush1.bf16.xpose.msra.mxu0 0
        %1526 = vmatprep.subr.bf16.mxu0 0
        %1527 = vmatpush1.bf16.xpose.msra.mxu0 0
        %1528 = vmatprep.subr.bf16.mxu0 0
        %1529 = vmatpush1.bf16.xpose.msra.mxu0 0
        %1530 = vmatprep.subr.bf16.mxu0 0
        %1531 = vmatpush1.bf16.xpose.msra.mxu0 0
        %1532 = vmatprep.subr.bf16.mxu0 0
        %1533 = vmatpush1.bf16.xpose.msra.mxu0 0
        %1534 = vmatprep.subr.bf16.mxu0 0
        %1535 = vmatpush1.bf16.xpose.msra.mxu0 0
        %1536 = vmatprep.mubr.bf16.mxu0 0
        %1537 = vmatmul.mubr.bf16.gmra.mrb[0].mxu0 %v1499
        %v1538 = vpop.f32.mrb[0].mxu0
        %v1539 = vadd.f32 0.0, %v1538
        %v1540 = vpop.f32.mrb[0].mxu0
        %v1541 = vpop.f32.mrb[0].mxu0
        %v1542 = vpop.f32.mrb[0].mxu0
        %1543 = vdwg.mxu0
        %v1544 = vsel %vm1386, %v1539, -inf
        %1545 = vmax.xlane.f32.xlu0 %v1544
        %v1546 = vpop.xlane.xlu0 %1545
        %v1547 = vsub.f32 %v1539, %v1546
        %v1548 = vmul.f32 %v1547, 1.442695
        %v1549 = vpow.pop %v1548
        %v1550 = vsel %vm1386, %v1549, 0.0
        %1551 = vadd.xlane.f32.xlu0 %v1550
        %v1552 = vpop.xlane.xlu0 %1551
        %v1553 = vrcp.pop %v1552
        %v1554 = vmul.f32 %v1549, %v1553
        %v1555 = vpack.c.bf16 %v1554, %v1554
        %1557 = vrot.lane.b32.xlu0 %v1385, 120
        %v1558 = vpop.permute.xlu0 %1557
        %v1560 = vsel %vm1386, %v1555, 0
        %v1563 = vsel %vm1448, %v1558, 0
        %1565 = vmatprep.subr.bf16.mxu0 0
        %1566 = vmatpush1.bf16.msra.mxu0 %v1563
        %1567 = vmatprep.subr.bf16.mxu0 0
        %1568 = vmatpush1.bf16.msra.mxu0 0
        %1569 = vmatprep.subr.bf16.mxu0 0
        %1570 = vmatpush1.bf16.msra.mxu0 0
        %1571 = vmatprep.subr.bf16.mxu0 0
        %1572 = vmatpush1.bf16.msra.mxu0 0
        %1573 = vmatprep.subr.bf16.mxu0 0
        %1574 = vmatpush1.bf16.msra.mxu0 0
        %1575 = vmatprep.subr.bf16.mxu0 0
        %1576 = vmatpush1.bf16.msra.mxu0 0
        %1577 = vmatprep.subr.bf16.mxu0 0
        %1578 = vmatpush1.bf16.msra.mxu0 0
        %1579 = vmatprep.subr.bf16.mxu0 0
        %1580 = vmatpush1.bf16.msra.mxu0 0
        %1581 = vmatprep.subr.bf16.mxu0 0
        %1582 = vmatpush1.bf16.msra.mxu0 0
        %1583 = vmatprep.subr.bf16.mxu0 0
        %1584 = vmatpush1.bf16.msra.mxu0 0
        %1585 = vmatprep.subr.bf16.mxu0 0
        %1586 = vmatpush1.bf16.msra.mxu0 0
        %1587 = vmatprep.subr.bf16.mxu0 0
        %1588 = vmatpush1.bf16.msra.mxu0 0
        %1589 = vmatprep.subr.bf16.mxu0 0
        %1590 = vmatpush1.bf16.msra.mxu0 0
        %1591 = vmatprep.subr.bf16.mxu0 0
        %1592 = vmatpush1.bf16.msra.mxu0 0
        %1593 = vmatprep.subr.bf16.mxu0 0
        %1594 = vmatpush1.bf16.msra.mxu0 0
        %1595 = vmatprep.subr.bf16.mxu0 0
        %1596 = vmatpush1.bf16.msra.mxu0 0
        %1597 = vmatprep.mubr.bf16.mxu0 0
        %1598 = vmatmul.mubr.bf16.gmra.mrb[0].mxu0 %v1560
        %v1599 = vpop.f32.mrb[0].mxu0
        %v1600 = vadd.f32 0.0, %v1599
        %v1601 = vpop.f32.mrb[0].mxu0
        %v1602 = vpop.f32.mrb[0].mxu0
        %v1603 = vpop.f32.mrb[0].mxu0
        %1604 = vdwg.mxu0
        %1605 = vrot.lane.b32.xlu0 %v1383, 112
        %v1606 = vpop.permute.xlu0 %1605
        %1607 = vrot.lane.b32.xlu0 %v1384, 112
        %v1608 = vpop.permute.xlu0 %1607
        %v1610 = vsel %vm1386, %v1606, 0
        %v1613 = vsel %vm1386, %v1608, 0
        %1615 = vmatprep.subr.bf16.mxu0 0
        %1616 = vmatpush1.bf16.xpose.msra.mxu0 %v1613
        %1617 = vmatprep.subr.bf16.mxu0 0
        %1618 = vmatpush1.bf16.xpose.msra.mxu0 0
        %1619 = vmatprep.subr.bf16.mxu0 0
        %1620 = vmatpush1.bf16.xpose.msra.mxu0 0
        %1621 = vmatprep.subr.bf16.mxu0 0
        %1622 = vmatpush1.bf16.xpose.msra.mxu0 0
        %1623 = vmatprep.subr.bf16.mxu0 0
        %1624 = vmatpush1.bf16.xpose.msra.mxu0 0
        %1625 = vmatprep.subr.bf16.mxu0 0
        %1626 = vmatpush1.bf16.xpose.msra.mxu0 0
        %1627 = vmatprep.subr.bf16.mxu0 0
        %1628 = vmatpush1.bf16.xpose.msra.mxu0 0
        %1629 = vmatprep.subr.bf16.mxu0 0
        %1630 = vmatpush1.bf16.xpose.msra.mxu0 0
        %1631 = vmatprep.subr.bf16.mxu0 0
        %1632 = vmatpush1.bf16.xpose.msra.mxu0 0
        %1633 = vmatprep.subr.bf16.mxu0 0
        %1634 = vmatpush1.bf16.xpose.msra.mxu0 0
        %1635 = vmatprep.subr.bf16.mxu0 0
        %1636 = vmatpush1.bf16.xpose.msra.mxu0 0
        %1637 = vmatprep.subr.bf16.mxu0 0
        %1638 = vmatpush1.bf16.xpose.msra.mxu0 0
        %1639 = vmatprep.subr.bf16.mxu0 0
        %1640 = vmatpush1.bf16.xpose.msra.mxu0 0
        %1641 = vmatprep.subr.bf16.mxu0 0
        %1642 = vmatpush1.bf16.xpose.msra.mxu0 0
        %1643 = vmatprep.subr.bf16.mxu0 0
        %1644 = vmatpush1.bf16.xpose.msra.mxu0 0
        %1645 = vmatprep.subr.bf16.mxu0 0
        %1646 = vmatpush1.bf16.xpose.msra.mxu0 0
        %1647 = vmatprep.mubr.bf16.mxu0 0
        %1648 = vmatmul.mubr.bf16.gmra.mrb[0].mxu0 %v1610
        %v1649 = vpop.f32.mrb[0].mxu0
        %v1650 = vadd.f32 0.0, %v1649
        %v1651 = vpop.f32.mrb[0].mxu0
        %v1652 = vpop.f32.mrb[0].mxu0
        %v1653 = vpop.f32.mrb[0].mxu0
        %1654 = vdwg.mxu0
        %v1655 = vsel %vm1386, %v1650, -inf
        %1656 = vmax.xlane.f32.xlu0 %v1655
        %v1657 = vpop.xlane.xlu0 %1656
        %v1658 = vsub.f32 %v1650, %v1657
        %v1659 = vmul.f32 %v1658, 1.442695
        %v1660 = vpow.pop %v1659
        %v1661 = vsel %vm1386, %v1660, 0.0
        %1662 = vadd.xlane.f32.xlu0 %v1661
        %v1663 = vpop.xlane.xlu0 %1662
        %v1664 = vrcp.pop %v1663
        %v1665 = vmul.f32 %v1660, %v1664
        %v1666 = vpack.c.bf16 %v1665, %v1665
        %1667 = vrot.lane.b32.xlu0 %v1385, 112
        %v1668 = vpop.permute.xlu0 %1667
        %v1670 = vsel %vm1386, %v1666, 0
        %v1673 = vsel %vm1448, %v1668, 0
        %1675 = vmatprep.subr.bf16.mxu0 0
        %1676 = vmatpush1.bf16.msra.mxu0 %v1673
        %1677 = vmatprep.subr.bf16.mxu0 0
        %1678 = vmatpush1.bf16.msra.mxu0 0
        %1679 = vmatprep.subr.bf16.mxu0 0
        %1680 = vmatpush1.bf16.msra.mxu0 0
        %1681 = vmatprep.subr.bf16.mxu0 0
        %1682 = vmatpush1.bf16.msra.mxu0 0
        %1683 = vmatprep.subr.bf16.mxu0 0
        %1684 = vmatpush1.bf16.msra.mxu0 0
        %1685 = vmatprep.subr.bf16.mxu0 0
        %1686 = vmatpush1.bf16.msra.mxu0 0
        %1687 = vmatprep.subr.bf16.mxu0 0
        %1688 = vmatpush1.bf16.msra.mxu0 0
        %1689 = vmatprep.subr.bf16.mxu0 0
        %1690 = vmatpush1.bf16.msra.mxu0 0
        %1691 = vmatprep.subr.bf16.mxu0 0
        %1692 = vmatpush1.bf16.msra.mxu0 0
        %1693 = vmatprep.subr.bf16.mxu0 0
        %1694 = vmatpush1.bf16.msra.mxu0 0
        %1695 = vmatprep.subr.bf16.mxu0 0
        %1696 = vmatpush1.bf16.msra.mxu0 0
        %1697 = vmatprep.subr.bf16.mxu0 0
        %1698 = vmatpush1.bf16.msra.mxu0 0
        %1699 = vmatprep.subr.bf16.mxu0 0
        %1700 = vmatpush1.bf16.msra.mxu0 0
        %1701 = vmatprep.subr.bf16.mxu0 0
        %1702 = vmatpush1.bf16.msra.mxu0 0
        %1703 = vmatprep.subr.bf16.mxu0 0
        %1704 = vmatpush1.bf16.msra.mxu0 0
        %1705 = vmatprep.subr.bf16.mxu0 0
        %1706 = vmatpush1.bf16.msra.mxu0 0
        %1707 = vmatprep.mubr.bf16.mxu0 0
        %1708 = vmatmul.mubr.bf16.gmra.mrb[0].mxu0 %v1670
        %v1709 = vpop.f32.mrb[0].mxu0
        %v1710 = vadd.f32 0.0, %v1709
        %v1711 = vpop.f32.mrb[0].mxu0
        %v1712 = vpop.f32.mrb[0].mxu0
        %v1713 = vpop.f32.mrb[0].mxu0
        %1714 = vdwg.mxu0
        %1715 = vrot.lane.b32.xlu0 %v1383, 104
        %v1716 = vpop.permute.xlu0 %1715
        %1717 = vrot.lane.b32.xlu0 %v1384, 104
        %v1718 = vpop.permute.xlu0 %1717
        %v1720 = vsel %vm1386, %v1716, 0
        %v1723 = vsel %vm1386, %v1718, 0
        %1725 = vmatprep.subr.bf16.mxu0 0
        %1726 = vmatpush1.bf16.xpose.msra.mxu0 %v1723
        %1727 = vmatprep.subr.bf16.mxu0 0
        %1728 = vmatpush1.bf16.xpose.msra.mxu0 0
        %1729 = vmatprep.subr.bf16.mxu0 0
        %1730 = vmatpush1.bf16.xpose.msra.mxu0 0
        %1731 = vmatprep.subr.bf16.mxu0 0
        %1732 = vmatpush1.bf16.xpose.msra.mxu0 0
        %1733 = vmatprep.subr.bf16.mxu0 0
        %1734 = vmatpush1.bf16.xpose.msra.mxu0 0
        %1735 = vmatprep.subr.bf16.mxu0 0
        %1736 = vmatpush1.bf16.xpose.msra.mxu0 0
        %1737 = vmatprep.subr.bf16.mxu0 0
        %1738 = vmatpush1.bf16.xpose.msra.mxu0 0
        %1739 = vmatprep.subr.bf16.mxu0 0
        %1740 = vmatpush1.bf16.xpose.msra.mxu0 0
        %1741 = vmatprep.subr.bf16.mxu0 0
        %1742 = vmatpush1.bf16.xpose.msra.mxu0 0
        %1743 = vmatprep.subr.bf16.mxu0 0
        %1744 = vmatpush1.bf16.xpose.msra.mxu0 0
        %1745 = vmatprep.subr.bf16.mxu0 0
        %1746 = vmatpush1.bf16.xpose.msra.mxu0 0
        %1747 = vmatprep.subr.bf16.mxu0 0
        %1748 = vmatpush1.bf16.xpose.msra.mxu0 0
        %1749 = vmatprep.subr.bf16.mxu0 0
        %1750 = vmatpush1.bf16.xpose.msra.mxu0 0
        %1751 = vmatprep.subr.bf16.mxu0 0
        %1752 = vmatpush1.bf16.xpose.msra.mxu0 0
        %1753 = vmatprep.subr.bf16.mxu0 0
        %1754 = vmatpush1.bf16.xpose.msra.mxu0 0
        %1755 = vmatprep.subr.bf16.mxu0 0
        %1756 = vmatpush1.bf16.xpose.msra.mxu0 0
        %1757 = vmatprep.mubr.bf16.mxu0 0
        %1758 = vmatmul.mubr.bf16.gmra.mrb[0].mxu0 %v1720
        %v1759 = vpop.f32.mrb[0].mxu0
        %v1760 = vadd.f32 0.0, %v1759
        %v1761 = vpop.f32.mrb[0].mxu0
        %v1762 = vpop.f32.mrb[0].mxu0
        %v1763 = vpop.f32.mrb[0].mxu0
        %1764 = vdwg.mxu0
        %v1765 = vsel %vm1386, %v1760, -inf
        %1766 = vmax.xlane.f32.xlu0 %v1765
        %v1767 = vpop.xlane.xlu0 %1766
        %v1768 = vsub.f32 %v1760, %v1767
        %v1769 = vmul.f32 %v1768, 1.442695
        %v1770 = vpow.pop %v1769
        %v1771 = vsel %vm1386, %v1770, 0.0
        %1772 = vadd.xlane.f32.xlu0 %v1771
        %v1773 = vpop.xlane.xlu0 %1772
        %v1774 = vrcp.pop %v1773
        %v1775 = vmul.f32 %v1770, %v1774
        %v1776 = vpack.c.bf16 %v1775, %v1775
        %1777 = vrot.lane.b32.xlu0 %v1385, 104
        %v1778 = vpop.permute.xlu0 %1777
        %v1780 = vsel %vm1386, %v1776, 0
        %v1783 = vsel %vm1448, %v1778, 0
        %1785 = vmatprep.subr.bf16.mxu0 0
        %1786 = vmatpush1.bf16.msra.mxu0 %v1783
        %1787 = vmatprep.subr.bf16.mxu0 0
        %1788 = vmatpush1.bf16.msra.mxu0 0
        %1789 = vmatprep.subr.bf16.mxu0 0
        %1790 = vmatpush1.bf16.msra.mxu0 0
        %1791 = vmatprep.subr.bf16.mxu0 0
        %1792 = vmatpush1.bf16.msra.mxu0 0
        %1793 = vmatprep.subr.bf16.mxu0 0
        %1794 = vmatpush1.bf16.msra.mxu0 0
        %1795 = vmatprep.subr.bf16.mxu0 0
        %1796 = vmatpush1.bf16.msra.mxu0 0
        %1797 = vmatprep.subr.bf16.mxu0 0
        %1798 = vmatpush1.bf16.msra.mxu0 0
        %1799 = vmatprep.subr.bf16.mxu0 0
        %1800 = vmatpush1.bf16.msra.mxu0 0
        %1801 = vmatprep.subr.bf16.mxu0 0
        %1802 = vmatpush1.bf16.msra.mxu0 0
        %1803 = vmatprep.subr.bf16.mxu0 0
        %1804 = vmatpush1.bf16.msra.mxu0 0
        %1805 = vmatprep.subr.bf16.mxu0 0
        %1806 = vmatpush1.bf16.msra.mxu0 0
        %1807 = vmatprep.subr.bf16.mxu0 0
        %1808 = vmatpush1.bf16.msra.mxu0 0
        %1809 = vmatprep.subr.bf16.mxu0 0
        %1810 = vmatpush1.bf16.msra.mxu0 0
        %1811 = vmatprep.subr.bf16.mxu0 0
        %1812 = vmatpush1.bf16.msra.mxu0 0
        %1813 = vmatprep.subr.bf16.mxu0 0
        %1814 = vmatpush1.bf16.msra.mxu0 0
        %1815 = vmatprep.subr.bf16.mxu0 0
        %1816 = vmatpush1.bf16.msra.mxu0 0
        %1817 = vmatprep.mubr.bf16.mxu0 0
        %1818 = vmatmul.mubr.bf16.gmra.mrb[0].mxu0 %v1780
        %v1819 = vpop.f32.mrb[0].mxu0
        %v1820 = vadd.f32 0.0, %v1819
        %v1821 = vpop.f32.mrb[0].mxu0
        %v1822 = vpop.f32.mrb[0].mxu0
        %v1823 = vpop.f32.mrb[0].mxu0
        %1824 = vdwg.mxu0
        %1826 = vrot.lane.b32.xlu0 %v1600, 8
        %v1827 = vpop.permute.xlu0 %1826
        %1830 = vrot.lane.b32.xlu0 %v1710, 16
        %v1831 = vpop.permute.xlu0 %1830
        %1834 = vrot.lane.b32.xlu0 %v1820, 24
        %v1835 = vpop.permute.xlu0 %1834
        %v1837 = vsel %vm1386, %v1487, %v1827
        %vm1838 = vcmask 130048
        %v1839 = vsel %vm1838, %v1837, %v1831
        %vm1840 = vcmask 195584
        %v1841 = vsel %vm1840, %v1839, %v1835
        %v1842 = vpack.c.bf16 %v1841, %v1841
        %v1843 = vld [vmem:[%s23] sm:$0xf]
        %v1844 = vld [vmem:[%s23 + $0x4] sm:$0xf]
        %v1845 = vld [vmem:[%s23 + $0x8] sm:$0xf]
        %v1846 = vld [vmem:[%s23 + $0xc] sm:$0xf]
        %v1847 = vld [vmem:[%s25] sm:$0x1]
        %v1849 = vlaneseq
        %v1850 = vshrl.u32 %v1849, 7
        %v1851 = vsub.s32 0, %v1850
        %v1852 = vrot.slane %v1847, %v1851
        %v1858 = vunpack.c.l.b16 %v1843
        %v1859 = vunpack.c.l.b16 %v1844
        %v1860 = vunpack.c.l.b16 %v1845
        %v1861 = vunpack.c.l.b16 %v1846
        %v1862 = vpack.c.b16 %v1859, %v1858
        %v1863 = vpack.c.b16 %v1861, %v1860
        %v1867 = vsel %vm1209, %v1842, 0
        %1869 = vmatprep.subr.bf16.mxu0 0
        %1870 = vmatpush1.bf16.msra.mxu0 %v1862
        %1871 = vmatprep.subr.bf16.mxu0 0
        %1872 = vmatpush1.bf16.msra.mxu0 %v1863
        %1873 = vmatprep.subr.bf16.mxu0 0
        %1874 = vmatpush1.bf16.msra.mxu0 0
        %1875 = vmatprep.subr.bf16.mxu0 0
        %1876 = vmatpush1.bf16.msra.mxu0 0
        %1877 = vmatprep.subr.bf16.mxu0 0
        %1878 = vmatpush1.bf16.msra.mxu0 0
        %1879 = vmatprep.subr.bf16.mxu0 0
        %1880 = vmatpush1.bf16.msra.mxu0 0
        %1881 = vmatprep.subr.bf16.mxu0 0
        %1882 = vmatpush1.bf16.msra.mxu0 0
        %1883 = vmatprep.subr.bf16.mxu0 0
        %1884 = vmatpush1.bf16.msra.mxu0 0
        %1885 = vmatprep.subr.bf16.mxu0 0
        %1886 = vmatpush1.bf16.msra.mxu0 0
        %1887 = vmatprep.subr.bf16.mxu0 0
        %1888 = vmatpush1.bf16.msra.mxu0 0
        %1889 = vmatprep.subr.bf16.mxu0 0
        %1890 = vmatpush1.bf16.msra.mxu0 0
        %1891 = vmatprep.subr.bf16.mxu0 0
        %1892 = vmatpush1.bf16.msra.mxu0 0
        %1893 = vmatprep.subr.bf16.mxu0 0
        %1894 = vmatpush1.bf16.msra.mxu0 0
        %1895 = vmatprep.subr.bf16.mxu0 0
        %1896 = vmatpush1.bf16.msra.mxu0 0
        %1897 = vmatprep.subr.bf16.mxu0 0
        %1898 = vmatpush1.bf16.msra.mxu0 0
        %1899 = vmatprep.subr.bf16.mxu0 0
        %1900 = vmatpush1.bf16.msra.mxu0 0
        %1901 = vmatprep.mubr.bf16.mxu0 0
        %1902 = vmatmul.mubr.bf16.gmra.mrb[0].mxu0 %v1867
        %v1903 = vpop.f32.mrb[0].mxu0
        %v1904 = vadd.f32 %v1852, %v1903
        %v1905 = vpop.f32.mrb[0].mxu0
        %v1906 = vpop.f32.mrb[0].mxu0
        %v1907 = vpop.f32.mrb[0].mxu0
        %1908 = vdwg.mxu0
        %v1909 = vadd.f32 %v1177, %v1904
        %v1910 = vld [vmem:[#allocation2] sm:$0x1]
        %v1912 = vlaneseq
        %v1913 = vshrl.u32 %v1912, 7
        %v1914 = vsub.s32 0, %v1913
        %v1915 = vrot.slane %v1910, %v1914
        %v1917 = vmul.f32 %v1909, %v1915
        %v1918 = vld [vmem:[#allocation5] sm:$0x1]
        %v1920 = vlaneseq
        %v1921 = vshrl.u32 %v1920, 7
        %v1922 = vsub.s32 0, %v1921
        %v1923 = vrot.slane %v1918, %v1922
        %v1925 = vadd.f32 %v1917, %v1923
        %v1926 = vadd.f32 %v1925, %v1180
        %v1927 = vadd.f32 %v1178, %v1181
        %v1928 = vadd.f32 %v1179, %v1182
        %v1929 = vpack.c.bf16 %v1926, %v1926
        %v1930 = vld [vmem:[%s31] sm:$0xf]
        %v1931 = vld [vmem:[%s31 + $0x4] sm:$0xf]
        %v1932 = vld [vmem:[%s31 + $0x8] sm:$0xf]
        %v1933 = vld [vmem:[%s31 + $0xc] sm:$0xf]
        %v1934 = vld [vmem:[#allocation7] sm:$0x1]
        %v1936 = vlaneseq
        %v1937 = vshrl.u32 %v1936, 7
        %v1938 = vsub.s32 0, %v1937
        %v1939 = vrot.slane %v1934, %v1938
        %v1945 = vunpack.c.l.b16 %v1930
        %v1946 = vunpack.c.l.b16 %v1931
        %v1947 = vunpack.c.l.b16 %v1932
        %v1948 = vunpack.c.l.b16 %v1933
        %v1949 = vpack.c.b16 %v1946, %v1945
        %v1950 = vpack.c.b16 %v1948, %v1947
        %v1954 = vsel %vm1209, %v1929, 0
        %1956 = vmatprep.subr.bf16.mxu0 0
        %1957 = vmatpush1.bf16.msra.mxu0 %v1949
        %1958 = vmatprep.subr.bf16.mxu0 0
        %1959 = vmatpush1.bf16.msra.mxu0 %v1950
        %1960 = vmatprep.subr.bf16.mxu0 0
        %1961 = vmatpush1.bf16.msra.mxu0 0
        %1962 = vmatprep.subr.bf16.mxu0 0
        %1963 = vmatpush1.bf16.msra.mxu0 0
        %1964 = vmatprep.subr.bf16.mxu0 0
        %1965 = vmatpush1.bf16.msra.mxu0 0
        %1966 = vmatprep.subr.bf16.mxu0 0
        %1967 = vmatpush1.bf16.msra.mxu0 0
        %1968 = vmatprep.subr.bf16.mxu0 0
        %1969 = vmatpush1.bf16.msra.mxu0 0
        %1970 = vmatprep.subr.bf16.mxu0 0
        %1971 = vmatpush1.bf16.msra.mxu0 0
        %1972 = vmatprep.subr.bf16.mxu0 0
        %1973 = vmatpush1.bf16.msra.mxu0 0
        %1974 = vmatprep.subr.bf16.mxu0 0
        %1975 = vmatpush1.bf16.msra.mxu0 0
        %1976 = vmatprep.subr.bf16.mxu0 0
        %1977 = vmatpush1.bf16.msra.mxu0 0
        %1978 = vmatprep.subr.bf16.mxu0 0
        %1979 = vmatpush1.bf16.msra.mxu0 0
        %1980 = vmatprep.subr.bf16.mxu0 0
        %1981 = vmatpush1.bf16.msra.mxu0 0
        %1982 = vmatprep.subr.bf16.mxu0 0
        %1983 = vmatpush1.bf16.msra.mxu0 0
        %1984 = vmatprep.subr.bf16.mxu0 0
        %1985 = vmatpush1.bf16.msra.mxu0 0
        %1986 = vmatprep.subr.bf16.mxu0 0
        %1987 = vmatpush1.bf16.msra.mxu0 0
        %1988 = vmatprep.mubr.bf16.mxu0 0
        %1989 = vmatmul.mubr.bf16.gmra.mrb[0].mxu0 %v1954
        %v1990 = vpop.f32.mrb[0].mxu0
        %v1991 = vadd.f32 %v1939, %v1990
        %v1992 = vpop.f32.mrb[0].mxu0
        %v1993 = vpop.f32.mrb[0].mxu0
        %v1994 = vpop.f32.mrb[0].mxu0
        %1995 = vdwg.mxu0
        %v1996 = vpack.c.bf16 %v1928, %v1927
        %v1997 = vld [vmem:[%s33] sm:$0xf]
        %v1998 = vld [vmem:[%s33 + $0x4] sm:$0xf]
        %v1999 = vld [vmem:[%s33 + $0x8] sm:$0xf]
        %v2000 = vld [vmem:[%s33 + $0xc] sm:$0xf]
        %v2001 = vld [vmem:[#allocation8] sm:$0x1]
        %v2003 = vlaneseq
        %v2004 = vshrl.u32 %v2003, 7
        %v2005 = vsub.s32 0, %v2004
        %v2006 = vrot.slane %v2001, %v2005
        %v2012 = vunpack.c.l.b16 %v1997
        %v2013 = vunpack.c.l.b16 %v1998
        %v2014 = vunpack.c.l.b16 %v1999
        %v2015 = vunpack.c.l.b16 %v2000
        %v2016 = vpack.c.b16 %v2013, %v2012
        %v2017 = vpack.c.b16 %v2015, %v2014
        %v2021 = vsel %vm1209, %v1996, 0
        %2023 = vmatprep.subr.bf16.mxu0 0
        %2024 = vmatpush1.bf16.msra.mxu0 %v2016
        %2025 = vmatprep.subr.bf16.mxu0 0
        %2026 = vmatpush1.bf16.msra.mxu0 %v2017
        %2027 = vmatprep.subr.bf16.mxu0 0
        %2028 = vmatpush1.bf16.msra.mxu0 0
        %2029 = vmatprep.subr.bf16.mxu0 0
        %2030 = vmatpush1.bf16.msra.mxu0 0
        %2031 = vmatprep.subr.bf16.mxu0 0
        %2032 = vmatpush1.bf16.msra.mxu0 0
        %2033 = vmatprep.subr.bf16.mxu0 0
        %2034 = vmatpush1.bf16.msra.mxu0 0
        %2035 = vmatprep.subr.bf16.mxu0 0
        %2036 = vmatpush1.bf16.msra.mxu0 0
        %2037 = vmatprep.subr.bf16.mxu0 0
        %2038 = vmatpush1.bf16.msra.mxu0 0
        %2039 = vmatprep.subr.bf16.mxu0 0
        %2040 = vmatpush1.bf16.msra.mxu0 0
        %2041 = vmatprep.subr.bf16.mxu0 0
        %2042 = vmatpush1.bf16.msra.mxu0 0
        %2043 = vmatprep.subr.bf16.mxu0 0
        %2044 = vmatpush1.bf16.msra.mxu0 0
        %2045 = vmatprep.subr.bf16.mxu0 0
        %2046 = vmatpush1.bf16.msra.mxu0 0
        %2047 = vmatprep.subr.bf16.mxu0 0
        %2048 = vmatpush1.bf16.msra.mxu0 0
        %2049 = vmatprep.subr.bf16.mxu0 0
        %2050 = vmatpush1.bf16.msra.mxu0 0
        %2051 = vmatprep.subr.bf16.mxu0 0
        %2052 = vmatpush1.bf16.msra.mxu0 0
        %2053 = vmatprep.subr.bf16.mxu0 0
        %2054 = vmatpush1.bf16.msra.mxu0 0
        %2055 = vmatprep.mubr.bf16.mxu0 0
        %2056 = vmatmul.mubr.bf16.gmra.mrb[0].mxu0 %v2021
        %v2057 = vpop.f32.mrb[0].mxu0
        %v2058 = vadd.f32 %v2006, %v2057
        %v2059 = vpop.f32.mrb[0].mxu0
        %v2060 = vpop.f32.mrb[0].mxu0
        %v2061 = vadd.f32 %v2006, %v2060
        %v2062 = vpop.f32.mrb[0].mxu0
        %2063 = vdwg.mxu0
        %v2064 = vpack.c.bf16 %v1179, %v1178
        %v2065 = vld [vmem:[%s35] sm:$0xf]
        %v2066 = vld [vmem:[%s35 + $0x4] sm:$0xf]
        %v2067 = vld [vmem:[%s35 + $0x8] sm:$0xf]
        %v2068 = vld [vmem:[%s35 + $0xc] sm:$0xf]
        %v2069 = vld [vmem:[#allocation10] sm:$0x1]
        %v2071 = vlaneseq
        %v2072 = vshrl.u32 %v2071, 7
        %v2073 = vsub.s32 0, %v2072
        %v2074 = vrot.slane %v2069, %v2073
        %v2080 = vunpack.c.l.b16 %v2065
        %v2081 = vunpack.c.l.b16 %v2066
        %v2082 = vunpack.c.l.b16 %v2067
        %v2083 = vunpack.c.l.b16 %v2068
        %v2084 = vpack.c.b16 %v2081, %v2080
        %v2085 = vpack.c.b16 %v2083, %v2082
        %v2089 = vsel %vm1209, %v2064, 0
        %2091 = vmatprep.subr.bf16.mxu0 0
        %2092 = vmatpush1.bf16.msra.mxu0 %v2084
        %2093 = vmatprep.subr.bf16.mxu0 0
        %2094 = vmatpush1.bf16.msra.mxu0 %v2085
        %2095 = vmatprep.subr.bf16.mxu0 0
        %2096 = vmatpush1.bf16.msra.mxu0 0
        %2097 = vmatprep.subr.bf16.mxu0 0
        %2098 = vmatpush1.bf16.msra.mxu0 0
        %2099 = vmatprep.subr.bf16.mxu0 0
        %2100 = vmatpush1.bf16.msra.mxu0 0
        %2101 = vmatprep.subr.bf16.mxu0 0
        %2102 = vmatpush1.bf16.msra.mxu0 0
        %2103 = vmatprep.subr.bf16.mxu0 0
        %2104 = vmatpush1.bf16.msra.mxu0 0
        %2105 = vmatprep.subr.bf16.mxu0 0
        %2106 = vmatpush1.bf16.msra.mxu0 0
        %2107 = vmatprep.subr.bf16.mxu0 0
        %2108 = vmatpush1.bf16.msra.mxu0 0
        %2109 = vmatprep.subr.bf16.mxu0 0
        %2110 = vmatpush1.bf16.msra.mxu0 0
        %2111 = vmatprep.subr.bf16.mxu0 0
        %2112 = vmatpush1.bf16.msra.mxu0 0
        %2113 = vmatprep.subr.bf16.mxu0 0
        %2114 = vmatpush1.bf16.msra.mxu0 0
        %2115 = vmatprep.subr.bf16.mxu0 0
        %2116 = vmatpush1.bf16.msra.mxu0 0
        %2117 = vmatprep.subr.bf16.mxu0 0
        %2118 = vmatpush1.bf16.msra.mxu0 0
        %2119 = vmatprep.subr.bf16.mxu0 0
        %2120 = vmatpush1.bf16.msra.mxu0 0
        %2121 = vmatprep.subr.bf16.mxu0 0
        %2122 = vmatpush1.bf16.msra.mxu0 0
        %2123 = vmatprep.mubr.bf16.mxu0 0
        %2124 = vmatmul.mubr.bf16.gmra.mrb[0].mxu0 %v2089
        %v2125 = vpop.f32.mrb[0].mxu0
        %v2126 = vadd.f32 %v2074, %v2125
        %v2127 = vpop.f32.mrb[0].mxu0
        %v2128 = vpop.f32.mrb[0].mxu0
        %v2129 = vadd.f32 %v2074, %v2128
        %v2130 = vpop.f32.mrb[0].mxu0
        %2131 = vdwg.mxu0
        %v2132 = vpack.c.bf16 %v1991, %v1991
        %v2133 = vpack.c.bf16 %v2061, %v2058
        %v2134 = vpack.c.bf16 %v2129, %v2126
        %v2136 = vlaneseq
        %v2137 = vshrl.u32 %v2136, 7
        %v2138 = vsub.s32 0, %v2137
        %v2139 = vrot.slane %v1183, %v2138
        %v2142 = vsel %vm1386, %v2132, 0
        %v2145 = vsel %vm1386, %v2133, 0
        %2147 = vmatprep.subr.bf16.mxu0 0
        %2148 = vmatpush1.bf16.xpose.msra.mxu0 %v2145
        %2149 = vmatprep.subr.bf16.mxu0 0
        %2150 = vmatpush1.bf16.xpose.msra.mxu0 0
        %2151 = vmatprep.subr.bf16.mxu0 0
        %2152 = vmatpush1.bf16.xpose.msra.mxu0 0
        %2153 = vmatprep.subr.bf16.mxu0 0
        %2154 = vmatpush1.bf16.xpose.msra.mxu0 0
        %2155 = vmatprep.subr.bf16.mxu0 0
        %2156 = vmatpush1.bf16.xpose.msra.mxu0 0
        %2157 = vmatprep.subr.bf16.mxu0 0
        %2158 = vmatpush1.bf16.xpose.msra.mxu0 0
        %2159 = vmatprep.subr.bf16.mxu0 0
        %2160 = vmatpush1.bf16.xpose.msra.mxu0 0
        %2161 = vmatprep.subr.bf16.mxu0 0
        %2162 = vmatpush1.bf16.xpose.msra.mxu0 0
        %2163 = vmatprep.subr.bf16.mxu0 0
        %2164 = vmatpush1.bf16.xpose.msra.mxu0 0
        %2165 = vmatprep.subr.bf16.mxu0 0
        %2166 = vmatpush1.bf16.xpose.msra.mxu0 0
        %2167 = vmatprep.subr.bf16.mxu0 0
        %2168 = vmatpush1.bf16.xpose.msra.mxu0 0
        %2169 = vmatprep.subr.bf16.mxu0 0
        %2170 = vmatpush1.bf16.xpose.msra.mxu0 0
        %2171 = vmatprep.subr.bf16.mxu0 0
        %2172 = vmatpush1.bf16.xpose.msra.mxu0 0
        %2173 = vmatprep.subr.bf16.mxu0 0
        %2174 = vmatpush1.bf16.xpose.msra.mxu0 0
        %2175 = vmatprep.subr.bf16.mxu0 0
        %2176 = vmatpush1.bf16.xpose.msra.mxu0 0
        %2177 = vmatprep.subr.bf16.mxu0 0
        %2178 = vmatpush1.bf16.xpose.msra.mxu0 0
        %2179 = vmatprep.mubr.bf16.mxu0 0
        %2180 = vmatmul.mubr.bf16.gmra.mrb[0].mxu0 %v2142
        %v2181 = vpop.f32.mrb[0].mxu0
        %v2182 = vadd.f32 %v2139, %v2181
        %v2183 = vpop.f32.mrb[0].mxu0
        %v2184 = vpop.f32.mrb[0].mxu0
        %v2185 = vpop.f32.mrb[0].mxu0
        %2186 = vdwg.mxu0
        %v2187 = vsel %vm1838, %v2182, -inf
        %2188 = vmax.xlane.f32.xlu0 %v2187
        %v2189 = vpop.xlane.xlu0 %2188
        %v2190 = vsub.f32 %v2182, %v2189
        %v2191 = vmul.f32 %v2190, 1.442695
        %v2192 = vpow.pop %v2191
        %v2193 = vsel %vm1838, %v2192, 0.0
        %2194 = vadd.xlane.f32.xlu0 %v2193
        %v2195 = vpop.xlane.xlu0 %2194
        %v2196 = vrcp.pop %v2195
        %v2197 = vmul.f32 %v2192, %v2196
        %v2198 = vpack.c.bf16 %v2197, %v2197
        %v2200 = vsel %vm1838, %v2198, 0
        %2202 = vmatprep.subr.bf16.mxu0 0
        %2203 = vmatpush1.bf16.msra.mxu0 %v2134
        %2204 = vmatprep.subr.bf16.mxu0 0
        %2205 = vmatpush1.bf16.msra.mxu0 0
        %2206 = vmatprep.subr.bf16.mxu0 0
        %2207 = vmatpush1.bf16.msra.mxu0 0
        %2208 = vmatprep.subr.bf16.mxu0 0
        %2209 = vmatpush1.bf16.msra.mxu0 0
        %2210 = vmatprep.subr.bf16.mxu0 0
        %2211 = vmatpush1.bf16.msra.mxu0 0
        %2212 = vmatprep.subr.bf16.mxu0 0
        %2213 = vmatpush1.bf16.msra.mxu0 0
        %2214 = vmatprep.subr.bf16.mxu0 0
        %2215 = vmatpush1.bf16.msra.mxu0 0
        %2216 = vmatprep.subr.bf16.mxu0 0
        %2217 = vmatpush1.bf16.msra.mxu0 0
        %2218 = vmatprep.subr.bf16.mxu0 0
        %2219 = vmatpush1.bf16.msra.mxu0 0
        %2220 = vmatprep.subr.bf16.mxu0 0
        %2221 = vmatpush1.bf16.msra.mxu0 0
        %2222 = vmatprep.subr.bf16.mxu0 0
        %2223 = vmatpush1.bf16.msra.mxu0 0
        %2224 = vmatprep.subr.bf16.mxu0 0
        %2225 = vmatpush1.bf16.msra.mxu0 0
        %2226 = vmatprep.subr.bf16.mxu0 0
        %2227 = vmatpush1.bf16.msra.mxu0 0
        %2228 = vmatprep.subr.bf16.mxu0 0
        %2229 = vmatpush1.bf16.msra.mxu0 0
        %2230 = vmatprep.subr.bf16.mxu0 0
        %2231 = vmatpush1.bf16.msra.mxu0 0
        %2232 = vmatprep.subr.bf16.mxu0 0
        %2233 = vmatpush1.bf16.msra.mxu0 0
        %2234 = vmatprep.mubr.bf16.mxu0 0
        %2235 = vmatmul.mubr.bf16.gmra.mrb[0].mxu0 %v2200
        %v2236 = vpop.f32.mrb[0].mxu0
        %v2237 = vadd.f32 0.0, %v2236
        %v2238 = vpop.f32.mrb[0].mxu0
        %v2239 = vpop.f32.mrb[0].mxu0
        %v2240 = vpop.f32.mrb[0].mxu0
        %2241 = vdwg.mxu0
        %2243 = vrot.lane.b32.xlu0 %v2132, 120
        %v2244 = vpop.permute.xlu0 %2243
        %2246 = vrot.lane.b32.xlu0 %v2133, 120
        %v2247 = vpop.permute.xlu0 %2246
        %v2249 = vsel %vm1386, %v2244, 0
        %v2252 = vsel %vm1386, %v2247, 0
        %2254 = vmatprep.subr.bf16.mxu0 0
        %2255 = vmatpush1.bf16.xpose.msra.mxu0 %v2252
        %2256 = vmatprep.subr.bf16.mxu0 0
        %2257 = vmatpush1.bf16.xpose.msra.mxu0 0
        %2258 = vmatprep.subr.bf16.mxu0 0
        %2259 = vmatpush1.bf16.xpose.msra.mxu0 0
        %2260 = vmatprep.subr.bf16.mxu0 0
        %2261 = vmatpush1.bf16.xpose.msra.mxu0 0
        %2262 = vmatprep.subr.bf16.mxu0 0
        %2263 = vmatpush1.bf16.xpose.msra.mxu0 0
        %2264 = vmatprep.subr.bf16.mxu0 0
        %2265 = vmatpush1.bf16.xpose.msra.mxu0 0
        %2266 = vmatprep.subr.bf16.mxu0 0
        %2267 = vmatpush1.bf16.xpose.msra.mxu0 0
        %2268 = vmatprep.subr.bf16.mxu0 0
        %2269 = vmatpush1.bf16.xpose.msra.mxu0 0
        %2270 = vmatprep.subr.bf16.mxu0 0
        %2271 = vmatpush1.bf16.xpose.msra.mxu0 0
        %2272 = vmatprep.subr.bf16.mxu0 0
        %2273 = vmatpush1.bf16.xpose.msra.mxu0 0
        %2274 = vmatprep.subr.bf16.mxu0 0
        %2275 = vmatpush1.bf16.xpose.msra.mxu0 0
        %2276 = vmatprep.subr.bf16.mxu0 0
        %2277 = vmatpush1.bf16.xpose.msra.mxu0 0
        %2278 = vmatprep.subr.bf16.mxu0 0
        %2279 = vmatpush1.bf16.xpose.msra.mxu0 0
        %2280 = vmatprep.subr.bf16.mxu0 0
        %2281 = vmatpush1.bf16.xpose.msra.mxu0 0
        %2282 = vmatprep.subr.bf16.mxu0 0
        %2283 = vmatpush1.bf16.xpose.msra.mxu0 0
        %2284 = vmatprep.subr.bf16.mxu0 0
        %2285 = vmatpush1.bf16.xpose.msra.mxu0 0
        %2286 = vmatprep.mubr.bf16.mxu0 0
        %2287 = vmatmul.mubr.bf16.gmra.mrb[0].mxu0 %v2249
        %v2288 = vpop.f32.mrb[0].mxu0
        %v2289 = vadd.f32 %v2139, %v2288
        %v2290 = vpop.f32.mrb[0].mxu0
        %v2291 = vpop.f32.mrb[0].mxu0
        %v2292 = vpop.f32.mrb[0].mxu0
        %2293 = vdwg.mxu0
        %v2294 = vsel %vm1838, %v2289, -inf
        %2295 = vmax.xlane.f32.xlu0 %v2294
        %v2296 = vpop.xlane.xlu0 %2295
        %v2297 = vsub.f32 %v2289, %v2296
        %v2298 = vmul.f32 %v2297, 1.442695
        %v2299 = vpow.pop %v2298
        %v2300 = vsel %vm1838, %v2299, 0.0
        %2301 = vadd.xlane.f32.xlu0 %v2300
        %v2302 = vpop.xlane.xlu0 %2301
        %v2303 = vrcp.pop %v2302
        %v2304 = vmul.f32 %v2299, %v2303
        %v2305 = vpack.c.bf16 %v2304, %v2304
        %2307 = vrot.lane.b32.xlu0 %v2134, 120
        %v2308 = vpop.permute.xlu0 %2307
        %v2311 = vsel %vm1838, %v2305, 0
        %2313 = vmatprep.subr.bf16.mxu0 0
        %2314 = vmatpush1.bf16.msra.mxu0 %v2308
        %2315 = vmatprep.subr.bf16.mxu0 0
        %2316 = vmatpush1.bf16.msra.mxu0 0
        %2317 = vmatprep.subr.bf16.mxu0 0
        %2318 = vmatpush1.bf16.msra.mxu0 0
        %2319 = vmatprep.subr.bf16.mxu0 0
        %2320 = vmatpush1.bf16.msra.mxu0 0
        %2321 = vmatprep.subr.bf16.mxu0 0
        %2322 = vmatpush1.bf16.msra.mxu0 0
        %2323 = vmatprep.subr.bf16.mxu0 0
        %2324 = vmatpush1.bf16.msra.mxu0 0
        %2325 = vmatprep.subr.bf16.mxu0 0
        %2326 = vmatpush1.bf16.msra.mxu0 0
        %2327 = vmatprep.subr.bf16.mxu0 0
        %2328 = vmatpush1.bf16.msra.mxu0 0
        %2329 = vmatprep.subr.bf16.mxu0 0
        %2330 = vmatpush1.bf16.msra.mxu0 0
        %2331 = vmatprep.subr.bf16.mxu0 0
        %2332 = vmatpush1.bf16.msra.mxu0 0
        %2333 = vmatprep.subr.bf16.mxu0 0
        %2334 = vmatpush1.bf16.msra.mxu0 0
        %2335 = vmatprep.subr.bf16.mxu0 0
        %2336 = vmatpush1.bf16.msra.mxu0 0
        %2337 = vmatprep.subr.bf16.mxu0 0
        %2338 = vmatpush1.bf16.msra.mxu0 0
        %2339 = vmatprep.subr.bf16.mxu0 0
        %2340 = vmatpush1.bf16.msra.mxu0 0
        %2341 = vmatprep.subr.bf16.mxu0 0
        %2342 = vmatpush1.bf16.msra.mxu0 0
        %2343 = vmatprep.subr.bf16.mxu0 0
        %2344 = vmatpush1.bf16.msra.mxu0 0
        %2345 = vmatprep.mubr.bf16.mxu0 0
        %2346 = vmatmul.mubr.bf16.gmra.mrb[0].mxu0 %v2311
        %v2347 = vpop.f32.mrb[0].mxu0
        %v2348 = vadd.f32 0.0, %v2347
        %v2349 = vpop.f32.mrb[0].mxu0
        %v2350 = vpop.f32.mrb[0].mxu0
        %v2351 = vpop.f32.mrb[0].mxu0
        %2352 = vdwg.mxu0
        %2353 = vrot.lane.b32.xlu0 %v2132, 112
        %v2354 = vpop.permute.xlu0 %2353
        %2355 = vrot.lane.b32.xlu0 %v2133, 112
        %v2356 = vpop.permute.xlu0 %2355
        %v2358 = vsel %vm1386, %v2354, 0
        %v2361 = vsel %vm1386, %v2356, 0
        %2363 = vmatprep.subr.bf16.mxu0 0
        %2364 = vmatpush1.bf16.xpose.msra.mxu0 %v2361
        %2365 = vmatprep.subr.bf16.mxu0 0
        %2366 = vmatpush1.bf16.xpose.msra.mxu0 0
        %2367 = vmatprep.subr.bf16.mxu0 0
        %2368 = vmatpush1.bf16.xpose.msra.mxu0 0
        %2369 = vmatprep.subr.bf16.mxu0 0
        %2370 = vmatpush1.bf16.xpose.msra.mxu0 0
        %2371 = vmatprep.subr.bf16.mxu0 0
        %2372 = vmatpush1.bf16.xpose.msra.mxu0 0
        %2373 = vmatprep.subr.bf16.mxu0 0
        %2374 = vmatpush1.bf16.xpose.msra.mxu0 0
        %2375 = vmatprep.subr.bf16.mxu0 0
        %2376 = vmatpush1.bf16.xpose.msra.mxu0 0
        %2377 = vmatprep.subr.bf16.mxu0 0
        %2378 = vmatpush1.bf16.xpose.msra.mxu0 0
        %2379 = vmatprep.subr.bf16.mxu0 0
        %2380 = vmatpush1.bf16.xpose.msra.mxu0 0
        %2381 = vmatprep.subr.bf16.mxu0 0
        %2382 = vmatpush1.bf16.xpose.msra.mxu0 0
        %2383 = vmatprep.subr.bf16.mxu0 0
        %2384 = vmatpush1.bf16.xpose.msra.mxu0 0
        %2385 = vmatprep.subr.bf16.mxu0 0
        %2386 = vmatpush1.bf16.xpose.msra.mxu0 0
        %2387 = vmatprep.subr.bf16.mxu0 0
        %2388 = vmatpush1.bf16.xpose.msra.mxu0 0
        %2389 = vmatprep.subr.bf16.mxu0 0
        %2390 = vmatpush1.bf16.xpose.msra.mxu0 0
        %2391 = vmatprep.subr.bf16.mxu0 0
        %2392 = vmatpush1.bf16.xpose.msra.mxu0 0
        %2393 = vmatprep.subr.bf16.mxu0 0
        %2394 = vmatpush1.bf16.xpose.msra.mxu0 0
        %2395 = vmatprep.mubr.bf16.mxu0 0
        %2396 = vmatmul.mubr.bf16.gmra.mrb[0].mxu0 %v2358
        %v2397 = vpop.f32.mrb[0].mxu0
        %v2398 = vadd.f32 %v2139, %v2397
        %v2399 = vpop.f32.mrb[0].mxu0
        %v2400 = vpop.f32.mrb[0].mxu0
        %v2401 = vpop.f32.mrb[0].mxu0
        %2402 = vdwg.mxu0
        %v2403 = vsel %vm1838, %v2398, -inf
        %2404 = vmax.xlane.f32.xlu0 %v2403
        %v2405 = vpop.xlane.xlu0 %2404
        %v2406 = vsub.f32 %v2398, %v2405
        %v2407 = vmul.f32 %v2406, 1.442695
        %v2408 = vpow.pop %v2407
        %v2409 = vsel %vm1838, %v2408, 0.0
        %2410 = vadd.xlane.f32.xlu0 %v2409
        %v2411 = vpop.xlane.xlu0 %2410
        %v2412 = vrcp.pop %v2411
        %v2413 = vmul.f32 %v2408, %v2412
        %v2414 = vpack.c.bf16 %v2413, %v2413
        %2415 = vrot.lane.b32.xlu0 %v2134, 112
        %v2416 = vpop.permute.xlu0 %2415
        %v2419 = vsel %vm1838, %v2414, 0
        %2421 = vmatprep.subr.bf16.mxu0 0
        %2422 = vmatpush1.bf16.msra.mxu0 %v2416
        %2423 = vmatprep.subr.bf16.mxu0 0
        %2424 = vmatpush1.bf16.msra.mxu0 0
        %2425 = vmatprep.subr.bf16.mxu0 0
        %2426 = vmatpush1.bf16.msra.mxu0 0
        %2427 = vmatprep.subr.bf16.mxu0 0
        %2428 = vmatpush1.bf16.msra.mxu0 0
        %2429 = vmatprep.subr.bf16.mxu0 0
        %2430 = vmatpush1.bf16.msra.mxu0 0
        %2431 = vmatprep.subr.bf16.mxu0 0
        %2432 = vmatpush1.bf16.msra.mxu0 0
        %2433 = vmatprep.subr.bf16.mxu0 0
        %2434 = vmatpush1.bf16.msra.mxu0 0
        %2435 = vmatprep.subr.bf16.mxu0 0
        %2436 = vmatpush1.bf16.msra.mxu0 0
        %2437 = vmatprep.subr.bf16.mxu0 0
        %2438 = vmatpush1.bf16.msra.mxu0 0
        %2439 = vmatprep.subr.bf16.mxu0 0
        %2440 = vmatpush1.bf16.msra.mxu0 0
        %2441 = vmatprep.subr.bf16.mxu0 0
        %2442 = vmatpush1.bf16.msra.mxu0 0
        %2443 = vmatprep.subr.bf16.mxu0 0
        %2444 = vmatpush1.bf16.msra.mxu0 0
        %2445 = vmatprep.subr.bf16.mxu0 0
        %2446 = vmatpush1.bf16.msra.mxu0 0
        %2447 = vmatprep.subr.bf16.mxu0 0
        %2448 = vmatpush1.bf16.msra.mxu0 0
        %2449 = vmatprep.subr.bf16.mxu0 0
        %2450 = vmatpush1.bf16.msra.mxu0 0
        %2451 = vmatprep.subr.bf16.mxu0 0
        %2452 = vmatpush1.bf16.msra.mxu0 0
        %2453 = vmatprep.mubr.bf16.mxu0 0
        %2454 = vmatmul.mubr.bf16.gmra.mrb[0].mxu0 %v2419
        %v2455 = vpop.f32.mrb[0].mxu0
        %v2456 = vadd.f32 0.0, %v2455
        %v2457 = vpop.f32.mrb[0].mxu0
        %v2458 = vpop.f32.mrb[0].mxu0
        %v2459 = vpop.f32.mrb[0].mxu0
        %2460 = vdwg.mxu0
        %2461 = vrot.lane.b32.xlu0 %v2132, 104
        %v2462 = vpop.permute.xlu0 %2461
        %2463 = vrot.lane.b32.xlu0 %v2133, 104
        %v2464 = vpop.permute.xlu0 %2463
        %v2466 = vsel %vm1386, %v2462, 0
        %v2469 = vsel %vm1386, %v2464, 0
        %2471 = vmatprep.subr.bf16.mxu0 0
        %2472 = vmatpush1.bf16.xpose.msra.mxu0 %v2469
        %2473 = vmatprep.subr.bf16.mxu0 0
        %2474 = vmatpush1.bf16.xpose.msra.mxu0 0
        %2475 = vmatprep.subr.bf16.mxu0 0
        %2476 = vmatpush1.bf16.xpose.msra.mxu0 0
        %2477 = vmatprep.subr.bf16.mxu0 0
        %2478 = vmatpush1.bf16.xpose.msra.mxu0 0
        %2479 = vmatprep.subr.bf16.mxu0 0
        %2480 = vmatpush1.bf16.xpose.msra.mxu0 0
        %2481 = vmatprep.subr.bf16.mxu0 0
        %2482 = vmatpush1.bf16.xpose.msra.mxu0 0
        %2483 = vmatprep.subr.bf16.mxu0 0
        %2484 = vmatpush1.bf16.xpose.msra.mxu0 0
        %2485 = vmatprep.subr.bf16.mxu0 0
        %2486 = vmatpush1.bf16.xpose.msra.mxu0 0
        %2487 = vmatprep.subr.bf16.mxu0 0
        %2488 = vmatpush1.bf16.xpose.msra.mxu0 0
        %2489 = vmatprep.subr.bf16.mxu0 0
        %2490 = vmatpush1.bf16.xpose.msra.mxu0 0
        %2491 = vmatprep.subr.bf16.mxu0 0
        %2492 = vmatpush1.bf16.xpose.msra.mxu0 0
        %2493 = vmatprep.subr.bf16.mxu0 0
        %2494 = vmatpush1.bf16.xpose.msra.mxu0 0
        %2495 = vmatprep.subr.bf16.mxu0 0
        %2496 = vmatpush1.bf16.xpose.msra.mxu0 0
        %2497 = vmatprep.subr.bf16.mxu0 0
        %2498 = vmatpush1.bf16.xpose.msra.mxu0 0
        %2499 = vmatprep.subr.bf16.mxu0 0
        %2500 = vmatpush1.bf16.xpose.msra.mxu0 0
        %2501 = vmatprep.subr.bf16.mxu0 0
        %2502 = vmatpush1.bf16.xpose.msra.mxu0 0
        %2503 = vmatprep.mubr.bf16.mxu0 0
        %2504 = vmatmul.mubr.bf16.gmra.mrb[0].mxu0 %v2466
        %v2505 = vpop.f32.mrb[0].mxu0
        %v2506 = vadd.f32 %v2139, %v2505
        %v2507 = vpop.f32.mrb[0].mxu0
        %v2508 = vpop.f32.mrb[0].mxu0
        %v2509 = vpop.f32.mrb[0].mxu0
        %2510 = vdwg.mxu0
        %v2511 = vsel %vm1838, %v2506, -inf
        %2512 = vmax.xlane.f32.xlu0 %v2511
        %v2513 = vpop.xlane.xlu0 %2512
        %v2514 = vsub.f32 %v2506, %v2513
        %v2515 = vmul.f32 %v2514, 1.442695
        %v2516 = vpow.pop %v2515
        %v2517 = vsel %vm1838, %v2516, 0.0
        %2518 = vadd.xlane.f32.xlu0 %v2517
        %v2519 = vpop.xlane.xlu0 %2518
        %v2520 = vrcp.pop %v2519
        %v2521 = vmul.f32 %v2516, %v2520
        %v2522 = vpack.c.bf16 %v2521, %v2521
        %2523 = vrot.lane.b32.xlu0 %v2134, 104
        %v2524 = vpop.permute.xlu0 %2523
        %v2527 = vsel %vm1838, %v2522, 0
        %2529 = vmatprep.subr.bf16.mxu0 0
        %2530 = vmatpush1.bf16.msra.mxu0 %v2524
        %2531 = vmatprep.subr.bf16.mxu0 0
        %2532 = vmatpush1.bf16.msra.mxu0 0
        %2533 = vmatprep.subr.bf16.mxu0 0
        %2534 = vmatpush1.bf16.msra.mxu0 0
        %2535 = vmatprep.subr.bf16.mxu0 0
        %2536 = vmatpush1.bf16.msra.mxu0 0
        %2537 = vmatprep.subr.bf16.mxu0 0
        %2538 = vmatpush1.bf16.msra.mxu0 0
        %2539 = vmatprep.subr.bf16.mxu0 0
        %2540 = vmatpush1.bf16.msra.mxu0 0
        %2541 = vmatprep.subr.bf16.mxu0 0
        %2542 = vmatpush1.bf16.msra.mxu0 0
        %2543 = vmatprep.subr.bf16.mxu0 0
        %2544 = vmatpush1.bf16.msra.mxu0 0
        %2545 = vmatprep.subr.bf16.mxu0 0
        %2546 = vmatpush1.bf16.msra.mxu0 0
        %2547 = vmatprep.subr.bf16.mxu0 0
        %2548 = vmatpush1.bf16.msra.mxu0 0
        %2549 = vmatprep.subr.bf16.mxu0 0
        %2550 = vmatpush1.bf16.msra.mxu0 0
        %2551 = vmatprep.subr.bf16.mxu0 0
        %2552 = vmatpush1.bf16.msra.mxu0 0
        %2553 = vmatprep.subr.bf16.mxu0 0
        %2554 = vmatpush1.bf16.msra.mxu0 0
        %2555 = vmatprep.subr.bf16.mxu0 0
        %2556 = vmatpush1.bf16.msra.mxu0 0
        %2557 = vmatprep.subr.bf16.mxu0 0
        %2558 = vmatpush1.bf16.msra.mxu0 0
        %2559 = vmatprep.subr.bf16.mxu0 0
        %2560 = vmatpush1.bf16.msra.mxu0 0
        %2561 = vmatprep.mubr.bf16.mxu0 0
        %2562 = vmatmul.mubr.bf16.gmra.mrb[0].mxu0 %v2527
        %v2563 = vpop.f32.mrb[0].mxu0
        %v2564 = vadd.f32 0.0, %v2563
        %v2565 = vpop.f32.mrb[0].mxu0
        %v2566 = vpop.f32.mrb[0].mxu0
        %v2567 = vpop.f32.mrb[0].mxu0
        %2568 = vdwg.mxu0
        %2570 = vrot.lane.b32.xlu0 %v2348, 8
        %v2571 = vpop.permute.xlu0 %2570
        %2574 = vrot.lane.b32.xlu0 %v2456, 16
        %v2575 = vpop.permute.xlu0 %2574
        %2578 = vrot.lane.b32.xlu0 %v2564, 24
        %v2579 = vpop.permute.xlu0 %2578
        %v2581 = vsel %vm1386, %v2237, %v2571
        %v2582 = vsel %vm1838, %v2581, %v2575
        %v2583 = vsel %vm1840, %v2582, %v2579
        %v2584 = vpack.c.bf16 %v2583, %v2583
        %v2585 = vld [vmem:[%s43] sm:$0xf]
        %v2586 = vld [vmem:[%s43 + $0x4] sm:$0xf]
        %v2587 = vld [vmem:[%s43 + $0x8] sm:$0xf]
        %v2588 = vld [vmem:[%s43 + $0xc] sm:$0xf]
        %v2589 = vld [vmem:[#allocation11] sm:$0x1]
        %v2591 = vlaneseq
        %v2592 = vshrl.u32 %v2591, 7
        %v2593 = vsub.s32 0, %v2592
        %v2594 = vrot.slane %v2589, %v2593
        %v2600 = vunpack.c.l.b16 %v2585
        %v2601 = vunpack.c.l.b16 %v2586
        %v2602 = vunpack.c.l.b16 %v2587
        %v2603 = vunpack.c.l.b16 %v2588
        %v2604 = vpack.c.b16 %v2601, %v2600
        %v2605 = vpack.c.b16 %v2603, %v2602
        %v2609 = vsel %vm1209, %v2584, 0
        %2611 = vmatprep.subr.bf16.mxu0 0
        %2612 = vmatpush1.bf16.msra.mxu0 %v2604
        %2613 = vmatprep.subr.bf16.mxu0 0
        %2614 = vmatpush1.bf16.msra.mxu0 %v2605
        %2615 = vmatprep.subr.bf16.mxu0 0
        %2616 = vmatpush1.bf16.msra.mxu0 0
        %2617 = vmatprep.subr.bf16.mxu0 0
        %2618 = vmatpush1.bf16.msra.mxu0 0
        %2619 = vmatprep.subr.bf16.mxu0 0
        %2620 = vmatpush1.bf16.msra.mxu0 0
        %2621 = vmatprep.subr.bf16.mxu0 0
        %2622 = vmatpush1.bf16.msra.mxu0 0
        %2623 = vmatprep.subr.bf16.mxu0 0
        %2624 = vmatpush1.bf16.msra.mxu0 0
        %2625 = vmatprep.subr.bf16.mxu0 0
        %2626 = vmatpush1.bf16.msra.mxu0 0
        %2627 = vmatprep.subr.bf16.mxu0 0
        %2628 = vmatpush1.bf16.msra.mxu0 0
        %2629 = vmatprep.subr.bf16.mxu0 0
        %2630 = vmatpush1.bf16.msra.mxu0 0
        %2631 = vmatprep.subr.bf16.mxu0 0
        %2632 = vmatpush1.bf16.msra.mxu0 0
        %2633 = vmatprep.subr.bf16.mxu0 0
        %2634 = vmatpush1.bf16.msra.mxu0 0
        %2635 = vmatprep.subr.bf16.mxu0 0
        %2636 = vmatpush1.bf16.msra.mxu0 0
        %2637 = vmatprep.subr.bf16.mxu0 0
        %2638 = vmatpush1.bf16.msra.mxu0 0
        %2639 = vmatprep.subr.bf16.mxu0 0
        %2640 = vmatpush1.bf16.msra.mxu0 0
        %2641 = vmatprep.subr.bf16.mxu0 0
        %2642 = vmatpush1.bf16.msra.mxu0 0
        %2643 = vmatprep.mubr.bf16.mxu0 0
        %2644 = vmatmul.mubr.bf16.gmra.mrb[0].mxu0 %v2609
        %v2645 = vpop.f32.mrb[0].mxu0
        %v2646 = vadd.f32 %v2594, %v2645
        %v2647 = vpop.f32.mrb[0].mxu0
        %v2648 = vpop.f32.mrb[0].mxu0
        %v2649 = vpop.f32.mrb[0].mxu0
        %2650 = vdwg.mxu0
        %v2651 = vadd.f32 %v1925, %v2646
        %v2652 = vld [vmem:[#allocation13] sm:$0x1]
        %v2654 = vlaneseq
        %v2655 = vshrl.u32 %v2654, 7
        %v2656 = vsub.s32 0, %v2655
        %v2657 = vrot.slane %v2652, %v2656
        %v2659 = vmul.f32 %v2651, %v2657
        %v2660 = vld [vmem:[#allocation14] sm:$0x1]
        %v2662 = vlaneseq
        %v2663 = vshrl.u32 %v2662, 7
        %v2664 = vsub.s32 0, %v2663
        %v2665 = vrot.slane %v2660, %v2664
        %v2667 = vadd.f32 %v2659, %v2665
        %v2668 = vpack.c.bf16 %v2667, %v2667
        %v2669 = vld [vmem:[%s51] sm:$0xf]
        %v2670 = vld [vmem:[%s51 + $0x4] sm:$0xf]
        %v2671 = vld [vmem:[%s51 + $0x8] sm:$0xf]
        %v2672 = vld [vmem:[%s51 + $0xc] sm:$0xf]
        %v2673 = vld [vmem:[#allocation16] sm:$0x1]
        %v2675 = vlaneseq
        %v2676 = vshrl.u32 %v2675, 7
        %v2677 = vsub.s32 0, %v2676
        %v2678 = vrot.slane %v2673, %v2677
        %v2684 = vunpack.c.l.b16 %v2669
        %v2685 = vunpack.c.l.b16 %v2670
        %v2686 = vunpack.c.l.b16 %v2671
        %v2687 = vunpack.c.l.b16 %v2672
        %v2688 = vpack.c.b16 %v2685, %v2684
        %v2689 = vpack.c.b16 %v2687, %v2686
        %v2693 = vsel %vm1209, %v2668, 0
        %2695 = vmatprep.subr.bf16.mxu0 0
        %2696 = vmatpush1.bf16.msra.mxu0 %v2688
        %2697 = vmatprep.subr.bf16.mxu0 0
        %2698 = vmatpush1.bf16.msra.mxu0 %v2689
        %2699 = vmatprep.subr.bf16.mxu0 0
        %2700 = vmatpush1.bf16.msra.mxu0 0
        %2701 = vmatprep.subr.bf16.mxu0 0
        %2702 = vmatpush1.bf16.msra.mxu0 0
        %2703 = vmatprep.subr.bf16.mxu0 0
        %2704 = vmatpush1.bf16.msra.mxu0 0
        %2705 = vmatprep.subr.bf16.mxu0 0
        %2706 = vmatpush1.bf16.msra.mxu0 0
        %2707 = vmatprep.subr.bf16.mxu0 0
        %2708 = vmatpush1.bf16.msra.mxu0 0
        %2709 = vmatprep.subr.bf16.mxu0 0
        %2710 = vmatpush1.bf16.msra.mxu0 0
        %2711 = vmatprep.subr.bf16.mxu0 0
        %2712 = vmatpush1.bf16.msra.mxu0 0
        %2713 = vmatprep.subr.bf16.mxu0 0
        %2714 = vmatpush1.bf16.msra.mxu0 0
        %2715 = vmatprep.subr.bf16.mxu0 0
        %2716 = vmatpush1.bf16.msra.mxu0 0
        %2717 = vmatprep.subr.bf16.mxu0 0
        %2718 = vmatpush1.bf16.msra.mxu0 0
        %2719 = vmatprep.subr.bf16.mxu0 0
        %2720 = vmatpush1.bf16.msra.mxu0 0
        %2721 = vmatprep.subr.bf16.mxu0 0
        %2722 = vmatpush1.bf16.msra.mxu0 0
        %2723 = vmatprep.subr.bf16.mxu0 0
        %2724 = vmatpush1.bf16.msra.mxu0 0
        %2725 = vmatprep.subr.bf16.mxu0 0
        %2726 = vmatpush1.bf16.msra.mxu0 0
        %2727 = vmatprep.mubr.bf16.mxu0 0
        %2728 = vmatmul.mubr.bf16.gmra.mrb[0].mxu0 %v2693
        %v2729 = vpop.f32.mrb[0].mxu0
        %v2730 = vadd.f32 %v2678, %v2729
        %v2731 = vpop.f32.mrb[0].mxu0
        %v2732 = vpop.f32.mrb[0].mxu0
        %v2733 = vpop.f32.mrb[0].mxu0
        %2734 = vdwg.mxu0
        %v2735 = vmax.f32 %v2730, 0.0
        %v2736 = vpack.c.bf16 %v2735, %v2735
        %v2737 = vld [vmem:[%s55] sm:$0xf]
        %v2738 = vld [vmem:[%s55 + $0x4] sm:$0xf]
        %v2739 = vld [vmem:[%s55 + $0x8] sm:$0xf]
        %v2740 = vld [vmem:[%s55 + $0xc] sm:$0xf]
        %v2741 = vld [vmem:[%s55 + $0x10] sm:$0xf]
        %v2742 = vld [vmem:[%s55 + $0x14] sm:$0xf]
        %v2743 = vld [vmem:[%s55 + $0x18] sm:$0xf]
        %v2744 = vld [vmem:[%s55 + $0x1c] sm:$0xf]
        %v2745 = vld [vmem:[#allocation17] sm:$0x1]
        %v2747 = vlaneseq
        %v2748 = vshrl.u32 %v2747, 7
        %v2749 = vsub.s32 0, %v2748
        %v2750 = vrot.slane %v2745, %v2749
        %v2760 = vunpack.c.l.b16 %v2737
        %v2761 = vunpack.c.l.b16 %v2738
        %v2762 = vunpack.c.l.b16 %v2739
        %v2763 = vunpack.c.l.b16 %v2740
        %v2764 = vunpack.c.l.b16 %v2741
        %v2765 = vunpack.c.l.b16 %v2742
        %v2766 = vunpack.c.l.b16 %v2743
        %v2767 = vunpack.c.l.b16 %v2744
        %v2768 = vpack.c.b16 %v2761, %v2760
        %v2769 = vpack.c.b16 %v2763, %v2762
        %v2770 = vpack.c.b16 %v2765, %v2764
        %v2771 = vpack.c.b16 %v2767, %v2766
        %vm2776 = vcmask 523264
        %v2778 = vsel %vm2776, %v2736, 0
        %2780 = vmatprep.subr.bf16.mxu0 0
        %2781 = vmatpush1.bf16.msra.mxu0 %v2768
        %2782 = vmatprep.subr.bf16.mxu0 0
        %2783 = vmatpush1.bf16.msra.mxu0 %v2769
        %2784 = vmatprep.subr.bf16.mxu0 0
        %2785 = vmatpush1.bf16.msra.mxu0 %v2770
        %2786 = vmatprep.subr.bf16.mxu0 0
        %2787 = vmatpush1.bf16.msra.mxu0 %v2771
        %2788 = vmatprep.subr.bf16.mxu0 0
        %2789 = vmatpush1.bf16.msra.mxu0 0
        %2790 = vmatprep.subr.bf16.mxu0 0
        %2791 = vmatpush1.bf16.msra.mxu0 0
        %2792 = vmatprep.subr.bf16.mxu0 0
        %2793 = vmatpush1.bf16.msra.mxu0 0
        %2794 = vmatprep.subr.bf16.mxu0 0
        %2795 = vmatpush1.bf16.msra.mxu0 0
        %2796 = vmatprep.subr.bf16.mxu0 0
        %2797 = vmatpush1.bf16.msra.mxu0 0
        %2798 = vmatprep.subr.bf16.mxu0 0
        %2799 = vmatpush1.bf16.msra.mxu0 0
        %2800 = vmatprep.subr.bf16.mxu0 0
        %2801 = vmatpush1.bf16.msra.mxu0 0
        %2802 = vmatprep.subr.bf16.mxu0 0
        %2803 = vmatpush1.bf16.msra.mxu0 0
        %2804 = vmatprep.subr.bf16.mxu0 0
        %2805 = vmatpush1.bf16.msra.mxu0 0
        %2806 = vmatprep.subr.bf16.mxu0 0
        %2807 = vmatpush1.bf16.msra.mxu0 0
        %2808 = vmatprep.subr.bf16.mxu0 0
        %2809 = vmatpush1.bf16.msra.mxu0 0
        %2810 = vmatprep.subr.bf16.mxu0 0
        %2811 = vmatpush1.bf16.msra.mxu0 0
        %2812 = vmatprep.mubr.bf16.mxu0 0
        %2813 = vmatmul.mubr.bf16.gmra.mrb[0].mxu0 %v2778
        %v2814 = vpop.f32.mrb[0].mxu0
        %v2815 = vadd.f32 %v2750, %v2814
        %v2816 = vpop.f32.mrb[0].mxu0
        %v2817 = vpop.f32.mrb[0].mxu0
        %v2818 = vpop.f32.mrb[0].mxu0
        %2819 = vdwg.mxu0
        %v2820 = vadd.f32 %v2667, %v2815
        %v2821 = vld [vmem:[#allocation19] sm:$0x1]
        %v2823 = vlaneseq
        %v2824 = vshrl.u32 %v2823, 7
        %v2825 = vsub.s32 0, %v2824
        %v2826 = vrot.slane %v2821, %v2825
        %v2828 = vmul.f32 %v2820, %v2826
        %v2829 = vld [vmem:[#allocation20] sm:$0x1]
        %v2831 = vlaneseq
        %v2832 = vshrl.u32 %v2831, 7
        %v2833 = vsub.s32 0, %v2832
        %v2834 = vrot.slane %v2829, %v2833
        %v2836 = vadd.f32 %v2828, %v2834
        %2837 = vst.msk [vmem:[%s1154] sm:$0xff] %vm1209, %v2836
        %s2838 = sand.u32 %s768, 1
        %s2839 = scalar_lea.sflag [#allocation4], %s2838
        %s2840 = sand.u32 %s768, 1
        %s2841 = smul.addr %s2840, 8
        %s2842 = scalar_lea.vmem [#allocation22], %s2841
        // Predicated region
        $region193: #{transformer_forward.9} parent=143 // pred_check
          %p2843 = pneg %p778
        $region194: #{transformer_forward.9} parent=143 // pred_check_branch
          %2845 = sbr.rel (%p2843) target = $region196
        $region195: #{transformer_forward.9} parent=143 // pred_region
          %s2847 = ssub.s32 128, 128
          %2848 = vsyncadd %s2839, %s2847
          %s2849 = smul.addr %s84, 128
          %s2850 = scalar_lea.hbm %s63, %s2849
          %s2852 = sshll.u32 %s2842, 4
          %s2853 = int_to_ptr.vmem [resolvable:$true] %s2852
          %2855 = dma.vmem_to_hbm [thread:$0]  %s2853, 128, %s2850, %s2839
        $region196: #{transformer_forward.9} parent=143 // pred_fallthru
          _
      $region144: #{transformer_forward.9} parent=5 // pred_fallthru
        _
      %p2856 = scmp.le.s32.totalorder 2, %s79
      // Predicated region
      $region197: #{transformer_forward.9} parent=5 // pred_check
        %p2857 = pneg %p2856
      $region198: #{transformer_forward.9} parent=5 // pred_check_branch
        %2859 = sbr.rel (%p2857) target = $region200
      $region199: #{transformer_forward.9} parent=5 // pred_region
        %s2860 = ssub.s32 %s79, 2
        // Predicated region
        $region201: #{transformer_forward.9} parent=199 // pred_check
          %p2861 = pneg %p784
        $region202: #{transformer_forward.9} parent=199 // pred_check_branch
          %2863 = sbr.rel (%p2861) target = $region204
        $region203: #{transformer_forward.9} parent=199 // pred_region
          %s2864 = sand.u32 %s769, 1
          %s2865 = scalar_lea.sflag [#allocation4], %s2864
          %s2866 = sand.u32 %s769, 1
          %s2867 = smul.addr %s2866, 8
          %s2868 = scalar_lea.vmem [#allocation22], %s2867
          %2869 = dma.done %s2865, 128
        $region204: #{transformer_forward.9} parent=199 // pred_fallthru
          _
      $region200: #{transformer_forward.9} parent=5 // pred_fallthru
        _
    $region6: #{transformer_forward.9} parent=1 // loop_footer
      %s83 = sadd.s32 1, %s79
    $region7: #{transformer_forward.9} parent=1 // loop_footer_branch
      %78 = sbr.rel target = $region3
    $region8: #{transformer_forward.9} parent=1 // loop_exit
      _
    %2870 = vsyncpa [#allocation3], 1
    %s2871 = scalar_lea.sflag [#allocation3], 1
    %2872 = vsyncpa %s2871, 1
    %2873 = vsyncpa [#allocation6], 1
    %2874 = vsyncpa [#allocation9], 1
    %2875 = vsyncpa [#allocation12], 1
    %2876 = vsyncpa [#allocation15], 1
    %2877 = vsyncpa [#allocation18], 1
    %2878 = vsyncpa [#allocation21], 1
    %2879 = vsyncpa [#allocation4], 1
    %s2880 = scalar_lea.sflag [#allocation4], 1
    %2881 = vsyncpa %s2880, 1

</llo_original>
